<compile_context>
chip_gen: v5e
topology: v5e:2x2
jax: 0.10.0
libtpu: 0.0.40
codegen_flags: <defaults>
</compile_context>

<pallas_src>
import functools
import math

import numpy as np
import jax
import jax.numpy as jnp
from jax.experimental import pallas as pl
from jax.experimental.pallas import tpu as pltpu


# --------------------------------------------------------------------------
# Constant matrices (numpy, cached per shape -> baked as compile-time consts)
# --------------------------------------------------------------------------

@functools.lru_cache(maxsize=None)
def _avg_matrix(L, ksize):
    """(L, L) matrix A with trend = A @ x == AvgPool1d(k, stride=1) over the
    replicate-padded series (exact PyTorch series_decomp semantics)."""
    pad = (ksize - 1) // 2
    A = np.zeros((L, L), np.float32)
    for t in range(L):
        for j in range(ksize):
            s = min(max(t + j - pad, 0), L - 1)
            A[t, s] += 1.0 / ksize
    return A


@functools.lru_cache(maxsize=None)
def _dft_matrices(L):
    """Real/imag DFT matrices: C[m,t] = cos(2*pi*m*t/L), S[m,t] = sin(2*pi*m*t/L)."""
    m = np.arange(L)
    ang = 2.0 * np.pi * np.outer(m, m) / L
    return np.cos(ang).astype(np.float32), np.sin(ang).astype(np.float32)


@functools.lru_cache(maxsize=None)
def _shift_matrices(L):
    """Circular shift permutations: (pm1 @ y)[t] = y[(t-1)%L], (pp1 @ y)[t] = y[(t+1)%L]."""
    pm1 = np.zeros((L, L), np.float32)
    pp1 = np.zeros((L, L), np.float32)
    for t in range(L):
        pm1[t, (t - 1) % L] = 1.0
        pp1[t, (t + 1) % L] = 1.0
    return pm1, pp1


# --------------------------------------------------------------------------
# series decomposition (moving-average matmul, residual add fused in)
# --------------------------------------------------------------------------

def _decomp_kernel(a_ref, x_ref, seas_ref, trend_ref):
    xin = x_ref[0]
    trend = jnp.dot(a_ref[...], xin, preferred_element_type=jnp.float32)
    trend_ref[0] = trend
    seas_ref[0] = xin - trend


def _decomp_add_kernel(a_ref, x_ref, y_ref, seas_ref, trend_ref):
    xin = x_ref[0] + y_ref[0]              # residual add fused into decomposition
    trend = jnp.dot(a_ref[...], xin, preferred_element_type=jnp.float32)
    trend_ref[0] = trend
    seas_ref[0] = xin - trend


def series_decomp(x, ksize, add=None):
    B, L, C = x.shape
    A = jnp.asarray(_avg_matrix(L, ksize))
    spec = pl.BlockSpec((1, L, C), lambda b: (b, 0, 0))
    in_specs = [pl.BlockSpec((L, L), lambda b: (0, 0)), spec]
    args = [A, x]
    kernel = _decomp_kernel
    if add is not None:
        in_specs.append(spec)
        args.append(add)
        kernel = _decomp_add_kernel
    seas, trend = pl.pallas_call(
        kernel,
        grid=(B,),
        in_specs=in_specs,
        out_specs=(spec, spec),
        out_shape=(jax.ShapeDtypeStruct((B, L, C), jnp.float32),
                   jax.ShapeDtypeStruct((B, L, C), jnp.float32)),
        compiler_params=pltpu.CompilerParams(dimension_semantics=("parallel",)),
    )(*args)
    return seas, trend


# --------------------------------------------------------------------------
# embedding: circular k=3 conv (shift-permutation matmuls) + temporal linear
# --------------------------------------------------------------------------

def _circular_conv3(x, w_ref, pm1, pp1):
    """Conv1d(k=3, padding=1, circular, no bias) channels-last:
       out[t] = x[(t-1)%L] @ W0 + x[t] @ W1 + x[(t+1)%L] @ W2."""
    y0 = jnp.dot(x, w_ref[0], preferred_element_type=jnp.float32)
    y1 = jnp.dot(x, w_ref[1], preferred_element_type=jnp.float32)
    y2 = jnp.dot(x, w_ref[2], preferred_element_type=jnp.float32)
    return (jnp.dot(pm1, y0, preferred_element_type=jnp.float32)
            + y1
            + jnp.dot(pp1, y2, preferred_element_type=jnp.float32))


def _embed_kernel(x_ref, mark_ref, wconv_ref, wtemp_ref, pm1_ref, pp1_ref, o_ref):
    val = _circular_conv3(x_ref[0], wconv_ref, pm1_ref[...], pp1_ref[...])
    tmp = jnp.dot(mark_ref[0], wtemp_ref[...], preferred_element_type=jnp.float32)
    o_ref[0] = val + tmp


def data_embedding(x, x_mark, p):
    B, L, Cin = x.shape
    F = x_mark.shape[2]
    dm = p["temp_w"].shape[1]
    pm1, pp1 = _shift_matrices(L)
    return pl.pallas_call(
        _embed_kernel,
        grid=(B,),
        in_specs=[pl.BlockSpec((1, L, Cin), lambda b: (b, 0, 0)),
                  pl.BlockSpec((1, L, F), lambda b: (b, 0, 0)),
                  pl.BlockSpec((3, Cin, dm), lambda b: (0, 0, 0)),
                  pl.BlockSpec((F, dm), lambda b: (0, 0)),
                  pl.BlockSpec((L, L), lambda b: (0, 0)),
                  pl.BlockSpec((L, L), lambda b: (0, 0))],
        out_specs=pl.BlockSpec((1, L, dm), lambda b: (b, 0, 0)),
        out_shape=jax.ShapeDtypeStruct((B, L, dm), jnp.float32),
        compiler_params=pltpu.CompilerParams(dimension_semantics=("parallel",)),
    )(x, x_mark, p["conv_w"], p["temp_w"], jnp.asarray(pm1), jnp.asarray(pp1))


# --------------------------------------------------------------------------
# AutoCorrelation: fused QKV projection + period correlation (real-DFT, MXU)
# --------------------------------------------------------------------------

def _corr_from_qk(q, k, cmat, smat, inv_norm):
    """corr[tau] = inv_norm * sum_{t,c} q[t,c] * k[(t-tau)%L, c], shape (L, 1).
    Exact equivalent of torch irfft(rfft(q)*conj(rfft(k))) meaned over heads/chans."""
    qc = jnp.dot(cmat, q, preferred_element_type=jnp.float32)
    qs = jnp.dot(smat, q, preferred_element_type=jnp.float32)
    kc = jnp.dot(cmat, k, preferred_element_type=jnp.float32)
    ks = jnp.dot(smat, k, preferred_element_type=jnp.float32)
    pr = jnp.sum(qc * kc + qs * ks, axis=1, keepdims=True)   # Re(Q*conj(K)) summed over c
    pi = jnp.sum(qc * ks - qs * kc, axis=1, keepdims=True)   # Im(Q*conj(K)) summed over c
    return (jnp.dot(cmat, pr, preferred_element_type=jnp.float32)
            - jnp.dot(smat, pi, preferred_element_type=jnp.float32)) * inv_norm


def _self_corr_kernel(x_ref, wq_ref, bq_ref, wk_ref, bk_ref, wv_ref, bv_ref,
                      cmat_ref, smat_ref, corr_ref, v_ref, *, inv_norm):
    x = x_ref[0]
    q = jnp.dot(x, wq_ref[...], preferred_element_type=jnp.float32) + bq_ref[...]
    k = jnp.dot(x, wk_ref[...], preferred_element_type=jnp.float32) + bk_ref[...]
    v = jnp.dot(x, wv_ref[...], preferred_element_type=jnp.float32) + bv_ref[...]
    corr_ref[0] = _corr_from_qk(q, k, cmat_ref[...], smat_ref[...], inv_norm)
    v_ref[0] = v


def _cross_corr_kernel(x_ref, c_ref, wq_ref, bq_ref, wk_ref, bk_ref, wv_ref, bv_ref,
                       cmat_ref, smat_ref, corr_ref, v_ref, *, inv_norm):
    x = x_ref[0]            # (L, dm) queries source
    cr = c_ref[0]           # (S, dm) keys/values source
    L, dm = x.shape
    S = cr.shape[0]
    q = jnp.dot(x, wq_ref[...], preferred_element_type=jnp.float32) + bq_ref[...]
    k = jnp.dot(cr, wk_ref[...], preferred_element_type=jnp.float32) + bk_ref[...]
    v = jnp.dot(cr, wv_ref[...], preferred_element_type=jnp.float32) + bv_ref[...]
    if S > L:               # static-shape branch: truncate (PyTorch semantics)
        k = k[:L, :]
        v = v[:L, :]
    elif S < L:             # static-shape branch: zero pad (PyTorch semantics)
        pad = jnp.zeros((L - S, dm), jnp.float32)
        k = jnp.concatenate([k, pad], axis=0)
        v = jnp.concatenate([v, pad], axis=0)
    corr_ref[0] = _corr_from_qk(q, k, cmat_ref[...], smat_ref[...], inv_norm)
    v_ref[0] = v


def _attn_correlation(p, queries, keys_values=None):
    """Returns mean correlation (B, L) and projected values V (B, L, dm)."""
    B, L, dm = queries.shape
    cmat_np, smat_np = _dft_matrices(L)
    cmat, smat = jnp.asarray(cmat_np), jnp.asarray(smat_np)
    inv_norm = 1.0 / float(L * dm)     # 1/L irfft normalization * 1/dm head/channel mean
    w_spec = pl.BlockSpec((dm, dm), lambda b: (0, 0))
    b_spec = pl.BlockSpec((1, dm), lambda b: (0, 0))
    m_spec = pl.BlockSpec((L, L), lambda b: (0, 0))
    out_specs = (pl.BlockSpec((1, L, 1), lambda b: (b, 0, 0)),
                 pl.BlockSpec((1, L, dm), lambda b: (b, 0, 0)))
    out_shape = (jax.ShapeDtypeStruct((B, L, 1), jnp.float32),
                 jax.ShapeDtypeStruct((B, L, dm), jnp.float32))
    cp = pltpu.CompilerParams(dimension_semantics=("parallel",))
    if keys_values is None:
        corr, v = pl.pallas_call(
            functools.partial(_self_corr_kernel, inv_norm=inv_norm),
            grid=(B,),
            in_specs=[pl.BlockSpec((1, L, dm), lambda b: (b, 0, 0)),
                      w_spec, b_spec, w_spec, b_spec, w_spec, b_spec,
                      m_spec, m_spec],
            out_specs=out_specs, out_shape=out_shape, compiler_params=cp,
        )(queries, p["Wq"], p["bq"], p["Wk"], p["bk"], p["Wv"], p["bv"], cmat, smat)
    else:
        S = keys_values.shape[1]
        corr, v = pl.pallas_call(
            functools.partial(_cross_corr_kernel, inv_norm=inv_norm),
            grid=(B,),
            in_specs=[pl.BlockSpec((1, L, dm), lambda b: (b, 0, 0)),
                      pl.BlockSpec((1, S, dm), lambda b: (b, 0, 0)),
                      w_spec, b_spec, w_spec, b_spec, w_spec, b_spec,
                      m_spec, m_spec],
            out_specs=out_specs, out_shape=out_shape, compiler_params=cp,
        )(queries, keys_values, p["Wq"], p["bq"], p["Wk"], p["bk"], p["Wv"], p["bv"],
          cmat, smat)
    return corr[:, :, 0], v


# --------------------------------------------------------------------------
# time-delay aggregation (delays/weights via SMEM, selection matmul) + out proj
# --------------------------------------------------------------------------

def _agg_kernel(delay_ref, w_ref, v_ref, wo_ref, bo_ref, o_ref, *, top_k):
    b = pl.program_id(0)
    v = v_ref[0]                                           # (L, dm)
    L = v.shape[0]
    t_idx = jax.lax.broadcasted_iota(jnp.int32, (L, L), 0)
    s_idx = jax.lax.broadcasted_iota(jnp.int32, (L, L), 1)
    shift = (s_idx - t_idx + L) % L                        # (s - t) mod L
    sel = jnp.zeros((L, L), jnp.float32)
    for i in range(top_k):                                 # static, tiny (factor*log L)
        d = delay_ref[b, i]                                # int32 scalar from SMEM
        w = w_ref[b, i]                                    # f32 scalar from SMEM
        sel = sel + jnp.where(shift == d, w, 0.0)
    # out[t] = sum_i w_i * V[(t + delay_i) % L]  -> one MXU matmul, fused out-proj
    agg = jnp.dot(sel, v, preferred_element_type=jnp.float32)
    o_ref[0] = jnp.dot(agg, wo_ref[...], preferred_element_type=jnp.float32) + bo_ref[...]


def auto_correlation(p, queries, keys_values, factor):
    """AutoCorrelationLayer forward (inference time-delay aggregation path)."""
    B, L, dm = queries.shape
    mean_value, v = _attn_correlation(p, queries, keys_values)
    top_k = max(1, int(factor * math.log(L)))
    # TODO(synk): torch.topk (data-dependent sort) has no clean Pallas equivalent;
    # jax.lax.top_k / softmax are host-side glue on a tiny (B, k) array.
    weights, delay = jax.lax.top_k(mean_value, top_k)
    tmp_corr = jax.nn.softmax(weights, axis=-1)
    return pl.pallas_call(
        functools.partial(_agg_kernel, top_k=top_k),
        grid=(B,),
        in_specs=[pl.BlockSpec(memory_space=pltpu.MemorySpace.SMEM),   # delays (B, k) i32
                  pl.BlockSpec(memory_space=pltpu.MemorySpace.SMEM),   # weights (B, k) f32
                  pl.BlockSpec((1, L, dm), lambda b: (b, 0, 0)),
                  pl.BlockSpec((dm, dm), lambda b: (0, 0)),
                  pl.BlockSpec((1, dm), lambda b: (0, 0))],
        out_specs=pl.BlockSpec((1, L, dm), lambda b: (b, 0, 0)),
        out_shape=jax.ShapeDtypeStruct((B, L, dm), jnp.float32),
        compiler_params=pltpu.CompilerParams(dimension_semantics=("parallel",)),
    )(delay.astype(jnp.int32), tmp_corr, v, p["Wo"], p["bo"])


# --------------------------------------------------------------------------
# FFN (+relu) + residual + series_decomp, all fused in one kernel
# --------------------------------------------------------------------------

def _ffn_decomp_kernel(a_ref, x_ref, w1_ref, w2_ref, seas_ref, trend_ref, *, activation):
    x = x_ref[0]
    h = jnp.dot(x, w1_ref[...], preferred_element_type=jnp.float32)
    h = jnp.maximum(h, 0.0) if activation == "relu" else jax.nn.gelu(h)
    y = jnp.dot(h, w2_ref[...], preferred_element_type=jnp.float32)
    xin = x + y
    trend = jnp.dot(a_ref[...], xin, preferred_element_type=jnp.float32)
    trend_ref[0] = trend
    seas_ref[0] = xin - trend


def ffn_decomp(x, w1, w2, ksize, activation):
    B, L, dm = x.shape
    dff = w1.shape[1]
    A = jnp.asarray(_avg_matrix(L, ksize))
    spec = pl.BlockSpec((1, L, dm), lambda b: (b, 0, 0))
    return pl.pallas_call(
        functools.partial(_ffn_decomp_kernel, activation=activation),
        grid=(B,),
        in_specs=[pl.BlockSpec((L, L), lambda b: (0, 0)),
                  spec,
                  pl.BlockSpec((dm, dff), lambda b: (0, 0)),
                  pl.BlockSpec((dff, dm), lambda b: (0, 0))],
        out_specs=(spec, spec),
        out_shape=(jax.ShapeDtypeStruct((B, L, dm), jnp.float32),
                   jax.ShapeDtypeStruct((B, L, dm), jnp.float32)),
        compiler_params=pltpu.CompilerParams(dimension_semantics=("parallel",)),
    )(A, x, w1, w2)


# --------------------------------------------------------------------------
# decoder trend path: sum of 3 trends + circular k=3 conv (d_model -> c_out)
# --------------------------------------------------------------------------

def _trend_conv_kernel(t1_ref, t2_ref, t3_ref, w_ref, pm1_ref, pp1_ref, o_ref):
    t = t1_ref[0] + t2_ref[0] + t3_ref[0]
    o_ref[0] = _circular_conv3(t, w_ref, pm1_ref[...], pp1_ref[...])


def trend_conv(t1, t2, t3, w):
    B, L, dm = t1.shape
    c_out = w.shape[2]
    pm1, pp1 = _shift_matrices(L)
    spec = pl.BlockSpec((1, L, dm), lambda b: (b, 0, 0))
    return pl.pallas_call(
        _trend_conv_kernel,
        grid=(B,),
        in_specs=[spec, spec, spec,
                  pl.BlockSpec((3, dm, c_out), lambda b: (0, 0, 0)),
                  pl.BlockSpec((L, L), lambda b: (0, 0)),
                  pl.BlockSpec((L, L), lambda b: (0, 0))],
        out_specs=pl.BlockSpec((1, L, c_out), lambda b: (b, 0, 0)),
        out_shape=jax.ShapeDtypeStruct((B, L, c_out), jnp.float32),
        compiler_params=pltpu.CompilerParams(dimension_semantics=("parallel",)),
    )(t1, t2, t3, w, jnp.asarray(pm1), jnp.asarray(pp1))


# --------------------------------------------------------------------------
# my_Layernorm (LayerNorm minus time-mean bias), optionally fused with proj
# --------------------------------------------------------------------------

def _my_layernorm_math(x, gamma, beta):
    mu = jnp.mean(x, axis=-1, keepdims=True)
    var = jnp.mean((x - mu) ** 2, axis=-1, keepdims=True)
    xhat = (x - mu) * jax.lax.rsqrt(var + 1e-5)
    xhat = xhat * gamma + beta
    return xhat - jnp.mean(xhat, axis=0, keepdims=True)    # subtract time-mean bias


def _norm_kernel(x_ref, g_ref, b_ref, o_ref):
    o_ref[0] = _my_layernorm_math(x_ref[0], g_ref[...], b_ref[...])


def _norm_proj_kernel(x_ref, g_ref, b_ref, wp_ref, bp_ref, o_ref):
    xn = _my_layernorm_math(x_ref[0], g_ref[...], b_ref[...])
    o_ref[0] = jnp.dot(xn, wp_ref[...], preferred_element_type=jnp.float32) + bp_ref[...]


def my_layernorm(x, gamma, beta, wproj=None, bproj=None):
    B, L, dm = x.shape
    spec = pl.BlockSpec((1, L, dm), lambda b: (b, 0, 0))
    g_spec = pl.BlockSpec((1, dm), lambda b: (0, 0))
    cp = pltpu.CompilerParams(dimension_semantics=("parallel",))
    if wproj is None:
        return pl.pallas_call(
            _norm_kernel, grid=(B,),
            in_specs=[spec, g_spec, g_spec],
            out_specs=spec,
            out_shape=jax.ShapeDtypeStruct((B, L, dm), jnp.float32),
            compiler_params=cp,
        )(x, gamma, beta)
    c_out = wproj.shape[1]
    return pl.pallas_call(
        _norm_proj_kernel, grid=(B,),
        in_specs=[spec, g_spec, g_spec,
                  pl.BlockSpec((dm, c_out), lambda b: (0, 0)),
                  pl.BlockSpec((1, c_out), lambda b: (0, 0))],
        out_specs=pl.BlockSpec((1, L, c_out), lambda b: (b, 0, 0)),
        out_shape=jax.ShapeDtypeStruct((B, L, c_out), jnp.float32),
        compiler_params=cp,
    )(x, gamma, beta, wproj, bproj)


# --------------------------------------------------------------------------
# final head: (trend + seasonal)[-pred_len:] @ W + b
# --------------------------------------------------------------------------

def _head_kernel(s_ref, t_ref, w_ref, b_ref, o_ref):
    x = s_ref[0] + t_ref[0]
    o_ref[0] = jnp.dot(x, w_ref[...], preferred_element_type=jnp.float32) + b_ref[...]


def final_head(seasonal, trend, w, b, pred_len):
    s = seasonal[:, -pred_len:, :]
    t = trend[:, -pred_len:, :]
    B, P, C = s.shape
    spec = pl.BlockSpec((1, P, C), lambda i: (i, 0, 0))
    return pl.pallas_call(
        _head_kernel, grid=(B,),
        in_specs=[spec, spec,
                  pl.BlockSpec((C, 1), lambda i: (0, 0)),
                  pl.BlockSpec((1, 1), lambda i: (0, 0))],
        out_specs=pl.BlockSpec((1, P, 1), lambda i: (i, 0, 0)),
        out_shape=jax.ShapeDtypeStruct((B, P, 1), jnp.float32),
        compiler_params=pltpu.CompilerParams(dimension_semantics=("parallel",)),
    )(s, t, w, b)


# ------------------------------ model (glue) -------------------------------

def encoder_layer(p, x, cfg):
    new_x = auto_correlation(p["attn"], x, None, cfg["factor"])
    x, _ = series_decomp(x, cfg["moving_avg"], add=new_x)
    x, _ = ffn_decomp(x, p["Wff1"], p["Wff2"], cfg["moving_avg"], cfg["activation"])
    return x


def encoder(p, x, cfg):
    for lp in p["layers"]:
        x = encoder_layer(lp, x, cfg)
    return my_layernorm(x, p["norm_w"], p["norm_b"])


def decoder_layer(p, x, cross, cfg):
    new_x = auto_correlation(p["self_attn"], x, None, cfg["factor"])
    x, trend1 = series_decomp(x, cfg["moving_avg"], add=new_x)
    new_x = auto_correlation(p["cross_attn"], x, cross, cfg["factor"])
    x, trend2 = series_decomp(x, cfg["moving_avg"], add=new_x)
    x, trend3 = ffn_decomp(x, p["Wff1"], p["Wff2"], cfg["moving_avg"], cfg["activation"])
    residual_trend = trend_conv(trend1, trend2, trend3, p["Wtrend"])
    return x, residual_trend


def decoder(p, x, cross, trend, cfg):
    for lp in p["layers"]:
        x, rt = decoder_layer(lp, x, cross, cfg)
        trend = trend + rt
    seasonal = my_layernorm(x, p["norm_w"], p["norm_b"], p["Wproj"], p["bproj"])
    return seasonal, trend


def autoformer_forward(params, x_enc, x_mark_enc, x_dec, x_mark_dec, cfg):
    pred_len, label_len = cfg["pred_len"], cfg["label_len"]
    mavg = cfg["moving_avg"]

    mean = jnp.repeat(jnp.mean(x_enc, axis=1, keepdims=True), pred_len, axis=1)
    zeros = jnp.zeros((x_dec.shape[0], pred_len, x_enc.shape[2]), jnp.float32)
    seasonal_init, trend_init = series_decomp(x_enc, mavg)
    trend_init = jnp.concatenate([trend_init[:, -label_len:, :], mean], axis=1)
    seasonal_init = jnp.concatenate([seasonal_init[:, -label_len:, :], zeros], axis=1)

    enc_out = data_embedding(x_enc, x_mark_enc, params["enc_emb"])
    enc_out = encoder(params["encoder"], enc_out, cfg)

    dec_emb = data_embedding(seasonal_init, x_mark_dec, params["dec_emb"])
    seasonal_part, trend_part = decoder(params["decoder"], dec_emb, enc_out,
                                        trend_init, cfg)

    return final_head(seasonal_part, trend_part, params["lin_w"], params["lin_b"],
                      pred_len)


# ------------------------------ parameters ---------------------------------

def init_params(key, cfg):
    cnt = [0]

    def rnd(shape, scale=0.1):
        cnt[0] += 1
        return (scale * jax.random.normal(jax.random.fold_in(key, cnt[0]), shape)
                ).astype(jnp.float32)

    dm, dff = cfg["d_model"], cfg["d_ff"]
    enc_in, dec_in, c_out = cfg["enc_in"], cfg["dec_in"], cfg["c_out"]
    n_time_feat = 4  # freq='h', embed='timeF'

    def attn():
        return dict(Wq=rnd((dm, dm)), bq=rnd((1, dm)),
                    Wk=rnd((dm, dm)), bk=rnd((1, dm)),
                    Wv=rnd((dm, dm)), bv=rnd((1, dm)),
                    Wo=rnd((dm, dm)), bo=rnd((1, dm)))

    return dict(
        enc_emb=dict(conv_w=rnd((3, enc_in, dm)), temp_w=rnd((n_time_feat, dm))),
        dec_emb=dict(conv_w=rnd((3, dec_in, dm)), temp_w=rnd((n_time_feat, dm))),
        encoder=dict(
            layers=[dict(attn=attn(), Wff1=rnd((dm, dff)), Wff2=rnd((dff, dm)))
                    for _ in range(cfg["e_layers"])],
            norm_w=jnp.ones((1, dm), jnp.float32),
            norm_b=jnp.zeros((1, dm), jnp.float32)),
        decoder=dict(
            layers=[dict(self_attn=attn(), cross_attn=attn(),
                         Wff1=rnd((dm, dff)), Wff2=rnd((dff, dm)),
                         Wtrend=rnd((3, dm, c_out)))
                    for _ in range(cfg["d_layers"])],
            norm_w=jnp.ones((1, dm), jnp.float32),
            norm_b=jnp.zeros((1, dm), jnp.float32),
            Wproj=rnd((dm, c_out)), bproj=rnd((1, c_out))),
        lin_w=rnd((enc_in, 1)), lin_b=rnd((1, 1)),
    )


# --------------------------------- main -------------------------------------

if __name__ == "__main__":
    cfg = dict(seq_len=16, label_len=8, pred_len=8, enc_in=4, dec_in=4, c_out=4,
               d_model=32, n_heads=4, d_ff=64, e_layers=2, d_layers=1,
               moving_avg=5, factor=1, dropout=0.0, activation="relu",
               embed="timeF", freq="h", embed_type=0, output_attention=False)

    key = jax.random.PRNGKey(0)
    params = init_params(key, cfg)

    B = 2
    k1, k2, k3, k4 = jax.random.split(jax.random.fold_in(key, 12345), 4)
    x_enc = jax.random.normal(k1, (B, cfg["seq_len"], cfg["enc_in"]), jnp.float32)
    x_mark_enc = jax.random.normal(k2, (B, cfg["seq_len"], 4), jnp.float32)
    x_dec = jax.random.normal(k3, (B, cfg["label_len"] + cfg["pred_len"],
                                   cfg["dec_in"]), jnp.float32)
    x_mark_dec = jax.random.normal(k4, (B, cfg["label_len"] + cfg["pred_len"], 4),
                                   jnp.float32)

    fwd = jax.jit(functools.partial(autoformer_forward, cfg=cfg))
    out = fwd(params, x_enc, x_mark_enc, x_dec, x_mark_dec)
    out = jax.block_until_ready(out)
    assert out.shape == (B, cfg["pred_len"], 1), out.shape
    print("KERNEL_OK")
</pallas_src>

<mosaic_0001>
module attributes {stable_mosaic.version = 11 : i64} {
  func.func @_decomp_kernel(%arg0: i32, %arg1: memref<16x16xf32, #tpu.memory_space<vmem>>, %arg2: memref<1x16x4xf32, #tpu.memory_space<vmem>>, %arg3: memref<1x16x4xf32, #tpu.memory_space<vmem>>, %arg4: memref<1x16x4xf32, #tpu.memory_space<vmem>>) attributes {dimension_semantics = [#tpu.dimension_semantics<parallel>], iteration_bounds = array<i64: 2>, scalar_prefetch = 0 : i64, scratch_operands = 0 : i64, tpu.core_type = #tpu.core_type<tc>, window_params = [{pipeline_mode = #tpu.pipeline_mode<synchronous>, transform_indices = @transform_0, window_bounds = array<i64: 16, 16>}, {transform_indices = @transform_1, window_bounds = array<i64: 1, 16, 4>}, {transform_indices = @transform_2, window_bounds = array<i64: 1, 16, 4>}, {transform_indices = @transform_3, window_bounds = array<i64: 1, 16, 4>}]} {
    %c0 = arith.constant 0 : index
    %c0_0 = arith.constant 0 : index
    %c0_1 = arith.constant 0 : index
    %0 = vector.load %arg2[%c0, %c0_0, %c0_1] : memref<1x16x4xf32, #tpu.memory_space<vmem>>, vector<1x16x4xf32>
    %1 = vector.shape_cast %0 : vector<1x16x4xf32> to vector<16x4xf32>
    %c0_2 = arith.constant 0 : index
    %c0_3 = arith.constant 0 : index
    %2 = vector.load %arg1[%c0_2, %c0_3] : memref<16x16xf32, #tpu.memory_space<vmem>>, vector<16x16xf32>
    %cst = arith.constant dense<0.000000e+00> : vector<16x4xf32>
    %3 = tpu.matmul %2, %1, %cst {dimension_numbers = #tpu.dot_dimension_numbers<[1], [0], [0], [1], [0, 0, 1, 1], [], []>} : vector<16x16xf32>, vector<16x4xf32>, vector<16x4xf32> -> vector<16x4xf32>
    %c0_4 = arith.constant 0 : index
    %c0_5 = arith.constant 0 : index
    %c0_6 = arith.constant 0 : index
    %4 = vector.load %arg4[%c0_4, %c0_5, %c0_6] : memref<1x16x4xf32, #tpu.memory_space<vmem>>, vector<1x16x4xf32>
    %5 = vector.shape_cast %4 : vector<1x16x4xf32> to vector<16x4xf32>
    %6 = vector.shape_cast %3 : vector<16x4xf32> to vector<1x16x4xf32>
    tpu.vector_store %arg4[%c0_4, %c0_5, %c0_6], %6 {strides = array<i32>} : memref<1x16x4xf32, #tpu.memory_space<vmem>>, vector<1x16x4xf32>,
    %7 = arith.subf %1, %3 : vector<16x4xf32>
    %c0_7 = arith.constant 0 : index
    %c0_8 = arith.constant 0 : index
    %c0_9 = arith.constant 0 : index
    %8 = vector.load %arg3[%c0_7, %c0_8, %c0_9] : memref<1x16x4xf32, #tpu.memory_space<vmem>>, vector<1x16x4xf32>
    %9 = vector.shape_cast %8 : vector<1x16x4xf32> to vector<16x4xf32>
    %10 = vector.shape_cast %7 : vector<16x4xf32> to vector<1x16x4xf32>
    tpu.vector_store %arg3[%c0_7, %c0_8, %c0_9], %10 {strides = array<i32>} : memref<1x16x4xf32, #tpu.memory_space<vmem>>, vector<1x16x4xf32>,
    return
  }
  func.func @transform_0(%arg0: i32) -> (i32, i32) {
    %c0_i32 = arith.constant 0 : i32
    %c0_i32_0 = arith.constant 0 : i32
    %c0_i32_1 = arith.constant 0 : i32
    return %c0_i32, %c0_i32_0 : i32, i32
  }
  func.func @transform_1(%arg0: i32) -> (i32, i32, i32) {
    %c0_i32 = arith.constant 0 : i32
    %c0_i32_0 = arith.constant 0 : i32
    %c0_i32_1 = arith.constant 0 : i32
    return %arg0, %c0_i32, %c0_i32_0 : i32, i32, i32
  }
  func.func @transform_2(%arg0: i32) -> (i32, i32, i32) {
    %c0_i32 = arith.constant 0 : i32
    %c0_i32_0 = arith.constant 0 : i32
    %c0_i32_1 = arith.constant 0 : i32
    return %arg0, %c0_i32, %c0_i32_0 : i32, i32, i32
  }
  func.func @transform_3(%arg0: i32) -> (i32, i32, i32) {
    %c0_i32 = arith.constant 0 : i32
    %c0_i32_0 = arith.constant 0 : i32
    %c0_i32_1 = arith.constant 0 : i32
    return %arg0, %c0_i32, %c0_i32_0 : i32, i32, i32
  }
}

module attributes {stable_mosaic.version = 11 : i64} {
  func.func @_embed_kernel(%arg0: i32, %arg1: memref<1x16x4xf32, #tpu.memory_space<vmem>>, %arg2: memref<1x16x4xf32, #tpu.memory_space<vmem>>, %arg3: memref<3x4x32xf32, #tpu.memory_space<vmem>>, %arg4: memref<4x32xf32, #tpu.memory_space<vmem>>, %arg5: memref<16x16xf32, #tpu.memory_space<vmem>>, %arg6: memref<16x16xf32, #tpu.memory_space<vmem>>, %arg7: memref<1x16x32xf32, #tpu.memory_space<vmem>>) attributes {dimension_semantics = [#tpu.dimension_semantics<parallel>], iteration_bounds = array<i64: 2>, scalar_prefetch = 0 : i64, scratch_operands = 0 : i64, tpu.core_type = #tpu.core_type<tc>, window_params = [{transform_indices = @transform_0, window_bounds = array<i64: 1, 16, 4>}, {transform_indices = @transform_1, window_bounds = array<i64: 1, 16, 4>}, {pipeline_mode = #tpu.pipeline_mode<synchronous>, transform_indices = @transform_2, window_bounds = array<i64: 3, 4, 32>}, {pipeline_mode = #tpu.pipeline_mode<synchronous>, transform_indices = @transform_3, window_bounds = array<i64: 4, 32>}, {pipeline_mode = #tpu.pipeline_mode<synchronous>, transform_indices = @transform_4, window_bounds = array<i64: 16, 16>}, {pipeline_mode = #tpu.pipeline_mode<synchronous>, transform_indices = @transform_5, window_bounds = array<i64: 16, 16>}, {transform_indices = @transform_6, window_bounds = array<i64: 1, 16, 32>}]} {
    %c0 = arith.constant 0 : index
    %c0_0 = arith.constant 0 : index
    %c0_1 = arith.constant 0 : index
    %0 = vector.load %arg1[%c0, %c0_0, %c0_1] : memref<1x16x4xf32, #tpu.memory_space<vmem>>, vector<1x16x4xf32>
    %1 = vector.shape_cast %0 : vector<1x16x4xf32> to vector<16x4xf32>
    %c0_2 = arith.constant 0 : index
    %c0_3 = arith.constant 0 : index
    %2 = vector.load %arg5[%c0_2, %c0_3] : memref<16x16xf32, #tpu.memory_space<vmem>>, vector<16x16xf32>
    %c0_4 = arith.constant 0 : index
    %c0_5 = arith.constant 0 : index
    %3 = vector.load %arg6[%c0_4, %c0_5] : memref<16x16xf32, #tpu.memory_space<vmem>>, vector<16x16xf32>
    %c0_6 = arith.constant 0 : index
    %c0_7 = arith.constant 0 : index
    %c0_8 = arith.constant 0 : index
    %4 = vector.load %arg3[%c0_6, %c0_7, %c0_8] : memref<3x4x32xf32, #tpu.memory_space<vmem>>, vector<1x4x32xf32>
    %5 = vector.shape_cast %4 : vector<1x4x32xf32> to vector<4x32xf32>
    %cst = arith.constant dense<0.000000e+00> : vector<16x32xf32>
    %6 = tpu.matmul %1, %5, %cst {dimension_numbers = #tpu.dot_dimension_numbers<[1], [0], [0], [1], [0, 0, 1, 1], [], []>} : vector<16x4xf32>, vector<4x32xf32>, vector<16x32xf32> -> vector<16x32xf32>
    %c1 = arith.constant 1 : index
    %c0_9 = arith.constant 0 : index
    %c0_10 = arith.constant 0 : index
    %7 = vector.load %arg3[%c1, %c0_9, %c0_10] : memref<3x4x32xf32, #tpu.memory_space<vmem>>, vector<1x4x32xf32>
    %8 = vector.shape_cast %7 : vector<1x4x32xf32> to vector<4x32xf32>
    %cst_11 = arith.constant dense<0.000000e+00> : vector<16x32xf32>
    %9 = tpu.matmul %1, %8, %cst_11 {dimension_numbers = #tpu.dot_dimension_numbers<[1], [0], [0], [1], [0, 0, 1, 1], [], []>} : vector<16x4xf32>, vector<4x32xf32>, vector<16x32xf32> -> vector<16x32xf32>
    %c2 = arith.constant 2 : index
    %c0_12 = arith.constant 0 : index
    %c0_13 = arith.constant 0 : index
    %10 = vector.load %arg3[%c2, %c0_12, %c0_13] : memref<3x4x32xf32, #tpu.memory_space<vmem>>, vector<1x4x32xf32>
    %11 = vector.shape_cast %10 : vector<1x4x32xf32> to vector<4x32xf32>
    %cst_14 = arith.constant dense<0.000000e+00> : vector<16x32xf32>
    %12 = tpu.matmul %1, %11, %cst_14 {dimension_numbers = #tpu.dot_dimension_numbers<[1], [0], [0], [1], [0, 0, 1, 1], [], []>} : vector<16x4xf32>, vector<4x32xf32>, vector<16x32xf32> -> vector<16x32xf32>
    %cst_15 = arith.constant dense<0.000000e+00> : vector<16x32xf32>
    %13 = tpu.matmul %2, %6, %cst_15 {dimension_numbers = #tpu.dot_dimension_numbers<[1], [0], [0], [1], [0, 0, 1, 1], [], []>} : vector<16x16xf32>, vector<16x32xf32>, vector<16x32xf32> -> vector<16x32xf32>
    %14 = arith.addf %13, %9 : vector<16x32xf32>
    %cst_16 = arith.constant dense<0.000000e+00> : vector<16x32xf32>
    %15 = tpu.matmul %3, %12, %cst_16 {dimension_numbers = #tpu.dot_dimension_numbers<[1], [0], [0], [1], [0, 0, 1, 1], [], []>} : vector<16x16xf32>, vector<16x32xf32>, vector<16x32xf32> -> vector<16x32xf32>
    %16 = arith.addf %14, %15 : vector<16x32xf32>
    %c0_17 = arith.constant 0 : index
    %c0_18 = arith.constant 0 : index
    %c0_19 = arith.constant 0 : index
    %17 = vector.load %arg2[%c0_17, %c0_18, %c0_19] : memref<1x16x4xf32, #tpu.memory_space<vmem>>, vector<1x16x4xf32>
    %18 = vector.shape_cast %17 : vector<1x16x4xf32> to vector<16x4xf32>
    %c0_20 = arith.constant 0 : index
    %c0_21 = arith.constant 0 : index
    %19 = vector.load %arg4[%c0_20, %c0_21] : memref<4x32xf32, #tpu.memory_space<vmem>>, vector<4x32xf32>
    %cst_22 = arith.constant dense<0.000000e+00> : vector<16x32xf32>
    %20 = tpu.matmul %18, %19, %cst_22 {dimension_numbers = #tpu.dot_dimension_numbers<[1], [0], [0], [1], [0, 0, 1, 1], [], []>} : vector<16x4xf32>, vector<4x32xf32>, vector<16x32xf32> -> vector<16x32xf32>
    %21 = arith.addf %16, %20 : vector<16x32xf32>
    %c0_23 = arith.constant 0 : index
    %c0_24 = arith.constant 0 : index
    %c0_25 = arith.constant 0 : index
    %22 = vector.load %arg7[%c0_23, %c0_24, %c0_25] : memref<1x16x32xf32, #tpu.memory_space<vmem>>, vector<1x16x32xf32>
    %23 = vector.shape_cast %22 : vector<1x16x32xf32> to vector<16x32xf32>
    %24 = vector.shape_cast %21 : vector<16x32xf32> to vector<1x16x32xf32>
    tpu.vector_store %arg7[%c0_23, %c0_24, %c0_25], %24 {strides = array<i32>} : memref<1x16x32xf32, #tpu.memory_space<vmem>>, vector<1x16x32xf32>,
    return
  }
  func.func @transform_0(%arg0: i32) -> (i32, i32, i32) {
    %c0_i32 = arith.constant 0 : i32
    %c0_i32_0 = arith.constant 0 : i32
    %c0_i32_1 = arith.constant 0 : i32
    return %arg0, %c0_i32, %c0_i32_0 : i32, i32, i32
  }
  func.func @transform_1(%arg0: i32) -> (i32, i32, i32) {
    %c0_i32 = arith.constant 0 : i32
    %c0_i32_0 = arith.constant 0 : i32
    %c0_i32_1 = arith.constant 0 : i32
    return %arg0, %c0_i32, %c0_i32_0 : i32, i32, i32
  }
  func.func @transform_2(%arg0: i32) -> (i32, i32, i32) {
    %c0_i32 = arith.constant 0 : i32
    %c0_i32_0 = arith.constant 0 : i32
    %c0_i32_1 = arith.constant 0 : i32
    %c0_i32_2 = arith.constant 0 : i32
    return %c0_i32, %c0_i32_0, %c0_i32_1 : i32, i32, i32
  }
  func.func @transform_3(%arg0: i32) -> (i32, i32) {
    %c0_i32 = arith.constant 0 : i32
    %c0_i32_0 = arith.constant 0 : i32
    %c0_i32_1 = arith.constant 0 : i32
    return %c0_i32, %c0_i32_0 : i32, i32
  }
  func.func @transform_4(%arg0: i32) -> (i32, i32) {
    %c0_i32 = arith.constant 0 : i32
    %c0_i32_0 = arith.constant 0 : i32
    %c0_i32_1 = arith.constant 0 : i32
    return %c0_i32, %c0_i32_0 : i32, i32
  }
  func.func @transform_5(%arg0: i32) -> (i32, i32) {
    %c0_i32 = arith.constant 0 : i32
    %c0_i32_0 = arith.constant 0 : i32
    %c0_i32_1 = arith.constant 0 : i32
    return %c0_i32, %c0_i32_0 : i32, i32
  }
  func.func @transform_6(%arg0: i32) -> (i32, i32, i32) {
    %c0_i32 = arith.constant 0 : i32
    %c0_i32_0 = arith.constant 0 : i32
    %c0_i32_1 = arith.constant 0 : i32
    return %arg0, %c0_i32, %c0_i32_0 : i32, i32, i32
  }
}

module attributes {stable_mosaic.version = 11 : i64} {
  func.func @_self_corr_kernel(%arg0: i32, %arg1: memref<1x16x32xf32, #tpu.memory_space<vmem>>, %arg2: memref<32x32xf32, #tpu.memory_space<vmem>>, %arg3: memref<1x32xf32, #tpu.memory_space<vmem>>, %arg4: memref<32x32xf32, #tpu.memory_space<vmem>>, %arg5: memref<1x32xf32, #tpu.memory_space<vmem>>, %arg6: memref<32x32xf32, #tpu.memory_space<vmem>>, %arg7: memref<1x32xf32, #tpu.memory_space<vmem>>, %arg8: memref<16x16xf32, #tpu.memory_space<vmem>>, %arg9: memref<16x16xf32, #tpu.memory_space<vmem>>, %arg10: memref<1x16x1xf32, #tpu.memory_space<vmem>>, %arg11: memref<1x16x32xf32, #tpu.memory_space<vmem>>) attributes {dimension_semantics = [#tpu.dimension_semantics<parallel>], iteration_bounds = array<i64: 2>, scalar_prefetch = 0 : i64, scratch_operands = 0 : i64, tpu.core_type = #tpu.core_type<tc>, window_params = [{transform_indices = @transform_0, window_bounds = array<i64: 1, 16, 32>}, {pipeline_mode = #tpu.pipeline_mode<synchronous>, transform_indices = @transform_1, window_bounds = array<i64: 32, 32>}, {pipeline_mode = #tpu.pipeline_mode<synchronous>, transform_indices = @transform_2, window_bounds = array<i64: 1, 32>}, {pipeline_mode = #tpu.pipeline_mode<synchronous>, transform_indices = @transform_3, window_bounds = array<i64: 32, 32>}, {pipeline_mode = #tpu.pipeline_mode<synchronous>, transform_indices = @transform_4, window_bounds = array<i64: 1, 32>}, {pipeline_mode = #tpu.pipeline_mode<synchronous>, transform_indices = @transform_5, window_bounds = array<i64: 32, 32>}, {pipeline_mode = #tpu.pipeline_mode<synchronous>, transform_indices = @transform_6, window_bounds = array<i64: 1, 32>}, {pipeline_mode = #tpu.pipeline_mode<synchronous>, transform_indices = @transform_7, window_bounds = array<i64: 16, 16>}, {pipeline_mode = #tpu.pipeline_mode<synchronous>, transform_indices = @transform_8, window_bounds = array<i64: 16, 16>}, {transform_indices = @transform_9, window_bounds = array<i64: 1, 16, 1>}, {transform_indices = @transform_10, window_bounds = array<i64: 1, 16, 32>}]} {
    %c0 = arith.constant 0 : index
    %c0_0 = arith.constant 0 : index
    %c0_1 = arith.constant 0 : index
    %0 = vector.load %arg1[%c0, %c0_0, %c0_1] : memref<1x16x32xf32, #tpu.memory_space<vmem>>, vector<1x16x32xf32>
    %1 = vector.shape_cast %0 : vector<1x16x32xf32> to vector<16x32xf32>
    %c0_2 = arith.constant 0 : index
    %c0_3 = arith.constant 0 : index
    %2 = vector.load %arg2[%c0_2, %c0_3] : memref<32x32xf32, #tpu.memory_space<vmem>>, vector<32x32xf32>
    %cst = arith.constant dense<0.000000e+00> : vector<16x32xf32>
    %3 = tpu.matmul %1, %2, %cst {dimension_numbers = #tpu.dot_dimension_numbers<[1], [0], [0], [1], [0, 0, 1, 1], [], []>} : vector<16x32xf32>, vector<32x32xf32>, vector<16x32xf32> -> vector<16x32xf32>
    %c0_4 = arith.constant 0 : index
    %c0_5 = arith.constant 0 : index
    %4 = vector.load %arg3[%c0_4, %c0_5] : memref<1x32xf32, #tpu.memory_space<vmem>>, vector<1x32xf32>
    %5 = vector.broadcast %4 : vector<1x32xf32> to vector<16x32xf32>
    %6 = arith.addf %3, %5 : vector<16x32xf32>
    %c0_6 = arith.constant 0 : index
    %c0_7 = arith.constant 0 : index
    %7 = vector.load %arg4[%c0_6, %c0_7] : memref<32x32xf32, #tpu.memory_space<vmem>>, vector<32x32xf32>
    %cst_8 = arith.constant dense<0.000000e+00> : vector<16x32xf32>
    %8 = tpu.matmul %1, %7, %cst_8 {dimension_numbers = #tpu.dot_dimension_numbers<[1], [0], [0], [1], [0, 0, 1, 1], [], []>} : vector<16x32xf32>, vector<32x32xf32>, vector<16x32xf32> -> vector<16x32xf32>
    %c0_9 = arith.constant 0 : index
    %c0_10 = arith.constant 0 : index
    %9 = vector.load %arg5[%c0_9, %c0_10] : memref<1x32xf32, #tpu.memory_space<vmem>>, vector<1x32xf32>
    %10 = vector.broadcast %9 : vector<1x32xf32> to vector<16x32xf32>
    %11 = arith.addf %8, %10 : vector<16x32xf32>
    %c0_11 = arith.constant 0 : index
    %c0_12 = arith.constant 0 : index
    %12 = vector.load %arg6[%c0_11, %c0_12] : memref<32x32xf32, #tpu.memory_space<vmem>>, vector<32x32xf32>
    %cst_13 = arith.constant dense<0.000000e+00> : vector<16x32xf32>
    %13 = tpu.matmul %1, %12, %cst_13 {dimension_numbers = #tpu.dot_dimension_numbers<[1], [0], [0], [1], [0, 0, 1, 1], [], []>} : vector<16x32xf32>, vector<32x32xf32>, vector<16x32xf32> -> vector<16x32xf32>
    %c0_14 = arith.constant 0 : index
    %c0_15 = arith.constant 0 : index
    %14 = vector.load %arg7[%c0_14, %c0_15] : memref<1x32xf32, #tpu.memory_space<vmem>>, vector<1x32xf32>
    %15 = vector.broadcast %14 : vector<1x32xf32> to vector<16x32xf32>
    %16 = arith.addf %13, %15 : vector<16x32xf32>
    %c0_16 = arith.constant 0 : index
    %c0_17 = arith.constant 0 : index
    %17 = vector.load %arg8[%c0_16, %c0_17] : memref<16x16xf32, #tpu.memory_space<vmem>>, vector<16x16xf32>
    %c0_18 = arith.constant 0 : index
    %c0_19 = arith.constant 0 : index
    %18 = vector.load %arg9[%c0_18, %c0_19] : memref<16x16xf32, #tpu.memory_space<vmem>>, vector<16x16xf32>
    %cst_20 = arith.constant dense<0.000000e+00> : vector<16x32xf32>
    %19 = tpu.matmul %17, %6, %cst_20 {dimension_numbers = #tpu.dot_dimension_numbers<[1], [0], [0], [1], [0, 0, 1, 1], [], []>} : vector<16x16xf32>, vector<16x32xf32>, vector<16x32xf32> -> vector<16x32xf32>
    %cst_21 = arith.constant dense<0.000000e+00> : vector<16x32xf32>
    %20 = tpu.matmul %18, %6, %cst_21 {dimension_numbers = #tpu.dot_dimension_numbers<[1], [0], [0], [1], [0, 0, 1, 1], [], []>} : vector<16x16xf32>, vector<16x32xf32>, vector<16x32xf32> -> vector<16x32xf32>
    %cst_22 = arith.constant dense<0.000000e+00> : vector<16x32xf32>
    %21 = tpu.matmul %17, %11, %cst_22 {dimension_numbers = #tpu.dot_dimension_numbers<[1], [0], [0], [1], [0, 0, 1, 1], [], []>} : vector<16x16xf32>, vector<16x32xf32>, vector<16x32xf32> -> vector<16x32xf32>
    %cst_23 = arith.constant dense<0.000000e+00> : vector<16x32xf32>
    %22 = tpu.matmul %18, %11, %cst_23 {dimension_numbers = #tpu.dot_dimension_numbers<[1], [0], [0], [1], [0, 0, 1, 1], [], []>} : vector<16x16xf32>, vector<16x32xf32>, vector<16x32xf32> -> vector<16x32xf32>
    %23 = arith.mulf %19, %21 : vector<16x32xf32>
    %24 = arith.mulf %20, %22 : vector<16x32xf32>
    %25 = arith.addf %23, %24 : vector<16x32xf32>
    %cst_24 = arith.constant dense<0.000000e+00> : vector<16xf32>
    %26 = vector.multi_reduction <add>, %25, %cst_24 [1] : vector<16x32xf32> to vector<16xf32>
    %27 = vector.shape_cast %26 : vector<16xf32> to vector<16x1xf32>
    %28 = arith.mulf %19, %22 : vector<16x32xf32>
    %29 = arith.mulf %20, %21 : vector<16x32xf32>
    %30 = arith.subf %28, %29 : vector<16x32xf32>
    %cst_25 = arith.constant dense<0.000000e+00> : vector<16xf32>
    %31 = vector.multi_reduction <add>, %30, %cst_25 [1] : vector<16x32xf32> to vector<16xf32>
    %32 = vector.shape_cast %31 : vector<16xf32> to vector<16x1xf32>
    %cst_26 = arith.constant dense<0.000000e+00> : vector<16x1xf32>
    %33 = tpu.matmul %17, %27, %cst_26 {dimension_numbers = #tpu.dot_dimension_numbers<[1], [0], [0], [1], [0, 0, 1, 1], [], []>} : vector<16x16xf32>, vector<16x1xf32>, vector<16x1xf32> -> vector<16x1xf32>
    %cst_27 = arith.constant dense<0.000000e+00> : vector<16x1xf32>
    %34 = tpu.matmul %18, %32, %cst_27 {dimension_numbers = #tpu.dot_dimension_numbers<[1], [0], [0], [1], [0, 0, 1, 1], [], []>} : vector<16x16xf32>, vector<16x1xf32>, vector<16x1xf32> -> vector<16x1xf32>
    %35 = arith.subf %33, %34 : vector<16x1xf32>
    %cst_28 = arith.constant 0.001953125 : f32
    %36 = vector.broadcast %cst_28 : f32 to vector<16x1xf32>
    %37 = arith.mulf %35, %36 : vector<16x1xf32>
    %c0_29 = arith.constant 0 : index
    %c0_30 = arith.constant 0 : index
    %c0_31 = arith.constant 0 : index
    %38 = vector.load %arg10[%c0_29, %c0_30, %c0_31] : memref<1x16x1xf32, #tpu.memory_space<vmem>>, vector<1x16x1xf32>
    %39 = vector.shape_cast %38 : vector<1x16x1xf32> to vector<16x1xf32>
    %40 = vector.shape_cast %37 : vector<16x1xf32> to vector<1x16x1xf32>
    tpu.vector_store %arg10[%c0_29, %c0_30, %c0_31], %40 {strides = array<i32>} : memref<1x16x1xf32, #tpu.memory_space<vmem>>, vector<1x16x1xf32>,
    %c0_32 = arith.constant 0 : index
    %c0_33 = arith.constant 0 : index
    %c0_34 = arith.constant 0 : index
    %41 = vector.load %arg11[%c0_32, %c0_33, %c0_34] : memref<1x16x32xf32, #tpu.memory_space<vmem>>, vector<1x16x32xf32>
    %42 = vector.shape_cast %41 : vector<1x16x32xf32> to vector<16x32xf32>
    %43 = vector.shape_cast %16 : vector<16x32xf32> to vector<1x16x32xf32>
    tpu.vector_store %arg11[%c0_32, %c0_33, %c0_34], %43 {strides = array<i32>} : memref<1x16x32xf32, #tpu.memory_space<vmem>>, vector<1x16x32xf32>,
    return
  }
  func.func @transform_0(%arg0: i32) -> (i32, i32, i32) {
    %c0_i32 = arith.constant 0 : i32
    %c0_i32_0 = arith.constant 0 : i32
    %c0_i32_1 = arith.constant 0 : i32
    return %arg0, %c0_i32, %c0_i32_0 : i32, i32, i32
  }
  func.func @transform_1(%arg0: i32) -> (i32, i32) {
    %c0_i32 = arith.constant 0 : i32
    %c0_i32_0 = arith.constant 0 : i32
    %c0_i32_1 = arith.constant 0 : i32
    return %c0_i32, %c0_i32_0 : i32, i32
  }
  func.func @transform_2(%arg0: i32) -> (i32, i32) {
    %c0_i32 = arith.constant 0 : i32
    %c0_i32_0 = arith.constant 0 : i32
    %c0_i32_1 = arith.constant 0 : i32
    return %c0_i32, %c0_i32_0 : i32, i32
  }
  func.func @transform_3(%arg0: i32) -> (i32, i32) {
    %c0_i32 = arith.constant 0 : i32
    %c0_i32_0 = arith.constant 0 : i32
    %c0_i32_1 = arith.constant 0 : i32
    return %c0_i32, %c0_i32_0 : i32, i32
  }
  func.func @transform_4(%arg0: i32) -> (i32, i32) {
    %c0_i32 = arith.constant 0 : i32
    %c0_i32_0 = arith.constant 0 : i32
    %c0_i32_1 = arith.constant 0 : i32
    return %c0_i32, %c0_i32_0 : i32, i32
  }
  func.func @transform_5(%arg0: i32) -> (i32, i32) {
    %c0_i32 = arith.constant 0 : i32
    %c0_i32_0 = arith.constant 0 : i32
    %c0_i32_1 = arith.constant 0 : i32
    return %c0_i32, %c0_i32_0 : i32, i32
  }
  func.func @transform_6(%arg0: i32) -> (i32, i32) {
    %c0_i32 = arith.constant 0 : i32
    %c0_i32_0 = arith.constant 0 : i32
    %c0_i32_1 = arith.constant 0 : i32
    return %c0_i32, %c0_i32_0 : i32, i32
  }
  func.func @transform_7(%arg0: i32) -> (i32, i32) {
    %c0_i32 = arith.constant 0 : i32
    %c0_i32_0 = arith.constant 0 : i32
    %c0_i32_1 = arith.constant 0 : i32
    return %c0_i32, %c0_i32_0 : i32, i32
  }
  func.func @transform_8(%arg0: i32) -> (i32, i32) {
    %c0_i32 = arith.constant 0 : i32
    %c0_i32_0 = arith.constant 0 : i32
    %c0_i32_1 = arith.constant 0 : i32
    return %c0_i32, %c0_i32_0 : i32, i32
  }
  func.func @transform_9(%arg0: i32) -> (i32, i32, i32) {
    %c0_i32 = arith.constant 0 : i32
    %c0_i32_0 = arith.constant 0 : i32
    %c0_i32_1 = arith.constant 0 : i32
    return %arg0, %c0_i32, %c0_i32_0 : i32, i32, i32
  }
  func.func @transform_10(%arg0: i32) -> (i32, i32, i32) {
    %c0_i32 = arith.constant 0 : i32
    %c0_i32_0 = arith.constant 0 : i32
    %c0_i32_1 = arith.constant 0 : i32
    return %arg0, %c0_i32, %c0_i32_0 : i32, i32, i32
  }
}

module attributes {stable_mosaic.version = 11 : i64} {
  func.func @_decomp_add_kernel(%arg0: i32, %arg1: memref<16x16xf32, #tpu.memory_space<vmem>>, %arg2: memref<1x16x32xf32, #tpu.memory_space<vmem>>, %arg3: memref<1x16x32xf32, #tpu.memory_space<vmem>>, %arg4: memref<1x16x32xf32, #tpu.memory_space<vmem>>, %arg5: memref<1x16x32xf32, #tpu.memory_space<vmem>>) attributes {dimension_semantics = [#tpu.dimension_semantics<parallel>], iteration_bounds = array<i64: 2>, scalar_prefetch = 0 : i64, scratch_operands = 0 : i64, tpu.core_type = #tpu.core_type<tc>, window_params = [{pipeline_mode = #tpu.pipeline_mode<synchronous>, transform_indices = @transform_0, window_bounds = array<i64: 16, 16>}, {transform_indices = @transform_1, window_bounds = array<i64: 1, 16, 32>}, {transform_indices = @transform_2, window_bounds = array<i64: 1, 16, 32>}, {transform_indices = @transform_3, window_bounds = array<i64: 1, 16, 32>}, {transform_indices = @transform_4, window_bounds = array<i64: 1, 16, 32>}]} {
    %c0 = arith.constant 0 : index
    %c0_0 = arith.constant 0 : index
    %c0_1 = arith.constant 0 : index
    %0 = vector.load %arg2[%c0, %c0_0, %c0_1] : memref<1x16x32xf32, #tpu.memory_space<vmem>>, vector<1x16x32xf32>
    %1 = vector.shape_cast %0 : vector<1x16x32xf32> to vector<16x32xf32>
    %c0_2 = arith.constant 0 : index
    %c0_3 = arith.constant 0 : index
    %c0_4 = arith.constant 0 : index
    %2 = vector.load %arg3[%c0_2, %c0_3, %c0_4] : memref<1x16x32xf32, #tpu.memory_space<vmem>>, vector<1x16x32xf32>
    %3 = vector.shape_cast %2 : vector<1x16x32xf32> to vector<16x32xf32>
    %4 = arith.addf %1, %3 : vector<16x32xf32>
    %c0_5 = arith.constant 0 : index
    %c0_6 = arith.constant 0 : index
    %5 = vector.load %arg1[%c0_5, %c0_6] : memref<16x16xf32, #tpu.memory_space<vmem>>, vector<16x16xf32>
    %cst = arith.constant dense<0.000000e+00> : vector<16x32xf32>
    %6 = tpu.matmul %5, %4, %cst {dimension_numbers = #tpu.dot_dimension_numbers<[1], [0], [0], [1], [0, 0, 1, 1], [], []>} : vector<16x16xf32>, vector<16x32xf32>, vector<16x32xf32> -> vector<16x32xf32>
    %c0_7 = arith.constant 0 : index
    %c0_8 = arith.constant 0 : index
    %c0_9 = arith.constant 0 : index
    %7 = vector.load %arg5[%c0_7, %c0_8, %c0_9] : memref<1x16x32xf32, #tpu.memory_space<vmem>>, vector<1x16x32xf32>
    %8 = vector.shape_cast %7 : vector<1x16x32xf32> to vector<16x32xf32>
    %9 = vector.shape_cast %6 : vector<16x32xf32> to vector<1x16x32xf32>
    tpu.vector_store %arg5[%c0_7, %c0_8, %c0_9], %9 {strides = array<i32>} : memref<1x16x32xf32, #tpu.memory_space<vmem>>, vector<1x16x32xf32>,
    %10 = arith.subf %4, %6 : vector<16x32xf32>
    %c0_10 = arith.constant 0 : index
    %c0_11 = arith.constant 0 : index
    %c0_12 = arith.constant 0 : index
    %11 = vector.load %arg4[%c0_10, %c0_11, %c0_12] : memref<1x16x32xf32, #tpu.memory_space<vmem>>, vector<1x16x32xf32>
    %12 = vector.shape_cast %11 : vector<1x16x32xf32> to vector<16x32xf32>
    %13 = vector.shape_cast %10 : vector<16x32xf32> to vector<1x16x32xf32>
    tpu.vector_store %arg4[%c0_10, %c0_11, %c0_12], %13 {strides = array<i32>} : memref<1x16x32xf32, #tpu.memory_space<vmem>>, vector<1x16x32xf32>,
    return
  }
  func.func @transform_0(%arg0: i32) -> (i32, i32) {
    %c0_i32 = arith.constant 0 : i32
    %c0_i32_0 = arith.constant 0 : i32
    %c0_i32_1 = arith.constant 0 : i32
    return %c0_i32, %c0_i32_0 : i32, i32
  }
  func.func @transform_1(%arg0: i32) -> (i32, i32, i32) {
    %c0_i32 = arith.constant 0 : i32
    %c0_i32_0 = arith.constant 0 : i32
    %c0_i32_1 = arith.constant 0 : i32
    return %arg0, %c0_i32, %c0_i32_0 : i32, i32, i32
  }
  func.func @transform_2(%arg0: i32) -> (i32, i32, i32) {
    %c0_i32 = arith.constant 0 : i32
    %c0_i32_0 = arith.constant 0 : i32
    %c0_i32_1 = arith.constant 0 : i32
    return %arg0, %c0_i32, %c0_i32_0 : i32, i32, i32
  }
  func.func @transform_3(%arg0: i32) -> (i32, i32, i32) {
    %c0_i32 = arith.constant 0 : i32
    %c0_i32_0 = arith.constant 0 : i32
    %c0_i32_1 = arith.constant 0 : i32
    return %arg0, %c0_i32, %c0_i32_0 : i32, i32, i32
  }
  func.func @transform_4(%arg0: i32) -> (i32, i32, i32) {
    %c0_i32 = arith.constant 0 : i32
    %c0_i32_0 = arith.constant 0 : i32
    %c0_i32_1 = arith.constant 0 : i32
    return %arg0, %c0_i32, %c0_i32_0 : i32, i32, i32
  }
}

module attributes {stable_mosaic.version = 11 : i64} {
  func.func @_agg_kernel(%arg0: i32, %arg1: memref<2x2xi32, #tpu.memory_space<smem>>, %arg2: memref<2x2xf32, #tpu.memory_space<smem>>, %arg3: memref<1x16x32xf32, #tpu.memory_space<vmem>>, %arg4: memref<32x32xf32, #tpu.memory_space<vmem>>, %arg5: memref<1x32xf32, #tpu.memory_space<vmem>>, %arg6: memref<1x16x32xf32, #tpu.memory_space<vmem>>) attributes {dimension_semantics = [#tpu.dimension_semantics<parallel>], iteration_bounds = array<i64: 2>, scalar_prefetch = 0 : i64, scratch_operands = 0 : i64, tpu.core_type = #tpu.core_type<tc>, window_params = [{transform_indices = @transform_0, window_bounds = array<i64: 2, 2>}, {transform_indices = @transform_1, window_bounds = array<i64: 2, 2>}, {transform_indices = @transform_2, window_bounds = array<i64: 1, 16, 32>}, {pipeline_mode = #tpu.pipeline_mode<synchronous>, transform_indices = @transform_3, window_bounds = array<i64: 32, 32>}, {pipeline_mode = #tpu.pipeline_mode<synchronous>, transform_indices = @transform_4, window_bounds = array<i64: 1, 32>}, {transform_indices = @transform_5, window_bounds = array<i64: 1, 16, 32>}]} {
    %c0 = arith.constant 0 : index
    %c0_0 = arith.constant 0 : index
    %c0_1 = arith.constant 0 : index
    %0 = vector.load %arg3[%c0, %c0_0, %c0_1] : memref<1x16x32xf32, #tpu.memory_space<vmem>>, vector<1x16x32xf32>
    %1 = vector.shape_cast %0 : vector<1x16x32xf32> to vector<16x32xf32>
    %2 = tpu.iota {dimensions = array<i32: 0>} : vector<16x16xi32>
    %3 = tpu.iota {dimensions = array<i32: 1>} : vector<16x16xi32>
    %4 = arith.subi %3, %2 : vector<16x16xi32>
    %c16_i32 = arith.constant 16 : i32
    %5 = vector.broadcast %c16_i32 : i32 to vector<16x16xi32>
    %6 = arith.addi %4, %5 : vector<16x16xi32>
    %c16_i32_2 = arith.constant 16 : i32
    %c0_i32 = arith.constant 0 : i32
    %7 = arith.cmpi eq, %c16_i32_2, %c0_i32 : i32
    %c1_i32 = arith.constant 1 : i32
    %8 = arith.select %7, %c1_i32, %c16_i32_2 : i32
    %9 = vector.broadcast %8 : i32 to vector<16x16xi32>
    %10 = arith.remsi %6, %9 : vector<16x16xi32>
    %c0_i32_3 = arith.constant 0 : i32
    %11 = vector.broadcast %c0_i32_3 : i32 to vector<16x16xi32>
    %12 = arith.cmpi ne, %10, %11 : vector<16x16xi32>
    %c0_i32_4 = arith.constant 0 : i32
    %13 = vector.broadcast %c0_i32_4 : i32 to vector<16x16xi32>
    %14 = arith.cmpi slt, %10, %13 : vector<16x16xi32>
    %c0_i32_5 = arith.constant 0 : i32
    %15 = arith.cmpi slt, %8, %c0_i32_5 : i32
    %16 = vector.broadcast %15 : i1 to vector<16x16xi1>
    %17 = vector.broadcast %16 : vector<16x16xi1> to vector<16x16xi1>
    %18 = arith.xori %14, %17 : vector<16x16xi1>
    %19 = arith.andi %18, %12 : vector<16x16xi1>
    %20 = vector.broadcast %8 : i32 to vector<16x16xi32>
    %21 = arith.addi %10, %20 : vector<16x16xi32>
    %22 = arith.select %19, %21, %10 : vector<16x16xi1>, vector<16x16xi32>
    %cst = arith.constant 0.000000e+00 : f32
    %23 = vector.broadcast %cst : f32 to vector<16x16xf32>
    %24 = arith.index_cast %arg0 : i32 to index
    %c0_6 = arith.constant 0 : index
    %25 = memref.load %arg1[%24, %c0_6] : memref<2x2xi32, #tpu.memory_space<smem>>
    %26 = arith.index_cast %arg0 : i32 to index
    %c0_7 = arith.constant 0 : index
    %27 = memref.load %arg2[%26, %c0_7] : memref<2x2xf32, #tpu.memory_space<smem>>
    %28 = vector.broadcast %25 : i32 to vector<16x16xi32>
    %29 = arith.cmpi eq, %22, %28 : vector<16x16xi32>
    %cst_8 = arith.constant 0.000000e+00 : f32
    %30 = vector.broadcast %27 : f32 to vector<16x16xf32>
    %31 = vector.broadcast %cst_8 : f32 to vector<16x16xf32>
    %32 = arith.select %29, %30, %31 : vector<16x16xi1>, vector<16x16xf32>
    %33 = arith.addf %23, %32 : vector<16x16xf32>
    %34 = arith.index_cast %arg0 : i32 to index
    %c1 = arith.constant 1 : index
    %35 = memref.load %arg1[%34, %c1] : memref<2x2xi32, #tpu.memory_space<smem>>
    %36 = arith.index_cast %arg0 : i32 to index
    %c1_9 = arith.constant 1 : index
    %37 = memref.load %arg2[%36, %c1_9] : memref<2x2xf32, #tpu.memory_space<smem>>
    %38 = vector.broadcast %35 : i32 to vector<16x16xi32>
    %39 = arith.cmpi eq, %22, %38 : vector<16x16xi32>
    %cst_10 = arith.constant 0.000000e+00 : f32
    %40 = vector.broadcast %37 : f32 to vector<16x16xf32>
    %41 = vector.broadcast %cst_10 : f32 to vector<16x16xf32>
    %42 = arith.select %39, %40, %41 : vector<16x16xi1>, vector<16x16xf32>
    %43 = arith.addf %33, %42 : vector<16x16xf32>
    %cst_11 = arith.constant dense<0.000000e+00> : vector<16x32xf32>
    %44 = tpu.matmul %43, %1, %cst_11 {dimension_numbers = #tpu.dot_dimension_numbers<[1], [0], [0], [1], [0, 0, 1, 1], [], []>} : vector<16x16xf32>, vector<16x32xf32>, vector<16x32xf32> -> vector<16x32xf32>
    %c0_12 = arith.constant 0 : index
    %c0_13 = arith.constant 0 : index
    %45 = vector.load %arg4[%c0_12, %c0_13] : memref<32x32xf32, #tpu.memory_space<vmem>>, vector<32x32xf32>
    %cst_14 = arith.constant dense<0.000000e+00> : vector<16x32xf32>
    %46 = tpu.matmul %44, %45, %cst_14 {dimension_numbers = #tpu.dot_dimension_numbers<[1], [0], [0], [1], [0, 0, 1, 1], [], []>} : vector<16x32xf32>, vector<32x32xf32>, vector<16x32xf32> -> vector<16x32xf32>
    %c0_15 = arith.constant 0 : index
    %c0_16 = arith.constant 0 : index
    %47 = vector.load %arg5[%c0_15, %c0_16] : memref<1x32xf32, #tpu.memory_space<vmem>>, vector<1x32xf32>
    %48 = vector.broadcast %47 : vector<1x32xf32> to vector<16x32xf32>
    %49 = arith.addf %46, %48 : vector<16x32xf32>
    %c0_17 = arith.constant 0 : index
    %c0_18 = arith.constant 0 : index
    %c0_19 = arith.constant 0 : index
    %50 = vector.load %arg6[%c0_17, %c0_18, %c0_19] : memref<1x16x32xf32, #tpu.memory_space<vmem>>, vector<1x16x32xf32>
    %51 = vector.shape_cast %50 : vector<1x16x32xf32> to vector<16x32xf32>
    %52 = vector.shape_cast %49 : vector<16x32xf32> to vector<1x16x32xf32>
    tpu.vector_store %arg6[%c0_17, %c0_18, %c0_19], %52 {strides = array<i32>} : memref<1x16x32xf32, #tpu.memory_space<vmem>>, vector<1x16x32xf32>,
    return
  }
  func.func @transform_0(%arg0: i32) -> (i32, i32) {
    %c0_i32 = arith.constant 0 : i32
    %c0_i32_0 = arith.constant 0 : i32
    %c0_i32_1 = arith.constant 0 : i32
    return %c0_i32, %c0_i32_0 : i32, i32
  }
  func.func @transform_1(%arg0: i32) -> (i32, i32) {
    %c0_i32 = arith.constant 0 : i32
    %c0_i32_0 = arith.constant 0 : i32
    %c0_i32_1 = arith.constant 0 : i32
    return %c0_i32, %c0_i32_0 : i32, i32
  }
  func.func @transform_2(%arg0: i32) -> (i32, i32, i32) {
    %c0_i32 = arith.constant 0 : i32
    %c0_i32_0 = arith.constant 0 : i32
    %c0_i32_1 = arith.constant 0 : i32
    return %arg0, %c0_i32, %c0_i32_0 : i32, i32, i32
  }
  func.func @transform_3(%arg0: i32) -> (i32, i32) {
    %c0_i32 = arith.constant 0 : i32
    %c0_i32_0 = arith.constant 0 : i32
    %c0_i32_1 = arith.constant 0 : i32
    return %c0_i32, %c0_i32_0 : i32, i32
  }
  func.func @transform_4(%arg0: i32) -> (i32, i32) {
    %c0_i32 = arith.constant 0 : i32
    %c0_i32_0 = arith.constant 0 : i32
    %c0_i32_1 = arith.constant 0 : i32
    return %c0_i32, %c0_i32_0 : i32, i32
  }
  func.func @transform_5(%arg0: i32) -> (i32, i32, i32) {
    %c0_i32 = arith.constant 0 : i32
    %c0_i32_0 = arith.constant 0 : i32
    %c0_i32_1 = arith.constant 0 : i32
    return %arg0, %c0_i32, %c0_i32_0 : i32, i32, i32
  }
}

module attributes {stable_mosaic.version = 11 : i64} {
  func.func @_decomp_add_kernel(%arg0: i32, %arg1: memref<16x16xf32, #tpu.memory_space<vmem>>, %arg2: memref<1x16x32xf32, #tpu.memory_space<vmem>>, %arg3: memref<1x16x32xf32, #tpu.memory_space<vmem>>, %arg4: memref<1x16x32xf32, #tpu.memory_space<vmem>>, %arg5: memref<1x16x32xf32, #tpu.memory_space<vmem>>) attributes {dimension_semantics = [#tpu.dimension_semantics<parallel>], iteration_bounds = array<i64: 2>, scalar_prefetch = 0 : i64, scratch_operands = 0 : i64, tpu.core_type = #tpu.core_type<tc>, window_params = [{pipeline_mode = #tpu.pipeline_mode<synchronous>, transform_indices = @transform_0, window_bounds = array<i64: 16, 16>}, {transform_indices = @transform_1, window_bounds = array<i64: 1, 16, 32>}, {transform_indices = @transform_2, window_bounds = array<i64: 1, 16, 32>}, {transform_indices = @transform_3, window_bounds = array<i64: 1, 16, 32>}, {transform_indices = @transform_4, window_bounds = array<i64: 1, 16, 32>}]} {
    %c0 = arith.constant 0 : index
    %c0_0 = arith.constant 0 : index
    %c0_1 = arith.constant 0 : index
    %0 = vector.load %arg2[%c0, %c0_0, %c0_1] : memref<1x16x32xf32, #tpu.memory_space<vmem>>, vector<1x16x32xf32>
    %1 = vector.shape_cast %0 : vector<1x16x32xf32> to vector<16x32xf32>
    %c0_2 = arith.constant 0 : index
    %c0_3 = arith.constant 0 : index
    %c0_4 = arith.constant 0 : index
    %2 = vector.load %arg3[%c0_2, %c0_3, %c0_4] : memref<1x16x32xf32, #tpu.memory_space<vmem>>, vector<1x16x32xf32>
    %3 = vector.shape_cast %2 : vector<1x16x32xf32> to vector<16x32xf32>
    %4 = arith.addf %1, %3 : vector<16x32xf32>
    %c0_5 = arith.constant 0 : index
    %c0_6 = arith.constant 0 : index
    %5 = vector.load %arg1[%c0_5, %c0_6] : memref<16x16xf32, #tpu.memory_space<vmem>>, vector<16x16xf32>
    %cst = arith.constant dense<0.000000e+00> : vector<16x32xf32>
    %6 = tpu.matmul %5, %4, %cst {dimension_numbers = #tpu.dot_dimension_numbers<[1], [0], [0], [1], [0, 0, 1, 1], [], []>} : vector<16x16xf32>, vector<16x32xf32>, vector<16x32xf32> -> vector<16x32xf32>
    %c0_7 = arith.constant 0 : index
    %c0_8 = arith.constant 0 : index
    %c0_9 = arith.constant 0 : index
    %7 = vector.load %arg5[%c0_7, %c0_8, %c0_9] : memref<1x16x32xf32, #tpu.memory_space<vmem>>, vector<1x16x32xf32>
    %8 = vector.shape_cast %7 : vector<1x16x32xf32> to vector<16x32xf32>
    %9 = vector.shape_cast %6 : vector<16x32xf32> to vector<1x16x32xf32>
    tpu.vector_store %arg5[%c0_7, %c0_8, %c0_9], %9 {strides = array<i32>} : memref<1x16x32xf32, #tpu.memory_space<vmem>>, vector<1x16x32xf32>,
    %10 = arith.subf %4, %6 : vector<16x32xf32>
    %c0_10 = arith.constant 0 : index
    %c0_11 = arith.constant 0 : index
    %c0_12 = arith.constant 0 : index
    %11 = vector.load %arg4[%c0_10, %c0_11, %c0_12] : memref<1x16x32xf32, #tpu.memory_space<vmem>>, vector<1x16x32xf32>
    %12 = vector.shape_cast %11 : vector<1x16x32xf32> to vector<16x32xf32>
    %13 = vector.shape_cast %10 : vector<16x32xf32> to vector<1x16x32xf32>
    tpu.vector_store %arg4[%c0_10, %c0_11, %c0_12], %13 {strides = array<i32>} : memref<1x16x32xf32, #tpu.memory_space<vmem>>, vector<1x16x32xf32>,
    return
  }
  func.func @transform_0(%arg0: i32) -> (i32, i32) {
    %c0_i32 = arith.constant 0 : i32
    %c0_i32_0 = arith.constant 0 : i32
    %c0_i32_1 = arith.constant 0 : i32
    return %c0_i32, %c0_i32_0 : i32, i32
  }
  func.func @transform_1(%arg0: i32) -> (i32, i32, i32) {
    %c0_i32 = arith.constant 0 : i32
    %c0_i32_0 = arith.constant 0 : i32
    %c0_i32_1 = arith.constant 0 : i32
    return %arg0, %c0_i32, %c0_i32_0 : i32, i32, i32
  }
  func.func @transform_2(%arg0: i32) -> (i32, i32, i32) {
    %c0_i32 = arith.constant 0 : i32
    %c0_i32_0 = arith.constant 0 : i32
    %c0_i32_1 = arith.constant 0 : i32
    return %arg0, %c0_i32, %c0_i32_0 : i32, i32, i32
  }
  func.func @transform_3(%arg0: i32) -> (i32, i32, i32) {
    %c0_i32 = arith.constant 0 : i32
    %c0_i32_0 = arith.constant 0 : i32
    %c0_i32_1 = arith.constant 0 : i32
    return %arg0, %c0_i32, %c0_i32_0 : i32, i32, i32
  }
  func.func @transform_4(%arg0: i32) -> (i32, i32, i32) {
    %c0_i32 = arith.constant 0 : i32
    %c0_i32_0 = arith.constant 0 : i32
    %c0_i32_1 = arith.constant 0 : i32
    return %arg0, %c0_i32, %c0_i32_0 : i32, i32, i32
  }
}

module attributes {stable_mosaic.version = 11 : i64} {
  func.func @_self_corr_kernel(%arg0: i32, %arg1: memref<1x16x32xf32, #tpu.memory_space<vmem>>, %arg2: memref<32x32xf32, #tpu.memory_space<vmem>>, %arg3: memref<1x32xf32, #tpu.memory_space<vmem>>, %arg4: memref<32x32xf32, #tpu.memory_space<vmem>>, %arg5: memref<1x32xf32, #tpu.memory_space<vmem>>, %arg6: memref<32x32xf32, #tpu.memory_space<vmem>>, %arg7: memref<1x32xf32, #tpu.memory_space<vmem>>, %arg8: memref<16x16xf32, #tpu.memory_space<vmem>>, %arg9: memref<16x16xf32, #tpu.memory_space<vmem>>, %arg10: memref<1x16x1xf32, #tpu.memory_space<vmem>>, %arg11: memref<1x16x32xf32, #tpu.memory_space<vmem>>) attributes {dimension_semantics = [#tpu.dimension_semantics<parallel>], iteration_bounds = array<i64: 2>, scalar_prefetch = 0 : i64, scratch_operands = 0 : i64, tpu.core_type = #tpu.core_type<tc>, window_params = [{transform_indices = @transform_0, window_bounds = array<i64: 1, 16, 32>}, {pipeline_mode = #tpu.pipeline_mode<synchronous>, transform_indices = @transform_1, window_bounds = array<i64: 32, 32>}, {pipeline_mode = #tpu.pipeline_mode<synchronous>, transform_indices = @transform_2, window_bounds = array<i64: 1, 32>}, {pipeline_mode = #tpu.pipeline_mode<synchronous>, transform_indices = @transform_3, window_bounds = array<i64: 32, 32>}, {pipeline_mode = #tpu.pipeline_mode<synchronous>, transform_indices = @transform_4, window_bounds = array<i64: 1, 32>}, {pipeline_mode = #tpu.pipeline_mode<synchronous>, transform_indices = @transform_5, window_bounds = array<i64: 32, 32>}, {pipeline_mode = #tpu.pipeline_mode<synchronous>, transform_indices = @transform_6, window_bounds = array<i64: 1, 32>}, {pipeline_mode = #tpu.pipeline_mode<synchronous>, transform_indices = @transform_7, window_bounds = array<i64: 16, 16>}, {pipeline_mode = #tpu.pipeline_mode<synchronous>, transform_indices = @transform_8, window_bounds = array<i64: 16, 16>}, {transform_indices = @transform_9, window_bounds = array<i64: 1, 16, 1>}, {transform_indices = @transform_10, window_bounds = array<i64: 1, 16, 32>}]} {
    %c0 = arith.constant 0 : index
    %c0_0 = arith.constant 0 : index
    %c0_1 = arith.constant 0 : index
    %0 = vector.load %arg1[%c0, %c0_0, %c0_1] : memref<1x16x32xf32, #tpu.memory_space<vmem>>, vector<1x16x32xf32>
    %1 = vector.shape_cast %0 : vector<1x16x32xf32> to vector<16x32xf32>
    %c0_2 = arith.constant 0 : index
    %c0_3 = arith.constant 0 : index
    %2 = vector.load %arg2[%c0_2, %c0_3] : memref<32x32xf32, #tpu.memory_space<vmem>>, vector<32x32xf32>
    %cst = arith.constant dense<0.000000e+00> : vector<16x32xf32>
    %3 = tpu.matmul %1, %2, %cst {dimension_numbers = #tpu.dot_dimension_numbers<[1], [0], [0], [1], [0, 0, 1, 1], [], []>} : vector<16x32xf32>, vector<32x32xf32>, vector<16x32xf32> -> vector<16x32xf32>
    %c0_4 = arith.constant 0 : index
    %c0_5 = arith.constant 0 : index
    %4 = vector.load %arg3[%c0_4, %c0_5] : memref<1x32xf32, #tpu.memory_space<vmem>>, vector<1x32xf32>
    %5 = vector.broadcast %4 : vector<1x32xf32> to vector<16x32xf32>
    %6 = arith.addf %3, %5 : vector<16x32xf32>
    %c0_6 = arith.constant 0 : index
    %c0_7 = arith.constant 0 : index
    %7 = vector.load %arg4[%c0_6, %c0_7] : memref<32x32xf32, #tpu.memory_space<vmem>>, vector<32x32xf32>
    %cst_8 = arith.constant dense<0.000000e+00> : vector<16x32xf32>
    %8 = tpu.matmul %1, %7, %cst_8 {dimension_numbers = #tpu.dot_dimension_numbers<[1], [0], [0], [1], [0, 0, 1, 1], [], []>} : vector<16x32xf32>, vector<32x32xf32>, vector<16x32xf32> -> vector<16x32xf32>
    %c0_9 = arith.constant 0 : index
    %c0_10 = arith.constant 0 : index
    %9 = vector.load %arg5[%c0_9, %c0_10] : memref<1x32xf32, #tpu.memory_space<vmem>>, vector<1x32xf32>
    %10 = vector.broadcast %9 : vector<1x32xf32> to vector<16x32xf32>
    %11 = arith.addf %8, %10 : vector<16x32xf32>
    %c0_11 = arith.constant 0 : index
    %c0_12 = arith.constant 0 : index
    %12 = vector.load %arg6[%c0_11, %c0_12] : memref<32x32xf32, #tpu.memory_space<vmem>>, vector<32x32xf32>
    %cst_13 = arith.constant dense<0.000000e+00> : vector<16x32xf32>
    %13 = tpu.matmul %1, %12, %cst_13 {dimension_numbers = #tpu.dot_dimension_numbers<[1], [0], [0], [1], [0, 0, 1, 1], [], []>} : vector<16x32xf32>, vector<32x32xf32>, vector<16x32xf32> -> vector<16x32xf32>
    %c0_14 = arith.constant 0 : index
    %c0_15 = arith.constant 0 : index
    %14 = vector.load %arg7[%c0_14, %c0_15] : memref<1x32xf32, #tpu.memory_space<vmem>>, vector<1x32xf32>
    %15 = vector.broadcast %14 : vector<1x32xf32> to vector<16x32xf32>
    %16 = arith.addf %13, %15 : vector<16x32xf32>
    %c0_16 = arith.constant 0 : index
    %c0_17 = arith.constant 0 : index
    %17 = vector.load %arg8[%c0_16, %c0_17] : memref<16x16xf32, #tpu.memory_space<vmem>>, vector<16x16xf32>
    %c0_18 = arith.constant 0 : index
    %c0_19 = arith.constant 0 : index
    %18 = vector.load %arg9[%c0_18, %c0_19] : memref<16x16xf32, #tpu.memory_space<vmem>>, vector<16x16xf32>
    %cst_20 = arith.constant dense<0.000000e+00> : vector<16x32xf32>
    %19 = tpu.matmul %17, %6, %cst_20 {dimension_numbers = #tpu.dot_dimension_numbers<[1], [0], [0], [1], [0, 0, 1, 1], [], []>} : vector<16x16xf32>, vector<16x32xf32>, vector<16x32xf32> -> vector<16x32xf32>
    %cst_21 = arith.constant dense<0.000000e+00> : vector<16x32xf32>
    %20 = tpu.matmul %18, %6, %cst_21 {dimension_numbers = #tpu.dot_dimension_numbers<[1], [0], [0], [1], [0, 0, 1, 1], [], []>} : vector<16x16xf32>, vector<16x32xf32>, vector<16x32xf32> -> vector<16x32xf32>
    %cst_22 = arith.constant dense<0.000000e+00> : vector<16x32xf32>
    %21 = tpu.matmul %17, %11, %cst_22 {dimension_numbers = #tpu.dot_dimension_numbers<[1], [0], [0], [1], [0, 0, 1, 1], [], []>} : vector<16x16xf32>, vector<16x32xf32>, vector<16x32xf32> -> vector<16x32xf32>
    %cst_23 = arith.constant dense<0.000000e+00> : vector<16x32xf32>
    %22 = tpu.matmul %18, %11, %cst_23 {dimension_numbers = #tpu.dot_dimension_numbers<[1], [0], [0], [1], [0, 0, 1, 1], [], []>} : vector<16x16xf32>, vector<16x32xf32>, vector<16x32xf32> -> vector<16x32xf32>
    %23 = arith.mulf %19, %21 : vector<16x32xf32>
    %24 = arith.mulf %20, %22 : vector<16x32xf32>
    %25 = arith.addf %23, %24 : vector<16x32xf32>
    %cst_24 = arith.constant dense<0.000000e+00> : vector<16xf32>
    %26 = vector.multi_reduction <add>, %25, %cst_24 [1] : vector<16x32xf32> to vector<16xf32>
    %27 = vector.shape_cast %26 : vector<16xf32> to vector<16x1xf32>
    %28 = arith.mulf %19, %22 : vector<16x32xf32>
    %29 = arith.mulf %20, %21 : vector<16x32xf32>
    %30 = arith.subf %28, %29 : vector<16x32xf32>
    %cst_25 = arith.constant dense<0.000000e+00> : vector<16xf32>
    %31 = vector.multi_reduction <add>, %30, %cst_25 [1] : vector<16x32xf32> to vector<16xf32>
    %32 = vector.shape_cast %31 : vector<16xf32> to vector<16x1xf32>
    %cst_26 = arith.constant dense<0.000000e+00> : vector<16x1xf32>
    %33 = tpu.matmul %17, %27, %cst_26 {dimension_numbers = #tpu.dot_dimension_numbers<[1], [0], [0], [1], [0, 0, 1, 1], [], []>} : vector<16x16xf32>, vector<16x1xf32>, vector<16x1xf32> -> vector<16x1xf32>
    %cst_27 = arith.constant dense<0.000000e+00> : vector<16x1xf32>
    %34 = tpu.matmul %18, %32, %cst_27 {dimension_numbers = #tpu.dot_dimension_numbers<[1], [0], [0], [1], [0, 0, 1, 1], [], []>} : vector<16x16xf32>, vector<16x1xf32>, vector<16x1xf32> -> vector<16x1xf32>
    %35 = arith.subf %33, %34 : vector<16x1xf32>
    %cst_28 = arith.constant 0.001953125 : f32
    %36 = vector.broadcast %cst_28 : f32 to vector<16x1xf32>
    %37 = arith.mulf %35, %36 : vector<16x1xf32>
    %c0_29 = arith.constant 0 : index
    %c0_30 = arith.constant 0 : index
    %c0_31 = arith.constant 0 : index
    %38 = vector.load %arg10[%c0_29, %c0_30, %c0_31] : memref<1x16x1xf32, #tpu.memory_space<vmem>>, vector<1x16x1xf32>
    %39 = vector.shape_cast %38 : vector<1x16x1xf32> to vector<16x1xf32>
    %40 = vector.shape_cast %37 : vector<16x1xf32> to vector<1x16x1xf32>
    tpu.vector_store %arg10[%c0_29, %c0_30, %c0_31], %40 {strides = array<i32>} : memref<1x16x1xf32, #tpu.memory_space<vmem>>, vector<1x16x1xf32>,
    %c0_32 = arith.constant 0 : index
    %c0_33 = arith.constant 0 : index
    %c0_34 = arith.constant 0 : index
    %41 = vector.load %arg11[%c0_32, %c0_33, %c0_34] : memref<1x16x32xf32, #tpu.memory_space<vmem>>, vector<1x16x32xf32>
    %42 = vector.shape_cast %41 : vector<1x16x32xf32> to vector<16x32xf32>
    %43 = vector.shape_cast %16 : vector<16x32xf32> to vector<1x16x32xf32>
    tpu.vector_store %arg11[%c0_32, %c0_33, %c0_34], %43 {strides = array<i32>} : memref<1x16x32xf32, #tpu.memory_space<vmem>>, vector<1x16x32xf32>,
    return
  }
  func.func @transform_0(%arg0: i32) -> (i32, i32, i32) {
    %c0_i32 = arith.constant 0 : i32
    %c0_i32_0 = arith.constant 0 : i32
    %c0_i32_1 = arith.constant 0 : i32
    return %arg0, %c0_i32, %c0_i32_0 : i32, i32, i32
  }
  func.func @transform_1(%arg0: i32) -> (i32, i32) {
    %c0_i32 = arith.constant 0 : i32
    %c0_i32_0 = arith.constant 0 : i32
    %c0_i32_1 = arith.constant 0 : i32
    return %c0_i32, %c0_i32_0 : i32, i32
  }
  func.func @transform_2(%arg0: i32) -> (i32, i32) {
    %c0_i32 = arith.constant 0 : i32
    %c0_i32_0 = arith.constant 0 : i32
    %c0_i32_1 = arith.constant 0 : i32
    return %c0_i32, %c0_i32_0 : i32, i32
  }
  func.func @transform_3(%arg0: i32) -> (i32, i32) {
    %c0_i32 = arith.constant 0 : i32
    %c0_i32_0 = arith.constant 0 : i32
    %c0_i32_1 = arith.constant 0 : i32
    return %c0_i32, %c0_i32_0 : i32, i32
  }
  func.func @transform_4(%arg0: i32) -> (i32, i32) {
    %c0_i32 = arith.constant 0 : i32
    %c0_i32_0 = arith.constant 0 : i32
    %c0_i32_1 = arith.constant 0 : i32
    return %c0_i32, %c0_i32_0 : i32, i32
  }
  func.func @transform_5(%arg0: i32) -> (i32, i32) {
    %c0_i32 = arith.constant 0 : i32
    %c0_i32_0 = arith.constant 0 : i32
    %c0_i32_1 = arith.constant 0 : i32
    return %c0_i32, %c0_i32_0 : i32, i32
  }
  func.func @transform_6(%arg0: i32) -> (i32, i32) {
    %c0_i32 = arith.constant 0 : i32
    %c0_i32_0 = arith.constant 0 : i32
    %c0_i32_1 = arith.constant 0 : i32
    return %c0_i32, %c0_i32_0 : i32, i32
  }
  func.func @transform_7(%arg0: i32) -> (i32, i32) {
    %c0_i32 = arith.constant 0 : i32
    %c0_i32_0 = arith.constant 0 : i32
    %c0_i32_1 = arith.constant 0 : i32
    return %c0_i32, %c0_i32_0 : i32, i32
  }
  func.func @transform_8(%arg0: i32) -> (i32, i32) {
    %c0_i32 = arith.constant 0 : i32
    %c0_i32_0 = arith.constant 0 : i32
    %c0_i32_1 = arith.constant 0 : i32
    return %c0_i32, %c0_i32_0 : i32, i32
  }
  func.func @transform_9(%arg0: i32) -> (i32, i32, i32) {
    %c0_i32 = arith.constant 0 : i32
    %c0_i32_0 = arith.constant 0 : i32
    %c0_i32_1 = arith.constant 0 : i32
    return %arg0, %c0_i32, %c0_i32_0 : i32, i32, i32
  }
  func.func @transform_10(%arg0: i32) -> (i32, i32, i32) {
    %c0_i32 = arith.constant 0 : i32
    %c0_i32_0 = arith.constant 0 : i32
    %c0_i32_1 = arith.constant 0 : i32
    return %arg0, %c0_i32, %c0_i32_0 : i32, i32, i32
  }
}

module attributes {stable_mosaic.version = 11 : i64} {
  func.func @_ffn_decomp_kernel(%arg0: i32, %arg1: memref<16x16xf32, #tpu.memory_space<vmem>>, %arg2: memref<1x16x32xf32, #tpu.memory_space<vmem>>, %arg3: memref<32x64xf32, #tpu.memory_space<vmem>>, %arg4: memref<64x32xf32, #tpu.memory_space<vmem>>, %arg5: memref<1x16x32xf32, #tpu.memory_space<vmem>>, %arg6: memref<1x16x32xf32, #tpu.memory_space<vmem>>) attributes {dimension_semantics = [#tpu.dimension_semantics<parallel>], iteration_bounds = array<i64: 2>, scalar_prefetch = 0 : i64, scratch_operands = 0 : i64, tpu.core_type = #tpu.core_type<tc>, window_params = [{pipeline_mode = #tpu.pipeline_mode<synchronous>, transform_indices = @transform_0, window_bounds = array<i64: 16, 16>}, {transform_indices = @transform_1, window_bounds = array<i64: 1, 16, 32>}, {pipeline_mode = #tpu.pipeline_mode<synchronous>, transform_indices = @transform_2, window_bounds = array<i64: 32, 64>}, {pipeline_mode = #tpu.pipeline_mode<synchronous>, transform_indices = @transform_3, window_bounds = array<i64: 64, 32>}, {transform_indices = @transform_4, window_bounds = array<i64: 1, 16, 32>}, {transform_indices = @transform_5, window_bounds = array<i64: 1, 16, 32>}]} {
    %c0 = arith.constant 0 : index
    %c0_0 = arith.constant 0 : index
    %c0_1 = arith.constant 0 : index
    %0 = vector.load %arg2[%c0, %c0_0, %c0_1] : memref<1x16x32xf32, #tpu.memory_space<vmem>>, vector<1x16x32xf32>
    %1 = vector.shape_cast %0 : vector<1x16x32xf32> to vector<16x32xf32>
    %c0_2 = arith.constant 0 : index
    %c0_3 = arith.constant 0 : index
    %2 = vector.load %arg3[%c0_2, %c0_3] : memref<32x64xf32, #tpu.memory_space<vmem>>, vector<32x64xf32>
    %cst = arith.constant dense<0.000000e+00> : vector<16x64xf32>
    %3 = tpu.matmul %1, %2, %cst {dimension_numbers = #tpu.dot_dimension_numbers<[1], [0], [0], [1], [0, 0, 1, 1], [], []>} : vector<16x32xf32>, vector<32x64xf32>, vector<16x64xf32> -> vector<16x64xf32>
    %cst_4 = arith.constant 0.000000e+00 : f32
    %4 = vector.broadcast %cst_4 : f32 to vector<16x64xf32>
    %5 = arith.maximumf %3, %4 : vector<16x64xf32>
    %c0_5 = arith.constant 0 : index
    %c0_6 = arith.constant 0 : index
    %6 = vector.load %arg4[%c0_5, %c0_6] : memref<64x32xf32, #tpu.memory_space<vmem>>, vector<64x32xf32>
    %cst_7 = arith.constant dense<0.000000e+00> : vector<16x32xf32>
    %7 = tpu.matmul %5, %6, %cst_7 {dimension_numbers = #tpu.dot_dimension_numbers<[1], [0], [0], [1], [0, 0, 1, 1], [], []>} : vector<16x64xf32>, vector<64x32xf32>, vector<16x32xf32> -> vector<16x32xf32>
    %8 = arith.addf %1, %7 : vector<16x32xf32>
    %c0_8 = arith.constant 0 : index
    %c0_9 = arith.constant 0 : index
    %9 = vector.load %arg1[%c0_8, %c0_9] : memref<16x16xf32, #tpu.memory_space<vmem>>, vector<16x16xf32>
    %cst_10 = arith.constant dense<0.000000e+00> : vector<16x32xf32>
    %10 = tpu.matmul %9, %8, %cst_10 {dimension_numbers = #tpu.dot_dimension_numbers<[1], [0], [0], [1], [0, 0, 1, 1], [], []>} : vector<16x16xf32>, vector<16x32xf32>, vector<16x32xf32> -> vector<16x32xf32>
    %c0_11 = arith.constant 0 : index
    %c0_12 = arith.constant 0 : index
    %c0_13 = arith.constant 0 : index
    %11 = vector.load %arg6[%c0_11, %c0_12, %c0_13] : memref<1x16x32xf32, #tpu.memory_space<vmem>>, vector<1x16x32xf32>
    %12 = vector.shape_cast %11 : vector<1x16x32xf32> to vector<16x32xf32>
    %13 = vector.shape_cast %10 : vector<16x32xf32> to vector<1x16x32xf32>
    tpu.vector_store %arg6[%c0_11, %c0_12, %c0_13], %13 {strides = array<i32>} : memref<1x16x32xf32, #tpu.memory_space<vmem>>, vector<1x16x32xf32>,
    %14 = arith.subf %8, %10 : vector<16x32xf32>
    %c0_14 = arith.constant 0 : index
    %c0_15 = arith.constant 0 : index
    %c0_16 = arith.constant 0 : index
    %15 = vector.load %arg5[%c0_14, %c0_15, %c0_16] : memref<1x16x32xf32, #tpu.memory_space<vmem>>, vector<1x16x32xf32>
    %16 = vector.shape_cast %15 : vector<1x16x32xf32> to vector<16x32xf32>
    %17 = vector.shape_cast %14 : vector<16x32xf32> to vector<1x16x32xf32>
    tpu.vector_store %arg5[%c0_14, %c0_15, %c0_16], %17 {strides = array<i32>} : memref<1x16x32xf32, #tpu.memory_space<vmem>>, vector<1x16x32xf32>,
    return
  }
  func.func @transform_0(%arg0: i32) -> (i32, i32) {
    %c0_i32 = arith.constant 0 : i32
    %c0_i32_0 = arith.constant 0 : i32
    %c0_i32_1 = arith.constant 0 : i32
    return %c0_i32, %c0_i32_0 : i32, i32
  }
  func.func @transform_1(%arg0: i32) -> (i32, i32, i32) {
    %c0_i32 = arith.constant 0 : i32
    %c0_i32_0 = arith.constant 0 : i32
    %c0_i32_1 = arith.constant 0 : i32
    return %arg0, %c0_i32, %c0_i32_0 : i32, i32, i32
  }
  func.func @transform_2(%arg0: i32) -> (i32, i32) {
    %c0_i32 = arith.constant 0 : i32
    %c0_i32_0 = arith.constant 0 : i32
    %c0_i32_1 = arith.constant 0 : i32
    return %c0_i32, %c0_i32_0 : i32, i32
  }
  func.func @transform_3(%arg0: i32) -> (i32, i32) {
    %c0_i32 = arith.constant 0 : i32
    %c0_i32_0 = arith.constant 0 : i32
    %c0_i32_1 = arith.constant 0 : i32
    return %c0_i32, %c0_i32_0 : i32, i32
  }
  func.func @transform_4(%arg0: i32) -> (i32, i32, i32) {
    %c0_i32 = arith.constant 0 : i32
    %c0_i32_0 = arith.constant 0 : i32
    %c0_i32_1 = arith.constant 0 : i32
    return %arg0, %c0_i32, %c0_i32_0 : i32, i32, i32
  }
  func.func @transform_5(%arg0: i32) -> (i32, i32, i32) {
    %c0_i32 = arith.constant 0 : i32
    %c0_i32_0 = arith.constant 0 : i32
    %c0_i32_1 = arith.constant 0 : i32
    return %arg0, %c0_i32, %c0_i32_0 : i32, i32, i32
  }
}

module attributes {stable_mosaic.version = 11 : i64} {
  func.func @_norm_kernel(%arg0: i32, %arg1: memref<1x16x32xf32, #tpu.memory_space<vmem>>, %arg2: memref<1x32xf32, #tpu.memory_space<vmem>>, %arg3: memref<1x32xf32, #tpu.memory_space<vmem>>, %arg4: memref<1x16x32xf32, #tpu.memory_space<vmem>>) attributes {dimension_semantics = [#tpu.dimension_semantics<parallel>], iteration_bounds = array<i64: 2>, scalar_prefetch = 0 : i64, scratch_operands = 0 : i64, tpu.core_type = #tpu.core_type<tc>, window_params = [{transform_indices = @transform_0, window_bounds = array<i64: 1, 16, 32>}, {pipeline_mode = #tpu.pipeline_mode<synchronous>, transform_indices = @transform_1, window_bounds = array<i64: 1, 32>}, {pipeline_mode = #tpu.pipeline_mode<synchronous>, transform_indices = @transform_2, window_bounds = array<i64: 1, 32>}, {transform_indices = @transform_3, window_bounds = array<i64: 1, 16, 32>}]} {
    %c0 = arith.constant 0 : index
    %c0_0 = arith.constant 0 : index
    %c0_1 = arith.constant 0 : index
    %0 = vector.load %arg1[%c0, %c0_0, %c0_1] : memref<1x16x32xf32, #tpu.memory_space<vmem>>, vector<1x16x32xf32>
    %1 = vector.shape_cast %0 : vector<1x16x32xf32> to vector<16x32xf32>
    %c0_2 = arith.constant 0 : index
    %c0_3 = arith.constant 0 : index
    %2 = vector.load %arg2[%c0_2, %c0_3] : memref<1x32xf32, #tpu.memory_space<vmem>>, vector<1x32xf32>
    %c0_4 = arith.constant 0 : index
    %c0_5 = arith.constant 0 : index
    %3 = vector.load %arg3[%c0_4, %c0_5] : memref<1x32xf32, #tpu.memory_space<vmem>>, vector<1x32xf32>
    %cst = arith.constant dense<0.000000e+00> : vector<16xf32>
    %4 = vector.multi_reduction <add>, %1, %cst [1] : vector<16x32xf32> to vector<16xf32>
    %5 = vector.shape_cast %4 : vector<16xf32> to vector<16x1xf32>
    %cst_6 = arith.constant 3.200000e+01 : f32
    %6 = vector.broadcast %cst_6 : f32 to vector<16x1xf32>
    %7 = arith.divf %5, %6 : vector<16x1xf32>
    %8 = vector.broadcast %7 : vector<16x1xf32> to vector<16x32xf32>
    %9 = arith.subf %1, %8 : vector<16x32xf32>
    %10 = arith.mulf %9, %9 : vector<16x32xf32>
    %cst_7 = arith.constant dense<0.000000e+00> : vector<16xf32>
    %11 = vector.multi_reduction <add>, %10, %cst_7 [1] : vector<16x32xf32> to vector<16xf32>
    %12 = vector.shape_cast %11 : vector<16xf32> to vector<16x1xf32>
    %cst_8 = arith.constant 3.200000e+01 : f32
    %13 = vector.broadcast %cst_8 : f32 to vector<16x1xf32>
    %14 = arith.divf %12, %13 : vector<16x1xf32>
    %15 = vector.broadcast %7 : vector<16x1xf32> to vector<16x32xf32>
    %16 = arith.subf %1, %15 : vector<16x32xf32>
    %cst_9 = arith.constant 9.99999974E-6 : f32
    %17 = vector.broadcast %cst_9 : f32 to vector<16x1xf32>
    %18 = arith.addf %14, %17 : vector<16x1xf32>
    %19 = math.rsqrt %18 : vector<16x1xf32>
    %20 = vector.broadcast %19 : vector<16x1xf32> to vector<16x32xf32>
    %21 = arith.mulf %16, %20 : vector<16x32xf32>
    %22 = vector.broadcast %2 : vector<1x32xf32> to vector<16x32xf32>
    %23 = arith.mulf %21, %22 : vector<16x32xf32>
    %24 = vector.broadcast %3 : vector<1x32xf32> to vector<16x32xf32>
    %25 = arith.addf %23, %24 : vector<16x32xf32>
    %cst_10 = arith.constant dense<0.000000e+00> : vector<32xf32>
    %26 = vector.multi_reduction <add>, %25, %cst_10 [0] : vector<16x32xf32> to vector<32xf32>
    %27 = vector.shape_cast %26 : vector<32xf32> to vector<1x32xf32>
    %cst_11 = arith.constant 1.600000e+01 : f32
    %28 = vector.broadcast %cst_11 : f32 to vector<1x32xf32>
    %29 = arith.divf %27, %28 : vector<1x32xf32>
    %30 = vector.broadcast %29 : vector<1x32xf32> to vector<16x32xf32>
    %31 = arith.subf %25, %30 : vector<16x32xf32>
    %c0_12 = arith.constant 0 : index
    %c0_13 = arith.constant 0 : index
    %c0_14 = arith.constant 0 : index
    %32 = vector.load %arg4[%c0_12, %c0_13, %c0_14] : memref<1x16x32xf32, #tpu.memory_space<vmem>>, vector<1x16x32xf32>
    %33 = vector.shape_cast %32 : vector<1x16x32xf32> to vector<16x32xf32>
    %34 = vector.shape_cast %31 : vector<16x32xf32> to vector<1x16x32xf32>
    tpu.vector_store %arg4[%c0_12, %c0_13, %c0_14], %34 {strides = array<i32>} : memref<1x16x32xf32, #tpu.memory_space<vmem>>, vector<1x16x32xf32>,
    return
  }
  func.func @transform_0(%arg0: i32) -> (i32, i32, i32) {
    %c0_i32 = arith.constant 0 : i32
    %c0_i32_0 = arith.constant 0 : i32
    %c0_i32_1 = arith.constant 0 : i32
    return %arg0, %c0_i32, %c0_i32_0 : i32, i32, i32
  }
  func.func @transform_1(%arg0: i32) -> (i32, i32) {
    %c0_i32 = arith.constant 0 : i32
    %c0_i32_0 = arith.constant 0 : i32
    %c0_i32_1 = arith.constant 0 : i32
    return %c0_i32, %c0_i32_0 : i32, i32
  }
  func.func @transform_2(%arg0: i32) -> (i32, i32) {
    %c0_i32 = arith.constant 0 : i32
    %c0_i32_0 = arith.constant 0 : i32
    %c0_i32_1 = arith.constant 0 : i32
    return %c0_i32, %c0_i32_0 : i32, i32
  }
  func.func @transform_3(%arg0: i32) -> (i32, i32, i32) {
    %c0_i32 = arith.constant 0 : i32
    %c0_i32_0 = arith.constant 0 : i32
    %c0_i32_1 = arith.constant 0 : i32
    return %arg0, %c0_i32, %c0_i32_0 : i32, i32, i32
  }
}

module attributes {stable_mosaic.version = 11 : i64} {
  func.func @_cross_corr_kernel(%arg0: i32, %arg1: memref<1x16x32xf32, #tpu.memory_space<vmem>>, %arg2: memref<1x16x32xf32, #tpu.memory_space<vmem>>, %arg3: memref<32x32xf32, #tpu.memory_space<vmem>>, %arg4: memref<1x32xf32, #tpu.memory_space<vmem>>, %arg5: memref<32x32xf32, #tpu.memory_space<vmem>>, %arg6: memref<1x32xf32, #tpu.memory_space<vmem>>, %arg7: memref<32x32xf32, #tpu.memory_space<vmem>>, %arg8: memref<1x32xf32, #tpu.memory_space<vmem>>, %arg9: memref<16x16xf32, #tpu.memory_space<vmem>>, %arg10: memref<16x16xf32, #tpu.memory_space<vmem>>, %arg11: memref<1x16x1xf32, #tpu.memory_space<vmem>>, %arg12: memref<1x16x32xf32, #tpu.memory_space<vmem>>) attributes {dimension_semantics = [#tpu.dimension_semantics<parallel>], iteration_bounds = array<i64: 2>, scalar_prefetch = 0 : i64, scratch_operands = 0 : i64, tpu.core_type = #tpu.core_type<tc>, window_params = [{transform_indices = @transform_0, window_bounds = array<i64: 1, 16, 32>}, {transform_indices = @transform_1, window_bounds = array<i64: 1, 16, 32>}, {pipeline_mode = #tpu.pipeline_mode<synchronous>, transform_indices = @transform_2, window_bounds = array<i64: 32, 32>}, {pipeline_mode = #tpu.pipeline_mode<synchronous>, transform_indices = @transform_3, window_bounds = array<i64: 1, 32>}, {pipeline_mode = #tpu.pipeline_mode<synchronous>, transform_indices = @transform_4, window_bounds = array<i64: 32, 32>}, {pipeline_mode = #tpu.pipeline_mode<synchronous>, transform_indices = @transform_5, window_bounds = array<i64: 1, 32>}, {pipeline_mode = #tpu.pipeline_mode<synchronous>, transform_indices = @transform_6, window_bounds = array<i64: 32, 32>}, {pipeline_mode = #tpu.pipeline_mode<synchronous>, transform_indices = @transform_7, window_bounds = array<i64: 1, 32>}, {pipeline_mode = #tpu.pipeline_mode<synchronous>, transform_indices = @transform_8, window_bounds = array<i64: 16, 16>}, {pipeline_mode = #tpu.pipeline_mode<synchronous>, transform_indices = @transform_9, window_bounds = array<i64: 16, 16>}, {transform_indices = @transform_10, window_bounds = array<i64: 1, 16, 1>}, {transform_indices = @transform_11, window_bounds = array<i64: 1, 16, 32>}]} {
    %c0 = arith.constant 0 : index
    %c0_0 = arith.constant 0 : index
    %c0_1 = arith.constant 0 : index
    %0 = vector.load %arg1[%c0, %c0_0, %c0_1] : memref<1x16x32xf32, #tpu.memory_space<vmem>>, vector<1x16x32xf32>
    %1 = vector.shape_cast %0 : vector<1x16x32xf32> to vector<16x32xf32>
    %c0_2 = arith.constant 0 : index
    %c0_3 = arith.constant 0 : index
    %c0_4 = arith.constant 0 : index
    %2 = vector.load %arg2[%c0_2, %c0_3, %c0_4] : memref<1x16x32xf32, #tpu.memory_space<vmem>>, vector<1x16x32xf32>
    %3 = vector.shape_cast %2 : vector<1x16x32xf32> to vector<16x32xf32>
    %c0_5 = arith.constant 0 : index
    %c0_6 = arith.constant 0 : index
    %4 = vector.load %arg3[%c0_5, %c0_6] : memref<32x32xf32, #tpu.memory_space<vmem>>, vector<32x32xf32>
    %cst = arith.constant dense<0.000000e+00> : vector<16x32xf32>
    %5 = tpu.matmul %1, %4, %cst {dimension_numbers = #tpu.dot_dimension_numbers<[1], [0], [0], [1], [0, 0, 1, 1], [], []>} : vector<16x32xf32>, vector<32x32xf32>, vector<16x32xf32> -> vector<16x32xf32>
    %c0_7 = arith.constant 0 : index
    %c0_8 = arith.constant 0 : index
    %6 = vector.load %arg4[%c0_7, %c0_8] : memref<1x32xf32, #tpu.memory_space<vmem>>, vector<1x32xf32>
    %7 = vector.broadcast %6 : vector<1x32xf32> to vector<16x32xf32>
    %8 = arith.addf %5, %7 : vector<16x32xf32>
    %c0_9 = arith.constant 0 : index
    %c0_10 = arith.constant 0 : index
    %9 = vector.load %arg5[%c0_9, %c0_10] : memref<32x32xf32, #tpu.memory_space<vmem>>, vector<32x32xf32>
    %cst_11 = arith.constant dense<0.000000e+00> : vector<16x32xf32>
    %10 = tpu.matmul %3, %9, %cst_11 {dimension_numbers = #tpu.dot_dimension_numbers<[1], [0], [0], [1], [0, 0, 1, 1], [], []>} : vector<16x32xf32>, vector<32x32xf32>, vector<16x32xf32> -> vector<16x32xf32>
    %c0_12 = arith.constant 0 : index
    %c0_13 = arith.constant 0 : index
    %11 = vector.load %arg6[%c0_12, %c0_13] : memref<1x32xf32, #tpu.memory_space<vmem>>, vector<1x32xf32>
    %12 = vector.broadcast %11 : vector<1x32xf32> to vector<16x32xf32>
    %13 = arith.addf %10, %12 : vector<16x32xf32>
    %c0_14 = arith.constant 0 : index
    %c0_15 = arith.constant 0 : index
    %14 = vector.load %arg7[%c0_14, %c0_15] : memref<32x32xf32, #tpu.memory_space<vmem>>, vector<32x32xf32>
    %cst_16 = arith.constant dense<0.000000e+00> : vector<16x32xf32>
    %15 = tpu.matmul %3, %14, %cst_16 {dimension_numbers = #tpu.dot_dimension_numbers<[1], [0], [0], [1], [0, 0, 1, 1], [], []>} : vector<16x32xf32>, vector<32x32xf32>, vector<16x32xf32> -> vector<16x32xf32>
    %c0_17 = arith.constant 0 : index
    %c0_18 = arith.constant 0 : index
    %16 = vector.load %arg8[%c0_17, %c0_18] : memref<1x32xf32, #tpu.memory_space<vmem>>, vector<1x32xf32>
    %17 = vector.broadcast %16 : vector<1x32xf32> to vector<16x32xf32>
    %18 = arith.addf %15, %17 : vector<16x32xf32>
    %c0_19 = arith.constant 0 : index
    %c0_20 = arith.constant 0 : index
    %19 = vector.load %arg9[%c0_19, %c0_20] : memref<16x16xf32, #tpu.memory_space<vmem>>, vector<16x16xf32>
    %c0_21 = arith.constant 0 : index
    %c0_22 = arith.constant 0 : index
    %20 = vector.load %arg10[%c0_21, %c0_22] : memref<16x16xf32, #tpu.memory_space<vmem>>, vector<16x16xf32>
    %cst_23 = arith.constant dense<0.000000e+00> : vector<16x32xf32>
    %21 = tpu.matmul %19, %8, %cst_23 {dimension_numbers = #tpu.dot_dimension_numbers<[1], [0], [0], [1], [0, 0, 1, 1], [], []>} : vector<16x16xf32>, vector<16x32xf32>, vector<16x32xf32> -> vector<16x32xf32>
    %cst_24 = arith.constant dense<0.000000e+00> : vector<16x32xf32>
    %22 = tpu.matmul %20, %8, %cst_24 {dimension_numbers = #tpu.dot_dimension_numbers<[1], [0], [0], [1], [0, 0, 1, 1], [], []>} : vector<16x16xf32>, vector<16x32xf32>, vector<16x32xf32> -> vector<16x32xf32>
    %cst_25 = arith.constant dense<0.000000e+00> : vector<16x32xf32>
    %23 = tpu.matmul %19, %13, %cst_25 {dimension_numbers = #tpu.dot_dimension_numbers<[1], [0], [0], [1], [0, 0, 1, 1], [], []>} : vector<16x16xf32>, vector<16x32xf32>, vector<16x32xf32> -> vector<16x32xf32>
    %cst_26 = arith.constant dense<0.000000e+00> : vector<16x32xf32>
    %24 = tpu.matmul %20, %13, %cst_26 {dimension_numbers = #tpu.dot_dimension_numbers<[1], [0], [0], [1], [0, 0, 1, 1], [], []>} : vector<16x16xf32>, vector<16x32xf32>, vector<16x32xf32> -> vector<16x32xf32>
    %25 = arith.mulf %21, %23 : vector<16x32xf32>
    %26 = arith.mulf %22, %24 : vector<16x32xf32>
    %27 = arith.addf %25, %26 : vector<16x32xf32>
    %cst_27 = arith.constant dense<0.000000e+00> : vector<16xf32>
    %28 = vector.multi_reduction <add>, %27, %cst_27 [1] : vector<16x32xf32> to vector<16xf32>
    %29 = vector.shape_cast %28 : vector<16xf32> to vector<16x1xf32>
    %30 = arith.mulf %21, %24 : vector<16x32xf32>
    %31 = arith.mulf %22, %23 : vector<16x32xf32>
    %32 = arith.subf %30, %31 : vector<16x32xf32>
    %cst_28 = arith.constant dense<0.000000e+00> : vector<16xf32>
    %33 = vector.multi_reduction <add>, %32, %cst_28 [1] : vector<16x32xf32> to vector<16xf32>
    %34 = vector.shape_cast %33 : vector<16xf32> to vector<16x1xf32>
    %cst_29 = arith.constant dense<0.000000e+00> : vector<16x1xf32>
    %35 = tpu.matmul %19, %29, %cst_29 {dimension_numbers = #tpu.dot_dimension_numbers<[1], [0], [0], [1], [0, 0, 1, 1], [], []>} : vector<16x16xf32>, vector<16x1xf32>, vector<16x1xf32> -> vector<16x1xf32>
    %cst_30 = arith.constant dense<0.000000e+00> : vector<16x1xf32>
    %36 = tpu.matmul %20, %34, %cst_30 {dimension_numbers = #tpu.dot_dimension_numbers<[1], [0], [0], [1], [0, 0, 1, 1], [], []>} : vector<16x16xf32>, vector<16x1xf32>, vector<16x1xf32> -> vector<16x1xf32>
    %37 = arith.subf %35, %36 : vector<16x1xf32>
    %cst_31 = arith.constant 0.001953125 : f32
    %38 = vector.broadcast %cst_31 : f32 to vector<16x1xf32>
    %39 = arith.mulf %37, %38 : vector<16x1xf32>
    %c0_32 = arith.constant 0 : index
    %c0_33 = arith.constant 0 : index
    %c0_34 = arith.constant 0 : index
    %40 = vector.load %arg11[%c0_32, %c0_33, %c0_34] : memref<1x16x1xf32, #tpu.memory_space<vmem>>, vector<1x16x1xf32>
    %41 = vector.shape_cast %40 : vector<1x16x1xf32> to vector<16x1xf32>
    %42 = vector.shape_cast %39 : vector<16x1xf32> to vector<1x16x1xf32>
    tpu.vector_store %arg11[%c0_32, %c0_33, %c0_34], %42 {strides = array<i32>} : memref<1x16x1xf32, #tpu.memory_space<vmem>>, vector<1x16x1xf32>,
    %c0_35 = arith.constant 0 : index
    %c0_36 = arith.constant 0 : index
    %c0_37 = arith.constant 0 : index
    %43 = vector.load %arg12[%c0_35, %c0_36, %c0_37] : memref<1x16x32xf32, #tpu.memory_space<vmem>>, vector<1x16x32xf32>
    %44 = vector.shape_cast %43 : vector<1x16x32xf32> to vector<16x32xf32>
    %45 = vector.shape_cast %18 : vector<16x32xf32> to vector<1x16x32xf32>
    tpu.vector_store %arg12[%c0_35, %c0_36, %c0_37], %45 {strides = array<i32>} : memref<1x16x32xf32, #tpu.memory_space<vmem>>, vector<1x16x32xf32>,
    return
  }
  func.func @transform_0(%arg0: i32) -> (i32, i32, i32) {
    %c0_i32 = arith.constant 0 : i32
    %c0_i32_0 = arith.constant 0 : i32
    %c0_i32_1 = arith.constant 0 : i32
    return %arg0, %c0_i32, %c0_i32_0 : i32, i32, i32
  }
  func.func @transform_1(%arg0: i32) -> (i32, i32, i32) {
    %c0_i32 = arith.constant 0 : i32
    %c0_i32_0 = arith.constant 0 : i32
    %c0_i32_1 = arith.constant 0 : i32
    return %arg0, %c0_i32, %c0_i32_0 : i32, i32, i32
  }
  func.func @transform_2(%arg0: i32) -> (i32, i32) {
    %c0_i32 = arith.constant 0 : i32
    %c0_i32_0 = arith.constant 0 : i32
    %c0_i32_1 = arith.constant 0 : i32
    return %c0_i32, %c0_i32_0 : i32, i32
  }
  func.func @transform_3(%arg0: i32) -> (i32, i32) {
    %c0_i32 = arith.constant 0 : i32
    %c0_i32_0 = arith.constant 0 : i32
    %c0_i32_1 = arith.constant 0 : i32
    return %c0_i32, %c0_i32_0 : i32, i32
  }
  func.func @transform_4(%arg0: i32) -> (i32, i32) {
    %c0_i32 = arith.constant 0 : i32
    %c0_i32_0 = arith.constant 0 : i32
    %c0_i32_1 = arith.constant 0 : i32
    return %c0_i32, %c0_i32_0 : i32, i32
  }
  func.func @transform_5(%arg0: i32) -> (i32, i32) {
    %c0_i32 = arith.constant 0 : i32
    %c0_i32_0 = arith.constant 0 : i32
    %c0_i32_1 = arith.constant 0 : i32
    return %c0_i32, %c0_i32_0 : i32, i32
  }
  func.func @transform_6(%arg0: i32) -> (i32, i32) {
    %c0_i32 = arith.constant 0 : i32
    %c0_i32_0 = arith.constant 0 : i32
    %c0_i32_1 = arith.constant 0 : i32
    return %c0_i32, %c0_i32_0 : i32, i32
  }
  func.func @transform_7(%arg0: i32) -> (i32, i32) {
    %c0_i32 = arith.constant 0 : i32
    %c0_i32_0 = arith.constant 0 : i32
    %c0_i32_1 = arith.constant 0 : i32
    return %c0_i32, %c0_i32_0 : i32, i32
  }
  func.func @transform_8(%arg0: i32) -> (i32, i32) {
    %c0_i32 = arith.constant 0 : i32
    %c0_i32_0 = arith.constant 0 : i32
    %c0_i32_1 = arith.constant 0 : i32
    return %c0_i32, %c0_i32_0 : i32, i32
  }
  func.func @transform_9(%arg0: i32) -> (i32, i32) {
    %c0_i32 = arith.constant 0 : i32
    %c0_i32_0 = arith.constant 0 : i32
    %c0_i32_1 = arith.constant 0 : i32
    return %c0_i32, %c0_i32_0 : i32, i32
  }
  func.func @transform_10(%arg0: i32) -> (i32, i32, i32) {
    %c0_i32 = arith.constant 0 : i32
    %c0_i32_0 = arith.constant 0 : i32
    %c0_i32_1 = arith.constant 0 : i32
    return %arg0, %c0_i32, %c0_i32_0 : i32, i32, i32
  }
  func.func @transform_11(%arg0: i32) -> (i32, i32, i32) {
    %c0_i32 = arith.constant 0 : i32
    %c0_i32_0 = arith.constant 0 : i32
    %c0_i32_1 = arith.constant 0 : i32
    return %arg0, %c0_i32, %c0_i32_0 : i32, i32, i32
  }
}

module attributes {stable_mosaic.version = 11 : i64} {
  func.func @_ffn_decomp_kernel(%arg0: i32, %arg1: memref<16x16xf32, #tpu.memory_space<vmem>>, %arg2: memref<1x16x32xf32, #tpu.memory_space<vmem>>, %arg3: memref<32x64xf32, #tpu.memory_space<vmem>>, %arg4: memref<64x32xf32, #tpu.memory_space<vmem>>, %arg5: memref<1x16x32xf32, #tpu.memory_space<vmem>>, %arg6: memref<1x16x32xf32, #tpu.memory_space<vmem>>) attributes {dimension_semantics = [#tpu.dimension_semantics<parallel>], iteration_bounds = array<i64: 2>, scalar_prefetch = 0 : i64, scratch_operands = 0 : i64, tpu.core_type = #tpu.core_type<tc>, window_params = [{pipeline_mode = #tpu.pipeline_mode<synchronous>, transform_indices = @transform_0, window_bounds = array<i64: 16, 16>}, {transform_indices = @transform_1, window_bounds = array<i64: 1, 16, 32>}, {pipeline_mode = #tpu.pipeline_mode<synchronous>, transform_indices = @transform_2, window_bounds = array<i64: 32, 64>}, {pipeline_mode = #tpu.pipeline_mode<synchronous>, transform_indices = @transform_3, window_bounds = array<i64: 64, 32>}, {transform_indices = @transform_4, window_bounds = array<i64: 1, 16, 32>}, {transform_indices = @transform_5, window_bounds = array<i64: 1, 16, 32>}]} {
    %c0 = arith.constant 0 : index
    %c0_0 = arith.constant 0 : index
    %c0_1 = arith.constant 0 : index
    %0 = vector.load %arg2[%c0, %c0_0, %c0_1] : memref<1x16x32xf32, #tpu.memory_space<vmem>>, vector<1x16x32xf32>
    %1 = vector.shape_cast %0 : vector<1x16x32xf32> to vector<16x32xf32>
    %c0_2 = arith.constant 0 : index
    %c0_3 = arith.constant 0 : index
    %2 = vector.load %arg3[%c0_2, %c0_3] : memref<32x64xf32, #tpu.memory_space<vmem>>, vector<32x64xf32>
    %cst = arith.constant dense<0.000000e+00> : vector<16x64xf32>
    %3 = tpu.matmul %1, %2, %cst {dimension_numbers = #tpu.dot_dimension_numbers<[1], [0], [0], [1], [0, 0, 1, 1], [], []>} : vector<16x32xf32>, vector<32x64xf32>, vector<16x64xf32> -> vector<16x64xf32>
    %cst_4 = arith.constant 0.000000e+00 : f32
    %4 = vector.broadcast %cst_4 : f32 to vector<16x64xf32>
    %5 = arith.maximumf %3, %4 : vector<16x64xf32>
    %c0_5 = arith.constant 0 : index
    %c0_6 = arith.constant 0 : index
    %6 = vector.load %arg4[%c0_5, %c0_6] : memref<64x32xf32, #tpu.memory_space<vmem>>, vector<64x32xf32>
    %cst_7 = arith.constant dense<0.000000e+00> : vector<16x32xf32>
    %7 = tpu.matmul %5, %6, %cst_7 {dimension_numbers = #tpu.dot_dimension_numbers<[1], [0], [0], [1], [0, 0, 1, 1], [], []>} : vector<16x64xf32>, vector<64x32xf32>, vector<16x32xf32> -> vector<16x32xf32>
    %8 = arith.addf %1, %7 : vector<16x32xf32>
    %c0_8 = arith.constant 0 : index
    %c0_9 = arith.constant 0 : index
    %9 = vector.load %arg1[%c0_8, %c0_9] : memref<16x16xf32, #tpu.memory_space<vmem>>, vector<16x16xf32>
    %cst_10 = arith.constant dense<0.000000e+00> : vector<16x32xf32>
    %10 = tpu.matmul %9, %8, %cst_10 {dimension_numbers = #tpu.dot_dimension_numbers<[1], [0], [0], [1], [0, 0, 1, 1], [], []>} : vector<16x16xf32>, vector<16x32xf32>, vector<16x32xf32> -> vector<16x32xf32>
    %c0_11 = arith.constant 0 : index
    %c0_12 = arith.constant 0 : index
    %c0_13 = arith.constant 0 : index
    %11 = vector.load %arg6[%c0_11, %c0_12, %c0_13] : memref<1x16x32xf32, #tpu.memory_space<vmem>>, vector<1x16x32xf32>
    %12 = vector.shape_cast %11 : vector<1x16x32xf32> to vector<16x32xf32>
    %13 = vector.shape_cast %10 : vector<16x32xf32> to vector<1x16x32xf32>
    tpu.vector_store %arg6[%c0_11, %c0_12, %c0_13], %13 {strides = array<i32>} : memref<1x16x32xf32, #tpu.memory_space<vmem>>, vector<1x16x32xf32>,
    %14 = arith.subf %8, %10 : vector<16x32xf32>
    %c0_14 = arith.constant 0 : index
    %c0_15 = arith.constant 0 : index
    %c0_16 = arith.constant 0 : index
    %15 = vector.load %arg5[%c0_14, %c0_15, %c0_16] : memref<1x16x32xf32, #tpu.memory_space<vmem>>, vector<1x16x32xf32>
    %16 = vector.shape_cast %15 : vector<1x16x32xf32> to vector<16x32xf32>
    %17 = vector.shape_cast %14 : vector<16x32xf32> to vector<1x16x32xf32>
    tpu.vector_store %arg5[%c0_14, %c0_15, %c0_16], %17 {strides = array<i32>} : memref<1x16x32xf32, #tpu.memory_space<vmem>>, vector<1x16x32xf32>,
    return
  }
  func.func @transform_0(%arg0: i32) -> (i32, i32) {
    %c0_i32 = arith.constant 0 : i32
    %c0_i32_0 = arith.constant 0 : i32
    %c0_i32_1 = arith.constant 0 : i32
    return %c0_i32, %c0_i32_0 : i32, i32
  }
  func.func @transform_1(%arg0: i32) -> (i32, i32, i32) {
    %c0_i32 = arith.constant 0 : i32
    %c0_i32_0 = arith.constant 0 : i32
    %c0_i32_1 = arith.constant 0 : i32
    return %arg0, %c0_i32, %c0_i32_0 : i32, i32, i32
  }
  func.func @transform_2(%arg0: i32) -> (i32, i32) {
    %c0_i32 = arith.constant 0 : i32
    %c0_i32_0 = arith.constant 0 : i32
    %c0_i32_1 = arith.constant 0 : i32
    return %c0_i32, %c0_i32_0 : i32, i32
  }
  func.func @transform_3(%arg0: i32) -> (i32, i32) {
    %c0_i32 = arith.constant 0 : i32
    %c0_i32_0 = arith.constant 0 : i32
    %c0_i32_1 = arith.constant 0 : i32
    return %c0_i32, %c0_i32_0 : i32, i32
  }
  func.func @transform_4(%arg0: i32) -> (i32, i32, i32) {
    %c0_i32 = arith.constant 0 : i32
    %c0_i32_0 = arith.constant 0 : i32
    %c0_i32_1 = arith.constant 0 : i32
    return %arg0, %c0_i32, %c0_i32_0 : i32, i32, i32
  }
  func.func @transform_5(%arg0: i32) -> (i32, i32, i32) {
    %c0_i32 = arith.constant 0 : i32
    %c0_i32_0 = arith.constant 0 : i32
    %c0_i32_1 = arith.constant 0 : i32
    return %arg0, %c0_i32, %c0_i32_0 : i32, i32, i32
  }
}

module attributes {stable_mosaic.version = 11 : i64} {
  func.func @_norm_proj_kernel(%arg0: i32, %arg1: memref<1x16x32xf32, #tpu.memory_space<vmem>>, %arg2: memref<1x32xf32, #tpu.memory_space<vmem>>, %arg3: memref<1x32xf32, #tpu.memory_space<vmem>>, %arg4: memref<32x4xf32, #tpu.memory_space<vmem>>, %arg5: memref<1x4xf32, #tpu.memory_space<vmem>>, %arg6: memref<1x16x4xf32, #tpu.memory_space<vmem>>) attributes {dimension_semantics = [#tpu.dimension_semantics<parallel>], iteration_bounds = array<i64: 2>, scalar_prefetch = 0 : i64, scratch_operands = 0 : i64, tpu.core_type = #tpu.core_type<tc>, window_params = [{transform_indices = @transform_0, window_bounds = array<i64: 1, 16, 32>}, {pipeline_mode = #tpu.pipeline_mode<synchronous>, transform_indices = @transform_1, window_bounds = array<i64: 1, 32>}, {pipeline_mode = #tpu.pipeline_mode<synchronous>, transform_indices = @transform_2, window_bounds = array<i64: 1, 32>}, {pipeline_mode = #tpu.pipeline_mode<synchronous>, transform_indices = @transform_3, window_bounds = array<i64: 32, 4>}, {pipeline_mode = #tpu.pipeline_mode<synchronous>, transform_indices = @transform_4, window_bounds = array<i64: 1, 4>}, {transform_indices = @transform_5, window_bounds = array<i64: 1, 16, 4>}]} {
    %c0 = arith.constant 0 : index
    %c0_0 = arith.constant 0 : index
    %c0_1 = arith.constant 0 : index
    %0 = vector.load %arg1[%c0, %c0_0, %c0_1] : memref<1x16x32xf32, #tpu.memory_space<vmem>>, vector<1x16x32xf32>
    %1 = vector.shape_cast %0 : vector<1x16x32xf32> to vector<16x32xf32>
    %c0_2 = arith.constant 0 : index
    %c0_3 = arith.constant 0 : index
    %2 = vector.load %arg2[%c0_2, %c0_3] : memref<1x32xf32, #tpu.memory_space<vmem>>, vector<1x32xf32>
    %c0_4 = arith.constant 0 : index
    %c0_5 = arith.constant 0 : index
    %3 = vector.load %arg3[%c0_4, %c0_5] : memref<1x32xf32, #tpu.memory_space<vmem>>, vector<1x32xf32>
    %cst = arith.constant dense<0.000000e+00> : vector<16xf32>
    %4 = vector.multi_reduction <add>, %1, %cst [1] : vector<16x32xf32> to vector<16xf32>
    %5 = vector.shape_cast %4 : vector<16xf32> to vector<16x1xf32>
    %cst_6 = arith.constant 3.200000e+01 : f32
    %6 = vector.broadcast %cst_6 : f32 to vector<16x1xf32>
    %7 = arith.divf %5, %6 : vector<16x1xf32>
    %8 = vector.broadcast %7 : vector<16x1xf32> to vector<16x32xf32>
    %9 = arith.subf %1, %8 : vector<16x32xf32>
    %10 = arith.mulf %9, %9 : vector<16x32xf32>
    %cst_7 = arith.constant dense<0.000000e+00> : vector<16xf32>
    %11 = vector.multi_reduction <add>, %10, %cst_7 [1] : vector<16x32xf32> to vector<16xf32>
    %12 = vector.shape_cast %11 : vector<16xf32> to vector<16x1xf32>
    %cst_8 = arith.constant 3.200000e+01 : f32
    %13 = vector.broadcast %cst_8 : f32 to vector<16x1xf32>
    %14 = arith.divf %12, %13 : vector<16x1xf32>
    %15 = vector.broadcast %7 : vector<16x1xf32> to vector<16x32xf32>
    %16 = arith.subf %1, %15 : vector<16x32xf32>
    %cst_9 = arith.constant 9.99999974E-6 : f32
    %17 = vector.broadcast %cst_9 : f32 to vector<16x1xf32>
    %18 = arith.addf %14, %17 : vector<16x1xf32>
    %19 = math.rsqrt %18 : vector<16x1xf32>
    %20 = vector.broadcast %19 : vector<16x1xf32> to vector<16x32xf32>
    %21 = arith.mulf %16, %20 : vector<16x32xf32>
    %22 = vector.broadcast %2 : vector<1x32xf32> to vector<16x32xf32>
    %23 = arith.mulf %21, %22 : vector<16x32xf32>
    %24 = vector.broadcast %3 : vector<1x32xf32> to vector<16x32xf32>
    %25 = arith.addf %23, %24 : vector<16x32xf32>
    %cst_10 = arith.constant dense<0.000000e+00> : vector<32xf32>
    %26 = vector.multi_reduction <add>, %25, %cst_10 [0] : vector<16x32xf32> to vector<32xf32>
    %27 = vector.shape_cast %26 : vector<32xf32> to vector<1x32xf32>
    %cst_11 = arith.constant 1.600000e+01 : f32
    %28 = vector.broadcast %cst_11 : f32 to vector<1x32xf32>
    %29 = arith.divf %27, %28 : vector<1x32xf32>
    %30 = vector.broadcast %29 : vector<1x32xf32> to vector<16x32xf32>
    %31 = arith.subf %25, %30 : vector<16x32xf32>
    %c0_12 = arith.constant 0 : index
    %c0_13 = arith.constant 0 : index
    %32 = vector.load %arg4[%c0_12, %c0_13] : memref<32x4xf32, #tpu.memory_space<vmem>>, vector<32x4xf32>
    %cst_14 = arith.constant dense<0.000000e+00> : vector<16x4xf32>
    %33 = tpu.matmul %31, %32, %cst_14 {dimension_numbers = #tpu.dot_dimension_numbers<[1], [0], [0], [1], [0, 0, 1, 1], [], []>} : vector<16x32xf32>, vector<32x4xf32>, vector<16x4xf32> -> vector<16x4xf32>
    %c0_15 = arith.constant 0 : index
    %c0_16 = arith.constant 0 : index
    %34 = vector.load %arg5[%c0_15, %c0_16] : memref<1x4xf32, #tpu.memory_space<vmem>>, vector<1x4xf32>
    %35 = vector.broadcast %34 : vector<1x4xf32> to vector<16x4xf32>
    %36 = arith.addf %33, %35 : vector<16x4xf32>
    %c0_17 = arith.constant 0 : index
    %c0_18 = arith.constant 0 : index
    %c0_19 = arith.constant 0 : index
    %37 = vector.load %arg6[%c0_17, %c0_18, %c0_19] : memref<1x16x4xf32, #tpu.memory_space<vmem>>, vector<1x16x4xf32>
    %38 = vector.shape_cast %37 : vector<1x16x4xf32> to vector<16x4xf32>
    %39 = vector.shape_cast %36 : vector<16x4xf32> to vector<1x16x4xf32>
    tpu.vector_store %arg6[%c0_17, %c0_18, %c0_19], %39 {strides = array<i32>} : memref<1x16x4xf32, #tpu.memory_space<vmem>>, vector<1x16x4xf32>,
    return
  }
  func.func @transform_0(%arg0: i32) -> (i32, i32, i32) {
    %c0_i32 = arith.constant 0 : i32
    %c0_i32_0 = arith.constant 0 : i32
    %c0_i32_1 = arith.constant 0 : i32
    return %arg0, %c0_i32, %c0_i32_0 : i32, i32, i32
  }
  func.func @transform_1(%arg0: i32) -> (i32, i32) {
    %c0_i32 = arith.constant 0 : i32
    %c0_i32_0 = arith.constant 0 : i32
    %c0_i32_1 = arith.constant 0 : i32
    return %c0_i32, %c0_i32_0 : i32, i32
  }
  func.func @transform_2(%arg0: i32) -> (i32, i32) {
    %c0_i32 = arith.constant 0 : i32
    %c0_i32_0 = arith.constant 0 : i32
    %c0_i32_1 = arith.constant 0 : i32
    return %c0_i32, %c0_i32_0 : i32, i32
  }
  func.func @transform_3(%arg0: i32) -> (i32, i32) {
    %c0_i32 = arith.constant 0 : i32
    %c0_i32_0 = arith.constant 0 : i32
    %c0_i32_1 = arith.constant 0 : i32
    return %c0_i32, %c0_i32_0 : i32, i32
  }
  func.func @transform_4(%arg0: i32) -> (i32, i32) {
    %c0_i32 = arith.constant 0 : i32
    %c0_i32_0 = arith.constant 0 : i32
    %c0_i32_1 = arith.constant 0 : i32
    return %c0_i32, %c0_i32_0 : i32, i32
  }
  func.func @transform_5(%arg0: i32) -> (i32, i32, i32) {
    %c0_i32 = arith.constant 0 : i32
    %c0_i32_0 = arith.constant 0 : i32
    %c0_i32_1 = arith.constant 0 : i32
    return %arg0, %c0_i32, %c0_i32_0 : i32, i32, i32
  }
}

module attributes {stable_mosaic.version = 11 : i64} {
  func.func @_trend_conv_kernel(%arg0: i32, %arg1: memref<1x16x32xf32, #tpu.memory_space<vmem>>, %arg2: memref<1x16x32xf32, #tpu.memory_space<vmem>>, %arg3: memref<1x16x32xf32, #tpu.memory_space<vmem>>, %arg4: memref<3x32x4xf32, #tpu.memory_space<vmem>>, %arg5: memref<16x16xf32, #tpu.memory_space<vmem>>, %arg6: memref<16x16xf32, #tpu.memory_space<vmem>>, %arg7: memref<1x16x4xf32, #tpu.memory_space<vmem>>) attributes {dimension_semantics = [#tpu.dimension_semantics<parallel>], iteration_bounds = array<i64: 2>, scalar_prefetch = 0 : i64, scratch_operands = 0 : i64, tpu.core_type = #tpu.core_type<tc>, window_params = [{transform_indices = @transform_0, window_bounds = array<i64: 1, 16, 32>}, {transform_indices = @transform_1, window_bounds = array<i64: 1, 16, 32>}, {transform_indices = @transform_2, window_bounds = array<i64: 1, 16, 32>}, {pipeline_mode = #tpu.pipeline_mode<synchronous>, transform_indices = @transform_3, window_bounds = array<i64: 3, 32, 4>}, {pipeline_mode = #tpu.pipeline_mode<synchronous>, transform_indices = @transform_4, window_bounds = array<i64: 16, 16>}, {pipeline_mode = #tpu.pipeline_mode<synchronous>, transform_indices = @transform_5, window_bounds = array<i64: 16, 16>}, {transform_indices = @transform_6, window_bounds = array<i64: 1, 16, 4>}]} {
    %c0 = arith.constant 0 : index
    %c0_0 = arith.constant 0 : index
    %c0_1 = arith.constant 0 : index
    %0 = vector.load %arg1[%c0, %c0_0, %c0_1] : memref<1x16x32xf32, #tpu.memory_space<vmem>>, vector<1x16x32xf32>
    %1 = vector.shape_cast %0 : vector<1x16x32xf32> to vector<16x32xf32>
    %c0_2 = arith.constant 0 : index
    %c0_3 = arith.constant 0 : index
    %c0_4 = arith.constant 0 : index
    %2 = vector.load %arg2[%c0_2, %c0_3, %c0_4] : memref<1x16x32xf32, #tpu.memory_space<vmem>>, vector<1x16x32xf32>
    %3 = vector.shape_cast %2 : vector<1x16x32xf32> to vector<16x32xf32>
    %4 = arith.addf %1, %3 : vector<16x32xf32>
    %c0_5 = arith.constant 0 : index
    %c0_6 = arith.constant 0 : index
    %c0_7 = arith.constant 0 : index
    %5 = vector.load %arg3[%c0_5, %c0_6, %c0_7] : memref<1x16x32xf32, #tpu.memory_space<vmem>>, vector<1x16x32xf32>
    %6 = vector.shape_cast %5 : vector<1x16x32xf32> to vector<16x32xf32>
    %7 = arith.addf %4, %6 : vector<16x32xf32>
    %c0_8 = arith.constant 0 : index
    %c0_9 = arith.constant 0 : index
    %8 = vector.load %arg5[%c0_8, %c0_9] : memref<16x16xf32, #tpu.memory_space<vmem>>, vector<16x16xf32>
    %c0_10 = arith.constant 0 : index
    %c0_11 = arith.constant 0 : index
    %9 = vector.load %arg6[%c0_10, %c0_11] : memref<16x16xf32, #tpu.memory_space<vmem>>, vector<16x16xf32>
    %c0_12 = arith.constant 0 : index
    %c0_13 = arith.constant 0 : index
    %c0_14 = arith.constant 0 : index
    %10 = vector.load %arg4[%c0_12, %c0_13, %c0_14] : memref<3x32x4xf32, #tpu.memory_space<vmem>>, vector<1x32x4xf32>
    %11 = vector.shape_cast %10 : vector<1x32x4xf32> to vector<32x4xf32>
    %cst = arith.constant dense<0.000000e+00> : vector<16x4xf32>
    %12 = tpu.matmul %7, %11, %cst {dimension_numbers = #tpu.dot_dimension_numbers<[1], [0], [0], [1], [0, 0, 1, 1], [], []>} : vector<16x32xf32>, vector<32x4xf32>, vector<16x4xf32> -> vector<16x4xf32>
    %c1 = arith.constant 1 : index
    %c0_15 = arith.constant 0 : index
    %c0_16 = arith.constant 0 : index
    %13 = vector.load %arg4[%c1, %c0_15, %c0_16] : memref<3x32x4xf32, #tpu.memory_space<vmem>>, vector<1x32x4xf32>
    %14 = vector.shape_cast %13 : vector<1x32x4xf32> to vector<32x4xf32>
    %cst_17 = arith.constant dense<0.000000e+00> : vector<16x4xf32>
    %15 = tpu.matmul %7, %14, %cst_17 {dimension_numbers = #tpu.dot_dimension_numbers<[1], [0], [0], [1], [0, 0, 1, 1], [], []>} : vector<16x32xf32>, vector<32x4xf32>, vector<16x4xf32> -> vector<16x4xf32>
    %c2 = arith.constant 2 : index
    %c0_18 = arith.constant 0 : index
    %c0_19 = arith.constant 0 : index
    %16 = vector.load %arg4[%c2, %c0_18, %c0_19] : memref<3x32x4xf32, #tpu.memory_space<vmem>>, vector<1x32x4xf32>
    %17 = vector.shape_cast %16 : vector<1x32x4xf32> to vector<32x4xf32>
    %cst_20 = arith.constant dense<0.000000e+00> : vector<16x4xf32>
    %18 = tpu.matmul %7, %17, %cst_20 {dimension_numbers = #tpu.dot_dimension_numbers<[1], [0], [0], [1], [0, 0, 1, 1], [], []>} : vector<16x32xf32>, vector<32x4xf32>, vector<16x4xf32> -> vector<16x4xf32>
    %cst_21 = arith.constant dense<0.000000e+00> : vector<16x4xf32>
    %19 = tpu.matmul %8, %12, %cst_21 {dimension_numbers = #tpu.dot_dimension_numbers<[1], [0], [0], [1], [0, 0, 1, 1], [], []>} : vector<16x16xf32>, vector<16x4xf32>, vector<16x4xf32> -> vector<16x4xf32>
    %20 = arith.addf %19, %15 : vector<16x4xf32>
    %cst_22 = arith.constant dense<0.000000e+00> : vector<16x4xf32>
    %21 = tpu.matmul %9, %18, %cst_22 {dimension_numbers = #tpu.dot_dimension_numbers<[1], [0], [0], [1], [0, 0, 1, 1], [], []>} : vector<16x16xf32>, vector<16x4xf32>, vector<16x4xf32> -> vector<16x4xf32>
    %22 = arith.addf %20, %21 : vector<16x4xf32>
    %c0_23 = arith.constant 0 : index
    %c0_24 = arith.constant 0 : index
    %c0_25 = arith.constant 0 : index
    %23 = vector.load %arg7[%c0_23, %c0_24, %c0_25] : memref<1x16x4xf32, #tpu.memory_space<vmem>>, vector<1x16x4xf32>
    %24 = vector.shape_cast %23 : vector<1x16x4xf32> to vector<16x4xf32>
    %25 = vector.shape_cast %22 : vector<16x4xf32> to vector<1x16x4xf32>
    tpu.vector_store %arg7[%c0_23, %c0_24, %c0_25], %25 {strides = array<i32>} : memref<1x16x4xf32, #tpu.memory_space<vmem>>, vector<1x16x4xf32>,
    return
  }
  func.func @transform_0(%arg0: i32) -> (i32, i32, i32) {
    %c0_i32 = arith.constant 0 : i32
    %c0_i32_0 = arith.constant 0 : i32
    %c0_i32_1 = arith.constant 0 : i32
    return %arg0, %c0_i32, %c0_i32_0 : i32, i32, i32
  }
  func.func @transform_1(%arg0: i32) -> (i32, i32, i32) {
    %c0_i32 = arith.constant 0 : i32
    %c0_i32_0 = arith.constant 0 : i32
    %c0_i32_1 = arith.constant 0 : i32
    return %arg0, %c0_i32, %c0_i32_0 : i32, i32, i32
  }
  func.func @transform_2(%arg0: i32) -> (i32, i32, i32) {
    %c0_i32 = arith.constant 0 : i32
    %c0_i32_0 = arith.constant 0 : i32
    %c0_i32_1 = arith.constant 0 : i32
    return %arg0, %c0_i32, %c0_i32_0 : i32, i32, i32
  }
  func.func @transform_3(%arg0: i32) -> (i32, i32, i32) {
    %c0_i32 = arith.constant 0 : i32
    %c0_i32_0 = arith.constant 0 : i32
    %c0_i32_1 = arith.constant 0 : i32
    %c0_i32_2 = arith.constant 0 : i32
    return %c0_i32, %c0_i32_0, %c0_i32_1 : i32, i32, i32
  }
  func.func @transform_4(%arg0: i32) -> (i32, i32) {
    %c0_i32 = arith.constant 0 : i32
    %c0_i32_0 = arith.constant 0 : i32
    %c0_i32_1 = arith.constant 0 : i32
    return %c0_i32, %c0_i32_0 : i32, i32
  }
  func.func @transform_5(%arg0: i32) -> (i32, i32) {
    %c0_i32 = arith.constant 0 : i32
    %c0_i32_0 = arith.constant 0 : i32
    %c0_i32_1 = arith.constant 0 : i32
    return %c0_i32, %c0_i32_0 : i32, i32
  }
  func.func @transform_6(%arg0: i32) -> (i32, i32, i32) {
    %c0_i32 = arith.constant 0 : i32
    %c0_i32_0 = arith.constant 0 : i32
    %c0_i32_1 = arith.constant 0 : i32
    return %arg0, %c0_i32, %c0_i32_0 : i32, i32, i32
  }
}

module attributes {stable_mosaic.version = 11 : i64} {
  func.func @_head_kernel(%arg0: i32, %arg1: memref<1x8x4xf32, #tpu.memory_space<vmem>>, %arg2: memref<1x8x4xf32, #tpu.memory_space<vmem>>, %arg3: memref<4x1xf32, #tpu.memory_space<vmem>>, %arg4: memref<1x1xf32, #tpu.memory_space<vmem>>, %arg5: memref<1x8x1xf32, #tpu.memory_space<vmem>>) attributes {dimension_semantics = [#tpu.dimension_semantics<parallel>], iteration_bounds = array<i64: 2>, scalar_prefetch = 0 : i64, scratch_operands = 0 : i64, tpu.core_type = #tpu.core_type<tc>, window_params = [{transform_indices = @transform_0, window_bounds = array<i64: 1, 8, 4>}, {transform_indices = @transform_1, window_bounds = array<i64: 1, 8, 4>}, {pipeline_mode = #tpu.pipeline_mode<synchronous>, transform_indices = @transform_2, window_bounds = array<i64: 4, 1>}, {pipeline_mode = #tpu.pipeline_mode<synchronous>, transform_indices = @transform_3, window_bounds = array<i64: 1, 1>}, {transform_indices = @transform_4, window_bounds = array<i64: 1, 8, 1>}]} {
    %c0 = arith.constant 0 : index
    %c0_0 = arith.constant 0 : index
    %c0_1 = arith.constant 0 : index
    %0 = vector.load %arg1[%c0, %c0_0, %c0_1] : memref<1x8x4xf32, #tpu.memory_space<vmem>>, vector<1x8x4xf32>
    %1 = vector.shape_cast %0 : vector<1x8x4xf32> to vector<8x4xf32>
    %c0_2 = arith.constant 0 : index
    %c0_3 = arith.constant 0 : index
    %c0_4 = arith.constant 0 : index
    %2 = vector.load %arg2[%c0_2, %c0_3, %c0_4] : memref<1x8x4xf32, #tpu.memory_space<vmem>>, vector<1x8x4xf32>
    %3 = vector.shape_cast %2 : vector<1x8x4xf32> to vector<8x4xf32>
    %4 = arith.addf %1, %3 : vector<8x4xf32>
    %c0_5 = arith.constant 0 : index
    %c0_6 = arith.constant 0 : index
    %5 = vector.load %arg3[%c0_5, %c0_6] : memref<4x1xf32, #tpu.memory_space<vmem>>, vector<4x1xf32>
    %cst = arith.constant dense<0.000000e+00> : vector<8x1xf32>
    %6 = tpu.matmul %4, %5, %cst {dimension_numbers = #tpu.dot_dimension_numbers<[1], [0], [0], [1], [0, 0, 1, 1], [], []>} : vector<8x4xf32>, vector<4x1xf32>, vector<8x1xf32> -> vector<8x1xf32>
    %c0_7 = arith.constant 0 : index
    %c0_8 = arith.constant 0 : index
    %7 = vector.load %arg4[%c0_7, %c0_8] : memref<1x1xf32, #tpu.memory_space<vmem>>, vector<1x1xf32>
    %8 = vector.broadcast %7 : vector<1x1xf32> to vector<8x1xf32>
    %9 = arith.addf %6, %8 : vector<8x1xf32>
    %c0_9 = arith.constant 0 : index
    %c0_10 = arith.constant 0 : index
    %c0_11 = arith.constant 0 : index
    %10 = vector.load %arg5[%c0_9, %c0_10, %c0_11] : memref<1x8x1xf32, #tpu.memory_space<vmem>>, vector<1x8x1xf32>
    %11 = vector.shape_cast %10 : vector<1x8x1xf32> to vector<8x1xf32>
    %12 = vector.shape_cast %9 : vector<8x1xf32> to vector<1x8x1xf32>
    tpu.vector_store %arg5[%c0_9, %c0_10, %c0_11], %12 {strides = array<i32>} : memref<1x8x1xf32, #tpu.memory_space<vmem>>, vector<1x8x1xf32>,
    return
  }
  func.func @transform_0(%arg0: i32) -> (i32, i32, i32) {
    %c0_i32 = arith.constant 0 : i32
    %c0_i32_0 = arith.constant 0 : i32
    %c0_i32_1 = arith.constant 0 : i32
    return %arg0, %c0_i32, %c0_i32_0 : i32, i32, i32
  }
  func.func @transform_1(%arg0: i32) -> (i32, i32, i32) {
    %c0_i32 = arith.constant 0 : i32
    %c0_i32_0 = arith.constant 0 : i32
    %c0_i32_1 = arith.constant 0 : i32
    return %arg0, %c0_i32, %c0_i32_0 : i32, i32, i32
  }
  func.func @transform_2(%arg0: i32) -> (i32, i32) {
    %c0_i32 = arith.constant 0 : i32
    %c0_i32_0 = arith.constant 0 : i32
    %c0_i32_1 = arith.constant 0 : i32
    return %c0_i32, %c0_i32_0 : i32, i32
  }
  func.func @transform_3(%arg0: i32) -> (i32, i32) {
    %c0_i32 = arith.constant 0 : i32
    %c0_i32_0 = arith.constant 0 : i32
    %c0_i32_1 = arith.constant 0 : i32
    return %c0_i32, %c0_i32_0 : i32, i32
  }
  func.func @transform_4(%arg0: i32) -> (i32, i32, i32) {
    %c0_i32 = arith.constant 0 : i32
    %c0_i32_0 = arith.constant 0 : i32
    %c0_i32_1 = arith.constant 0 : i32
    return %arg0, %c0_i32, %c0_i32_0 : i32, i32, i32
  }
}

</mosaic_0001>

<llo_original>
// kernel: autoformer_forward.22
$region0: #{autoformer_forward.22}
  #allocation0 [shape = 'u32[]', space=smem, size = 0x4, offset = 0x4, fixed_abs, tag = 'smem constant byte address 0x4 - core index']
  #allocation1 [shape = 'u32[72,128]{1,0:T(1,128)}', space=vmem, size = 0x9000, scoped, tag = 'internal scratch']
  %s0 = inlined_call_operand.vmem [shape: f32[16,16], index: 0, kind: input, shape index: {}]
  %s1 = inlined_call_operand.vmem [shape: f32[2,16,4], index: 1, kind: input, shape index: {}]
  %s2 = inlined_call_operand.vmem [shape: f32[2,16,4], index: 2, kind: output, shape index: {0}]
  %s3 = inlined_call_operand.vmem [shape: f32[2,16,4], index: 3, kind: output, shape index: {1}]
  %4 = xla_tuple %s2, %s3
  %s5 = sld [smem:[#allocation0]]
  $region49: #{autoformer_forward.22} parent=0
    _
  %s7 = ssub.s32 1, %s5
  %s8 = scalar_select 0, %s7, %s5
  loop: start=0, step=1, limit=4
  $region2: #{autoformer_forward.22} parent=0 // loop_pre_header
    _
  $region3: #{autoformer_forward.22} parent=0 // loop_header
    %s10 = sphi 0, %s14
    %p11 = scmp.ge.s32.totalorder %s10, 4
    %s18 = sphi 0, %s18
    %s20 = sphi 0, %s18
    %s21 = sphi 0, %s20
    %s35 = sphi 0, %s21
    %s41 = sphi 0, %s43
    %s44 = sphi 0, %s41
    %s45 = sphi 0, %s44
    %s61 = sphi 0, %s45
    %s67 = sphi 0, %s69
    %s70 = sphi 0, %s67
    %s71 = sphi 0, %s70
    %s87 = sphi 0, %s71
    %s93 = sphi 0, %s95
    %s96 = sphi 0, %s93
    %s97 = sphi 0, %s96
    %s113 = sphi 0, %s97
  $region4: #{autoformer_forward.22} parent=0 // loop_header_branch
    %13 = sbr.rel (%p11) target = $region8
  $region5: #{autoformer_forward.22} parent=0 // loop_body
    %s15 = ssub.s32 %s10, 1
    %s16 = ssub.s32 %s10, 2
    %s17 = sadd.s32 %s10, 1
    %s19 = sadd.s32 %s18, 1
    %p22 = scmp.eq.s32.totalorder %s10, 1
    %p23 = scmp.ne.s32.totalorder %s18, %s20
    %p24 = scmp.eq.s32.totalorder %s10, 0
    %p25 = por %p23, %p24
    %p26 = scmp.ne.s32.totalorder %s18, %s20
    %p27 = scmp.eq.s32.totalorder %s15, 1
    %p28 = por %p26, %p27
    %p29 = scmp.ne.s32.totalorder %s20, %s21
    %p30 = scmp.eq.s32.totalorder %s15, 0
    %p31 = por %p29, %p30
    %p32 = scmp.ne.s32.totalorder %s20, %s21
    %p33 = scmp.eq.s32.totalorder %s16, 1
    %p34 = por %p32, %p33
    %p36 = scmp.ne.s32.totalorder %s21, %s35
    %p37 = scmp.eq.s32.totalorder %s16, 0
    %p38 = por %p36, %p37
    %s39 = ssub.s32 %s10, %s17
    %p40 = scmp.eq.s32.totalorder %s39, 0
    %s42 = sadd.s32 %s41, 1
    %s43 = scalar_select %p40, %s41, %s42
    %p46 = pneg %p40
    %p47 = scmp.eq.s32.totalorder %s10, 1
    %p48 = por %p46, %p47
    %p49 = scmp.ne.s32.totalorder %s41, %s44
    %p50 = scmp.eq.s32.totalorder %s10, 0
    %p51 = por %p49, %p50
    %p52 = scmp.ne.s32.totalorder %s41, %s44
    %p53 = scmp.eq.s32.totalorder %s15, 1
    %p54 = por %p52, %p53
    %p55 = scmp.ne.s32.totalorder %s44, %s45
    %p56 = scmp.eq.s32.totalorder %s15, 0
    %p57 = por %p55, %p56
    %p58 = scmp.ne.s32.totalorder %s44, %s45
    %p59 = scmp.eq.s32.totalorder %s16, 1
    %p60 = por %p58, %p59
    %p62 = scmp.ne.s32.totalorder %s45, %s61
    %p63 = scmp.eq.s32.totalorder %s16, 0
    %p64 = por %p62, %p63
    %s65 = ssub.s32 %s10, %s17
    %p66 = scmp.eq.s32.totalorder %s65, 0
    %s68 = sadd.s32 %s67, 1
    %s69 = scalar_select %p66, %s67, %s68
    %p72 = pneg %p66
    %p73 = scmp.eq.s32.totalorder %s10, 1
    %p74 = por %p72, %p73
    %p75 = scmp.ne.s32.totalorder %s67, %s70
    %p76 = scmp.eq.s32.totalorder %s10, 0
    %p77 = por %p75, %p76
    %p78 = scmp.ne.s32.totalorder %s67, %s70
    %p79 = scmp.eq.s32.totalorder %s15, 1
    %p80 = por %p78, %p79
    %p81 = scmp.ne.s32.totalorder %s70, %s71
    %p82 = scmp.eq.s32.totalorder %s15, 0
    %p83 = por %p81, %p82
    %p84 = scmp.ne.s32.totalorder %s70, %s71
    %p85 = scmp.eq.s32.totalorder %s16, 1
    %p86 = por %p84, %p85
    %p88 = scmp.ne.s32.totalorder %s71, %s87
    %p89 = scmp.eq.s32.totalorder %s16, 0
    %p90 = por %p88, %p89
    %s91 = ssub.s32 %s10, %s17
    %p92 = scmp.eq.s32.totalorder %s91, 0
    %s94 = sadd.s32 %s93, 1
    %s95 = scalar_select %p92, %s93, %s94
    %p98 = pneg %p92
    %p99 = scmp.eq.s32.totalorder %s10, 1
    %p100 = por %p98, %p99
    %p101 = scmp.ne.s32.totalorder %s93, %s96
    %p102 = scmp.eq.s32.totalorder %s10, 0
    %p103 = por %p101, %p102
    %p104 = scmp.ne.s32.totalorder %s93, %s96
    %p105 = scmp.eq.s32.totalorder %s15, 1
    %p106 = por %p104, %p105
    %p107 = scmp.ne.s32.totalorder %s96, %s97
    %p108 = scmp.eq.s32.totalorder %s15, 0
    %p109 = por %p107, %p108
    %p110 = scmp.ne.s32.totalorder %s96, %s97
    %p111 = scmp.eq.s32.totalorder %s16, 1
    %p112 = por %p110, %p111
    %p114 = scmp.ne.s32.totalorder %s97, %s113
    %p115 = scmp.eq.s32.totalorder %s16, 0
    %p116 = por %p114, %p115
    %p117 = scmp.le.s32.totalorder 1, %s10
    %p118 = scmp.lt.s32.totalorder %s10, 3
    %p119 = pnand %p117, %p118
    %p120 = pneg %p119
    // Predicated region
    $region9: #{autoformer_forward.22} parent=5 // pred_check
      _
    $region10: #{autoformer_forward.22} parent=5 // pred_check_branch
      %122 = sbr.rel (%p119) target = $region12
    $region11: #{autoformer_forward.22} parent=5 // pred_region
      %s123 = ssub.s32 %s10, 1
      // Predicated region
      $region13: #{autoformer_forward.22} parent=11 // pred_check
        %p124 = pneg %p31
      $region14: #{autoformer_forward.22} parent=11 // pred_check_branch
        %126 = sbr.rel (%p124) target = $region16
      $region15: #{autoformer_forward.22} parent=11 // pred_region
        _
      $region16: #{autoformer_forward.22} parent=11 // pred_fallthru
        _
    $region12: #{autoformer_forward.22} parent=5 // pred_fallthru
      _
    %p127 = scmp.lt.s32.totalorder %s10, 2
    // Predicated region
    $region17: #{autoformer_forward.22} parent=5 // pred_check
      %p128 = pneg %p127
    $region18: #{autoformer_forward.22} parent=5 // pred_check_branch
      %130 = sbr.rel (%p128) target = $region20
    $region19: #{autoformer_forward.22} parent=5 // pred_region
      // Predicated region
      $region21: #{autoformer_forward.22} parent=19 // pred_check
        %p131 = pneg %p51
      $region22: #{autoformer_forward.22} parent=19 // pred_check_branch
        %133 = sbr.rel (%p131) target = $region24
      $region23: #{autoformer_forward.22} parent=19 // pred_region
        %p134 = scmp.lt.s32.totalorder %s10, 1
        %s135 = scalar_select %p134, %s10, 1
        %s136 = smul.addr %s135, 2
        %s137 = smul.addr %s136, 8
        %s138 = scalar_lea.vmem %s1, %s137
      $region24: #{autoformer_forward.22} parent=19 // pred_fallthru
        _
    $region20: #{autoformer_forward.22} parent=5 // pred_fallthru
      _
    %p139 = scmp.le.s32.totalorder 1, %s10
    %p140 = scmp.lt.s32.totalorder %s10, 3
    %p141 = pnand %p139, %p140
    %p142 = pneg %p141
    // Predicated region
    $region25: #{autoformer_forward.22} parent=5 // pred_check
      _
    $region26: #{autoformer_forward.22} parent=5 // pred_check_branch
      %144 = sbr.rel (%p141) target = $region28
    $region27: #{autoformer_forward.22} parent=5 // pred_region
      %s145 = ssub.s32 %s10, 1
      %p146 = pneg %p31
      %p147 = pneg %p28
      %p148 = scmp.lt.s32.totalorder %s15, 1
      %s149 = scalar_select %p148, %s15, 1
      %s150 = smul.addr %s149, 2
      %s151 = smul.addr %s150, 8
      %s152 = scalar_lea.vmem %s1, %s151
      %p153 = pneg %p57
      %p154 = pneg %p54
      %p155 = pneg %p83
      %p156 = pneg %p80
      %p157 = scmp.lt.s32.totalorder %s15, 1
      %s158 = scalar_select %p157, %s15, 1
      %s159 = smul.addr %s158, 2
      %s160 = smul.addr %s159, 8
      %s161 = scalar_lea.vmem %s2, %s160
      %p162 = pneg %p109
      %p163 = pneg %p106
      %p164 = scmp.lt.s32.totalorder %s15, 1
      %s165 = scalar_select %p164, %s15, 1
      %s166 = smul.addr %s165, 2
      %s167 = smul.addr %s166, 8
      %s168 = scalar_lea.vmem %s3, %s167
      %p169 = scmp.lt.s32.totalorder %s15, 1
      %s170 = scalar_select %p169, %s15, 1
      %s171 = smul.addr %s170, 2
      %s172 = smul.addr %s171, 8
      %s173 = scalar_lea.vmem %s1, %s172
      %p174 = scmp.lt.s32.totalorder %s15, 1
      %s175 = scalar_select %p174, %s15, 1
      %s176 = smul.addr %s175, 2
      %s177 = smul.addr %s176, 8
      %s178 = scalar_lea.vmem %s2, %s177
      %p179 = scmp.lt.s32.totalorder %s15, 1
      %s180 = scalar_select %p179, %s15, 1
      %s181 = smul.addr %s180, 2
      %s182 = smul.addr %s181, 8
      %s183 = scalar_lea.vmem %s3, %s182
      %v184 = vld [vmem:[%s173] sm:$0xff]
      %v185 = vld [vmem:[%s173 + $0x8] sm:$0xff]
      %v186 = vld [vmem:[%s0] sm:$0xff]
      %v187 = vld [vmem:[%s0 + $0x8] sm:$0xff]
      %vm188 = vcmask 130048
      %v190 = vsel %vm188, %v186, 0
      %v193 = vsel %vm188, %v187, 0
      %195 = vmatpush.msra.mxu0 0.0
      %196 = vmatpush.msra.mxu0 0.0
      %197 = vmatpush.msra.mxu0 0.0
      %198 = vmatpush.msra.mxu0 0.0
      %199 = vmatpush.msra.mxu0 0.0
      %200 = vmatpush.msra.mxu0 0.0
      %201 = vmatpush.msra.mxu0 0.0
      %202 = vmatpush.msra.mxu0 0.0
      %203 = vmatpush.msra.mxu0 0.0
      %204 = vmatpush.msra.mxu0 0.0
      %205 = vmatpush.msra.mxu0 0.0
      %206 = vmatpush.msra.mxu0 0.0
      %207 = vmatpush.msra.mxu0 0.0
      %208 = vmatpush.msra.mxu0 0.0
      %209 = vmatpush.msra.mxu0 %v185
      %210 = vmatpush.msra.mxu0 %v184
      %211 = vmatmul.f32.gmra.mxu0 %v190
      %v212 = vpop.f32.mrf.mxu0
      %v213 = vadd.f32 0.0, %v212
      %214 = vmatmul.f32.gmra.mxu0 %v193
      %v215 = vpop.f32.mrf.mxu0
      %v216 = vadd.f32 0.0, %v215
      %217 = vdwg.mxu0
      %vm218 = vcmask 31744
      %219 = vst.msk [vmem:[%s183] sm:$0xff] %vm218, %v213
      %220 = vst.msk [vmem:[%s183 + $0x8] sm:$0xff] %vm218, %v216
      %v221 = vsub.f32 %v184, %v213
      %v222 = vsub.f32 %v185, %v216
      %223 = vst.msk [vmem:[%s178] sm:$0xff] %vm218, %v221
      %224 = vst.msk [vmem:[%s178 + $0x8] sm:$0xff] %vm218, %v222
      %p225 = scmp.lt.s32.totalorder %s15, 1
      %s226 = scalar_select %p225, %s15, 1
      %s227 = smul.addr %s226, 2
      %s228 = smul.addr %s227, 8
      %s229 = scalar_lea.vmem %s2, %s228
      %p230 = scmp.lt.s32.totalorder %s15, 1
      %s231 = scalar_select %p230, %s15, 1
      %s232 = smul.addr %s231, 2
      %s233 = smul.addr %s232, 8
      %s234 = scalar_lea.vmem %s3, %s233
      // Predicated region
      $region29: #{autoformer_forward.22} parent=27 // pred_check
        %p235 = pneg %p80
      $region30: #{autoformer_forward.22} parent=27 // pred_check_branch
        %237 = sbr.rel (%p235) target = $region32
      $region31: #{autoformer_forward.22} parent=27 // pred_region
        _
      $region32: #{autoformer_forward.22} parent=27 // pred_fallthru
        _
      // Predicated region
      $region33: #{autoformer_forward.22} parent=27 // pred_check
        %p238 = pneg %p106
      $region34: #{autoformer_forward.22} parent=27 // pred_check_branch
        %240 = sbr.rel (%p238) target = $region36
      $region35: #{autoformer_forward.22} parent=27 // pred_region
        _
      $region36: #{autoformer_forward.22} parent=27 // pred_fallthru
        _
    $region28: #{autoformer_forward.22} parent=5 // pred_fallthru
      _
    %p241 = scmp.le.s32.totalorder 2, %s10
    // Predicated region
    $region37: #{autoformer_forward.22} parent=5 // pred_check
      %p242 = pneg %p241
    $region38: #{autoformer_forward.22} parent=5 // pred_check_branch
      %244 = sbr.rel (%p242) target = $region40
    $region39: #{autoformer_forward.22} parent=5 // pred_region
      %s245 = ssub.s32 %s10, 2
      // Predicated region
      $region41: #{autoformer_forward.22} parent=39 // pred_check
        %p246 = pneg %p86
      $region42: #{autoformer_forward.22} parent=39 // pred_check_branch
        %248 = sbr.rel (%p246) target = $region44
      $region43: #{autoformer_forward.22} parent=39 // pred_region
        %p249 = scmp.lt.s32.totalorder %s16, 1
        %s250 = scalar_select %p249, %s16, 1
        %s251 = smul.addr %s250, 2
        %s252 = smul.addr %s251, 8
        %s253 = scalar_lea.vmem %s2, %s252
      $region44: #{autoformer_forward.22} parent=39 // pred_fallthru
        _
      // Predicated region
      $region45: #{autoformer_forward.22} parent=39 // pred_check
        %p254 = pneg %p112
      $region46: #{autoformer_forward.22} parent=39 // pred_check_branch
        %256 = sbr.rel (%p254) target = $region48
      $region47: #{autoformer_forward.22} parent=39 // pred_region
        %p257 = scmp.lt.s32.totalorder %s16, 1
        %s258 = scalar_select %p257, %s16, 1
        %s259 = smul.addr %s258, 2
        %s260 = smul.addr %s259, 8
        %s261 = scalar_lea.vmem %s3, %s260
      $region48: #{autoformer_forward.22} parent=39 // pred_fallthru
        _
    $region40: #{autoformer_forward.22} parent=5 // pred_fallthru
      _
  $region6: #{autoformer_forward.22} parent=0 // loop_footer
    %s14 = sadd.s32 1, %s10
  $region7: #{autoformer_forward.22} parent=0 // loop_footer_branch
    %9 = sbr.rel target = $region3
  $region8: #{autoformer_forward.22} parent=0 // loop_exit
    _

// kernel: autoformer_forward.33
$region0: #{autoformer_forward.33}
  #allocation0 [shape = 'u32[]', space=smem, size = 0x4, offset = 0x4, fixed_abs, tag = 'smem constant byte address 0x4 - core index']
  #allocation1 [shape = 'u32[72,128]{1,0:T(1,128)}', space=vmem, size = 0x9000, scoped, tag = 'internal scratch']
  %s0 = inlined_call_operand.vmem [shape: f32[2,16,4], index: 0, kind: input, shape index: {}]
  %s1 = inlined_call_operand.vmem [shape: f32[2,16,4], index: 1, kind: input, shape index: {}]
  %s2 = inlined_call_operand.vmem [shape: f32[3,4,32], index: 2, kind: input, shape index: {}]
  %s3 = inlined_call_operand.vmem [shape: f32[4,32], index: 3, kind: input, shape index: {}]
  %s4 = inlined_call_operand.vmem [shape: f32[16,16], index: 4, kind: input, shape index: {}]
  %s5 = inlined_call_operand.vmem [shape: f32[16,16], index: 5, kind: input, shape index: {}]
  %s6 = inlined_call_operand.vmem [shape: f32[2,16,32], index: 6, kind: output, shape index: {}]
  %s7 = sld [smem:[#allocation0]]
  $region57: #{autoformer_forward.33} parent=0
    _
  %s9 = ssub.s32 1, %s7
  %s10 = scalar_select 0, %s9, %s7
  loop: start=0, step=1, limit=4
  $region2: #{autoformer_forward.33} parent=0 // loop_pre_header
    _
  $region3: #{autoformer_forward.33} parent=0 // loop_header
    %s12 = sphi 0, %s16
    %p13 = scmp.ge.s32.totalorder %s12, 4
    %s22 = sphi 0, %s24
    %s25 = sphi 0, %s22
    %s26 = sphi 0, %s25
    %s42 = sphi 0, %s26
    %s48 = sphi 0, %s50
    %s51 = sphi 0, %s48
    %s52 = sphi 0, %s51
    %s68 = sphi 0, %s52
    %s72 = sphi 0, %s72
    %s74 = sphi 0, %s72
    %s75 = sphi 0, %s74
    %s89 = sphi 0, %s75
    %s93 = sphi 0, %s93
    %s95 = sphi 0, %s93
    %s96 = sphi 0, %s95
    %s110 = sphi 0, %s96
    %s114 = sphi 0, %s114
    %s116 = sphi 0, %s114
    %s117 = sphi 0, %s116
    %s131 = sphi 0, %s117
    %s135 = sphi 0, %s135
    %s137 = sphi 0, %s135
    %s138 = sphi 0, %s137
    %s152 = sphi 0, %s138
    %s158 = sphi 0, %s160
    %s161 = sphi 0, %s158
    %s162 = sphi 0, %s161
    %s178 = sphi 0, %s162
  $region4: #{autoformer_forward.33} parent=0 // loop_header_branch
    %15 = sbr.rel (%p13) target = $region8
  $region5: #{autoformer_forward.33} parent=0 // loop_body
    %s17 = ssub.s32 %s12, 1
    %s18 = ssub.s32 %s12, 2
    %s19 = sadd.s32 %s12, 1
    %s20 = ssub.s32 %s12, %s19
    %p21 = scmp.eq.s32.totalorder %s20, 0
    %s23 = sadd.s32 %s22, 1
    %s24 = scalar_select %p21, %s22, %s23
    %p27 = pneg %p21
    %p28 = scmp.eq.s32.totalorder %s12, 1
    %p29 = por %p27, %p28
    %p30 = scmp.ne.s32.totalorder %s22, %s25
    %p31 = scmp.eq.s32.totalorder %s12, 0
    %p32 = por %p30, %p31
    %p33 = scmp.ne.s32.totalorder %s22, %s25
    %p34 = scmp.eq.s32.totalorder %s17, 1
    %p35 = por %p33, %p34
    %p36 = scmp.ne.s32.totalorder %s25, %s26
    %p37 = scmp.eq.s32.totalorder %s17, 0
    %p38 = por %p36, %p37
    %p39 = scmp.ne.s32.totalorder %s25, %s26
    %p40 = scmp.eq.s32.totalorder %s18, 1
    %p41 = por %p39, %p40
    %p43 = scmp.ne.s32.totalorder %s26, %s42
    %p44 = scmp.eq.s32.totalorder %s18, 0
    %p45 = por %p43, %p44
    %s46 = ssub.s32 %s12, %s19
    %p47 = scmp.eq.s32.totalorder %s46, 0
    %s49 = sadd.s32 %s48, 1
    %s50 = scalar_select %p47, %s48, %s49
    %p53 = pneg %p47
    %p54 = scmp.eq.s32.totalorder %s12, 1
    %p55 = por %p53, %p54
    %p56 = scmp.ne.s32.totalorder %s48, %s51
    %p57 = scmp.eq.s32.totalorder %s12, 0
    %p58 = por %p56, %p57
    %p59 = scmp.ne.s32.totalorder %s48, %s51
    %p60 = scmp.eq.s32.totalorder %s17, 1
    %p61 = por %p59, %p60
    %p62 = scmp.ne.s32.totalorder %s51, %s52
    %p63 = scmp.eq.s32.totalorder %s17, 0
    %p64 = por %p62, %p63
    %p65 = scmp.ne.s32.totalorder %s51, %s52
    %p66 = scmp.eq.s32.totalorder %s18, 1
    %p67 = por %p65, %p66
    %p69 = scmp.ne.s32.totalorder %s52, %s68
    %p70 = scmp.eq.s32.totalorder %s18, 0
    %p71 = por %p69, %p70
    %s73 = sadd.s32 %s72, 1
    %p76 = scmp.eq.s32.totalorder %s12, 1
    %p77 = scmp.ne.s32.totalorder %s72, %s74
    %p78 = scmp.eq.s32.totalorder %s12, 0
    %p79 = por %p77, %p78
    %p80 = scmp.ne.s32.totalorder %s72, %s74
    %p81 = scmp.eq.s32.totalorder %s17, 1
    %p82 = por %p80, %p81
    %p83 = scmp.ne.s32.totalorder %s74, %s75
    %p84 = scmp.eq.s32.totalorder %s17, 0
    %p85 = por %p83, %p84
    %p86 = scmp.ne.s32.totalorder %s74, %s75
    %p87 = scmp.eq.s32.totalorder %s18, 1
    %p88 = por %p86, %p87
    %p90 = scmp.ne.s32.totalorder %s75, %s89
    %p91 = scmp.eq.s32.totalorder %s18, 0
    %p92 = por %p90, %p91
    %s94 = sadd.s32 %s93, 1
    %p97 = scmp.eq.s32.totalorder %s12, 1
    %p98 = scmp.ne.s32.totalorder %s93, %s95
    %p99 = scmp.eq.s32.totalorder %s12, 0
    %p100 = por %p98, %p99
    %p101 = scmp.ne.s32.totalorder %s93, %s95
    %p102 = scmp.eq.s32.totalorder %s17, 1
    %p103 = por %p101, %p102
    %p104 = scmp.ne.s32.totalorder %s95, %s96
    %p105 = scmp.eq.s32.totalorder %s17, 0
    %p106 = por %p104, %p105
    %p107 = scmp.ne.s32.totalorder %s95, %s96
    %p108 = scmp.eq.s32.totalorder %s18, 1
    %p109 = por %p107, %p108
    %p111 = scmp.ne.s32.totalorder %s96, %s110
    %p112 = scmp.eq.s32.totalorder %s18, 0
    %p113 = por %p111, %p112
    %s115 = sadd.s32 %s114, 1
    %p118 = scmp.eq.s32.totalorder %s12, 1
    %p119 = scmp.ne.s32.totalorder %s114, %s116
    %p120 = scmp.eq.s32.totalorder %s12, 0
    %p121 = por %p119, %p120
    %p122 = scmp.ne.s32.totalorder %s114, %s116
    %p123 = scmp.eq.s32.totalorder %s17, 1
    %p124 = por %p122, %p123
    %p125 = scmp.ne.s32.totalorder %s116, %s117
    %p126 = scmp.eq.s32.totalorder %s17, 0
    %p127 = por %p125, %p126
    %p128 = scmp.ne.s32.totalorder %s116, %s117
    %p129 = scmp.eq.s32.totalorder %s18, 1
    %p130 = por %p128, %p129
    %p132 = scmp.ne.s32.totalorder %s117, %s131
    %p133 = scmp.eq.s32.totalorder %s18, 0
    %p134 = por %p132, %p133
    %s136 = sadd.s32 %s135, 1
    %p139 = scmp.eq.s32.totalorder %s12, 1
    %p140 = scmp.ne.s32.totalorder %s135, %s137
    %p141 = scmp.eq.s32.totalorder %s12, 0
    %p142 = por %p140, %p141
    %p143 = scmp.ne.s32.totalorder %s135, %s137
    %p144 = scmp.eq.s32.totalorder %s17, 1
    %p145 = por %p143, %p144
    %p146 = scmp.ne.s32.totalorder %s137, %s138
    %p147 = scmp.eq.s32.totalorder %s17, 0
    %p148 = por %p146, %p147
    %p149 = scmp.ne.s32.totalorder %s137, %s138
    %p150 = scmp.eq.s32.totalorder %s18, 1
    %p151 = por %p149, %p150
    %p153 = scmp.ne.s32.totalorder %s138, %s152
    %p154 = scmp.eq.s32.totalorder %s18, 0
    %p155 = por %p153, %p154
    %s156 = ssub.s32 %s12, %s19
    %p157 = scmp.eq.s32.totalorder %s156, 0
    %s159 = sadd.s32 %s158, 1
    %s160 = scalar_select %p157, %s158, %s159
    %p163 = pneg %p157
    %p164 = scmp.eq.s32.totalorder %s12, 1
    %p165 = por %p163, %p164
    %p166 = scmp.ne.s32.totalorder %s158, %s161
    %p167 = scmp.eq.s32.totalorder %s12, 0
    %p168 = por %p166, %p167
    %p169 = scmp.ne.s32.totalorder %s158, %s161
    %p170 = scmp.eq.s32.totalorder %s17, 1
    %p171 = por %p169, %p170
    %p172 = scmp.ne.s32.totalorder %s161, %s162
    %p173 = scmp.eq.s32.totalorder %s17, 0
    %p174 = por %p172, %p173
    %p175 = scmp.ne.s32.totalorder %s161, %s162
    %p176 = scmp.eq.s32.totalorder %s18, 1
    %p177 = por %p175, %p176
    %p179 = scmp.ne.s32.totalorder %s162, %s178
    %p180 = scmp.eq.s32.totalorder %s18, 0
    %p181 = por %p179, %p180
    %p182 = scmp.le.s32.totalorder 1, %s12
    %p183 = scmp.lt.s32.totalorder %s12, 3
    %p184 = pnand %p182, %p183
    %p185 = pneg %p184
    // Predicated region
    $region9: #{autoformer_forward.33} parent=5 // pred_check
      _
    $region10: #{autoformer_forward.33} parent=5 // pred_check_branch
      %187 = sbr.rel (%p184) target = $region12
    $region11: #{autoformer_forward.33} parent=5 // pred_region
      %s188 = ssub.s32 %s12, 1
      // Predicated region
      $region13: #{autoformer_forward.33} parent=11 // pred_check
        %p189 = pneg %p85
      $region14: #{autoformer_forward.33} parent=11 // pred_check_branch
        %191 = sbr.rel (%p189) target = $region16
      $region15: #{autoformer_forward.33} parent=11 // pred_region
        _
      $region16: #{autoformer_forward.33} parent=11 // pred_fallthru
        _
      // Predicated region
      $region17: #{autoformer_forward.33} parent=11 // pred_check
        %p192 = pneg %p106
      $region18: #{autoformer_forward.33} parent=11 // pred_check_branch
        %194 = sbr.rel (%p192) target = $region20
      $region19: #{autoformer_forward.33} parent=11 // pred_region
        _
      $region20: #{autoformer_forward.33} parent=11 // pred_fallthru
        _
      // Predicated region
      $region21: #{autoformer_forward.33} parent=11 // pred_check
        %p195 = pneg %p127
      $region22: #{autoformer_forward.33} parent=11 // pred_check_branch
        %197 = sbr.rel (%p195) target = $region24
      $region23: #{autoformer_forward.33} parent=11 // pred_region
        _
      $region24: #{autoformer_forward.33} parent=11 // pred_fallthru
        _
      // Predicated region
      $region25: #{autoformer_forward.33} parent=11 // pred_check
        %p198 = pneg %p148
      $region26: #{autoformer_forward.33} parent=11 // pred_check_branch
        %200 = sbr.rel (%p198) target = $region28
      $region27: #{autoformer_forward.33} parent=11 // pred_region
        _
      $region28: #{autoformer_forward.33} parent=11 // pred_fallthru
        _
    $region12: #{autoformer_forward.33} parent=5 // pred_fallthru
      _
    %p201 = scmp.lt.s32.totalorder %s12, 2
    // Predicated region
    $region29: #{autoformer_forward.33} parent=5 // pred_check
      %p202 = pneg %p201
    $region30: #{autoformer_forward.33} parent=5 // pred_check_branch
      %204 = sbr.rel (%p202) target = $region32
    $region31: #{autoformer_forward.33} parent=5 // pred_region
      // Predicated region
      $region33: #{autoformer_forward.33} parent=31 // pred_check
        %p205 = pneg %p32
      $region34: #{autoformer_forward.33} parent=31 // pred_check_branch
        %207 = sbr.rel (%p205) target = $region36
      $region35: #{autoformer_forward.33} parent=31 // pred_region
        %p208 = scmp.lt.s32.totalorder %s12, 1
        %s209 = scalar_select %p208, %s12, 1
        %s210 = smul.addr %s209, 2
        %s211 = smul.addr %s210, 8
        %s212 = scalar_lea.vmem %s0, %s211
      $region36: #{autoformer_forward.33} parent=31 // pred_fallthru
        _
      // Predicated region
      $region37: #{autoformer_forward.33} parent=31 // pred_check
        %p213 = pneg %p58
      $region38: #{autoformer_forward.33} parent=31 // pred_check_branch
        %215 = sbr.rel (%p213) target = $region40
      $region39: #{autoformer_forward.33} parent=31 // pred_region
        %p216 = scmp.lt.s32.totalorder %s12, 1
        %s217 = scalar_select %p216, %s12, 1
        %s218 = smul.addr %s217, 2
        %s219 = smul.addr %s218, 8
        %s220 = scalar_lea.vmem %s1, %s219
      $region40: #{autoformer_forward.33} parent=31 // pred_fallthru
        _
    $region32: #{autoformer_forward.33} parent=5 // pred_fallthru
      _
    %p221 = scmp.le.s32.totalorder 1, %s12
    %p222 = scmp.lt.s32.totalorder %s12, 3
    %p223 = pnand %p221, %p222
    %p224 = pneg %p223
    // Predicated region
    $region41: #{autoformer_forward.33} parent=5 // pred_check
      _
    $region42: #{autoformer_forward.33} parent=5 // pred_check_branch
      %226 = sbr.rel (%p223) target = $region44
    $region43: #{autoformer_forward.33} parent=5 // pred_region
      %s227 = ssub.s32 %s12, 1
      %p228 = scmp.lt.s32.totalorder %s17, 1
      %s229 = scalar_select %p228, %s17, 1
      %s230 = smul.addr %s229, 2
      %s231 = smul.addr %s230, 8
      %s232 = scalar_lea.vmem %s0, %s231
      %p233 = pneg %p38
      %p234 = pneg %p35
      %p235 = scmp.lt.s32.totalorder %s17, 1
      %s236 = scalar_select %p235, %s17, 1
      %s237 = smul.addr %s236, 2
      %s238 = smul.addr %s237, 8
      %s239 = scalar_lea.vmem %s1, %s238
      %p240 = pneg %p64
      %p241 = pneg %p61
      %p242 = pneg %p85
      %p243 = pneg %p82
      %p244 = pneg %p106
      %p245 = pneg %p103
      %p246 = pneg %p127
      %p247 = pneg %p124
      %p248 = pneg %p148
      %p249 = pneg %p145
      %p250 = pneg %p174
      %p251 = pneg %p171
      %p252 = scmp.lt.s32.totalorder %s17, 1
      %s253 = scalar_select %p252, %s17, 1
      %s254 = smul.addr %s253, 2
      %s255 = smul.addr %s254, 8
      %s256 = scalar_lea.vmem %s6, %s255
      %p257 = scmp.lt.s32.totalorder %s17, 1
      %s258 = scalar_select %p257, %s17, 1
      %s259 = smul.addr %s258, 2
      %s260 = smul.addr %s259, 8
      %s261 = scalar_lea.vmem %s0, %s260
      %p262 = scmp.lt.s32.totalorder %s17, 1
      %s263 = scalar_select %p262, %s17, 1
      %s264 = smul.addr %s263, 2
      %s265 = smul.addr %s264, 8
      %s266 = scalar_lea.vmem %s1, %s265
      %p267 = scmp.lt.s32.totalorder %s17, 1
      %s268 = scalar_select %p267, %s17, 1
      %s269 = smul.addr %s268, 2
      %s270 = smul.addr %s269, 8
      %s271 = scalar_lea.vmem %s6, %s270
      %v272 = vld [vmem:[%s261] sm:$0xff]
      %v273 = vld [vmem:[%s261 + $0x8] sm:$0xff]
      %v274 = vld [vmem:[%s4] sm:$0xff]
      %v275 = vld [vmem:[%s4 + $0x8] sm:$0xff]
      %v276 = vld [vmem:[%s5] sm:$0xff]
      %v277 = vld [vmem:[%s5 + $0x8] sm:$0xff]
      %v278 = vld [vmem:[%s2] sm:$0xf]
      %vm279 = vcmask 31744
      %v281 = vsel %vm279, %v272, 0
      %v284 = vsel %vm279, %v273, 0
      %vm286 = vcmask 1043456
      %v288 = vsel %vm286, %v278, 0
      %290 = vmatpush.msra.mxu0 0.0
      %291 = vmatpush.msra.mxu0 0.0
      %292 = vmatpush.msra.mxu0 0.0
      %293 = vmatpush.msra.mxu0 0.0
      %294 = vmatpush.msra.mxu0 0.0
      %295 = vmatpush.msra.mxu0 0.0
      %296 = vmatpush.msra.mxu0 0.0
      %297 = vmatpush.msra.mxu0 0.0
      %298 = vmatpush.msra.mxu0 0.0
      %299 = vmatpush.msra.mxu0 0.0
      %300 = vmatpush.msra.mxu0 0.0
      %301 = vmatpush.msra.mxu0 0.0
      %302 = vmatpush.msra.mxu0 0.0
      %303 = vmatpush.msra.mxu0 0.0
      %304 = vmatpush.msra.mxu0 0.0
      %305 = vmatpush.msra.mxu0 %v288
      %306 = vmatmul.f32.gmra.mxu0 %v281
      %v307 = vpop.f32.mrf.mxu0
      %v308 = vadd.f32 0.0, %v307
      %309 = vmatmul.f32.gmra.mxu0 %v284
      %v310 = vpop.f32.mrf.mxu0
      %v311 = vadd.f32 0.0, %v310
      %312 = vdwg.mxu0
      %s313 = scalar_lea.vmem %s2, 4
      %v314 = vld [vmem:[%s313] sm:$0xf]
      %v316 = vsel %vm286, %v314, 0
      %318 = vmatpush.msra.mxu0 0.0
      %319 = vmatpush.msra.mxu0 0.0
      %320 = vmatpush.msra.mxu0 0.0
      %321 = vmatpush.msra.mxu0 0.0
      %322 = vmatpush.msra.mxu0 0.0
      %323 = vmatpush.msra.mxu0 0.0
      %324 = vmatpush.msra.mxu0 0.0
      %325 = vmatpush.msra.mxu0 0.0
      %326 = vmatpush.msra.mxu0 0.0
      %327 = vmatpush.msra.mxu0 0.0
      %328 = vmatpush.msra.mxu0 0.0
      %329 = vmatpush.msra.mxu0 0.0
      %330 = vmatpush.msra.mxu0 0.0
      %331 = vmatpush.msra.mxu0 0.0
      %332 = vmatpush.msra.mxu0 0.0
      %333 = vmatpush.msra.mxu0 %v316
      %334 = vmatmul.f32.gmra.mxu0 %v281
      %v335 = vpop.f32.mrf.mxu0
      %v336 = vadd.f32 0.0, %v335
      %337 = vmatmul.f32.gmra.mxu0 %v284
      %v338 = vpop.f32.mrf.mxu0
      %v339 = vadd.f32 0.0, %v338
      %340 = vdwg.mxu0
      %s341 = scalar_lea.vmem %s2, 8
      %v342 = vld [vmem:[%s341] sm:$0xf]
      %v344 = vsel %vm286, %v342, 0
      %346 = vmatpush.msra.mxu0 0.0
      %347 = vmatpush.msra.mxu0 0.0
      %348 = vmatpush.msra.mxu0 0.0
      %349 = vmatpush.msra.mxu0 0.0
      %350 = vmatpush.msra.mxu0 0.0
      %351 = vmatpush.msra.mxu0 0.0
      %352 = vmatpush.msra.mxu0 0.0
      %353 = vmatpush.msra.mxu0 0.0
      %354 = vmatpush.msra.mxu0 0.0
      %355 = vmatpush.msra.mxu0 0.0
      %356 = vmatpush.msra.mxu0 0.0
      %357 = vmatpush.msra.mxu0 0.0
      %358 = vmatpush.msra.mxu0 0.0
      %359 = vmatpush.msra.mxu0 0.0
      %360 = vmatpush.msra.mxu0 0.0
      %361 = vmatpush.msra.mxu0 %v344
      %362 = vmatmul.f32.gmra.mxu0 %v281
      %v363 = vpop.f32.mrf.mxu0
      %v364 = vadd.f32 0.0, %v363
      %365 = vmatmul.f32.gmra.mxu0 %v284
      %v366 = vpop.f32.mrf.mxu0
      %v367 = vadd.f32 0.0, %v366
      %368 = vdwg.mxu0
      %vm369 = vcmask 130048
      %v371 = vsel %vm369, %v274, 0
      %v374 = vsel %vm369, %v275, 0
      %376 = vmatpush.msra.mxu0 0.0
      %377 = vmatpush.msra.mxu0 0.0
      %378 = vmatpush.msra.mxu0 0.0
      %379 = vmatpush.msra.mxu0 0.0
      %380 = vmatpush.msra.mxu0 0.0
      %381 = vmatpush.msra.mxu0 0.0
      %382 = vmatpush.msra.mxu0 0.0
      %383 = vmatpush.msra.mxu0 0.0
      %384 = vmatpush.msra.mxu0 0.0
      %385 = vmatpush.msra.mxu0 0.0
      %386 = vmatpush.msra.mxu0 0.0
      %387 = vmatpush.msra.mxu0 0.0
      %388 = vmatpush.msra.mxu0 0.0
      %389 = vmatpush.msra.mxu0 0.0
      %390 = vmatpush.msra.mxu0 %v311
      %391 = vmatpush.msra.mxu0 %v308
      %392 = vmatmul.f32.gmra.mxu0 %v371
      %v393 = vpop.f32.mrf.mxu0
      %v394 = vadd.f32 %v336, %v393
      %395 = vmatmul.f32.gmra.mxu0 %v374
      %v396 = vpop.f32.mrf.mxu0
      %v397 = vadd.f32 %v339, %v396
      %398 = vdwg.mxu0
      %v400 = vsel %vm369, %v276, 0
      %v403 = vsel %vm369, %v277, 0
      %405 = vmatpush.msra.mxu0 0.0
      %406 = vmatpush.msra.mxu0 0.0
      %407 = vmatpush.msra.mxu0 0.0
      %408 = vmatpush.msra.mxu0 0.0
      %409 = vmatpush.msra.mxu0 0.0
      %410 = vmatpush.msra.mxu0 0.0
      %411 = vmatpush.msra.mxu0 0.0
      %412 = vmatpush.msra.mxu0 0.0
      %413 = vmatpush.msra.mxu0 0.0
      %414 = vmatpush.msra.mxu0 0.0
      %415 = vmatpush.msra.mxu0 0.0
      %416 = vmatpush.msra.mxu0 0.0
      %417 = vmatpush.msra.mxu0 0.0
      %418 = vmatpush.msra.mxu0 0.0
      %419 = vmatpush.msra.mxu0 %v367
      %420 = vmatpush.msra.mxu0 %v364
      %421 = vmatmul.f32.gmra.mxu0 %v400
      %v422 = vpop.f32.mrf.mxu0
      %v423 = vadd.f32 0.0, %v422
      %424 = vmatmul.f32.gmra.mxu0 %v403
      %v425 = vpop.f32.mrf.mxu0
      %v426 = vadd.f32 0.0, %v425
      %427 = vdwg.mxu0
      %v428 = vadd.f32 %v394, %v423
      %v429 = vadd.f32 %v397, %v426
      %v430 = vld [vmem:[%s266] sm:$0xff]
      %v431 = vld [vmem:[%s266 + $0x8] sm:$0xff]
      %v432 = vld [vmem:[%s3] sm:$0xf]
      %v434 = vsel %vm279, %v430, 0
      %v437 = vsel %vm279, %v431, 0
      %v440 = vsel %vm286, %v432, 0
      %442 = vmatpush.msra.mxu0 0.0
      %443 = vmatpush.msra.mxu0 0.0
      %444 = vmatpush.msra.mxu0 0.0
      %445 = vmatpush.msra.mxu0 0.0
      %446 = vmatpush.msra.mxu0 0.0
      %447 = vmatpush.msra.mxu0 0.0
      %448 = vmatpush.msra.mxu0 0.0
      %449 = vmatpush.msra.mxu0 0.0
      %450 = vmatpush.msra.mxu0 0.0
      %451 = vmatpush.msra.mxu0 0.0
      %452 = vmatpush.msra.mxu0 0.0
      %453 = vmatpush.msra.mxu0 0.0
      %454 = vmatpush.msra.mxu0 0.0
      %455 = vmatpush.msra.mxu0 0.0
      %456 = vmatpush.msra.mxu0 0.0
      %457 = vmatpush.msra.mxu0 %v440
      %458 = vmatmul.f32.gmra.mxu0 %v434
      %v459 = vpop.f32.mrf.mxu0
      %v460 = vadd.f32 0.0, %v459
      %461 = vmatmul.f32.gmra.mxu0 %v437
      %v462 = vpop.f32.mrf.mxu0
      %v463 = vadd.f32 0.0, %v462
      %464 = vdwg.mxu0
      %v465 = vadd.f32 %v428, %v460
      %v466 = vadd.f32 %v429, %v463
      %vm467 = vcmask 261120
      %468 = vst.msk [vmem:[%s271] sm:$0xff] %vm467, %v465
      %469 = vst.msk [vmem:[%s271 + $0x8] sm:$0xff] %vm467, %v466
      %p470 = scmp.lt.s32.totalorder %s17, 1
      %s471 = scalar_select %p470, %s17, 1
      %s472 = smul.addr %s471, 2
      %s473 = smul.addr %s472, 8
      %s474 = scalar_lea.vmem %s6, %s473
      // Predicated region
      $region45: #{autoformer_forward.33} parent=43 // pred_check
        %p475 = pneg %p171
      $region46: #{autoformer_forward.33} parent=43 // pred_check_branch
        %477 = sbr.rel (%p475) target = $region48
      $region47: #{autoformer_forward.33} parent=43 // pred_region
        _
      $region48: #{autoformer_forward.33} parent=43 // pred_fallthru
        _
    $region44: #{autoformer_forward.33} parent=5 // pred_fallthru
      _
    %p478 = scmp.le.s32.totalorder 2, %s12
    // Predicated region
    $region49: #{autoformer_forward.33} parent=5 // pred_check
      %p479 = pneg %p478
    $region50: #{autoformer_forward.33} parent=5 // pred_check_branch
      %481 = sbr.rel (%p479) target = $region52
    $region51: #{autoformer_forward.33} parent=5 // pred_region
      %s482 = ssub.s32 %s12, 2
      // Predicated region
      $region53: #{autoformer_forward.33} parent=51 // pred_check
        %p483 = pneg %p177
      $region54: #{autoformer_forward.33} parent=51 // pred_check_branch
        %485 = sbr.rel (%p483) target = $region56
      $region55: #{autoformer_forward.33} parent=51 // pred_region
        %p486 = scmp.lt.s32.totalorder %s18, 1
        %s487 = scalar_select %p486, %s18, 1
        %s488 = smul.addr %s487, 2
        %s489 = smul.addr %s488, 8
        %s490 = scalar_lea.vmem %s6, %s489
      $region56: #{autoformer_forward.33} parent=51 // pred_fallthru
        _
    $region52: #{autoformer_forward.33} parent=5 // pred_fallthru
      _
  $region6: #{autoformer_forward.33} parent=0 // loop_footer
    %s16 = sadd.s32 1, %s12
  $region7: #{autoformer_forward.33} parent=0 // loop_footer_branch
    %11 = sbr.rel target = $region3
  $region8: #{autoformer_forward.33} parent=0 // loop_exit
    _

// kernel: autoformer_forward.34
$region0: #{autoformer_forward.34}
  #allocation0 [shape = 'u32[]', space=smem, size = 0x4, offset = 0x4, fixed_abs, tag = 'smem constant byte address 0x4 - core index']
  #allocation1 [shape = 'u32[72,128]{1,0:T(1,128)}', space=vmem, size = 0x9000, scoped, tag = 'internal scratch']
  %s0 = inlined_call_operand.vmem [shape: f32[2,16,32], index: 0, kind: input, shape index: {}]
  %s1 = inlined_call_operand.vmem [shape: f32[32,32], index: 1, kind: input, shape index: {}]
  %s2 = inlined_call_operand.vmem [shape: f32[1,32], index: 2, kind: input, shape index: {}]
  %s3 = inlined_call_operand.vmem [shape: f32[32,32], index: 3, kind: input, shape index: {}]
  %s4 = inlined_call_operand.hbm [shape: f32[1,32], index: 4, kind: input, shape index: {}]
  %s5 = inlined_call_operand.vmem [shape: f32[32,32], index: 5, kind: input, shape index: {}]
  %s6 = inlined_call_operand.hbm [shape: f32[1,32], index: 6, kind: input, shape index: {}]
  %s7 = inlined_call_operand.vmem [shape: f32[16,16], index: 7, kind: input, shape index: {}]
  %s8 = inlined_call_operand.vmem [shape: f32[16,16], index: 8, kind: input, shape index: {}]
  %s9 = inlined_call_operand.vmem [shape: f32[2,16,1], index: 9, kind: output, shape index: {0}]
  %s10 = inlined_call_operand.vmem [shape: f32[2,16,32], index: 10, kind: output, shape index: {1}]
  %11 = xla_tuple %s9, %s10
  %s12 = sld [smem:[#allocation0]]
  $region85: #{autoformer_forward.34} parent=0
    _
  %s14 = ssub.s32 1, %s12
  %s15 = scalar_select 0, %s14, %s12
  $region1: #{autoformer_forward.34} parent=0
    #allocation2 [shape = 'u8[512]{0}', space=vmem, size = 0x400, scoped, tag = 'input window, operand 4, single buffered']
    #allocation3 [shape = 's32[2]{0}', space=sflag, size = 0x8, scoped, tag = 'scoped memory for autoformer_forward.34']
    #allocation4 [shape = 'u8[512]{0}', space=vmem, size = 0x400, scoped, tag = 'input window, operand 6, single buffered']
    #allocation5 [shape = 's32[1]{0}', space=sflag, size = 0x4, scoped, tag = 'scoped memory for autoformer_forward.34']
    %16 = vsyncpa [#allocation3], 0
    %17 = vsyncpa [#allocation5], 0
    loop: start=0, step=1, limit=4
    $region2: #{autoformer_forward.34} parent=1 // loop_pre_header
      _
    $region3: #{autoformer_forward.34} parent=1 // loop_header
      %s19 = sphi 0, %s23
      %p20 = scmp.ge.s32.totalorder %s19, 4
      %s29 = sphi 0, %s31
      %s32 = sphi 0, %s29
      %s33 = sphi 0, %s32
      %s49 = sphi 0, %s33
      %s53 = sphi 0, %s53
      %s55 = sphi 0, %s53
      %s56 = sphi 0, %s55
      %s70 = sphi 0, %s56
      %s74 = sphi 0, %s74
      %s76 = sphi 0, %s74
      %s77 = sphi 0, %s76
      %s91 = sphi 0, %s77
      %s95 = sphi 0, %s95
      %s97 = sphi 0, %s95
      %s98 = sphi 0, %s97
      %s112 = sphi 0, %s98
      %s116 = sphi 0, %s116
      %s118 = sphi 0, %s116
      %s119 = sphi 0, %s118
      %s133 = sphi 0, %s119
      %s137 = sphi 0, %s137
      %s139 = sphi 0, %s137
      %s140 = sphi 0, %s139
      %s154 = sphi 0, %s140
      %s158 = sphi 0, %s158
      %s160 = sphi 0, %s158
      %s161 = sphi 0, %s160
      %s175 = sphi 0, %s161
      %s179 = sphi 0, %s179
      %s181 = sphi 0, %s179
      %s182 = sphi 0, %s181
      %s196 = sphi 0, %s182
      %s200 = sphi 0, %s200
      %s202 = sphi 0, %s200
      %s203 = sphi 0, %s202
      %s217 = sphi 0, %s203
      %s223 = sphi 0, %s225
      %s226 = sphi 0, %s223
      %s227 = sphi 0, %s226
      %s243 = sphi 0, %s227
      %s249 = sphi 0, %s251
      %s252 = sphi 0, %s249
      %s253 = sphi 0, %s252
      %s269 = sphi 0, %s253
    $region4: #{autoformer_forward.34} parent=1 // loop_header_branch
      %22 = sbr.rel (%p20) target = $region8
    $region5: #{autoformer_forward.34} parent=1 // loop_body
      %s24 = ssub.s32 %s19, 1
      %s25 = ssub.s32 %s19, 2
      %s26 = sadd.s32 %s19, 1
      %s27 = ssub.s32 %s19, %s26
      %p28 = scmp.eq.s32.totalorder %s27, 0
      %s30 = sadd.s32 %s29, 1
      %s31 = scalar_select %p28, %s29, %s30
      %p34 = pneg %p28
      %p35 = scmp.eq.s32.totalorder %s19, 1
      %p36 = por %p34, %p35
      %p37 = scmp.ne.s32.totalorder %s29, %s32
      %p38 = scmp.eq.s32.totalorder %s19, 0
      %p39 = por %p37, %p38
      %p40 = scmp.ne.s32.totalorder %s29, %s32
      %p41 = scmp.eq.s32.totalorder %s24, 1
      %p42 = por %p40, %p41
      %p43 = scmp.ne.s32.totalorder %s32, %s33
      %p44 = scmp.eq.s32.totalorder %s24, 0
      %p45 = por %p43, %p44
      %p46 = scmp.ne.s32.totalorder %s32, %s33
      %p47 = scmp.eq.s32.totalorder %s25, 1
      %p48 = por %p46, %p47
      %p50 = scmp.ne.s32.totalorder %s33, %s49
      %p51 = scmp.eq.s32.totalorder %s25, 0
      %p52 = por %p50, %p51
      %s54 = sadd.s32 %s53, 1
      %p57 = scmp.eq.s32.totalorder %s19, 1
      %p58 = scmp.ne.s32.totalorder %s53, %s55
      %p59 = scmp.eq.s32.totalorder %s19, 0
      %p60 = por %p58, %p59
      %p61 = scmp.ne.s32.totalorder %s53, %s55
      %p62 = scmp.eq.s32.totalorder %s24, 1
      %p63 = por %p61, %p62
      %p64 = scmp.ne.s32.totalorder %s55, %s56
      %p65 = scmp.eq.s32.totalorder %s24, 0
      %p66 = por %p64, %p65
      %p67 = scmp.ne.s32.totalorder %s55, %s56
      %p68 = scmp.eq.s32.totalorder %s25, 1
      %p69 = por %p67, %p68
      %p71 = scmp.ne.s32.totalorder %s56, %s70
      %p72 = scmp.eq.s32.totalorder %s25, 0
      %p73 = por %p71, %p72
      %s75 = sadd.s32 %s74, 1
      %p78 = scmp.eq.s32.totalorder %s19, 1
      %p79 = scmp.ne.s32.totalorder %s74, %s76
      %p80 = scmp.eq.s32.totalorder %s19, 0
      %p81 = por %p79, %p80
      %p82 = scmp.ne.s32.totalorder %s74, %s76
      %p83 = scmp.eq.s32.totalorder %s24, 1
      %p84 = por %p82, %p83
      %p85 = scmp.ne.s32.totalorder %s76, %s77
      %p86 = scmp.eq.s32.totalorder %s24, 0
      %p87 = por %p85, %p86
      %p88 = scmp.ne.s32.totalorder %s76, %s77
      %p89 = scmp.eq.s32.totalorder %s25, 1
      %p90 = por %p88, %p89
      %p92 = scmp.ne.s32.totalorder %s77, %s91
      %p93 = scmp.eq.s32.totalorder %s25, 0
      %p94 = por %p92, %p93
      %s96 = sadd.s32 %s95, 1
      %p99 = scmp.eq.s32.totalorder %s19, 1
      %p100 = scmp.ne.s32.totalorder %s95, %s97
      %p101 = scmp.eq.s32.totalorder %s19, 0
      %p102 = por %p100, %p101
      %p103 = scmp.ne.s32.totalorder %s95, %s97
      %p104 = scmp.eq.s32.totalorder %s24, 1
      %p105 = por %p103, %p104
      %p106 = scmp.ne.s32.totalorder %s97, %s98
      %p107 = scmp.eq.s32.totalorder %s24, 0
      %p108 = por %p106, %p107
      %p109 = scmp.ne.s32.totalorder %s97, %s98
      %p110 = scmp.eq.s32.totalorder %s25, 1
      %p111 = por %p109, %p110
      %p113 = scmp.ne.s32.totalorder %s98, %s112
      %p114 = scmp.eq.s32.totalorder %s25, 0
      %p115 = por %p113, %p114
      %s117 = sadd.s32 %s116, 1
      %p120 = scmp.eq.s32.totalorder %s19, 1
      %p121 = scmp.ne.s32.totalorder %s116, %s118
      %p122 = scmp.eq.s32.totalorder %s19, 0
      %p123 = por %p121, %p122
      %p124 = scmp.ne.s32.totalorder %s116, %s118
      %p125 = scmp.eq.s32.totalorder %s24, 1
      %p126 = por %p124, %p125
      %p127 = scmp.ne.s32.totalorder %s118, %s119
      %p128 = scmp.eq.s32.totalorder %s24, 0
      %p129 = por %p127, %p128
      %p130 = scmp.ne.s32.totalorder %s118, %s119
      %p131 = scmp.eq.s32.totalorder %s25, 1
      %p132 = por %p130, %p131
      %p134 = scmp.ne.s32.totalorder %s119, %s133
      %p135 = scmp.eq.s32.totalorder %s25, 0
      %p136 = por %p134, %p135
      %s138 = sadd.s32 %s137, 1
      %p141 = scmp.eq.s32.totalorder %s19, 1
      %p142 = scmp.ne.s32.totalorder %s137, %s139
      %p143 = scmp.eq.s32.totalorder %s19, 0
      %p144 = por %p142, %p143
      %p145 = scmp.ne.s32.totalorder %s137, %s139
      %p146 = scmp.eq.s32.totalorder %s24, 1
      %p147 = por %p145, %p146
      %p148 = scmp.ne.s32.totalorder %s139, %s140
      %p149 = scmp.eq.s32.totalorder %s24, 0
      %p150 = por %p148, %p149
      %p151 = scmp.ne.s32.totalorder %s139, %s140
      %p152 = scmp.eq.s32.totalorder %s25, 1
      %p153 = por %p151, %p152
      %p155 = scmp.ne.s32.totalorder %s140, %s154
      %p156 = scmp.eq.s32.totalorder %s25, 0
      %p157 = por %p155, %p156
      %s159 = sadd.s32 %s158, 1
      %p162 = scmp.eq.s32.totalorder %s19, 1
      %p163 = scmp.ne.s32.totalorder %s158, %s160
      %p164 = scmp.eq.s32.totalorder %s19, 0
      %p165 = por %p163, %p164
      %p166 = scmp.ne.s32.totalorder %s158, %s160
      %p167 = scmp.eq.s32.totalorder %s24, 1
      %p168 = por %p166, %p167
      %p169 = scmp.ne.s32.totalorder %s160, %s161
      %p170 = scmp.eq.s32.totalorder %s24, 0
      %p171 = por %p169, %p170
      %p172 = scmp.ne.s32.totalorder %s160, %s161
      %p173 = scmp.eq.s32.totalorder %s25, 1
      %p174 = por %p172, %p173
      %p176 = scmp.ne.s32.totalorder %s161, %s175
      %p177 = scmp.eq.s32.totalorder %s25, 0
      %p178 = por %p176, %p177
      %s180 = sadd.s32 %s179, 1
      %p183 = scmp.eq.s32.totalorder %s19, 1
      %p184 = scmp.ne.s32.totalorder %s179, %s181
      %p185 = scmp.eq.s32.totalorder %s19, 0
      %p186 = por %p184, %p185
      %p187 = scmp.ne.s32.totalorder %s179, %s181
      %p188 = scmp.eq.s32.totalorder %s24, 1
      %p189 = por %p187, %p188
      %p190 = scmp.ne.s32.totalorder %s181, %s182
      %p191 = scmp.eq.s32.totalorder %s24, 0
      %p192 = por %p190, %p191
      %p193 = scmp.ne.s32.totalorder %s181, %s182
      %p194 = scmp.eq.s32.totalorder %s25, 1
      %p195 = por %p193, %p194
      %p197 = scmp.ne.s32.totalorder %s182, %s196
      %p198 = scmp.eq.s32.totalorder %s25, 0
      %p199 = por %p197, %p198
      %s201 = sadd.s32 %s200, 1
      %p204 = scmp.eq.s32.totalorder %s19, 1
      %p205 = scmp.ne.s32.totalorder %s200, %s202
      %p206 = scmp.eq.s32.totalorder %s19, 0
      %p207 = por %p205, %p206
      %p208 = scmp.ne.s32.totalorder %s200, %s202
      %p209 = scmp.eq.s32.totalorder %s24, 1
      %p210 = por %p208, %p209
      %p211 = scmp.ne.s32.totalorder %s202, %s203
      %p212 = scmp.eq.s32.totalorder %s24, 0
      %p213 = por %p211, %p212
      %p214 = scmp.ne.s32.totalorder %s202, %s203
      %p215 = scmp.eq.s32.totalorder %s25, 1
      %p216 = por %p214, %p215
      %p218 = scmp.ne.s32.totalorder %s203, %s217
      %p219 = scmp.eq.s32.totalorder %s25, 0
      %p220 = por %p218, %p219
      %s221 = ssub.s32 %s19, %s26
      %p222 = scmp.eq.s32.totalorder %s221, 0
      %s224 = sadd.s32 %s223, 1
      %s225 = scalar_select %p222, %s223, %s224
      %p228 = pneg %p222
      %p229 = scmp.eq.s32.totalorder %s19, 1
      %p230 = por %p228, %p229
      %p231 = scmp.ne.s32.totalorder %s223, %s226
      %p232 = scmp.eq.s32.totalorder %s19, 0
      %p233 = por %p231, %p232
      %p234 = scmp.ne.s32.totalorder %s223, %s226
      %p235 = scmp.eq.s32.totalorder %s24, 1
      %p236 = por %p234, %p235
      %p237 = scmp.ne.s32.totalorder %s226, %s227
      %p238 = scmp.eq.s32.totalorder %s24, 0
      %p239 = por %p237, %p238
      %p240 = scmp.ne.s32.totalorder %s226, %s227
      %p241 = scmp.eq.s32.totalorder %s25, 1
      %p242 = por %p240, %p241
      %p244 = scmp.ne.s32.totalorder %s227, %s243
      %p245 = scmp.eq.s32.totalorder %s25, 0
      %p246 = por %p244, %p245
      %s247 = ssub.s32 %s19, %s26
      %p248 = scmp.eq.s32.totalorder %s247, 0
      %s250 = sadd.s32 %s249, 1
      %s251 = scalar_select %p248, %s249, %s250
      %p254 = pneg %p248
      %p255 = scmp.eq.s32.totalorder %s19, 1
      %p256 = por %p254, %p255
      %p257 = scmp.ne.s32.totalorder %s249, %s252
      %p258 = scmp.eq.s32.totalorder %s19, 0
      %p259 = por %p257, %p258
      %p260 = scmp.ne.s32.totalorder %s249, %s252
      %p261 = scmp.eq.s32.totalorder %s24, 1
      %p262 = por %p260, %p261
      %p263 = scmp.ne.s32.totalorder %s252, %s253
      %p264 = scmp.eq.s32.totalorder %s24, 0
      %p265 = por %p263, %p264
      %p266 = scmp.ne.s32.totalorder %s252, %s253
      %p267 = scmp.eq.s32.totalorder %s25, 1
      %p268 = por %p266, %p267
      %p270 = scmp.ne.s32.totalorder %s253, %s269
      %p271 = scmp.eq.s32.totalorder %s25, 0
      %p272 = por %p270, %p271
      %p273 = scmp.le.s32.totalorder 1, %s19
      %p274 = scmp.lt.s32.totalorder %s19, 3
      %p275 = pnand %p273, %p274
      %p276 = pneg %p275
      // Predicated region
      $region9: #{autoformer_forward.34} parent=5 // pred_check
        _
      $region10: #{autoformer_forward.34} parent=5 // pred_check_branch
        %278 = sbr.rel (%p275) target = $region12
      $region11: #{autoformer_forward.34} parent=5 // pred_region
        %s279 = ssub.s32 %s19, 1
        // Predicated region
        $region13: #{autoformer_forward.34} parent=11 // pred_check
          %p280 = pneg %p66
        $region14: #{autoformer_forward.34} parent=11 // pred_check_branch
          %282 = sbr.rel (%p280) target = $region16
        $region15: #{autoformer_forward.34} parent=11 // pred_region
          _
        $region16: #{autoformer_forward.34} parent=11 // pred_fallthru
          _
        // Predicated region
        $region17: #{autoformer_forward.34} parent=11 // pred_check
          %p283 = pneg %p87
        $region18: #{autoformer_forward.34} parent=11 // pred_check_branch
          %285 = sbr.rel (%p283) target = $region20
        $region19: #{autoformer_forward.34} parent=11 // pred_region
          _
        $region20: #{autoformer_forward.34} parent=11 // pred_fallthru
          _
        // Predicated region
        $region21: #{autoformer_forward.34} parent=11 // pred_check
          %p286 = pneg %p108
        $region22: #{autoformer_forward.34} parent=11 // pred_check_branch
          %288 = sbr.rel (%p286) target = $region24
        $region23: #{autoformer_forward.34} parent=11 // pred_region
          _
        $region24: #{autoformer_forward.34} parent=11 // pred_fallthru
          _
        // Predicated region
        $region25: #{autoformer_forward.34} parent=11 // pred_check
          %p289 = pneg %p129
        $region26: #{autoformer_forward.34} parent=11 // pred_check_branch
          %291 = sbr.rel (%p289) target = $region28
        $region27: #{autoformer_forward.34} parent=11 // pred_region
          %293 = vsyncadd [#allocation3], 0
          %s295 = sshll.u32 %s4, 4
          %s296 = int_to_ptr.hbm [resolvable:$true] %s295
          %s297 = sshll.u32 [#allocation2], 4
          %s298 = int_to_ptr.vmem [resolvable:$true] %s297
          %300 = dma.hbm_to_vmem [thread:$0]  %s296, 16, %s298, [#allocation3]
        $region28: #{autoformer_forward.34} parent=11 // pred_fallthru
          _
        // Predicated region
        $region29: #{autoformer_forward.34} parent=11 // pred_check
          %p301 = pneg %p150
        $region30: #{autoformer_forward.34} parent=11 // pred_check_branch
          %303 = sbr.rel (%p301) target = $region32
        $region31: #{autoformer_forward.34} parent=11 // pred_region
          _
        $region32: #{autoformer_forward.34} parent=11 // pred_fallthru
          _
        // Predicated region
        $region33: #{autoformer_forward.34} parent=11 // pred_check
          %p304 = pneg %p171
        $region34: #{autoformer_forward.34} parent=11 // pred_check_branch
          %306 = sbr.rel (%p304) target = $region36
        $region35: #{autoformer_forward.34} parent=11 // pred_region
          %308 = vsyncadd [#allocation5], 0
          %s310 = sshll.u32 %s6, 4
          %s311 = int_to_ptr.hbm [resolvable:$true] %s310
          %s312 = sshll.u32 [#allocation4], 4
          %s313 = int_to_ptr.vmem [resolvable:$true] %s312
          %315 = dma.hbm_to_vmem [thread:$0]  %s311, 16, %s313, [#allocation5]
        $region36: #{autoformer_forward.34} parent=11 // pred_fallthru
          _
        // Predicated region
        $region37: #{autoformer_forward.34} parent=11 // pred_check
          %p316 = pneg %p192
        $region38: #{autoformer_forward.34} parent=11 // pred_check_branch
          %318 = sbr.rel (%p316) target = $region40
        $region39: #{autoformer_forward.34} parent=11 // pred_region
          _
        $region40: #{autoformer_forward.34} parent=11 // pred_fallthru
          _
        // Predicated region
        $region41: #{autoformer_forward.34} parent=11 // pred_check
          %p319 = pneg %p213
        $region42: #{autoformer_forward.34} parent=11 // pred_check_branch
          %321 = sbr.rel (%p319) target = $region44
        $region43: #{autoformer_forward.34} parent=11 // pred_region
          _
        $region44: #{autoformer_forward.34} parent=11 // pred_fallthru
          _
      $region12: #{autoformer_forward.34} parent=5 // pred_fallthru
        _
      %p322 = scmp.lt.s32.totalorder %s19, 2
      // Predicated region
      $region45: #{autoformer_forward.34} parent=5 // pred_check
        %p323 = pneg %p322
      $region46: #{autoformer_forward.34} parent=5 // pred_check_branch
        %325 = sbr.rel (%p323) target = $region48
      $region47: #{autoformer_forward.34} parent=5 // pred_region
        // Predicated region
        $region49: #{autoformer_forward.34} parent=47 // pred_check
          %p326 = pneg %p39
        $region50: #{autoformer_forward.34} parent=47 // pred_check_branch
          %328 = sbr.rel (%p326) target = $region52
        $region51: #{autoformer_forward.34} parent=47 // pred_region
          %p329 = scmp.lt.s32.totalorder %s19, 1
          %s330 = scalar_select %p329, %s19, 1
          %s331 = smul.addr %s330, 2
          %s332 = smul.addr %s331, 8
          %s333 = scalar_lea.vmem %s0, %s332
        $region52: #{autoformer_forward.34} parent=47 // pred_fallthru
          _
      $region48: #{autoformer_forward.34} parent=5 // pred_fallthru
        _
      %p334 = scmp.le.s32.totalorder 1, %s19
      %p335 = scmp.lt.s32.totalorder %s19, 3
      %p336 = pnand %p334, %p335
      %p337 = pneg %p336
      // Predicated region
      $region53: #{autoformer_forward.34} parent=5 // pred_check
        _
      $region54: #{autoformer_forward.34} parent=5 // pred_check_branch
        %339 = sbr.rel (%p336) target = $region56
      $region55: #{autoformer_forward.34} parent=5 // pred_region
        %s340 = ssub.s32 %s19, 1
        // Predicated region
        $region57: #{autoformer_forward.34} parent=55 // pred_check
          %p341 = pneg %p129
        $region58: #{autoformer_forward.34} parent=55 // pred_check_branch
          %343 = sbr.rel (%p341) target = $region60
        $region59: #{autoformer_forward.34} parent=55 // pred_region
          %345 = dma.done [#allocation3], 16
        $region60: #{autoformer_forward.34} parent=55 // pred_fallthru
          _
        // Predicated region
        $region61: #{autoformer_forward.34} parent=55 // pred_check
          %p346 = pneg %p171
        $region62: #{autoformer_forward.34} parent=55 // pred_check_branch
          %348 = sbr.rel (%p346) target = $region64
        $region63: #{autoformer_forward.34} parent=55 // pred_region
          %350 = dma.done [#allocation5], 16
        $region64: #{autoformer_forward.34} parent=55 // pred_fallthru
          _
        %p351 = scmp.lt.s32.totalorder %s24, 1
        %s352 = scalar_select %p351, %s24, 1
        %s353 = smul.addr %s352, 2
        %s354 = smul.addr %s353, 8
        %s355 = scalar_lea.vmem %s0, %s354
        %p356 = pneg %p45
        %p357 = pneg %p42
        %p358 = pneg %p66
        %p359 = pneg %p63
        %p360 = pneg %p87
        %p361 = pneg %p84
        %p362 = pneg %p108
        %p363 = pneg %p105
        %p364 = pneg %p129
        %p365 = pneg %p126
        %p366 = pneg %p150
        %p367 = pneg %p147
        %p368 = pneg %p171
        %p369 = pneg %p168
        %p370 = pneg %p192
        %p371 = pneg %p189
        %p372 = pneg %p213
        %p373 = pneg %p210
        %p374 = pneg %p239
        %p375 = pneg %p236
        %p376 = scmp.lt.s32.totalorder %s24, 1
        %s377 = scalar_select %p376, %s24, 1
        %s378 = smul.addr %s377, 2
        %s379 = smul.addr %s378, 8
        %s380 = scalar_lea.vmem %s9, %s379
        %p381 = pneg %p265
        %p382 = pneg %p262
        %p383 = scmp.lt.s32.totalorder %s24, 1
        %s384 = scalar_select %p383, %s24, 1
        %s385 = smul.addr %s384, 2
        %s386 = smul.addr %s385, 8
        %s387 = scalar_lea.vmem %s10, %s386
        %p388 = scmp.lt.s32.totalorder %s24, 1
        %s389 = scalar_select %p388, %s24, 1
        %s390 = smul.addr %s389, 2
        %s391 = smul.addr %s390, 8
        %s392 = scalar_lea.vmem %s0, %s391
        %p393 = scmp.lt.s32.totalorder %s24, 1
        %s394 = scalar_select %p393, %s24, 1
        %s395 = smul.addr %s394, 2
        %s396 = smul.addr %s395, 8
        %s397 = scalar_lea.vmem %s9, %s396
        %p398 = scmp.lt.s32.totalorder %s24, 1
        %s399 = scalar_select %p398, %s24, 1
        %s400 = smul.addr %s399, 2
        %s401 = smul.addr %s400, 8
        %s402 = scalar_lea.vmem %s10, %s401
        %v403 = vld [vmem:[%s392] sm:$0xff]
        %v404 = vld [vmem:[%s392 + $0x8] sm:$0xff]
        %v405 = vld [vmem:[%s1] sm:$0xff]
        %v406 = vld [vmem:[%s1 + $0x8] sm:$0xff]
        %v407 = vld [vmem:[%s1 + $0x10] sm:$0xff]
        %v408 = vld [vmem:[%s1 + $0x18] sm:$0xff]
        %v409 = vld [vmem:[%s2] sm:$0x1]
        %v411 = vperm.slane %v409, 0
        %vm413 = vcmask 261120
        %v415 = vsel %vm413, %v403, 0
        %v418 = vsel %vm413, %v404, 0
        %420 = vmatpush.msra.mxu0 0.0
        %421 = vmatpush.msra.mxu0 0.0
        %422 = vmatpush.msra.mxu0 0.0
        %423 = vmatpush.msra.mxu0 0.0
        %424 = vmatpush.msra.mxu0 0.0
        %425 = vmatpush.msra.mxu0 0.0
        %426 = vmatpush.msra.mxu0 0.0
        %427 = vmatpush.msra.mxu0 0.0
        %428 = vmatpush.msra.mxu0 0.0
        %429 = vmatpush.msra.mxu0 0.0
        %430 = vmatpush.msra.mxu0 0.0
        %431 = vmatpush.msra.mxu0 0.0
        %432 = vmatpush.msra.mxu0 %v408
        %433 = vmatpush.msra.mxu0 %v407
        %434 = vmatpush.msra.mxu0 %v406
        %435 = vmatpush.msra.mxu0 %v405
        %436 = vmatmul.f32.gmra.mxu0 %v415
        %v437 = vpop.f32.mrf.mxu0
        %v438 = vadd.f32 %v411, %v437
        %439 = vmatmul.f32.gmra.mxu0 %v418
        %v440 = vpop.f32.mrf.mxu0
        %v441 = vadd.f32 %v411, %v440
        %442 = vdwg.mxu0
        %v443 = vld [vmem:[%s3] sm:$0xff]
        %v444 = vld [vmem:[%s3 + $0x8] sm:$0xff]
        %v445 = vld [vmem:[%s3 + $0x10] sm:$0xff]
        %v446 = vld [vmem:[%s3 + $0x18] sm:$0xff]
        %v447 = vld [vmem:[#allocation2] sm:$0x1]
        %v449 = vperm.slane %v447, 0
        %451 = vmatpush.msra.mxu0 0.0
        %452 = vmatpush.msra.mxu0 0.0
        %453 = vmatpush.msra.mxu0 0.0
        %454 = vmatpush.msra.mxu0 0.0
        %455 = vmatpush.msra.mxu0 0.0
        %456 = vmatpush.msra.mxu0 0.0
        %457 = vmatpush.msra.mxu0 0.0
        %458 = vmatpush.msra.mxu0 0.0
        %459 = vmatpush.msra.mxu0 0.0
        %460 = vmatpush.msra.mxu0 0.0
        %461 = vmatpush.msra.mxu0 0.0
        %462 = vmatpush.msra.mxu0 0.0
        %463 = vmatpush.msra.mxu0 %v446
        %464 = vmatpush.msra.mxu0 %v445
        %465 = vmatpush.msra.mxu0 %v444
        %466 = vmatpush.msra.mxu0 %v443
        %467 = vmatmul.f32.gmra.mxu0 %v415
        %v468 = vpop.f32.mrf.mxu0
        %v469 = vadd.f32 %v449, %v468
        %470 = vmatmul.f32.gmra.mxu0 %v418
        %v471 = vpop.f32.mrf.mxu0
        %v472 = vadd.f32 %v449, %v471
        %473 = vdwg.mxu0
        %v474 = vld [vmem:[%s5] sm:$0xff]
        %v475 = vld [vmem:[%s5 + $0x8] sm:$0xff]
        %v476 = vld [vmem:[%s5 + $0x10] sm:$0xff]
        %v477 = vld [vmem:[%s5 + $0x18] sm:$0xff]
        %v478 = vld [vmem:[#allocation4] sm:$0x1]
        %v480 = vperm.slane %v478, 0
        %482 = vmatpush.msra.mxu0 0.0
        %483 = vmatpush.msra.mxu0 0.0
        %484 = vmatpush.msra.mxu0 0.0
        %485 = vmatpush.msra.mxu0 0.0
        %486 = vmatpush.msra.mxu0 0.0
        %487 = vmatpush.msra.mxu0 0.0
        %488 = vmatpush.msra.mxu0 0.0
        %489 = vmatpush.msra.mxu0 0.0
        %490 = vmatpush.msra.mxu0 0.0
        %491 = vmatpush.msra.mxu0 0.0
        %492 = vmatpush.msra.mxu0 0.0
        %493 = vmatpush.msra.mxu0 0.0
        %494 = vmatpush.msra.mxu0 %v477
        %495 = vmatpush.msra.mxu0 %v476
        %496 = vmatpush.msra.mxu0 %v475
        %497 = vmatpush.msra.mxu0 %v474
        %498 = vmatmul.f32.gmra.mxu0 %v415
        %v499 = vpop.f32.mrf.mxu0
        %v500 = vadd.f32 %v480, %v499
        %501 = vmatmul.f32.gmra.mxu0 %v418
        %v502 = vpop.f32.mrf.mxu0
        %v503 = vadd.f32 %v480, %v502
        %504 = vdwg.mxu0
        %v505 = vld [vmem:[%s7] sm:$0xff]
        %v506 = vld [vmem:[%s7 + $0x8] sm:$0xff]
        %v507 = vld [vmem:[%s8] sm:$0xff]
        %v508 = vld [vmem:[%s8 + $0x8] sm:$0xff]
        %vm509 = vcmask 130048
        %v511 = vsel %vm509, %v505, 0
        %v514 = vsel %vm509, %v506, 0
        %516 = vmatpush.msra.mxu0 0.0
        %517 = vmatpush.msra.mxu0 0.0
        %518 = vmatpush.msra.mxu0 0.0
        %519 = vmatpush.msra.mxu0 0.0
        %520 = vmatpush.msra.mxu0 0.0
        %521 = vmatpush.msra.mxu0 0.0
        %522 = vmatpush.msra.mxu0 0.0
        %523 = vmatpush.msra.mxu0 0.0
        %524 = vmatpush.msra.mxu0 0.0
        %525 = vmatpush.msra.mxu0 0.0
        %526 = vmatpush.msra.mxu0 0.0
        %527 = vmatpush.msra.mxu0 0.0
        %528 = vmatpush.msra.mxu0 0.0
        %529 = vmatpush.msra.mxu0 0.0
        %530 = vmatpush.msra.mxu0 %v441
        %531 = vmatpush.msra.mxu0 %v438
        %532 = vmatmul.f32.gmra.mxu0 %v511
        %v533 = vpop.f32.mrf.mxu0
        %v534 = vadd.f32 0.0, %v533
        %535 = vmatmul.f32.gmra.mxu0 %v514
        %v536 = vpop.f32.mrf.mxu0
        %v537 = vadd.f32 0.0, %v536
        %538 = vdwg.mxu0
        %v540 = vsel %vm509, %v507, 0
        %v543 = vsel %vm509, %v508, 0
        %545 = vmatpush.msra.mxu0 0.0
        %546 = vmatpush.msra.mxu0 0.0
        %547 = vmatpush.msra.mxu0 0.0
        %548 = vmatpush.msra.mxu0 0.0
        %549 = vmatpush.msra.mxu0 0.0
        %550 = vmatpush.msra.mxu0 0.0
        %551 = vmatpush.msra.mxu0 0.0
        %552 = vmatpush.msra.mxu0 0.0
        %553 = vmatpush.msra.mxu0 0.0
        %554 = vmatpush.msra.mxu0 0.0
        %555 = vmatpush.msra.mxu0 0.0
        %556 = vmatpush.msra.mxu0 0.0
        %557 = vmatpush.msra.mxu0 0.0
        %558 = vmatpush.msra.mxu0 0.0
        %559 = vmatpush.msra.mxu0 %v441
        %560 = vmatpush.msra.mxu0 %v438
        %561 = vmatmul.f32.gmra.mxu0 %v540
        %v562 = vpop.f32.mrf.mxu0
        %v563 = vadd.f32 0.0, %v562
        %564 = vmatmul.f32.gmra.mxu0 %v543
        %v565 = vpop.f32.mrf.mxu0
        %v566 = vadd.f32 0.0, %v565
        %567 = vdwg.mxu0
        %568 = vmatpush.msra.mxu0 0.0
        %569 = vmatpush.msra.mxu0 0.0
        %570 = vmatpush.msra.mxu0 0.0
        %571 = vmatpush.msra.mxu0 0.0
        %572 = vmatpush.msra.mxu0 0.0
        %573 = vmatpush.msra.mxu0 0.0
        %574 = vmatpush.msra.mxu0 0.0
        %575 = vmatpush.msra.mxu0 0.0
        %576 = vmatpush.msra.mxu0 0.0
        %577 = vmatpush.msra.mxu0 0.0
        %578 = vmatpush.msra.mxu0 0.0
        %579 = vmatpush.msra.mxu0 0.0
        %580 = vmatpush.msra.mxu0 0.0
        %581 = vmatpush.msra.mxu0 0.0
        %582 = vmatpush.msra.mxu0 %v472
        %583 = vmatpush.msra.mxu0 %v469
        %584 = vmatmul.f32.gmra.mxu0 %v511
        %v585 = vpop.f32.mrf.mxu0
        %v586 = vadd.f32 0.0, %v585
        %587 = vmatmul.f32.gmra.mxu0 %v514
        %v588 = vpop.f32.mrf.mxu0
        %v589 = vadd.f32 0.0, %v588
        %590 = vdwg.mxu0
        %591 = vmatpush.msra.mxu0 0.0
        %592 = vmatpush.msra.mxu0 0.0
        %593 = vmatpush.msra.mxu0 0.0
        %594 = vmatpush.msra.mxu0 0.0
        %595 = vmatpush.msra.mxu0 0.0
        %596 = vmatpush.msra.mxu0 0.0
        %597 = vmatpush.msra.mxu0 0.0
        %598 = vmatpush.msra.mxu0 0.0
        %599 = vmatpush.msra.mxu0 0.0
        %600 = vmatpush.msra.mxu0 0.0
        %601 = vmatpush.msra.mxu0 0.0
        %602 = vmatpush.msra.mxu0 0.0
        %603 = vmatpush.msra.mxu0 0.0
        %604 = vmatpush.msra.mxu0 0.0
        %605 = vmatpush.msra.mxu0 %v472
        %606 = vmatpush.msra.mxu0 %v469
        %607 = vmatmul.f32.gmra.mxu0 %v540
        %v608 = vpop.f32.mrf.mxu0
        %v609 = vadd.f32 0.0, %v608
        %610 = vmatmul.f32.gmra.mxu0 %v543
        %v611 = vpop.f32.mrf.mxu0
        %v612 = vadd.f32 0.0, %v611
        %613 = vdwg.mxu0
        %v614 = vmul.f32 %v534, %v586
        %v615 = vmul.f32 %v537, %v589
        %v616 = vmul.f32 %v563, %v609
        %v617 = vmul.f32 %v566, %v612
        %v618 = vadd.f32 %v614, %v616
        %v619 = vadd.f32 %v615, %v617
        %v620 = vsel %vm413, %v618, 0.0
        %621 = vadd.xlane.f32.xlu0 %v620
        %v622 = vpop.xlane.xlu0 %621
        %v623 = vsel %vm413, %v619, 0.0
        %624 = vadd.xlane.f32.xlu0 %v623
        %v625 = vpop.xlane.xlu0 %624
        %v626 = vmul.f32 %v534, %v609
        %v627 = vmul.f32 %v537, %v612
        %v628 = vmul.f32 %v563, %v586
        %v629 = vmul.f32 %v566, %v589
        %v630 = vsub.f32 %v626, %v628
        %v631 = vsub.f32 %v627, %v629
        %v632 = vsel %vm413, %v630, 0.0
        %633 = vadd.xlane.f32.xlu0 %v632
        %v634 = vpop.xlane.xlu0 %633
        %v635 = vsel %vm413, %v631, 0.0
        %636 = vadd.xlane.f32.xlu0 %v635
        %v637 = vpop.xlane.xlu0 %636
        %638 = vmatpush.msra.mxu0 0.0
        %639 = vmatpush.msra.mxu0 0.0
        %640 = vmatpush.msra.mxu0 0.0
        %641 = vmatpush.msra.mxu0 0.0
        %642 = vmatpush.msra.mxu0 0.0
        %643 = vmatpush.msra.mxu0 0.0
        %644 = vmatpush.msra.mxu0 0.0
        %645 = vmatpush.msra.mxu0 0.0
        %646 = vmatpush.msra.mxu0 0.0
        %647 = vmatpush.msra.mxu0 0.0
        %648 = vmatpush.msra.mxu0 0.0
        %649 = vmatpush.msra.mxu0 0.0
        %650 = vmatpush.msra.mxu0 0.0
        %651 = vmatpush.msra.mxu0 0.0
        %652 = vmatpush.msra.mxu0 %v625
        %653 = vmatpush.msra.mxu0 %v622
        %654 = vmatmul.f32.gmra.mxu0 %v511
        %v655 = vpop.f32.mrf.mxu0
        %v656 = vadd.f32 0.0, %v655
        %657 = vmatmul.f32.gmra.mxu0 %v514
        %v658 = vpop.f32.mrf.mxu0
        %v659 = vadd.f32 0.0, %v658
        %660 = vdwg.mxu0
        %661 = vmatpush.msra.mxu0 0.0
        %662 = vmatpush.msra.mxu0 0.0
        %663 = vmatpush.msra.mxu0 0.0
        %664 = vmatpush.msra.mxu0 0.0
        %665 = vmatpush.msra.mxu0 0.0
        %666 = vmatpush.msra.mxu0 0.0
        %667 = vmatpush.msra.mxu0 0.0
        %668 = vmatpush.msra.mxu0 0.0
        %669 = vmatpush.msra.mxu0 0.0
        %670 = vmatpush.msra.mxu0 0.0
        %671 = vmatpush.msra.mxu0 0.0
        %672 = vmatpush.msra.mxu0 0.0
        %673 = vmatpush.msra.mxu0 0.0
        %674 = vmatpush.msra.mxu0 0.0
        %675 = vmatpush.msra.mxu0 %v637
        %676 = vmatpush.msra.mxu0 %v634
        %677 = vmatmul.f32.gmra.mxu0 %v540
        %v678 = vpop.f32.mrf.mxu0
        %v679 = vadd.f32 0.0, %v678
        %680 = vmatmul.f32.gmra.mxu0 %v543
        %v681 = vpop.f32.mrf.mxu0
        %v682 = vadd.f32 0.0, %v681
        %683 = vdwg.mxu0
        %v684 = vsub.f32 %v656, %v679
        %v685 = vsub.f32 %v659, %v682
        %v686 = vmul.f32 %v684, 0.001953125
        %v687 = vmul.f32 %v685, 0.001953125
        %vm688 = vcmask 7168
        %689 = vst.msk [vmem:[%s397] sm:$0xff] %vm688, %v686
        %690 = vst.msk [vmem:[%s397 + $0x8] sm:$0xff] %vm688, %v687
        %691 = vst.msk [vmem:[%s402] sm:$0xff] %vm413, %v500
        %692 = vst.msk [vmem:[%s402 + $0x8] sm:$0xff] %vm413, %v503
        %p693 = scmp.lt.s32.totalorder %s24, 1
        %s694 = scalar_select %p693, %s24, 1
        %s695 = smul.addr %s694, 2
        %s696 = smul.addr %s695, 8
        %s697 = scalar_lea.vmem %s9, %s696
        %p698 = scmp.lt.s32.totalorder %s24, 1
        %s699 = scalar_select %p698, %s24, 1
        %s700 = smul.addr %s699, 2
        %s701 = smul.addr %s700, 8
        %s702 = scalar_lea.vmem %s10, %s701
        // Predicated region
        $region65: #{autoformer_forward.34} parent=55 // pred_check
          %p703 = pneg %p236
        $region66: #{autoformer_forward.34} parent=55 // pred_check_branch
          %705 = sbr.rel (%p703) target = $region68
        $region67: #{autoformer_forward.34} parent=55 // pred_region
          _
        $region68: #{autoformer_forward.34} parent=55 // pred_fallthru
          _
        // Predicated region
        $region69: #{autoformer_forward.34} parent=55 // pred_check
          %p706 = pneg %p262
        $region70: #{autoformer_forward.34} parent=55 // pred_check_branch
          %708 = sbr.rel (%p706) target = $region72
        $region71: #{autoformer_forward.34} parent=55 // pred_region
          _
        $region72: #{autoformer_forward.34} parent=55 // pred_fallthru
          _
      $region56: #{autoformer_forward.34} parent=5 // pred_fallthru
        _
      %p709 = scmp.le.s32.totalorder 2, %s19
      // Predicated region
      $region73: #{autoformer_forward.34} parent=5 // pred_check
        %p710 = pneg %p709
      $region74: #{autoformer_forward.34} parent=5 // pred_check_branch
        %712 = sbr.rel (%p710) target = $region76
      $region75: #{autoformer_forward.34} parent=5 // pred_region
        %s713 = ssub.s32 %s19, 2
        // Predicated region
        $region77: #{autoformer_forward.34} parent=75 // pred_check
          %p714 = pneg %p242
        $region78: #{autoformer_forward.34} parent=75 // pred_check_branch
          %716 = sbr.rel (%p714) target = $region80
        $region79: #{autoformer_forward.34} parent=75 // pred_region
          %p717 = scmp.lt.s32.totalorder %s25, 1
          %s718 = scalar_select %p717, %s25, 1
          %s719 = smul.addr %s718, 2
          %s720 = smul.addr %s719, 8
          %s721 = scalar_lea.vmem %s9, %s720
        $region80: #{autoformer_forward.34} parent=75 // pred_fallthru
          _
        // Predicated region
        $region81: #{autoformer_forward.34} parent=75 // pred_check
          %p722 = pneg %p268
        $region82: #{autoformer_forward.34} parent=75 // pred_check_branch
          %724 = sbr.rel (%p722) target = $region84
        $region83: #{autoformer_forward.34} parent=75 // pred_region
          %p725 = scmp.lt.s32.totalorder %s25, 1
          %s726 = scalar_select %p725, %s25, 1
          %s727 = smul.addr %s726, 2
          %s728 = smul.addr %s727, 8
          %s729 = scalar_lea.vmem %s10, %s728
        $region84: #{autoformer_forward.34} parent=75 // pred_fallthru
          _
      $region76: #{autoformer_forward.34} parent=5 // pred_fallthru
        _
    $region6: #{autoformer_forward.34} parent=1 // loop_footer
      %s23 = sadd.s32 1, %s19
    $region7: #{autoformer_forward.34} parent=1 // loop_footer_branch
      %18 = sbr.rel target = $region3
    $region8: #{autoformer_forward.34} parent=1 // loop_exit
      _
    %730 = vsyncpa [#allocation3], 1
    %s731 = scalar_lea.sflag [#allocation3], 1
    %732 = vsyncpa %s731, 1
    %733 = vsyncpa [#allocation5], 1

// kernel: autoformer_forward.36
$region0: #{autoformer_forward.36}
  #allocation0 [shape = 'u32[]', space=smem, size = 0x4, offset = 0x4, fixed_abs, tag = 'smem constant byte address 0x4 - core index']
  #allocation1 [shape = 'u32[72,128]{1,0:T(1,128)}', space=vmem, size = 0x9000, scoped, tag = 'internal scratch']
  %s0 = inlined_call_operand.vmem [shape: f32[16,16], index: 0, kind: input, shape index: {}]
  %s1 = inlined_call_operand.vmem [shape: f32[2,16,32], index: 1, kind: input, shape index: {}]
  %s2 = inlined_call_operand.vmem [shape: f32[2,16,32], index: 2, kind: input, shape index: {}]
  %s3 = inlined_call_operand.vmem [shape: f32[2,16,32], index: 3, kind: output, shape index: {0}]
  %s4 = inlined_call_operand.vmem [shape: f32[2,16,32], index: 4, kind: output, shape index: {1}]
  %5 = xla_tuple %s3, %s4
  %s6 = sld [smem:[#allocation0]]
  $region53: #{autoformer_forward.36} parent=0
    _
  %s8 = ssub.s32 1, %s6
  %s9 = scalar_select 0, %s8, %s6
  loop: start=0, step=1, limit=4
  $region2: #{autoformer_forward.36} parent=0 // loop_pre_header
    _
  $region3: #{autoformer_forward.36} parent=0 // loop_header
    %s11 = sphi 0, %s15
    %p12 = scmp.ge.s32.totalorder %s11, 4
    %s19 = sphi 0, %s19
    %s21 = sphi 0, %s19
    %s22 = sphi 0, %s21
    %s36 = sphi 0, %s22
    %s42 = sphi 0, %s44
    %s45 = sphi 0, %s42
    %s46 = sphi 0, %s45
    %s62 = sphi 0, %s46
    %s68 = sphi 0, %s70
    %s71 = sphi 0, %s68
    %s72 = sphi 0, %s71
    %s88 = sphi 0, %s72
    %s94 = sphi 0, %s96
    %s97 = sphi 0, %s94
    %s98 = sphi 0, %s97
    %s114 = sphi 0, %s98
    %s120 = sphi 0, %s122
    %s123 = sphi 0, %s120
    %s124 = sphi 0, %s123
    %s140 = sphi 0, %s124
  $region4: #{autoformer_forward.36} parent=0 // loop_header_branch
    %14 = sbr.rel (%p12) target = $region8
  $region5: #{autoformer_forward.36} parent=0 // loop_body
    %s16 = ssub.s32 %s11, 1
    %s17 = ssub.s32 %s11, 2
    %s18 = sadd.s32 %s11, 1
    %s20 = sadd.s32 %s19, 1
    %p23 = scmp.eq.s32.totalorder %s11, 1
    %p24 = scmp.ne.s32.totalorder %s19, %s21
    %p25 = scmp.eq.s32.totalorder %s11, 0
    %p26 = por %p24, %p25
    %p27 = scmp.ne.s32.totalorder %s19, %s21
    %p28 = scmp.eq.s32.totalorder %s16, 1
    %p29 = por %p27, %p28
    %p30 = scmp.ne.s32.totalorder %s21, %s22
    %p31 = scmp.eq.s32.totalorder %s16, 0
    %p32 = por %p30, %p31
    %p33 = scmp.ne.s32.totalorder %s21, %s22
    %p34 = scmp.eq.s32.totalorder %s17, 1
    %p35 = por %p33, %p34
    %p37 = scmp.ne.s32.totalorder %s22, %s36
    %p38 = scmp.eq.s32.totalorder %s17, 0
    %p39 = por %p37, %p38
    %s40 = ssub.s32 %s11, %s18
    %p41 = scmp.eq.s32.totalorder %s40, 0
    %s43 = sadd.s32 %s42, 1
    %s44 = scalar_select %p41, %s42, %s43
    %p47 = pneg %p41
    %p48 = scmp.eq.s32.totalorder %s11, 1
    %p49 = por %p47, %p48
    %p50 = scmp.ne.s32.totalorder %s42, %s45
    %p51 = scmp.eq.s32.totalorder %s11, 0
    %p52 = por %p50, %p51
    %p53 = scmp.ne.s32.totalorder %s42, %s45
    %p54 = scmp.eq.s32.totalorder %s16, 1
    %p55 = por %p53, %p54
    %p56 = scmp.ne.s32.totalorder %s45, %s46
    %p57 = scmp.eq.s32.totalorder %s16, 0
    %p58 = por %p56, %p57
    %p59 = scmp.ne.s32.totalorder %s45, %s46
    %p60 = scmp.eq.s32.totalorder %s17, 1
    %p61 = por %p59, %p60
    %p63 = scmp.ne.s32.totalorder %s46, %s62
    %p64 = scmp.eq.s32.totalorder %s17, 0
    %p65 = por %p63, %p64
    %s66 = ssub.s32 %s11, %s18
    %p67 = scmp.eq.s32.totalorder %s66, 0
    %s69 = sadd.s32 %s68, 1
    %s70 = scalar_select %p67, %s68, %s69
    %p73 = pneg %p67
    %p74 = scmp.eq.s32.totalorder %s11, 1
    %p75 = por %p73, %p74
    %p76 = scmp.ne.s32.totalorder %s68, %s71
    %p77 = scmp.eq.s32.totalorder %s11, 0
    %p78 = por %p76, %p77
    %p79 = scmp.ne.s32.totalorder %s68, %s71
    %p80 = scmp.eq.s32.totalorder %s16, 1
    %p81 = por %p79, %p80
    %p82 = scmp.ne.s32.totalorder %s71, %s72
    %p83 = scmp.eq.s32.totalorder %s16, 0
    %p84 = por %p82, %p83
    %p85 = scmp.ne.s32.totalorder %s71, %s72
    %p86 = scmp.eq.s32.totalorder %s17, 1
    %p87 = por %p85, %p86
    %p89 = scmp.ne.s32.totalorder %s72, %s88
    %p90 = scmp.eq.s32.totalorder %s17, 0
    %p91 = por %p89, %p90
    %s92 = ssub.s32 %s11, %s18
    %p93 = scmp.eq.s32.totalorder %s92, 0
    %s95 = sadd.s32 %s94, 1
    %s96 = scalar_select %p93, %s94, %s95
    %p99 = pneg %p93
    %p100 = scmp.eq.s32.totalorder %s11, 1
    %p101 = por %p99, %p100
    %p102 = scmp.ne.s32.totalorder %s94, %s97
    %p103 = scmp.eq.s32.totalorder %s11, 0
    %p104 = por %p102, %p103
    %p105 = scmp.ne.s32.totalorder %s94, %s97
    %p106 = scmp.eq.s32.totalorder %s16, 1
    %p107 = por %p105, %p106
    %p108 = scmp.ne.s32.totalorder %s97, %s98
    %p109 = scmp.eq.s32.totalorder %s16, 0
    %p110 = por %p108, %p109
    %p111 = scmp.ne.s32.totalorder %s97, %s98
    %p112 = scmp.eq.s32.totalorder %s17, 1
    %p113 = por %p111, %p112
    %p115 = scmp.ne.s32.totalorder %s98, %s114
    %p116 = scmp.eq.s32.totalorder %s17, 0
    %p117 = por %p115, %p116
    %s118 = ssub.s32 %s11, %s18
    %p119 = scmp.eq.s32.totalorder %s118, 0
    %s121 = sadd.s32 %s120, 1
    %s122 = scalar_select %p119, %s120, %s121
    %p125 = pneg %p119
    %p126 = scmp.eq.s32.totalorder %s11, 1
    %p127 = por %p125, %p126
    %p128 = scmp.ne.s32.totalorder %s120, %s123
    %p129 = scmp.eq.s32.totalorder %s11, 0
    %p130 = por %p128, %p129
    %p131 = scmp.ne.s32.totalorder %s120, %s123
    %p132 = scmp.eq.s32.totalorder %s16, 1
    %p133 = por %p131, %p132
    %p134 = scmp.ne.s32.totalorder %s123, %s124
    %p135 = scmp.eq.s32.totalorder %s16, 0
    %p136 = por %p134, %p135
    %p137 = scmp.ne.s32.totalorder %s123, %s124
    %p138 = scmp.eq.s32.totalorder %s17, 1
    %p139 = por %p137, %p138
    %p141 = scmp.ne.s32.totalorder %s124, %s140
    %p142 = scmp.eq.s32.totalorder %s17, 0
    %p143 = por %p141, %p142
    %p144 = scmp.le.s32.totalorder 1, %s11
    %p145 = scmp.lt.s32.totalorder %s11, 3
    %p146 = pnand %p144, %p145
    %p147 = pneg %p146
    // Predicated region
    $region9: #{autoformer_forward.36} parent=5 // pred_check
      _
    $region10: #{autoformer_forward.36} parent=5 // pred_check_branch
      %149 = sbr.rel (%p146) target = $region12
    $region11: #{autoformer_forward.36} parent=5 // pred_region
      %s150 = ssub.s32 %s11, 1
      // Predicated region
      $region13: #{autoformer_forward.36} parent=11 // pred_check
        %p151 = pneg %p32
      $region14: #{autoformer_forward.36} parent=11 // pred_check_branch
        %153 = sbr.rel (%p151) target = $region16
      $region15: #{autoformer_forward.36} parent=11 // pred_region
        _
      $region16: #{autoformer_forward.36} parent=11 // pred_fallthru
        _
    $region12: #{autoformer_forward.36} parent=5 // pred_fallthru
      _
    %p154 = scmp.lt.s32.totalorder %s11, 2
    // Predicated region
    $region17: #{autoformer_forward.36} parent=5 // pred_check
      %p155 = pneg %p154
    $region18: #{autoformer_forward.36} parent=5 // pred_check_branch
      %157 = sbr.rel (%p155) target = $region20
    $region19: #{autoformer_forward.36} parent=5 // pred_region
      // Predicated region
      $region21: #{autoformer_forward.36} parent=19 // pred_check
        %p158 = pneg %p52
      $region22: #{autoformer_forward.36} parent=19 // pred_check_branch
        %160 = sbr.rel (%p158) target = $region24
      $region23: #{autoformer_forward.36} parent=19 // pred_region
        %p161 = scmp.lt.s32.totalorder %s11, 1
        %s162 = scalar_select %p161, %s11, 1
        %s163 = smul.addr %s162, 2
        %s164 = smul.addr %s163, 8
        %s165 = scalar_lea.vmem %s1, %s164
      $region24: #{autoformer_forward.36} parent=19 // pred_fallthru
        _
      // Predicated region
      $region25: #{autoformer_forward.36} parent=19 // pred_check
        %p166 = pneg %p78
      $region26: #{autoformer_forward.36} parent=19 // pred_check_branch
        %168 = sbr.rel (%p166) target = $region28
      $region27: #{autoformer_forward.36} parent=19 // pred_region
        %p169 = scmp.lt.s32.totalorder %s11, 1
        %s170 = scalar_select %p169, %s11, 1
        %s171 = smul.addr %s170, 2
        %s172 = smul.addr %s171, 8
        %s173 = scalar_lea.vmem %s2, %s172
      $region28: #{autoformer_forward.36} parent=19 // pred_fallthru
        _
    $region20: #{autoformer_forward.36} parent=5 // pred_fallthru
      _
    %p174 = scmp.le.s32.totalorder 1, %s11
    %p175 = scmp.lt.s32.totalorder %s11, 3
    %p176 = pnand %p174, %p175
    %p177 = pneg %p176
    // Predicated region
    $region29: #{autoformer_forward.36} parent=5 // pred_check
      _
    $region30: #{autoformer_forward.36} parent=5 // pred_check_branch
      %179 = sbr.rel (%p176) target = $region32
    $region31: #{autoformer_forward.36} parent=5 // pred_region
      %s180 = ssub.s32 %s11, 1
      %p181 = pneg %p32
      %p182 = pneg %p29
      %p183 = scmp.lt.s32.totalorder %s16, 1
      %s184 = scalar_select %p183, %s16, 1
      %s185 = smul.addr %s184, 2
      %s186 = smul.addr %s185, 8
      %s187 = scalar_lea.vmem %s1, %s186
      %p188 = pneg %p58
      %p189 = pneg %p55
      %p190 = scmp.lt.s32.totalorder %s16, 1
      %s191 = scalar_select %p190, %s16, 1
      %s192 = smul.addr %s191, 2
      %s193 = smul.addr %s192, 8
      %s194 = scalar_lea.vmem %s2, %s193
      %p195 = pneg %p84
      %p196 = pneg %p81
      %p197 = pneg %p110
      %p198 = pneg %p107
      %p199 = scmp.lt.s32.totalorder %s16, 1
      %s200 = scalar_select %p199, %s16, 1
      %s201 = smul.addr %s200, 2
      %s202 = smul.addr %s201, 8
      %s203 = scalar_lea.vmem %s3, %s202
      %p204 = pneg %p136
      %p205 = pneg %p133
      %p206 = scmp.lt.s32.totalorder %s16, 1
      %s207 = scalar_select %p206, %s16, 1
      %s208 = smul.addr %s207, 2
      %s209 = smul.addr %s208, 8
      %s210 = scalar_lea.vmem %s4, %s209
      %p211 = scmp.lt.s32.totalorder %s16, 1
      %s212 = scalar_select %p211, %s16, 1
      %s213 = smul.addr %s212, 2
      %s214 = smul.addr %s213, 8
      %s215 = scalar_lea.vmem %s1, %s214
      %p216 = scmp.lt.s32.totalorder %s16, 1
      %s217 = scalar_select %p216, %s16, 1
      %s218 = smul.addr %s217, 2
      %s219 = smul.addr %s218, 8
      %s220 = scalar_lea.vmem %s2, %s219
      %p221 = scmp.lt.s32.totalorder %s16, 1
      %s222 = scalar_select %p221, %s16, 1
      %s223 = smul.addr %s222, 2
      %s224 = smul.addr %s223, 8
      %s225 = scalar_lea.vmem %s3, %s224
      %p226 = scmp.lt.s32.totalorder %s16, 1
      %s227 = scalar_select %p226, %s16, 1
      %s228 = smul.addr %s227, 2
      %s229 = smul.addr %s228, 8
      %s230 = scalar_lea.vmem %s4, %s229
      %v231 = vld [vmem:[%s215] sm:$0xff]
      %v232 = vld [vmem:[%s215 + $0x8] sm:$0xff]
      %v233 = vld [vmem:[%s220] sm:$0xff]
      %v234 = vld [vmem:[%s220 + $0x8] sm:$0xff]
      %v235 = vadd.f32 %v231, %v233
      %v236 = vadd.f32 %v232, %v234
      %v237 = vld [vmem:[%s0] sm:$0xff]
      %v238 = vld [vmem:[%s0 + $0x8] sm:$0xff]
      %vm239 = vcmask 130048
      %v241 = vsel %vm239, %v237, 0
      %v244 = vsel %vm239, %v238, 0
      %246 = vmatpush.msra.mxu0 0.0
      %247 = vmatpush.msra.mxu0 0.0
      %248 = vmatpush.msra.mxu0 0.0
      %249 = vmatpush.msra.mxu0 0.0
      %250 = vmatpush.msra.mxu0 0.0
      %251 = vmatpush.msra.mxu0 0.0
      %252 = vmatpush.msra.mxu0 0.0
      %253 = vmatpush.msra.mxu0 0.0
      %254 = vmatpush.msra.mxu0 0.0
      %255 = vmatpush.msra.mxu0 0.0
      %256 = vmatpush.msra.mxu0 0.0
      %257 = vmatpush.msra.mxu0 0.0
      %258 = vmatpush.msra.mxu0 0.0
      %259 = vmatpush.msra.mxu0 0.0
      %260 = vmatpush.msra.mxu0 %v236
      %261 = vmatpush.msra.mxu0 %v235
      %262 = vmatmul.f32.gmra.mxu0 %v241
      %v263 = vpop.f32.mrf.mxu0
      %v264 = vadd.f32 0.0, %v263
      %265 = vmatmul.f32.gmra.mxu0 %v244
      %v266 = vpop.f32.mrf.mxu0
      %v267 = vadd.f32 0.0, %v266
      %268 = vdwg.mxu0
      %vm269 = vcmask 261120
      %270 = vst.msk [vmem:[%s230] sm:$0xff] %vm269, %v264
      %271 = vst.msk [vmem:[%s230 + $0x8] sm:$0xff] %vm269, %v267
      %v272 = vsub.f32 %v235, %v264
      %v273 = vsub.f32 %v236, %v267
      %274 = vst.msk [vmem:[%s225] sm:$0xff] %vm269, %v272
      %275 = vst.msk [vmem:[%s225 + $0x8] sm:$0xff] %vm269, %v273
      %p276 = scmp.lt.s32.totalorder %s16, 1
      %s277 = scalar_select %p276, %s16, 1
      %s278 = smul.addr %s277, 2
      %s279 = smul.addr %s278, 8
      %s280 = scalar_lea.vmem %s3, %s279
      %p281 = scmp.lt.s32.totalorder %s16, 1
      %s282 = scalar_select %p281, %s16, 1
      %s283 = smul.addr %s282, 2
      %s284 = smul.addr %s283, 8
      %s285 = scalar_lea.vmem %s4, %s284
      // Predicated region
      $region33: #{autoformer_forward.36} parent=31 // pred_check
        %p286 = pneg %p107
      $region34: #{autoformer_forward.36} parent=31 // pred_check_branch
        %288 = sbr.rel (%p286) target = $region36
      $region35: #{autoformer_forward.36} parent=31 // pred_region
        _
      $region36: #{autoformer_forward.36} parent=31 // pred_fallthru
        _
      // Predicated region
      $region37: #{autoformer_forward.36} parent=31 // pred_check
        %p289 = pneg %p133
      $region38: #{autoformer_forward.36} parent=31 // pred_check_branch
        %291 = sbr.rel (%p289) target = $region40
      $region39: #{autoformer_forward.36} parent=31 // pred_region
        _
      $region40: #{autoformer_forward.36} parent=31 // pred_fallthru
        _
    $region32: #{autoformer_forward.36} parent=5 // pred_fallthru
      _
    %p292 = scmp.le.s32.totalorder 2, %s11
    // Predicated region
    $region41: #{autoformer_forward.36} parent=5 // pred_check
      %p293 = pneg %p292
    $region42: #{autoformer_forward.36} parent=5 // pred_check_branch
      %295 = sbr.rel (%p293) target = $region44
    $region43: #{autoformer_forward.36} parent=5 // pred_region
      %s296 = ssub.s32 %s11, 2
      // Predicated region
      $region45: #{autoformer_forward.36} parent=43 // pred_check
        %p297 = pneg %p113
      $region46: #{autoformer_forward.36} parent=43 // pred_check_branch
        %299 = sbr.rel (%p297) target = $region48
      $region47: #{autoformer_forward.36} parent=43 // pred_region
        %p300 = scmp.lt.s32.totalorder %s17, 1
        %s301 = scalar_select %p300, %s17, 1
        %s302 = smul.addr %s301, 2
        %s303 = smul.addr %s302, 8
        %s304 = scalar_lea.vmem %s3, %s303
      $region48: #{autoformer_forward.36} parent=43 // pred_fallthru
        _
      // Predicated region
      $region49: #{autoformer_forward.36} parent=43 // pred_check
        %p305 = pneg %p139
      $region50: #{autoformer_forward.36} parent=43 // pred_check_branch
        %307 = sbr.rel (%p305) target = $region52
      $region51: #{autoformer_forward.36} parent=43 // pred_region
        %p308 = scmp.lt.s32.totalorder %s17, 1
        %s309 = scalar_select %p308, %s17, 1
        %s310 = smul.addr %s309, 2
        %s311 = smul.addr %s310, 8
        %s312 = scalar_lea.vmem %s4, %s311
      $region52: #{autoformer_forward.36} parent=43 // pred_fallthru
        _
    $region44: #{autoformer_forward.36} parent=5 // pred_fallthru
      _
  $region6: #{autoformer_forward.36} parent=0 // loop_footer
    %s15 = sadd.s32 1, %s11
  $region7: #{autoformer_forward.36} parent=0 // loop_footer_branch
    %10 = sbr.rel target = $region3
  $region8: #{autoformer_forward.36} parent=0 // loop_exit
    _

// kernel: autoformer_forward.35
$region0: #{autoformer_forward.35}
  #allocation0 [shape = 'u32[]', space=smem, size = 0x4, offset = 0x4, fixed_abs, tag = 'smem constant byte address 0x4 - core index']
  #allocation1 [shape = 'u32[72,128]{1,0:T(1,128)}', space=vmem, size = 0x9000, scoped, tag = 'internal scratch']
  %s0 = inlined_call_operand.vmem [shape: s32[2,2], index: 0, kind: input, shape index: {}]
  %s1 = inlined_call_operand.vmem [shape: f32[2,2], index: 1, kind: input, shape index: {}]
  %s2 = inlined_call_operand.vmem [shape: f32[2,16,32], index: 2, kind: input, shape index: {}]
  %s3 = inlined_call_operand.vmem [shape: f32[32,32], index: 3, kind: input, shape index: {}]
  %s4 = inlined_call_operand.vmem [shape: f32[1,32], index: 4, kind: input, shape index: {}]
  %s5 = inlined_call_operand.vmem [shape: f32[2,16,32], index: 5, kind: output, shape index: {}]
  %s6 = sld [smem:[#allocation0]]
  $region61: #{autoformer_forward.35} parent=0
    _
  %s8 = ssub.s32 1, %s6
  %s9 = scalar_select 0, %s8, %s6
  $region1: #{autoformer_forward.35} parent=0
    #allocation2 [shape = 'u8[1024]{0}', space=smem, size = 0x400, scoped, tag = 'input window, operand 0, single buffered']
    #allocation3 [shape = 's32[2]{0}', space=sflag, size = 0x8, scoped, tag = 'scoped memory for autoformer_forward.35']
    #allocation4 [shape = 'u8[1024]{0}', space=smem, size = 0x400, scoped, tag = 'input window, operand 1, single buffered']
    #allocation5 [shape = 's32[1]{0}', space=sflag, size = 0x4, scoped, tag = 'scoped memory for autoformer_forward.35']
    %10 = vsyncpa [#allocation3], 0
    %11 = vsyncpa [#allocation5], 0
    loop: start=0, step=1, limit=4
    $region2: #{autoformer_forward.35} parent=1 // loop_pre_header
      _
    $region3: #{autoformer_forward.35} parent=1 // loop_header
      %s13 = sphi 0, %s17
      %p14 = scmp.ge.s32.totalorder %s13, 4
      %s21 = sphi 0, %s21
      %s23 = sphi 0, %s21
      %s24 = sphi 0, %s23
      %s38 = sphi 0, %s24
      %s42 = sphi 0, %s42
      %s44 = sphi 0, %s42
      %s45 = sphi 0, %s44
      %s59 = sphi 0, %s45
      %s65 = sphi 0, %s67
      %s68 = sphi 0, %s65
      %s69 = sphi 0, %s68
      %s85 = sphi 0, %s69
      %s89 = sphi 0, %s89
      %s91 = sphi 0, %s89
      %s92 = sphi 0, %s91
      %s106 = sphi 0, %s92
      %s110 = sphi 0, %s110
      %s112 = sphi 0, %s110
      %s113 = sphi 0, %s112
      %s127 = sphi 0, %s113
      %s133 = sphi 0, %s135
      %s136 = sphi 0, %s133
      %s137 = sphi 0, %s136
      %s153 = sphi 0, %s137
    $region4: #{autoformer_forward.35} parent=1 // loop_header_branch
      %16 = sbr.rel (%p14) target = $region8
    $region5: #{autoformer_forward.35} parent=1 // loop_body
      %s18 = ssub.s32 %s13, 1
      %s19 = ssub.s32 %s13, 2
      %s20 = sadd.s32 %s13, 1
      %s22 = sadd.s32 %s21, 1
      %p25 = scmp.eq.s32.totalorder %s13, 1
      %p26 = scmp.ne.s32.totalorder %s21, %s23
      %p27 = scmp.eq.s32.totalorder %s13, 0
      %p28 = por %p26, %p27
      %p29 = scmp.ne.s32.totalorder %s21, %s23
      %p30 = scmp.eq.s32.totalorder %s18, 1
      %p31 = por %p29, %p30
      %p32 = scmp.ne.s32.totalorder %s23, %s24
      %p33 = scmp.eq.s32.totalorder %s18, 0
      %p34 = por %p32, %p33
      %p35 = scmp.ne.s32.totalorder %s23, %s24
      %p36 = scmp.eq.s32.totalorder %s19, 1
      %p37 = por %p35, %p36
      %p39 = scmp.ne.s32.totalorder %s24, %s38
      %p40 = scmp.eq.s32.totalorder %s19, 0
      %p41 = por %p39, %p40
      %s43 = sadd.s32 %s42, 1
      %p46 = scmp.eq.s32.totalorder %s13, 1
      %p47 = scmp.ne.s32.totalorder %s42, %s44
      %p48 = scmp.eq.s32.totalorder %s13, 0
      %p49 = por %p47, %p48
      %p50 = scmp.ne.s32.totalorder %s42, %s44
      %p51 = scmp.eq.s32.totalorder %s18, 1
      %p52 = por %p50, %p51
      %p53 = scmp.ne.s32.totalorder %s44, %s45
      %p54 = scmp.eq.s32.totalorder %s18, 0
      %p55 = por %p53, %p54
      %p56 = scmp.ne.s32.totalorder %s44, %s45
      %p57 = scmp.eq.s32.totalorder %s19, 1
      %p58 = por %p56, %p57
      %p60 = scmp.ne.s32.totalorder %s45, %s59
      %p61 = scmp.eq.s32.totalorder %s19, 0
      %p62 = por %p60, %p61
      %s63 = ssub.s32 %s13, %s20
      %p64 = scmp.eq.s32.totalorder %s63, 0
      %s66 = sadd.s32 %s65, 1
      %s67 = scalar_select %p64, %s65, %s66
      %p70 = pneg %p64
      %p71 = scmp.eq.s32.totalorder %s13, 1
      %p72 = por %p70, %p71
      %p73 = scmp.ne.s32.totalorder %s65, %s68
      %p74 = scmp.eq.s32.totalorder %s13, 0
      %p75 = por %p73, %p74
      %p76 = scmp.ne.s32.totalorder %s65, %s68
      %p77 = scmp.eq.s32.totalorder %s18, 1
      %p78 = por %p76, %p77
      %p79 = scmp.ne.s32.totalorder %s68, %s69
      %p80 = scmp.eq.s32.totalorder %s18, 0
      %p81 = por %p79, %p80
      %p82 = scmp.ne.s32.totalorder %s68, %s69
      %p83 = scmp.eq.s32.totalorder %s19, 1
      %p84 = por %p82, %p83
      %p86 = scmp.ne.s32.totalorder %s69, %s85
      %p87 = scmp.eq.s32.totalorder %s19, 0
      %p88 = por %p86, %p87
      %s90 = sadd.s32 %s89, 1
      %p93 = scmp.eq.s32.totalorder %s13, 1
      %p94 = scmp.ne.s32.totalorder %s89, %s91
      %p95 = scmp.eq.s32.totalorder %s13, 0
      %p96 = por %p94, %p95
      %p97 = scmp.ne.s32.totalorder %s89, %s91
      %p98 = scmp.eq.s32.totalorder %s18, 1
      %p99 = por %p97, %p98
      %p100 = scmp.ne.s32.totalorder %s91, %s92
      %p101 = scmp.eq.s32.totalorder %s18, 0
      %p102 = por %p100, %p101
      %p103 = scmp.ne.s32.totalorder %s91, %s92
      %p104 = scmp.eq.s32.totalorder %s19, 1
      %p105 = por %p103, %p104
      %p107 = scmp.ne.s32.totalorder %s92, %s106
      %p108 = scmp.eq.s32.totalorder %s19, 0
      %p109 = por %p107, %p108
      %s111 = sadd.s32 %s110, 1
      %p114 = scmp.eq.s32.totalorder %s13, 1
      %p115 = scmp.ne.s32.totalorder %s110, %s112
      %p116 = scmp.eq.s32.totalorder %s13, 0
      %p117 = por %p115, %p116
      %p118 = scmp.ne.s32.totalorder %s110, %s112
      %p119 = scmp.eq.s32.totalorder %s18, 1
      %p120 = por %p118, %p119
      %p121 = scmp.ne.s32.totalorder %s112, %s113
      %p122 = scmp.eq.s32.totalorder %s18, 0
      %p123 = por %p121, %p122
      %p124 = scmp.ne.s32.totalorder %s112, %s113
      %p125 = scmp.eq.s32.totalorder %s19, 1
      %p126 = por %p124, %p125
      %p128 = scmp.ne.s32.totalorder %s113, %s127
      %p129 = scmp.eq.s32.totalorder %s19, 0
      %p130 = por %p128, %p129
      %s131 = ssub.s32 %s13, %s20
      %p132 = scmp.eq.s32.totalorder %s131, 0
      %s134 = sadd.s32 %s133, 1
      %s135 = scalar_select %p132, %s133, %s134
      %p138 = pneg %p132
      %p139 = scmp.eq.s32.totalorder %s13, 1
      %p140 = por %p138, %p139
      %p141 = scmp.ne.s32.totalorder %s133, %s136
      %p142 = scmp.eq.s32.totalorder %s13, 0
      %p143 = por %p141, %p142
      %p144 = scmp.ne.s32.totalorder %s133, %s136
      %p145 = scmp.eq.s32.totalorder %s18, 1
      %p146 = por %p144, %p145
      %p147 = scmp.ne.s32.totalorder %s136, %s137
      %p148 = scmp.eq.s32.totalorder %s18, 0
      %p149 = por %p147, %p148
      %p150 = scmp.ne.s32.totalorder %s136, %s137
      %p151 = scmp.eq.s32.totalorder %s19, 1
      %p152 = por %p150, %p151
      %p154 = scmp.ne.s32.totalorder %s137, %s153
      %p155 = scmp.eq.s32.totalorder %s19, 0
      %p156 = por %p154, %p155
      %p157 = scmp.le.s32.totalorder 1, %s13
      %p158 = scmp.lt.s32.totalorder %s13, 3
      %p159 = pnand %p157, %p158
      %p160 = pneg %p159
      // Predicated region
      $region9: #{autoformer_forward.35} parent=5 // pred_check
        _
      $region10: #{autoformer_forward.35} parent=5 // pred_check_branch
        %162 = sbr.rel (%p159) target = $region12
      $region11: #{autoformer_forward.35} parent=5 // pred_region
        %s163 = ssub.s32 %s13, 1
        // Predicated region
        $region13: #{autoformer_forward.35} parent=11 // pred_check
          %p164 = pneg %p34
        $region14: #{autoformer_forward.35} parent=11 // pred_check_branch
          %166 = sbr.rel (%p164) target = $region16
        $region15: #{autoformer_forward.35} parent=11 // pred_region
          %168 = vsyncadd [#allocation3], 0
          %s170 = sshll.u32 %s0, 4
          %s171 = int_to_ptr.vmem [resolvable:$true] %s170
          %173 = dma.vmem_to_smem %s171, 32, [#allocation2], [#allocation3]
        $region16: #{autoformer_forward.35} parent=11 // pred_fallthru
          _
        // Predicated region
        $region17: #{autoformer_forward.35} parent=11 // pred_check
          %p174 = pneg %p55
        $region18: #{autoformer_forward.35} parent=11 // pred_check_branch
          %176 = sbr.rel (%p174) target = $region20
        $region19: #{autoformer_forward.35} parent=11 // pred_region
          %178 = vsyncadd [#allocation5], 0
          %s180 = sshll.u32 %s1, 4
          %s181 = int_to_ptr.vmem [resolvable:$true] %s180
          %183 = dma.vmem_to_smem %s181, 32, [#allocation4], [#allocation5]
        $region20: #{autoformer_forward.35} parent=11 // pred_fallthru
          _
        // Predicated region
        $region21: #{autoformer_forward.35} parent=11 // pred_check
          %p184 = pneg %p102
        $region22: #{autoformer_forward.35} parent=11 // pred_check_branch
          %186 = sbr.rel (%p184) target = $region24
        $region23: #{autoformer_forward.35} parent=11 // pred_region
          _
        $region24: #{autoformer_forward.35} parent=11 // pred_fallthru
          _
        // Predicated region
        $region25: #{autoformer_forward.35} parent=11 // pred_check
          %p187 = pneg %p123
        $region26: #{autoformer_forward.35} parent=11 // pred_check_branch
          %189 = sbr.rel (%p187) target = $region28
        $region27: #{autoformer_forward.35} parent=11 // pred_region
          _
        $region28: #{autoformer_forward.35} parent=11 // pred_fallthru
          _
      $region12: #{autoformer_forward.35} parent=5 // pred_fallthru
        _
      %p190 = scmp.lt.s32.totalorder %s13, 2
      // Predicated region
      $region29: #{autoformer_forward.35} parent=5 // pred_check
        %p191 = pneg %p190
      $region30: #{autoformer_forward.35} parent=5 // pred_check_branch
        %193 = sbr.rel (%p191) target = $region32
      $region31: #{autoformer_forward.35} parent=5 // pred_region
        // Predicated region
        $region33: #{autoformer_forward.35} parent=31 // pred_check
          %p194 = pneg %p75
        $region34: #{autoformer_forward.35} parent=31 // pred_check_branch
          %196 = sbr.rel (%p194) target = $region36
        $region35: #{autoformer_forward.35} parent=31 // pred_region
          %p197 = scmp.lt.s32.totalorder %s13, 1
          %s198 = scalar_select %p197, %s13, 1
          %s199 = smul.addr %s198, 2
          %s200 = smul.addr %s199, 8
          %s201 = scalar_lea.vmem %s2, %s200
        $region36: #{autoformer_forward.35} parent=31 // pred_fallthru
          _
      $region32: #{autoformer_forward.35} parent=5 // pred_fallthru
        _
      %p202 = scmp.le.s32.totalorder 1, %s13
      %p203 = scmp.lt.s32.totalorder %s13, 3
      %p204 = pnand %p202, %p203
      %p205 = pneg %p204
      // Predicated region
      $region37: #{autoformer_forward.35} parent=5 // pred_check
        _
      $region38: #{autoformer_forward.35} parent=5 // pred_check_branch
        %207 = sbr.rel (%p204) target = $region40
      $region39: #{autoformer_forward.35} parent=5 // pred_region
        %s208 = ssub.s32 %s13, 1
        // Predicated region
        $region41: #{autoformer_forward.35} parent=39 // pred_check
          %p209 = pneg %p34
        $region42: #{autoformer_forward.35} parent=39 // pred_check_branch
          %211 = sbr.rel (%p209) target = $region44
        $region43: #{autoformer_forward.35} parent=39 // pred_region
          %213 = dma.done [#allocation3], 32
        $region44: #{autoformer_forward.35} parent=39 // pred_fallthru
          _
        // Predicated region
        $region45: #{autoformer_forward.35} parent=39 // pred_check
          %p214 = pneg %p55
        $region46: #{autoformer_forward.35} parent=39 // pred_check_branch
          %216 = sbr.rel (%p214) target = $region48
        $region47: #{autoformer_forward.35} parent=39 // pred_region
          %218 = dma.done [#allocation5], 32
        $region48: #{autoformer_forward.35} parent=39 // pred_fallthru
          _
        %219 = sfence
        %p220 = pneg %p34
        %p221 = pneg %p31
        %p222 = pneg %p55
        %p223 = pneg %p52
        %p224 = scmp.lt.s32.totalorder %s18, 1
        %s225 = scalar_select %p224, %s18, 1
        %s226 = smul.addr %s225, 2
        %s227 = smul.addr %s226, 8
        %s228 = scalar_lea.vmem %s2, %s227
        %p229 = pneg %p81
        %p230 = pneg %p78
        %p231 = pneg %p102
        %p232 = pneg %p99
        %p233 = pneg %p123
        %p234 = pneg %p120
        %p235 = pneg %p149
        %p236 = pneg %p146
        %p237 = scmp.lt.s32.totalorder %s18, 1
        %s238 = scalar_select %p237, %s18, 1
        %s239 = smul.addr %s238, 2
        %s240 = smul.addr %s239, 8
        %s241 = scalar_lea.vmem %s5, %s240
        %p242 = scmp.lt.s32.totalorder %s18, 1
        %s243 = scalar_select %p242, %s18, 1
        %s244 = smul.addr %s243, 2
        %s245 = smul.addr %s244, 8
        %s246 = scalar_lea.vmem %s2, %s245
        %p247 = scmp.lt.s32.totalorder %s18, 1
        %s248 = scalar_select %p247, %s18, 1
        %s249 = smul.addr %s248, 2
        %s250 = smul.addr %s249, 8
        %s251 = scalar_lea.vmem %s5, %s250
        %v252 = vld [vmem:[%s246] sm:$0xff]
        %v253 = vld [vmem:[%s246 + $0x8] sm:$0xff]
        %v254 = vlaneseq
        %v255 = vshrl.u32 %v254, 7
        %v256 = vadd.s32 %v255, 8
        %v257 = vlaneseq
        %v258 = vand.u32 %v257, 127
        %v259 = vsub.s32 %v258, %v255
        %v260 = vsub.s32 %v258, %v256
        %v261 = vadd.s32 %v259, 16
        %v262 = vadd.s32 %v260, 16
        %vm263 = vcmp.lt.s32.totalorder %v261, 0
        %v264 = vsub.s32 0, %v261
        %v265 = vsel %vm263, %v264, %v261
        %v266 = vshrl.u32 %v265, 4
        %v267 = vand.u32 %v265, 15
        %v268 = vsub.s32 0, %v267
        %v269 = vsel %vm263, %v268, %v267
        %vm270 = vcmp.lt.s32.totalorder %v262, 0
        %v271 = vsub.s32 0, %v262
        %v272 = vsel %vm270, %v271, %v262
        %v273 = vshrl.u32 %v272, 4
        %v274 = vand.u32 %v272, 15
        %v275 = vsub.s32 0, %v274
        %v276 = vsel %vm270, %v275, %v274
        %vm277 = vcmp.ne.s32.totalorder %v269, 0
        %vm278 = vcmp.ne.s32.totalorder %v276, 0
        %vm279 = vcmp.lt.s32.totalorder %v269, 0
        %vm280 = vcmp.lt.s32.totalorder %v276, 0
        %vm281 = vmand %vm279, %vm277
        %vm282 = vmand %vm280, %vm278
        %v283 = vadd.s32 %v269, 16
        %v284 = vadd.s32 %v276, 16
        %v285 = vsel %vm281, %v283, %v269
        %v286 = vsel %vm282, %v284, %v276
        %s287 = smul.u32 %s18, 128
        %s288 = sld [smem:[#allocation2 + %s287]]
        %s289 = sld [smem:[#allocation4 + %s287]]
        %v290 = vstv %s288
        %vm291 = vcmp.eq.s32.totalorder %v285, %v290
        %vm292 = vcmp.eq.s32.totalorder %v286, %v290
        %v293 = vstv %s289
        %v294 = vsel %vm291, %v293, 0.0
        %v295 = vsel %vm292, %v293, 0.0
        %v296 = vadd.f32 %v294, 0.0
        %v297 = vadd.f32 %v295, 0.0
        %s298 = sadd.s32 %s287, 1
        %s299 = sld [smem:[#allocation2 + %s298]]
        %s300 = sld [smem:[#allocation4 + %s298]]
        %v301 = vstv %s299
        %vm302 = vcmp.eq.s32.totalorder %v285, %v301
        %vm303 = vcmp.eq.s32.totalorder %v286, %v301
        %v304 = vstv %s300
        %v305 = vsel %vm302, %v304, 0.0
        %v306 = vsel %vm303, %v304, 0.0
        %v307 = vadd.f32 %v296, %v305
        %v308 = vadd.f32 %v297, %v306
        %vm309 = vcmask 130048
        %v311 = vsel %vm309, %v307, 0
        %v314 = vsel %vm309, %v308, 0
        %316 = vmatpush.msra.mxu0 0.0
        %317 = vmatpush.msra.mxu0 0.0
        %318 = vmatpush.msra.mxu0 0.0
        %319 = vmatpush.msra.mxu0 0.0
        %320 = vmatpush.msra.mxu0 0.0
        %321 = vmatpush.msra.mxu0 0.0
        %322 = vmatpush.msra.mxu0 0.0
        %323 = vmatpush.msra.mxu0 0.0
        %324 = vmatpush.msra.mxu0 0.0
        %325 = vmatpush.msra.mxu0 0.0
        %326 = vmatpush.msra.mxu0 0.0
        %327 = vmatpush.msra.mxu0 0.0
        %328 = vmatpush.msra.mxu0 0.0
        %329 = vmatpush.msra.mxu0 0.0
        %330 = vmatpush.msra.mxu0 %v253
        %331 = vmatpush.msra.mxu0 %v252
        %332 = vmatmul.f32.gmra.mxu0 %v311
        %v333 = vpop.f32.mrf.mxu0
        %v334 = vadd.f32 0.0, %v333
        %335 = vmatmul.f32.gmra.mxu0 %v314
        %v336 = vpop.f32.mrf.mxu0
        %v337 = vadd.f32 0.0, %v336
        %338 = vdwg.mxu0
        %v339 = vld [vmem:[%s3] sm:$0xff]
        %v340 = vld [vmem:[%s3 + $0x8] sm:$0xff]
        %v341 = vld [vmem:[%s3 + $0x10] sm:$0xff]
        %v342 = vld [vmem:[%s3 + $0x18] sm:$0xff]
        %v343 = vld [vmem:[%s4] sm:$0x1]
        %v345 = vperm.slane %v343, 0
        %vm347 = vcmask 261120
        %v349 = vsel %vm347, %v334, 0
        %v352 = vsel %vm347, %v337, 0
        %354 = vmatpush.msra.mxu0 0.0
        %355 = vmatpush.msra.mxu0 0.0
        %356 = vmatpush.msra.mxu0 0.0
        %357 = vmatpush.msra.mxu0 0.0
        %358 = vmatpush.msra.mxu0 0.0
        %359 = vmatpush.msra.mxu0 0.0
        %360 = vmatpush.msra.mxu0 0.0
        %361 = vmatpush.msra.mxu0 0.0
        %362 = vmatpush.msra.mxu0 0.0
        %363 = vmatpush.msra.mxu0 0.0
        %364 = vmatpush.msra.mxu0 0.0
        %365 = vmatpush.msra.mxu0 0.0
        %366 = vmatpush.msra.mxu0 %v342
        %367 = vmatpush.msra.mxu0 %v341
        %368 = vmatpush.msra.mxu0 %v340
        %369 = vmatpush.msra.mxu0 %v339
        %370 = vmatmul.f32.gmra.mxu0 %v349
        %v371 = vpop.f32.mrf.mxu0
        %v372 = vadd.f32 %v345, %v371
        %373 = vmatmul.f32.gmra.mxu0 %v352
        %v374 = vpop.f32.mrf.mxu0
        %v375 = vadd.f32 %v345, %v374
        %376 = vdwg.mxu0
        %377 = vst.msk [vmem:[%s251] sm:$0xff] %vm347, %v372
        %378 = vst.msk [vmem:[%s251 + $0x8] sm:$0xff] %vm347, %v375
        %p379 = scmp.lt.s32.totalorder %s18, 1
        %s380 = scalar_select %p379, %s18, 1
        %s381 = smul.addr %s380, 2
        %s382 = smul.addr %s381, 8
        %s383 = scalar_lea.vmem %s5, %s382
        // Predicated region
        $region49: #{autoformer_forward.35} parent=39 // pred_check
          %p384 = pneg %p146
        $region50: #{autoformer_forward.35} parent=39 // pred_check_branch
          %386 = sbr.rel (%p384) target = $region52
        $region51: #{autoformer_forward.35} parent=39 // pred_region
          _
        $region52: #{autoformer_forward.35} parent=39 // pred_fallthru
          _
      $region40: #{autoformer_forward.35} parent=5 // pred_fallthru
        _
      %p387 = scmp.le.s32.totalorder 2, %s13
      // Predicated region
      $region53: #{autoformer_forward.35} parent=5 // pred_check
        %p388 = pneg %p387
      $region54: #{autoformer_forward.35} parent=5 // pred_check_branch
        %390 = sbr.rel (%p388) target = $region56
      $region55: #{autoformer_forward.35} parent=5 // pred_region
        %s391 = ssub.s32 %s13, 2
        // Predicated region
        $region57: #{autoformer_forward.35} parent=55 // pred_check
          %p392 = pneg %p152
        $region58: #{autoformer_forward.35} parent=55 // pred_check_branch
          %394 = sbr.rel (%p392) target = $region60
        $region59: #{autoformer_forward.35} parent=55 // pred_region
          %p395 = scmp.lt.s32.totalorder %s19, 1
          %s396 = scalar_select %p395, %s19, 1
          %s397 = smul.addr %s396, 2
          %s398 = smul.addr %s397, 8
          %s399 = scalar_lea.vmem %s5, %s398
        $region60: #{autoformer_forward.35} parent=55 // pred_fallthru
          _
      $region56: #{autoformer_forward.35} parent=5 // pred_fallthru
        _
    $region6: #{autoformer_forward.35} parent=1 // loop_footer
      %s17 = sadd.s32 1, %s13
    $region7: #{autoformer_forward.35} parent=1 // loop_footer_branch
      %12 = sbr.rel target = $region3
    $region8: #{autoformer_forward.35} parent=1 // loop_exit
      _
    %400 = vsyncpa [#allocation3], 1
    %s401 = scalar_lea.sflag [#allocation3], 1
    %402 = vsyncpa %s401, 1
    %403 = vsyncpa [#allocation5], 1

// kernel: autoformer_forward.26
$region0: #{autoformer_forward.26}
  #allocation0 [shape = 'u32[]', space=smem, size = 0x4, offset = 0x4, fixed_abs, tag = 'smem constant byte address 0x4 - core index']
  #allocation1 [shape = 'u32[72,128]{1,0:T(1,128)}', space=vmem, size = 0x9000, scoped, tag = 'internal scratch']
  %s0 = inlined_call_operand.vmem [shape: f32[16,16], index: 0, kind: input, shape index: {}]
  %s1 = inlined_call_operand.vmem [shape: f32[2,16,32], index: 1, kind: input, shape index: {}]
  %s2 = inlined_call_operand.vmem [shape: f32[2,16,32], index: 2, kind: input, shape index: {}]
  %s3 = inlined_call_operand.vmem [shape: f32[2,16,32], index: 3, kind: output, shape index: {0}]
  %s4 = inlined_call_operand.hbm [shape: f32[2,16,32], index: 4, kind: output, shape index: {1}]
  %5 = xla_tuple %s3, %s4
  %s6 = sld [smem:[#allocation0]]
  $region53: #{autoformer_forward.26} parent=0
    _
  %s8 = ssub.s32 1, %s6
  %s9 = scalar_select 0, %s8, %s6
  $region1: #{autoformer_forward.26} parent=0
    #allocation2 [shape = 'u8[16384]{0}', space=vmem, size = 0x4000, scoped, tag = 'output window, operand 1']
    #allocation3 [shape = 's32[2]{0}', space=sflag, size = 0x8, scoped, tag = 'scoped memory for autoformer_forward.26']
    %10 = vsyncpa [#allocation3], 0
    %s11 = scalar_lea.sflag [#allocation3], 1
    %12 = vsyncpa %s11, 0
    loop: start=0, step=1, limit=4
    $region2: #{autoformer_forward.26} parent=1 // loop_pre_header
      _
    $region3: #{autoformer_forward.26} parent=1 // loop_header
      %s14 = sphi 0, %s18
      %p15 = scmp.ge.s32.totalorder %s14, 4
      %s22 = sphi 0, %s22
      %s24 = sphi 0, %s22
      %s25 = sphi 0, %s24
      %s39 = sphi 0, %s25
      %s45 = sphi 0, %s47
      %s48 = sphi 0, %s45
      %s49 = sphi 0, %s48
      %s65 = sphi 0, %s49
      %s71 = sphi 0, %s73
      %s74 = sphi 0, %s71
      %s75 = sphi 0, %s74
      %s91 = sphi 0, %s75
      %s97 = sphi 0, %s99
      %s100 = sphi 0, %s97
      %s101 = sphi 0, %s100
      %s117 = sphi 0, %s101
      %s123 = sphi 0, %s125
      %s126 = sphi 0, %s123
      %s127 = sphi 0, %s126
      %s143 = sphi 0, %s127
    $region4: #{autoformer_forward.26} parent=1 // loop_header_branch
      %17 = sbr.rel (%p15) target = $region8
    $region5: #{autoformer_forward.26} parent=1 // loop_body
      %s19 = ssub.s32 %s14, 1
      %s20 = ssub.s32 %s14, 2
      %s21 = sadd.s32 %s14, 1
      %s23 = sadd.s32 %s22, 1
      %p26 = scmp.eq.s32.totalorder %s14, 1
      %p27 = scmp.ne.s32.totalorder %s22, %s24
      %p28 = scmp.eq.s32.totalorder %s14, 0
      %p29 = por %p27, %p28
      %p30 = scmp.ne.s32.totalorder %s22, %s24
      %p31 = scmp.eq.s32.totalorder %s19, 1
      %p32 = por %p30, %p31
      %p33 = scmp.ne.s32.totalorder %s24, %s25
      %p34 = scmp.eq.s32.totalorder %s19, 0
      %p35 = por %p33, %p34
      %p36 = scmp.ne.s32.totalorder %s24, %s25
      %p37 = scmp.eq.s32.totalorder %s20, 1
      %p38 = por %p36, %p37
      %p40 = scmp.ne.s32.totalorder %s25, %s39
      %p41 = scmp.eq.s32.totalorder %s20, 0
      %p42 = por %p40, %p41
      %s43 = ssub.s32 %s14, %s21
      %p44 = scmp.eq.s32.totalorder %s43, 0
      %s46 = sadd.s32 %s45, 1
      %s47 = scalar_select %p44, %s45, %s46
      %p50 = pneg %p44
      %p51 = scmp.eq.s32.totalorder %s14, 1
      %p52 = por %p50, %p51
      %p53 = scmp.ne.s32.totalorder %s45, %s48
      %p54 = scmp.eq.s32.totalorder %s14, 0
      %p55 = por %p53, %p54
      %p56 = scmp.ne.s32.totalorder %s45, %s48
      %p57 = scmp.eq.s32.totalorder %s19, 1
      %p58 = por %p56, %p57
      %p59 = scmp.ne.s32.totalorder %s48, %s49
      %p60 = scmp.eq.s32.totalorder %s19, 0
      %p61 = por %p59, %p60
      %p62 = scmp.ne.s32.totalorder %s48, %s49
      %p63 = scmp.eq.s32.totalorder %s20, 1
      %p64 = por %p62, %p63
      %p66 = scmp.ne.s32.totalorder %s49, %s65
      %p67 = scmp.eq.s32.totalorder %s20, 0
      %p68 = por %p66, %p67
      %s69 = ssub.s32 %s14, %s21
      %p70 = scmp.eq.s32.totalorder %s69, 0
      %s72 = sadd.s32 %s71, 1
      %s73 = scalar_select %p70, %s71, %s72
      %p76 = pneg %p70
      %p77 = scmp.eq.s32.totalorder %s14, 1
      %p78 = por %p76, %p77
      %p79 = scmp.ne.s32.totalorder %s71, %s74
      %p80 = scmp.eq.s32.totalorder %s14, 0
      %p81 = por %p79, %p80
      %p82 = scmp.ne.s32.totalorder %s71, %s74
      %p83 = scmp.eq.s32.totalorder %s19, 1
      %p84 = por %p82, %p83
      %p85 = scmp.ne.s32.totalorder %s74, %s75
      %p86 = scmp.eq.s32.totalorder %s19, 0
      %p87 = por %p85, %p86
      %p88 = scmp.ne.s32.totalorder %s74, %s75
      %p89 = scmp.eq.s32.totalorder %s20, 1
      %p90 = por %p88, %p89
      %p92 = scmp.ne.s32.totalorder %s75, %s91
      %p93 = scmp.eq.s32.totalorder %s20, 0
      %p94 = por %p92, %p93
      %s95 = ssub.s32 %s14, %s21
      %p96 = scmp.eq.s32.totalorder %s95, 0
      %s98 = sadd.s32 %s97, 1
      %s99 = scalar_select %p96, %s97, %s98
      %p102 = pneg %p96
      %p103 = scmp.eq.s32.totalorder %s14, 1
      %p104 = por %p102, %p103
      %p105 = scmp.ne.s32.totalorder %s97, %s100
      %p106 = scmp.eq.s32.totalorder %s14, 0
      %p107 = por %p105, %p106
      %p108 = scmp.ne.s32.totalorder %s97, %s100
      %p109 = scmp.eq.s32.totalorder %s19, 1
      %p110 = por %p108, %p109
      %p111 = scmp.ne.s32.totalorder %s100, %s101
      %p112 = scmp.eq.s32.totalorder %s19, 0
      %p113 = por %p111, %p112
      %p114 = scmp.ne.s32.totalorder %s100, %s101
      %p115 = scmp.eq.s32.totalorder %s20, 1
      %p116 = por %p114, %p115
      %p118 = scmp.ne.s32.totalorder %s101, %s117
      %p119 = scmp.eq.s32.totalorder %s20, 0
      %p120 = por %p118, %p119
      %s121 = ssub.s32 %s14, %s21
      %p122 = scmp.eq.s32.totalorder %s121, 0
      %s124 = sadd.s32 %s123, 1
      %s125 = scalar_select %p122, %s123, %s124
      %p128 = pneg %p122
      %p129 = scmp.eq.s32.totalorder %s14, 1
      %p130 = por %p128, %p129
      %p131 = scmp.ne.s32.totalorder %s123, %s126
      %p132 = scmp.eq.s32.totalorder %s14, 0
      %p133 = por %p131, %p132
      %p134 = scmp.ne.s32.totalorder %s123, %s126
      %p135 = scmp.eq.s32.totalorder %s19, 1
      %p136 = por %p134, %p135
      %p137 = scmp.ne.s32.totalorder %s126, %s127
      %p138 = scmp.eq.s32.totalorder %s19, 0
      %p139 = por %p137, %p138
      %p140 = scmp.ne.s32.totalorder %s126, %s127
      %p141 = scmp.eq.s32.totalorder %s20, 1
      %p142 = por %p140, %p141
      %p144 = scmp.ne.s32.totalorder %s127, %s143
      %p145 = scmp.eq.s32.totalorder %s20, 0
      %p146 = por %p144, %p145
      %p147 = scmp.le.s32.totalorder 1, %s14
      %p148 = scmp.lt.s32.totalorder %s14, 3
      %p149 = pnand %p147, %p148
      %p150 = pneg %p149
      // Predicated region
      $region9: #{autoformer_forward.26} parent=5 // pred_check
        _
      $region10: #{autoformer_forward.26} parent=5 // pred_check_branch
        %152 = sbr.rel (%p149) target = $region12
      $region11: #{autoformer_forward.26} parent=5 // pred_region
        %s153 = ssub.s32 %s14, 1
        // Predicated region
        $region13: #{autoformer_forward.26} parent=11 // pred_check
          %p154 = pneg %p35
        $region14: #{autoformer_forward.26} parent=11 // pred_check_branch
          %156 = sbr.rel (%p154) target = $region16
        $region15: #{autoformer_forward.26} parent=11 // pred_region
          _
        $region16: #{autoformer_forward.26} parent=11 // pred_fallthru
          _
      $region12: #{autoformer_forward.26} parent=5 // pred_fallthru
        _
      %p157 = scmp.lt.s32.totalorder %s14, 2
      // Predicated region
      $region17: #{autoformer_forward.26} parent=5 // pred_check
        %p158 = pneg %p157
      $region18: #{autoformer_forward.26} parent=5 // pred_check_branch
        %160 = sbr.rel (%p158) target = $region20
      $region19: #{autoformer_forward.26} parent=5 // pred_region
        // Predicated region
        $region21: #{autoformer_forward.26} parent=19 // pred_check
          %p161 = pneg %p55
        $region22: #{autoformer_forward.26} parent=19 // pred_check_branch
          %163 = sbr.rel (%p161) target = $region24
        $region23: #{autoformer_forward.26} parent=19 // pred_region
          %p164 = scmp.lt.s32.totalorder %s14, 1
          %s165 = scalar_select %p164, %s14, 1
          %s166 = smul.addr %s165, 2
          %s167 = smul.addr %s166, 8
          %s168 = scalar_lea.vmem %s1, %s167
        $region24: #{autoformer_forward.26} parent=19 // pred_fallthru
          _
        // Predicated region
        $region25: #{autoformer_forward.26} parent=19 // pred_check
          %p169 = pneg %p81
        $region26: #{autoformer_forward.26} parent=19 // pred_check_branch
          %171 = sbr.rel (%p169) target = $region28
        $region27: #{autoformer_forward.26} parent=19 // pred_region
          %p172 = scmp.lt.s32.totalorder %s14, 1
          %s173 = scalar_select %p172, %s14, 1
          %s174 = smul.addr %s173, 2
          %s175 = smul.addr %s174, 8
          %s176 = scalar_lea.vmem %s2, %s175
        $region28: #{autoformer_forward.26} parent=19 // pred_fallthru
          _
      $region20: #{autoformer_forward.26} parent=5 // pred_fallthru
        _
      %p177 = scmp.le.s32.totalorder 1, %s14
      %p178 = scmp.lt.s32.totalorder %s14, 3
      %p179 = pnand %p177, %p178
      %p180 = pneg %p179
      // Predicated region
      $region29: #{autoformer_forward.26} parent=5 // pred_check
        _
      $region30: #{autoformer_forward.26} parent=5 // pred_check_branch
        %182 = sbr.rel (%p179) target = $region32
      $region31: #{autoformer_forward.26} parent=5 // pred_region
        %s183 = ssub.s32 %s14, 1
        %p184 = pneg %p35
        %p185 = pneg %p32
        %p186 = scmp.lt.s32.totalorder %s19, 1
        %s187 = scalar_select %p186, %s19, 1
        %s188 = smul.addr %s187, 2
        %s189 = smul.addr %s188, 8
        %s190 = scalar_lea.vmem %s1, %s189
        %p191 = pneg %p61
        %p192 = pneg %p58
        %p193 = scmp.lt.s32.totalorder %s19, 1
        %s194 = scalar_select %p193, %s19, 1
        %s195 = smul.addr %s194, 2
        %s196 = smul.addr %s195, 8
        %s197 = scalar_lea.vmem %s2, %s196
        %p198 = pneg %p87
        %p199 = pneg %p84
        %p200 = pneg %p113
        %p201 = pneg %p110
        %p202 = scmp.lt.s32.totalorder %s19, 1
        %s203 = scalar_select %p202, %s19, 1
        %s204 = smul.addr %s203, 2
        %s205 = smul.addr %s204, 8
        %s206 = scalar_lea.vmem %s3, %s205
        %p207 = pneg %p139
        %p208 = pneg %p136
        %s209 = sand.u32 %s126, 1
        %s210 = scalar_lea.sflag [#allocation3], %s209
        %s211 = sand.u32 %s126, 1
        %s212 = smul.addr %s211, 16
        %s213 = scalar_lea.vmem [#allocation2], %s212
        %p214 = scmp.lt.s32.totalorder %s19, 1
        %s215 = scalar_select %p214, %s19, 1
        %s216 = smul.addr %s215, 2
        %s217 = smul.addr %s216, 8
        %s218 = scalar_lea.vmem %s1, %s217
        %p219 = scmp.lt.s32.totalorder %s19, 1
        %s220 = scalar_select %p219, %s19, 1
        %s221 = smul.addr %s220, 2
        %s222 = smul.addr %s221, 8
        %s223 = scalar_lea.vmem %s2, %s222
        %p224 = scmp.lt.s32.totalorder %s19, 1
        %s225 = scalar_select %p224, %s19, 1
        %s226 = smul.addr %s225, 2
        %s227 = smul.addr %s226, 8
        %s228 = scalar_lea.vmem %s3, %s227
        %v229 = vld [vmem:[%s218] sm:$0xff]
        %v230 = vld [vmem:[%s218 + $0x8] sm:$0xff]
        %v231 = vld [vmem:[%s223] sm:$0xff]
        %v232 = vld [vmem:[%s223 + $0x8] sm:$0xff]
        %v233 = vadd.f32 %v229, %v231
        %v234 = vadd.f32 %v230, %v232
        %v235 = vld [vmem:[%s0] sm:$0xff]
        %v236 = vld [vmem:[%s0 + $0x8] sm:$0xff]
        %vm237 = vcmask 130048
        %v239 = vsel %vm237, %v235, 0
        %v242 = vsel %vm237, %v236, 0
        %244 = vmatpush.msra.mxu0 0.0
        %245 = vmatpush.msra.mxu0 0.0
        %246 = vmatpush.msra.mxu0 0.0
        %247 = vmatpush.msra.mxu0 0.0
        %248 = vmatpush.msra.mxu0 0.0
        %249 = vmatpush.msra.mxu0 0.0
        %250 = vmatpush.msra.mxu0 0.0
        %251 = vmatpush.msra.mxu0 0.0
        %252 = vmatpush.msra.mxu0 0.0
        %253 = vmatpush.msra.mxu0 0.0
        %254 = vmatpush.msra.mxu0 0.0
        %255 = vmatpush.msra.mxu0 0.0
        %256 = vmatpush.msra.mxu0 0.0
        %257 = vmatpush.msra.mxu0 0.0
        %258 = vmatpush.msra.mxu0 %v234
        %259 = vmatpush.msra.mxu0 %v233
        %260 = vmatmul.f32.gmra.mxu0 %v239
        %v261 = vpop.f32.mrf.mxu0
        %v262 = vadd.f32 0.0, %v261
        %263 = vmatmul.f32.gmra.mxu0 %v242
        %v264 = vpop.f32.mrf.mxu0
        %v265 = vadd.f32 0.0, %v264
        %266 = vdwg.mxu0
        %vm267 = vcmask 261120
        %268 = vst.msk [vmem:[%s213] sm:$0xff] %vm267, %v262
        %269 = vst.msk [vmem:[%s213 + $0x8] sm:$0xff] %vm267, %v265
        %v270 = vsub.f32 %v233, %v262
        %v271 = vsub.f32 %v234, %v265
        %272 = vst.msk [vmem:[%s228] sm:$0xff] %vm267, %v270
        %273 = vst.msk [vmem:[%s228 + $0x8] sm:$0xff] %vm267, %v271
        %p274 = scmp.lt.s32.totalorder %s19, 1
        %s275 = scalar_select %p274, %s19, 1
        %s276 = smul.addr %s275, 2
        %s277 = smul.addr %s276, 8
        %s278 = scalar_lea.vmem %s3, %s277
        %s279 = sand.u32 %s126, 1
        %s280 = scalar_lea.sflag [#allocation3], %s279
        %s281 = sand.u32 %s126, 1
        %s282 = smul.addr %s281, 16
        %s283 = scalar_lea.vmem [#allocation2], %s282
        // Predicated region
        $region33: #{autoformer_forward.26} parent=31 // pred_check
          %p284 = pneg %p110
        $region34: #{autoformer_forward.26} parent=31 // pred_check_branch
          %286 = sbr.rel (%p284) target = $region36
        $region35: #{autoformer_forward.26} parent=31 // pred_region
          _
        $region36: #{autoformer_forward.26} parent=31 // pred_fallthru
          _
        // Predicated region
        $region37: #{autoformer_forward.26} parent=31 // pred_check
          %p287 = pneg %p136
        $region38: #{autoformer_forward.26} parent=31 // pred_check_branch
          %289 = sbr.rel (%p287) target = $region40
        $region39: #{autoformer_forward.26} parent=31 // pred_region
          %291 = vsyncadd %s280, 0
          %s292 = smul.addr %s19, 2
          %s293 = smul.addr %s292, 8
          %s294 = scalar_lea.hbm %s4, %s293
          %s295 = sshll.u32 %s283, 4
          %s296 = int_to_ptr.vmem [resolvable:$true] %s295
          %s297 = sshll.u32 %s294, 4
          %s298 = int_to_ptr.hbm [resolvable:$true] %s297
          %303 = dma.vmem_to_hbm [thread:$0]  %s296, 256, %s298, %s280, 128, 128, 8
        $region40: #{autoformer_forward.26} parent=31 // pred_fallthru
          _
      $region32: #{autoformer_forward.26} parent=5 // pred_fallthru
        _
      %p304 = scmp.le.s32.totalorder 2, %s14
      // Predicated region
      $region41: #{autoformer_forward.26} parent=5 // pred_check
        %p305 = pneg %p304
      $region42: #{autoformer_forward.26} parent=5 // pred_check_branch
        %307 = sbr.rel (%p305) target = $region44
      $region43: #{autoformer_forward.26} parent=5 // pred_region
        %s308 = ssub.s32 %s14, 2
        // Predicated region
        $region45: #{autoformer_forward.26} parent=43 // pred_check
          %p309 = pneg %p116
        $region46: #{autoformer_forward.26} parent=43 // pred_check_branch
          %311 = sbr.rel (%p309) target = $region48
        $region47: #{autoformer_forward.26} parent=43 // pred_region
          %p312 = scmp.lt.s32.totalorder %s20, 1
          %s313 = scalar_select %p312, %s20, 1
          %s314 = smul.addr %s313, 2
          %s315 = smul.addr %s314, 8
          %s316 = scalar_lea.vmem %s3, %s315
        $region48: #{autoformer_forward.26} parent=43 // pred_fallthru
          _
        // Predicated region
        $region49: #{autoformer_forward.26} parent=43 // pred_check
          %p317 = pneg %p142
        $region50: #{autoformer_forward.26} parent=43 // pred_check_branch
          %319 = sbr.rel (%p317) target = $region52
        $region51: #{autoformer_forward.26} parent=43 // pred_region
          %s320 = sand.u32 %s127, 1
          %s321 = scalar_lea.sflag [#allocation3], %s320
          %s322 = sand.u32 %s127, 1
          %s323 = smul.addr %s322, 16
          %s324 = scalar_lea.vmem [#allocation2], %s323
          %326 = dma.done %s321, 256
        $region52: #{autoformer_forward.26} parent=43 // pred_fallthru
          _
      $region44: #{autoformer_forward.26} parent=5 // pred_fallthru
        _
    $region6: #{autoformer_forward.26} parent=1 // loop_footer
      %s18 = sadd.s32 1, %s14
    $region7: #{autoformer_forward.26} parent=1 // loop_footer_branch
      %13 = sbr.rel target = $region3
    $region8: #{autoformer_forward.26} parent=1 // loop_exit
      _
    %327 = vsyncpa [#allocation3], 1
    %s328 = scalar_lea.sflag [#allocation3], 1
    %329 = vsyncpa %s328, 1

// kernel: autoformer_forward.24
$region0: #{autoformer_forward.24}
  #allocation0 [shape = 'u32[]', space=smem, size = 0x4, offset = 0x4, fixed_abs, tag = 'smem constant byte address 0x4 - core index']
  #allocation1 [shape = 'u32[72,128]{1,0:T(1,128)}', space=vmem, size = 0x9000, scoped, tag = 'internal scratch']
  %s0 = inlined_call_operand.vmem [shape: f32[2,16,32], index: 0, kind: input, shape index: {}]
  %s1 = inlined_call_operand.vmem [shape: f32[32,32], index: 1, kind: input, shape index: {}]
  %s2 = inlined_call_operand.vmem [shape: f32[1,32], index: 2, kind: input, shape index: {}]
  %s3 = inlined_call_operand.vmem [shape: f32[32,32], index: 3, kind: input, shape index: {}]
  %s4 = inlined_call_operand.vmem [shape: f32[1,32], index: 4, kind: input, shape index: {}]
  %s5 = inlined_call_operand.vmem [shape: f32[32,32], index: 5, kind: input, shape index: {}]
  %s6 = inlined_call_operand.vmem [shape: f32[1,32], index: 6, kind: input, shape index: {}]
  %s7 = inlined_call_operand.vmem [shape: f32[16,16], index: 7, kind: input, shape index: {}]
  %s8 = inlined_call_operand.vmem [shape: f32[16,16], index: 8, kind: input, shape index: {}]
  %s9 = inlined_call_operand.vmem [shape: f32[2,16,1], index: 9, kind: output, shape index: {0}]
  %s10 = inlined_call_operand.vmem [shape: f32[2,16,32], index: 10, kind: output, shape index: {1}]
  %11 = xla_tuple %s9, %s10
  %s12 = sld [smem:[#allocation0]]
  $region77: #{autoformer_forward.24} parent=0
    _
  %s14 = ssub.s32 1, %s12
  %s15 = scalar_select 0, %s14, %s12
  loop: start=0, step=1, limit=4
  $region2: #{autoformer_forward.24} parent=0 // loop_pre_header
    _
  $region3: #{autoformer_forward.24} parent=0 // loop_header
    %s17 = sphi 0, %s21
    %p18 = scmp.ge.s32.totalorder %s17, 4
    %s27 = sphi 0, %s29
    %s30 = sphi 0, %s27
    %s31 = sphi 0, %s30
    %s47 = sphi 0, %s31
    %s51 = sphi 0, %s51
    %s53 = sphi 0, %s51
    %s54 = sphi 0, %s53
    %s68 = sphi 0, %s54
    %s72 = sphi 0, %s72
    %s74 = sphi 0, %s72
    %s75 = sphi 0, %s74
    %s89 = sphi 0, %s75
    %s93 = sphi 0, %s93
    %s95 = sphi 0, %s93
    %s96 = sphi 0, %s95
    %s110 = sphi 0, %s96
    %s114 = sphi 0, %s114
    %s116 = sphi 0, %s114
    %s117 = sphi 0, %s116
    %s131 = sphi 0, %s117
    %s135 = sphi 0, %s135
    %s137 = sphi 0, %s135
    %s138 = sphi 0, %s137
    %s152 = sphi 0, %s138
    %s156 = sphi 0, %s156
    %s158 = sphi 0, %s156
    %s159 = sphi 0, %s158
    %s173 = sphi 0, %s159
    %s177 = sphi 0, %s177
    %s179 = sphi 0, %s177
    %s180 = sphi 0, %s179
    %s194 = sphi 0, %s180
    %s198 = sphi 0, %s198
    %s200 = sphi 0, %s198
    %s201 = sphi 0, %s200
    %s215 = sphi 0, %s201
    %s221 = sphi 0, %s223
    %s224 = sphi 0, %s221
    %s225 = sphi 0, %s224
    %s241 = sphi 0, %s225
    %s247 = sphi 0, %s249
    %s250 = sphi 0, %s247
    %s251 = sphi 0, %s250
    %s267 = sphi 0, %s251
  $region4: #{autoformer_forward.24} parent=0 // loop_header_branch
    %20 = sbr.rel (%p18) target = $region8
  $region5: #{autoformer_forward.24} parent=0 // loop_body
    %s22 = ssub.s32 %s17, 1
    %s23 = ssub.s32 %s17, 2
    %s24 = sadd.s32 %s17, 1
    %s25 = ssub.s32 %s17, %s24
    %p26 = scmp.eq.s32.totalorder %s25, 0
    %s28 = sadd.s32 %s27, 1
    %s29 = scalar_select %p26, %s27, %s28
    %p32 = pneg %p26
    %p33 = scmp.eq.s32.totalorder %s17, 1
    %p34 = por %p32, %p33
    %p35 = scmp.ne.s32.totalorder %s27, %s30
    %p36 = scmp.eq.s32.totalorder %s17, 0
    %p37 = por %p35, %p36
    %p38 = scmp.ne.s32.totalorder %s27, %s30
    %p39 = scmp.eq.s32.totalorder %s22, 1
    %p40 = por %p38, %p39
    %p41 = scmp.ne.s32.totalorder %s30, %s31
    %p42 = scmp.eq.s32.totalorder %s22, 0
    %p43 = por %p41, %p42
    %p44 = scmp.ne.s32.totalorder %s30, %s31
    %p45 = scmp.eq.s32.totalorder %s23, 1
    %p46 = por %p44, %p45
    %p48 = scmp.ne.s32.totalorder %s31, %s47
    %p49 = scmp.eq.s32.totalorder %s23, 0
    %p50 = por %p48, %p49
    %s52 = sadd.s32 %s51, 1
    %p55 = scmp.eq.s32.totalorder %s17, 1
    %p56 = scmp.ne.s32.totalorder %s51, %s53
    %p57 = scmp.eq.s32.totalorder %s17, 0
    %p58 = por %p56, %p57
    %p59 = scmp.ne.s32.totalorder %s51, %s53
    %p60 = scmp.eq.s32.totalorder %s22, 1
    %p61 = por %p59, %p60
    %p62 = scmp.ne.s32.totalorder %s53, %s54
    %p63 = scmp.eq.s32.totalorder %s22, 0
    %p64 = por %p62, %p63
    %p65 = scmp.ne.s32.totalorder %s53, %s54
    %p66 = scmp.eq.s32.totalorder %s23, 1
    %p67 = por %p65, %p66
    %p69 = scmp.ne.s32.totalorder %s54, %s68
    %p70 = scmp.eq.s32.totalorder %s23, 0
    %p71 = por %p69, %p70
    %s73 = sadd.s32 %s72, 1
    %p76 = scmp.eq.s32.totalorder %s17, 1
    %p77 = scmp.ne.s32.totalorder %s72, %s74
    %p78 = scmp.eq.s32.totalorder %s17, 0
    %p79 = por %p77, %p78
    %p80 = scmp.ne.s32.totalorder %s72, %s74
    %p81 = scmp.eq.s32.totalorder %s22, 1
    %p82 = por %p80, %p81
    %p83 = scmp.ne.s32.totalorder %s74, %s75
    %p84 = scmp.eq.s32.totalorder %s22, 0
    %p85 = por %p83, %p84
    %p86 = scmp.ne.s32.totalorder %s74, %s75
    %p87 = scmp.eq.s32.totalorder %s23, 1
    %p88 = por %p86, %p87
    %p90 = scmp.ne.s32.totalorder %s75, %s89
    %p91 = scmp.eq.s32.totalorder %s23, 0
    %p92 = por %p90, %p91
    %s94 = sadd.s32 %s93, 1
    %p97 = scmp.eq.s32.totalorder %s17, 1
    %p98 = scmp.ne.s32.totalorder %s93, %s95
    %p99 = scmp.eq.s32.totalorder %s17, 0
    %p100 = por %p98, %p99
    %p101 = scmp.ne.s32.totalorder %s93, %s95
    %p102 = scmp.eq.s32.totalorder %s22, 1
    %p103 = por %p101, %p102
    %p104 = scmp.ne.s32.totalorder %s95, %s96
    %p105 = scmp.eq.s32.totalorder %s22, 0
    %p106 = por %p104, %p105
    %p107 = scmp.ne.s32.totalorder %s95, %s96
    %p108 = scmp.eq.s32.totalorder %s23, 1
    %p109 = por %p107, %p108
    %p111 = scmp.ne.s32.totalorder %s96, %s110
    %p112 = scmp.eq.s32.totalorder %s23, 0
    %p113 = por %p111, %p112
    %s115 = sadd.s32 %s114, 1
    %p118 = scmp.eq.s32.totalorder %s17, 1
    %p119 = scmp.ne.s32.totalorder %s114, %s116
    %p120 = scmp.eq.s32.totalorder %s17, 0
    %p121 = por %p119, %p120
    %p122 = scmp.ne.s32.totalorder %s114, %s116
    %p123 = scmp.eq.s32.totalorder %s22, 1
    %p124 = por %p122, %p123
    %p125 = scmp.ne.s32.totalorder %s116, %s117
    %p126 = scmp.eq.s32.totalorder %s22, 0
    %p127 = por %p125, %p126
    %p128 = scmp.ne.s32.totalorder %s116, %s117
    %p129 = scmp.eq.s32.totalorder %s23, 1
    %p130 = por %p128, %p129
    %p132 = scmp.ne.s32.totalorder %s117, %s131
    %p133 = scmp.eq.s32.totalorder %s23, 0
    %p134 = por %p132, %p133
    %s136 = sadd.s32 %s135, 1
    %p139 = scmp.eq.s32.totalorder %s17, 1
    %p140 = scmp.ne.s32.totalorder %s135, %s137
    %p141 = scmp.eq.s32.totalorder %s17, 0
    %p142 = por %p140, %p141
    %p143 = scmp.ne.s32.totalorder %s135, %s137
    %p144 = scmp.eq.s32.totalorder %s22, 1
    %p145 = por %p143, %p144
    %p146 = scmp.ne.s32.totalorder %s137, %s138
    %p147 = scmp.eq.s32.totalorder %s22, 0
    %p148 = por %p146, %p147
    %p149 = scmp.ne.s32.totalorder %s137, %s138
    %p150 = scmp.eq.s32.totalorder %s23, 1
    %p151 = por %p149, %p150
    %p153 = scmp.ne.s32.totalorder %s138, %s152
    %p154 = scmp.eq.s32.totalorder %s23, 0
    %p155 = por %p153, %p154
    %s157 = sadd.s32 %s156, 1
    %p160 = scmp.eq.s32.totalorder %s17, 1
    %p161 = scmp.ne.s32.totalorder %s156, %s158
    %p162 = scmp.eq.s32.totalorder %s17, 0
    %p163 = por %p161, %p162
    %p164 = scmp.ne.s32.totalorder %s156, %s158
    %p165 = scmp.eq.s32.totalorder %s22, 1
    %p166 = por %p164, %p165
    %p167 = scmp.ne.s32.totalorder %s158, %s159
    %p168 = scmp.eq.s32.totalorder %s22, 0
    %p169 = por %p167, %p168
    %p170 = scmp.ne.s32.totalorder %s158, %s159
    %p171 = scmp.eq.s32.totalorder %s23, 1
    %p172 = por %p170, %p171
    %p174 = scmp.ne.s32.totalorder %s159, %s173
    %p175 = scmp.eq.s32.totalorder %s23, 0
    %p176 = por %p174, %p175
    %s178 = sadd.s32 %s177, 1
    %p181 = scmp.eq.s32.totalorder %s17, 1
    %p182 = scmp.ne.s32.totalorder %s177, %s179
    %p183 = scmp.eq.s32.totalorder %s17, 0
    %p184 = por %p182, %p183
    %p185 = scmp.ne.s32.totalorder %s177, %s179
    %p186 = scmp.eq.s32.totalorder %s22, 1
    %p187 = por %p185, %p186
    %p188 = scmp.ne.s32.totalorder %s179, %s180
    %p189 = scmp.eq.s32.totalorder %s22, 0
    %p190 = por %p188, %p189
    %p191 = scmp.ne.s32.totalorder %s179, %s180
    %p192 = scmp.eq.s32.totalorder %s23, 1
    %p193 = por %p191, %p192
    %p195 = scmp.ne.s32.totalorder %s180, %s194
    %p196 = scmp.eq.s32.totalorder %s23, 0
    %p197 = por %p195, %p196
    %s199 = sadd.s32 %s198, 1
    %p202 = scmp.eq.s32.totalorder %s17, 1
    %p203 = scmp.ne.s32.totalorder %s198, %s200
    %p204 = scmp.eq.s32.totalorder %s17, 0
    %p205 = por %p203, %p204
    %p206 = scmp.ne.s32.totalorder %s198, %s200
    %p207 = scmp.eq.s32.totalorder %s22, 1
    %p208 = por %p206, %p207
    %p209 = scmp.ne.s32.totalorder %s200, %s201
    %p210 = scmp.eq.s32.totalorder %s22, 0
    %p211 = por %p209, %p210
    %p212 = scmp.ne.s32.totalorder %s200, %s201
    %p213 = scmp.eq.s32.totalorder %s23, 1
    %p214 = por %p212, %p213
    %p216 = scmp.ne.s32.totalorder %s201, %s215
    %p217 = scmp.eq.s32.totalorder %s23, 0
    %p218 = por %p216, %p217
    %s219 = ssub.s32 %s17, %s24
    %p220 = scmp.eq.s32.totalorder %s219, 0
    %s222 = sadd.s32 %s221, 1
    %s223 = scalar_select %p220, %s221, %s222
    %p226 = pneg %p220
    %p227 = scmp.eq.s32.totalorder %s17, 1
    %p228 = por %p226, %p227
    %p229 = scmp.ne.s32.totalorder %s221, %s224
    %p230 = scmp.eq.s32.totalorder %s17, 0
    %p231 = por %p229, %p230
    %p232 = scmp.ne.s32.totalorder %s221, %s224
    %p233 = scmp.eq.s32.totalorder %s22, 1
    %p234 = por %p232, %p233
    %p235 = scmp.ne.s32.totalorder %s224, %s225
    %p236 = scmp.eq.s32.totalorder %s22, 0
    %p237 = por %p235, %p236
    %p238 = scmp.ne.s32.totalorder %s224, %s225
    %p239 = scmp.eq.s32.totalorder %s23, 1
    %p240 = por %p238, %p239
    %p242 = scmp.ne.s32.totalorder %s225, %s241
    %p243 = scmp.eq.s32.totalorder %s23, 0
    %p244 = por %p242, %p243
    %s245 = ssub.s32 %s17, %s24
    %p246 = scmp.eq.s32.totalorder %s245, 0
    %s248 = sadd.s32 %s247, 1
    %s249 = scalar_select %p246, %s247, %s248
    %p252 = pneg %p246
    %p253 = scmp.eq.s32.totalorder %s17, 1
    %p254 = por %p252, %p253
    %p255 = scmp.ne.s32.totalorder %s247, %s250
    %p256 = scmp.eq.s32.totalorder %s17, 0
    %p257 = por %p255, %p256
    %p258 = scmp.ne.s32.totalorder %s247, %s250
    %p259 = scmp.eq.s32.totalorder %s22, 1
    %p260 = por %p258, %p259
    %p261 = scmp.ne.s32.totalorder %s250, %s251
    %p262 = scmp.eq.s32.totalorder %s22, 0
    %p263 = por %p261, %p262
    %p264 = scmp.ne.s32.totalorder %s250, %s251
    %p265 = scmp.eq.s32.totalorder %s23, 1
    %p266 = por %p264, %p265
    %p268 = scmp.ne.s32.totalorder %s251, %s267
    %p269 = scmp.eq.s32.totalorder %s23, 0
    %p270 = por %p268, %p269
    %p271 = scmp.le.s32.totalorder 1, %s17
    %p272 = scmp.lt.s32.totalorder %s17, 3
    %p273 = pnand %p271, %p272
    %p274 = pneg %p273
    // Predicated region
    $region9: #{autoformer_forward.24} parent=5 // pred_check
      _
    $region10: #{autoformer_forward.24} parent=5 // pred_check_branch
      %276 = sbr.rel (%p273) target = $region12
    $region11: #{autoformer_forward.24} parent=5 // pred_region
      %s277 = ssub.s32 %s17, 1
      // Predicated region
      $region13: #{autoformer_forward.24} parent=11 // pred_check
        %p278 = pneg %p64
      $region14: #{autoformer_forward.24} parent=11 // pred_check_branch
        %280 = sbr.rel (%p278) target = $region16
      $region15: #{autoformer_forward.24} parent=11 // pred_region
        _
      $region16: #{autoformer_forward.24} parent=11 // pred_fallthru
        _
      // Predicated region
      $region17: #{autoformer_forward.24} parent=11 // pred_check
        %p281 = pneg %p85
      $region18: #{autoformer_forward.24} parent=11 // pred_check_branch
        %283 = sbr.rel (%p281) target = $region20
      $region19: #{autoformer_forward.24} parent=11 // pred_region
        _
      $region20: #{autoformer_forward.24} parent=11 // pred_fallthru
        _
      // Predicated region
      $region21: #{autoformer_forward.24} parent=11 // pred_check
        %p284 = pneg %p106
      $region22: #{autoformer_forward.24} parent=11 // pred_check_branch
        %286 = sbr.rel (%p284) target = $region24
      $region23: #{autoformer_forward.24} parent=11 // pred_region
        _
      $region24: #{autoformer_forward.24} parent=11 // pred_fallthru
        _
      // Predicated region
      $region25: #{autoformer_forward.24} parent=11 // pred_check
        %p287 = pneg %p127
      $region26: #{autoformer_forward.24} parent=11 // pred_check_branch
        %289 = sbr.rel (%p287) target = $region28
      $region27: #{autoformer_forward.24} parent=11 // pred_region
        _
      $region28: #{autoformer_forward.24} parent=11 // pred_fallthru
        _
      // Predicated region
      $region29: #{autoformer_forward.24} parent=11 // pred_check
        %p290 = pneg %p148
      $region30: #{autoformer_forward.24} parent=11 // pred_check_branch
        %292 = sbr.rel (%p290) target = $region32
      $region31: #{autoformer_forward.24} parent=11 // pred_region
        _
      $region32: #{autoformer_forward.24} parent=11 // pred_fallthru
        _
      // Predicated region
      $region33: #{autoformer_forward.24} parent=11 // pred_check
        %p293 = pneg %p169
      $region34: #{autoformer_forward.24} parent=11 // pred_check_branch
        %295 = sbr.rel (%p293) target = $region36
      $region35: #{autoformer_forward.24} parent=11 // pred_region
        _
      $region36: #{autoformer_forward.24} parent=11 // pred_fallthru
        _
      // Predicated region
      $region37: #{autoformer_forward.24} parent=11 // pred_check
        %p296 = pneg %p190
      $region38: #{autoformer_forward.24} parent=11 // pred_check_branch
        %298 = sbr.rel (%p296) target = $region40
      $region39: #{autoformer_forward.24} parent=11 // pred_region
        _
      $region40: #{autoformer_forward.24} parent=11 // pred_fallthru
        _
      // Predicated region
      $region41: #{autoformer_forward.24} parent=11 // pred_check
        %p299 = pneg %p211
      $region42: #{autoformer_forward.24} parent=11 // pred_check_branch
        %301 = sbr.rel (%p299) target = $region44
      $region43: #{autoformer_forward.24} parent=11 // pred_region
        _
      $region44: #{autoformer_forward.24} parent=11 // pred_fallthru
        _
    $region12: #{autoformer_forward.24} parent=5 // pred_fallthru
      _
    %p302 = scmp.lt.s32.totalorder %s17, 2
    // Predicated region
    $region45: #{autoformer_forward.24} parent=5 // pred_check
      %p303 = pneg %p302
    $region46: #{autoformer_forward.24} parent=5 // pred_check_branch
      %305 = sbr.rel (%p303) target = $region48
    $region47: #{autoformer_forward.24} parent=5 // pred_region
      // Predicated region
      $region49: #{autoformer_forward.24} parent=47 // pred_check
        %p306 = pneg %p37
      $region50: #{autoformer_forward.24} parent=47 // pred_check_branch
        %308 = sbr.rel (%p306) target = $region52
      $region51: #{autoformer_forward.24} parent=47 // pred_region
        %p309 = scmp.lt.s32.totalorder %s17, 1
        %s310 = scalar_select %p309, %s17, 1
        %s311 = smul.addr %s310, 2
        %s312 = smul.addr %s311, 8
        %s313 = scalar_lea.vmem %s0, %s312
      $region52: #{autoformer_forward.24} parent=47 // pred_fallthru
        _
    $region48: #{autoformer_forward.24} parent=5 // pred_fallthru
      _
    %p314 = scmp.le.s32.totalorder 1, %s17
    %p315 = scmp.lt.s32.totalorder %s17, 3
    %p316 = pnand %p314, %p315
    %p317 = pneg %p316
    // Predicated region
    $region53: #{autoformer_forward.24} parent=5 // pred_check
      _
    $region54: #{autoformer_forward.24} parent=5 // pred_check_branch
      %319 = sbr.rel (%p316) target = $region56
    $region55: #{autoformer_forward.24} parent=5 // pred_region
      %s320 = ssub.s32 %s17, 1
      %p321 = scmp.lt.s32.totalorder %s22, 1
      %s322 = scalar_select %p321, %s22, 1
      %s323 = smul.addr %s322, 2
      %s324 = smul.addr %s323, 8
      %s325 = scalar_lea.vmem %s0, %s324
      %p326 = pneg %p43
      %p327 = pneg %p40
      %p328 = pneg %p64
      %p329 = pneg %p61
      %p330 = pneg %p85
      %p331 = pneg %p82
      %p332 = pneg %p106
      %p333 = pneg %p103
      %p334 = pneg %p127
      %p335 = pneg %p124
      %p336 = pneg %p148
      %p337 = pneg %p145
      %p338 = pneg %p169
      %p339 = pneg %p166
      %p340 = pneg %p190
      %p341 = pneg %p187
      %p342 = pneg %p211
      %p343 = pneg %p208
      %p344 = pneg %p237
      %p345 = pneg %p234
      %p346 = scmp.lt.s32.totalorder %s22, 1
      %s347 = scalar_select %p346, %s22, 1
      %s348 = smul.addr %s347, 2
      %s349 = smul.addr %s348, 8
      %s350 = scalar_lea.vmem %s9, %s349
      %p351 = pneg %p263
      %p352 = pneg %p260
      %p353 = scmp.lt.s32.totalorder %s22, 1
      %s354 = scalar_select %p353, %s22, 1
      %s355 = smul.addr %s354, 2
      %s356 = smul.addr %s355, 8
      %s357 = scalar_lea.vmem %s10, %s356
      %p358 = scmp.lt.s32.totalorder %s22, 1
      %s359 = scalar_select %p358, %s22, 1
      %s360 = smul.addr %s359, 2
      %s361 = smul.addr %s360, 8
      %s362 = scalar_lea.vmem %s0, %s361
      %p363 = scmp.lt.s32.totalorder %s22, 1
      %s364 = scalar_select %p363, %s22, 1
      %s365 = smul.addr %s364, 2
      %s366 = smul.addr %s365, 8
      %s367 = scalar_lea.vmem %s9, %s366
      %p368 = scmp.lt.s32.totalorder %s22, 1
      %s369 = scalar_select %p368, %s22, 1
      %s370 = smul.addr %s369, 2
      %s371 = smul.addr %s370, 8
      %s372 = scalar_lea.vmem %s10, %s371
      %v373 = vld [vmem:[%s362] sm:$0xff]
      %v374 = vld [vmem:[%s362 + $0x8] sm:$0xff]
      %v375 = vld [vmem:[%s1] sm:$0xff]
      %v376 = vld [vmem:[%s1 + $0x8] sm:$0xff]
      %v377 = vld [vmem:[%s1 + $0x10] sm:$0xff]
      %v378 = vld [vmem:[%s1 + $0x18] sm:$0xff]
      %v379 = vld [vmem:[%s2] sm:$0x1]
      %v381 = vperm.slane %v379, 0
      %vm383 = vcmask 261120
      %v385 = vsel %vm383, %v373, 0
      %v388 = vsel %vm383, %v374, 0
      %390 = vmatpush.msra.mxu0 0.0
      %391 = vmatpush.msra.mxu0 0.0
      %392 = vmatpush.msra.mxu0 0.0
      %393 = vmatpush.msra.mxu0 0.0
      %394 = vmatpush.msra.mxu0 0.0
      %395 = vmatpush.msra.mxu0 0.0
      %396 = vmatpush.msra.mxu0 0.0
      %397 = vmatpush.msra.mxu0 0.0
      %398 = vmatpush.msra.mxu0 0.0
      %399 = vmatpush.msra.mxu0 0.0
      %400 = vmatpush.msra.mxu0 0.0
      %401 = vmatpush.msra.mxu0 0.0
      %402 = vmatpush.msra.mxu0 %v378
      %403 = vmatpush.msra.mxu0 %v377
      %404 = vmatpush.msra.mxu0 %v376
      %405 = vmatpush.msra.mxu0 %v375
      %406 = vmatmul.f32.gmra.mxu0 %v385
      %v407 = vpop.f32.mrf.mxu0
      %v408 = vadd.f32 %v381, %v407
      %409 = vmatmul.f32.gmra.mxu0 %v388
      %v410 = vpop.f32.mrf.mxu0
      %v411 = vadd.f32 %v381, %v410
      %412 = vdwg.mxu0
      %v413 = vld [vmem:[%s3] sm:$0xff]
      %v414 = vld [vmem:[%s3 + $0x8] sm:$0xff]
      %v415 = vld [vmem:[%s3 + $0x10] sm:$0xff]
      %v416 = vld [vmem:[%s3 + $0x18] sm:$0xff]
      %v417 = vld [vmem:[%s4] sm:$0x1]
      %v419 = vperm.slane %v417, 0
      %421 = vmatpush.msra.mxu0 0.0
      %422 = vmatpush.msra.mxu0 0.0
      %423 = vmatpush.msra.mxu0 0.0
      %424 = vmatpush.msra.mxu0 0.0
      %425 = vmatpush.msra.mxu0 0.0
      %426 = vmatpush.msra.mxu0 0.0
      %427 = vmatpush.msra.mxu0 0.0
      %428 = vmatpush.msra.mxu0 0.0
      %429 = vmatpush.msra.mxu0 0.0
      %430 = vmatpush.msra.mxu0 0.0
      %431 = vmatpush.msra.mxu0 0.0
      %432 = vmatpush.msra.mxu0 0.0
      %433 = vmatpush.msra.mxu0 %v416
      %434 = vmatpush.msra.mxu0 %v415
      %435 = vmatpush.msra.mxu0 %v414
      %436 = vmatpush.msra.mxu0 %v413
      %437 = vmatmul.f32.gmra.mxu0 %v385
      %v438 = vpop.f32.mrf.mxu0
      %v439 = vadd.f32 %v419, %v438
      %440 = vmatmul.f32.gmra.mxu0 %v388
      %v441 = vpop.f32.mrf.mxu0
      %v442 = vadd.f32 %v419, %v441
      %443 = vdwg.mxu0
      %v444 = vld [vmem:[%s5] sm:$0xff]
      %v445 = vld [vmem:[%s5 + $0x8] sm:$0xff]
      %v446 = vld [vmem:[%s5 + $0x10] sm:$0xff]
      %v447 = vld [vmem:[%s5 + $0x18] sm:$0xff]
      %v448 = vld [vmem:[%s6] sm:$0x1]
      %v450 = vperm.slane %v448, 0
      %452 = vmatpush.msra.mxu0 0.0
      %453 = vmatpush.msra.mxu0 0.0
      %454 = vmatpush.msra.mxu0 0.0
      %455 = vmatpush.msra.mxu0 0.0
      %456 = vmatpush.msra.mxu0 0.0
      %457 = vmatpush.msra.mxu0 0.0
      %458 = vmatpush.msra.mxu0 0.0
      %459 = vmatpush.msra.mxu0 0.0
      %460 = vmatpush.msra.mxu0 0.0
      %461 = vmatpush.msra.mxu0 0.0
      %462 = vmatpush.msra.mxu0 0.0
      %463 = vmatpush.msra.mxu0 0.0
      %464 = vmatpush.msra.mxu0 %v447
      %465 = vmatpush.msra.mxu0 %v446
      %466 = vmatpush.msra.mxu0 %v445
      %467 = vmatpush.msra.mxu0 %v444
      %468 = vmatmul.f32.gmra.mxu0 %v385
      %v469 = vpop.f32.mrf.mxu0
      %v470 = vadd.f32 %v450, %v469
      %471 = vmatmul.f32.gmra.mxu0 %v388
      %v472 = vpop.f32.mrf.mxu0
      %v473 = vadd.f32 %v450, %v472
      %474 = vdwg.mxu0
      %v475 = vld [vmem:[%s7] sm:$0xff]
      %v476 = vld [vmem:[%s7 + $0x8] sm:$0xff]
      %v477 = vld [vmem:[%s8] sm:$0xff]
      %v478 = vld [vmem:[%s8 + $0x8] sm:$0xff]
      %vm479 = vcmask 130048
      %v481 = vsel %vm479, %v475, 0
      %v484 = vsel %vm479, %v476, 0
      %486 = vmatpush.msra.mxu0 0.0
      %487 = vmatpush.msra.mxu0 0.0
      %488 = vmatpush.msra.mxu0 0.0
      %489 = vmatpush.msra.mxu0 0.0
      %490 = vmatpush.msra.mxu0 0.0
      %491 = vmatpush.msra.mxu0 0.0
      %492 = vmatpush.msra.mxu0 0.0
      %493 = vmatpush.msra.mxu0 0.0
      %494 = vmatpush.msra.mxu0 0.0
      %495 = vmatpush.msra.mxu0 0.0
      %496 = vmatpush.msra.mxu0 0.0
      %497 = vmatpush.msra.mxu0 0.0
      %498 = vmatpush.msra.mxu0 0.0
      %499 = vmatpush.msra.mxu0 0.0
      %500 = vmatpush.msra.mxu0 %v411
      %501 = vmatpush.msra.mxu0 %v408
      %502 = vmatmul.f32.gmra.mxu0 %v481
      %v503 = vpop.f32.mrf.mxu0
      %v504 = vadd.f32 0.0, %v503
      %505 = vmatmul.f32.gmra.mxu0 %v484
      %v506 = vpop.f32.mrf.mxu0
      %v507 = vadd.f32 0.0, %v506
      %508 = vdwg.mxu0
      %v510 = vsel %vm479, %v477, 0
      %v513 = vsel %vm479, %v478, 0
      %515 = vmatpush.msra.mxu0 0.0
      %516 = vmatpush.msra.mxu0 0.0
      %517 = vmatpush.msra.mxu0 0.0
      %518 = vmatpush.msra.mxu0 0.0
      %519 = vmatpush.msra.mxu0 0.0
      %520 = vmatpush.msra.mxu0 0.0
      %521 = vmatpush.msra.mxu0 0.0
      %522 = vmatpush.msra.mxu0 0.0
      %523 = vmatpush.msra.mxu0 0.0
      %524 = vmatpush.msra.mxu0 0.0
      %525 = vmatpush.msra.mxu0 0.0
      %526 = vmatpush.msra.mxu0 0.0
      %527 = vmatpush.msra.mxu0 0.0
      %528 = vmatpush.msra.mxu0 0.0
      %529 = vmatpush.msra.mxu0 %v411
      %530 = vmatpush.msra.mxu0 %v408
      %531 = vmatmul.f32.gmra.mxu0 %v510
      %v532 = vpop.f32.mrf.mxu0
      %v533 = vadd.f32 0.0, %v532
      %534 = vmatmul.f32.gmra.mxu0 %v513
      %v535 = vpop.f32.mrf.mxu0
      %v536 = vadd.f32 0.0, %v535
      %537 = vdwg.mxu0
      %538 = vmatpush.msra.mxu0 0.0
      %539 = vmatpush.msra.mxu0 0.0
      %540 = vmatpush.msra.mxu0 0.0
      %541 = vmatpush.msra.mxu0 0.0
      %542 = vmatpush.msra.mxu0 0.0
      %543 = vmatpush.msra.mxu0 0.0
      %544 = vmatpush.msra.mxu0 0.0
      %545 = vmatpush.msra.mxu0 0.0
      %546 = vmatpush.msra.mxu0 0.0
      %547 = vmatpush.msra.mxu0 0.0
      %548 = vmatpush.msra.mxu0 0.0
      %549 = vmatpush.msra.mxu0 0.0
      %550 = vmatpush.msra.mxu0 0.0
      %551 = vmatpush.msra.mxu0 0.0
      %552 = vmatpush.msra.mxu0 %v442
      %553 = vmatpush.msra.mxu0 %v439
      %554 = vmatmul.f32.gmra.mxu0 %v481
      %v555 = vpop.f32.mrf.mxu0
      %v556 = vadd.f32 0.0, %v555
      %557 = vmatmul.f32.gmra.mxu0 %v484
      %v558 = vpop.f32.mrf.mxu0
      %v559 = vadd.f32 0.0, %v558
      %560 = vdwg.mxu0
      %561 = vmatpush.msra.mxu0 0.0
      %562 = vmatpush.msra.mxu0 0.0
      %563 = vmatpush.msra.mxu0 0.0
      %564 = vmatpush.msra.mxu0 0.0
      %565 = vmatpush.msra.mxu0 0.0
      %566 = vmatpush.msra.mxu0 0.0
      %567 = vmatpush.msra.mxu0 0.0
      %568 = vmatpush.msra.mxu0 0.0
      %569 = vmatpush.msra.mxu0 0.0
      %570 = vmatpush.msra.mxu0 0.0
      %571 = vmatpush.msra.mxu0 0.0
      %572 = vmatpush.msra.mxu0 0.0
      %573 = vmatpush.msra.mxu0 0.0
      %574 = vmatpush.msra.mxu0 0.0
      %575 = vmatpush.msra.mxu0 %v442
      %576 = vmatpush.msra.mxu0 %v439
      %577 = vmatmul.f32.gmra.mxu0 %v510
      %v578 = vpop.f32.mrf.mxu0
      %v579 = vadd.f32 0.0, %v578
      %580 = vmatmul.f32.gmra.mxu0 %v513
      %v581 = vpop.f32.mrf.mxu0
      %v582 = vadd.f32 0.0, %v581
      %583 = vdwg.mxu0
      %v584 = vmul.f32 %v504, %v556
      %v585 = vmul.f32 %v507, %v559
      %v586 = vmul.f32 %v533, %v579
      %v587 = vmul.f32 %v536, %v582
      %v588 = vadd.f32 %v584, %v586
      %v589 = vadd.f32 %v585, %v587
      %v590 = vsel %vm383, %v588, 0.0
      %591 = vadd.xlane.f32.xlu0 %v590
      %v592 = vpop.xlane.xlu0 %591
      %v593 = vsel %vm383, %v589, 0.0
      %594 = vadd.xlane.f32.xlu0 %v593
      %v595 = vpop.xlane.xlu0 %594
      %v596 = vmul.f32 %v504, %v579
      %v597 = vmul.f32 %v507, %v582
      %v598 = vmul.f32 %v533, %v556
      %v599 = vmul.f32 %v536, %v559
      %v600 = vsub.f32 %v596, %v598
      %v601 = vsub.f32 %v597, %v599
      %v602 = vsel %vm383, %v600, 0.0
      %603 = vadd.xlane.f32.xlu0 %v602
      %v604 = vpop.xlane.xlu0 %603
      %v605 = vsel %vm383, %v601, 0.0
      %606 = vadd.xlane.f32.xlu0 %v605
      %v607 = vpop.xlane.xlu0 %606
      %608 = vmatpush.msra.mxu0 0.0
      %609 = vmatpush.msra.mxu0 0.0
      %610 = vmatpush.msra.mxu0 0.0
      %611 = vmatpush.msra.mxu0 0.0
      %612 = vmatpush.msra.mxu0 0.0
      %613 = vmatpush.msra.mxu0 0.0
      %614 = vmatpush.msra.mxu0 0.0
      %615 = vmatpush.msra.mxu0 0.0
      %616 = vmatpush.msra.mxu0 0.0
      %617 = vmatpush.msra.mxu0 0.0
      %618 = vmatpush.msra.mxu0 0.0
      %619 = vmatpush.msra.mxu0 0.0
      %620 = vmatpush.msra.mxu0 0.0
      %621 = vmatpush.msra.mxu0 0.0
      %622 = vmatpush.msra.mxu0 %v595
      %623 = vmatpush.msra.mxu0 %v592
      %624 = vmatmul.f32.gmra.mxu0 %v481
      %v625 = vpop.f32.mrf.mxu0
      %v626 = vadd.f32 0.0, %v625
      %627 = vmatmul.f32.gmra.mxu0 %v484
      %v628 = vpop.f32.mrf.mxu0
      %v629 = vadd.f32 0.0, %v628
      %630 = vdwg.mxu0
      %631 = vmatpush.msra.mxu0 0.0
      %632 = vmatpush.msra.mxu0 0.0
      %633 = vmatpush.msra.mxu0 0.0
      %634 = vmatpush.msra.mxu0 0.0
      %635 = vmatpush.msra.mxu0 0.0
      %636 = vmatpush.msra.mxu0 0.0
      %637 = vmatpush.msra.mxu0 0.0
      %638 = vmatpush.msra.mxu0 0.0
      %639 = vmatpush.msra.mxu0 0.0
      %640 = vmatpush.msra.mxu0 0.0
      %641 = vmatpush.msra.mxu0 0.0
      %642 = vmatpush.msra.mxu0 0.0
      %643 = vmatpush.msra.mxu0 0.0
      %644 = vmatpush.msra.mxu0 0.0
      %645 = vmatpush.msra.mxu0 %v607
      %646 = vmatpush.msra.mxu0 %v604
      %647 = vmatmul.f32.gmra.mxu0 %v510
      %v648 = vpop.f32.mrf.mxu0
      %v649 = vadd.f32 0.0, %v648
      %650 = vmatmul.f32.gmra.mxu0 %v513
      %v651 = vpop.f32.mrf.mxu0
      %v652 = vadd.f32 0.0, %v651
      %653 = vdwg.mxu0
      %v654 = vsub.f32 %v626, %v649
      %v655 = vsub.f32 %v629, %v652
      %v656 = vmul.f32 %v654, 0.001953125
      %v657 = vmul.f32 %v655, 0.001953125
      %vm658 = vcmask 7168
      %659 = vst.msk [vmem:[%s367] sm:$0xff] %vm658, %v656
      %660 = vst.msk [vmem:[%s367 + $0x8] sm:$0xff] %vm658, %v657
      %661 = vst.msk [vmem:[%s372] sm:$0xff] %vm383, %v470
      %662 = vst.msk [vmem:[%s372 + $0x8] sm:$0xff] %vm383, %v473
      %p663 = scmp.lt.s32.totalorder %s22, 1
      %s664 = scalar_select %p663, %s22, 1
      %s665 = smul.addr %s664, 2
      %s666 = smul.addr %s665, 8
      %s667 = scalar_lea.vmem %s9, %s666
      %p668 = scmp.lt.s32.totalorder %s22, 1
      %s669 = scalar_select %p668, %s22, 1
      %s670 = smul.addr %s669, 2
      %s671 = smul.addr %s670, 8
      %s672 = scalar_lea.vmem %s10, %s671
      // Predicated region
      $region57: #{autoformer_forward.24} parent=55 // pred_check
        %p673 = pneg %p234
      $region58: #{autoformer_forward.24} parent=55 // pred_check_branch
        %675 = sbr.rel (%p673) target = $region60
      $region59: #{autoformer_forward.24} parent=55 // pred_region
        _
      $region60: #{autoformer_forward.24} parent=55 // pred_fallthru
        _
      // Predicated region
      $region61: #{autoformer_forward.24} parent=55 // pred_check
        %p676 = pneg %p260
      $region62: #{autoformer_forward.24} parent=55 // pred_check_branch
        %678 = sbr.rel (%p676) target = $region64
      $region63: #{autoformer_forward.24} parent=55 // pred_region
        _
      $region64: #{autoformer_forward.24} parent=55 // pred_fallthru
        _
    $region56: #{autoformer_forward.24} parent=5 // pred_fallthru
      _
    %p679 = scmp.le.s32.totalorder 2, %s17
    // Predicated region
    $region65: #{autoformer_forward.24} parent=5 // pred_check
      %p680 = pneg %p679
    $region66: #{autoformer_forward.24} parent=5 // pred_check_branch
      %682 = sbr.rel (%p680) target = $region68
    $region67: #{autoformer_forward.24} parent=5 // pred_region
      %s683 = ssub.s32 %s17, 2
      // Predicated region
      $region69: #{autoformer_forward.24} parent=67 // pred_check
        %p684 = pneg %p240
      $region70: #{autoformer_forward.24} parent=67 // pred_check_branch
        %686 = sbr.rel (%p684) target = $region72
      $region71: #{autoformer_forward.24} parent=67 // pred_region
        %p687 = scmp.lt.s32.totalorder %s23, 1
        %s688 = scalar_select %p687, %s23, 1
        %s689 = smul.addr %s688, 2
        %s690 = smul.addr %s689, 8
        %s691 = scalar_lea.vmem %s9, %s690
      $region72: #{autoformer_forward.24} parent=67 // pred_fallthru
        _
      // Predicated region
      $region73: #{autoformer_forward.24} parent=67 // pred_check
        %p692 = pneg %p266
      $region74: #{autoformer_forward.24} parent=67 // pred_check_branch
        %694 = sbr.rel (%p692) target = $region76
      $region75: #{autoformer_forward.24} parent=67 // pred_region
        %p695 = scmp.lt.s32.totalorder %s23, 1
        %s696 = scalar_select %p695, %s23, 1
        %s697 = smul.addr %s696, 2
        %s698 = smul.addr %s697, 8
        %s699 = scalar_lea.vmem %s10, %s698
      $region76: #{autoformer_forward.24} parent=67 // pred_fallthru
        _
    $region68: #{autoformer_forward.24} parent=5 // pred_fallthru
      _
  $region6: #{autoformer_forward.24} parent=0 // loop_footer
    %s21 = sadd.s32 1, %s17
  $region7: #{autoformer_forward.24} parent=0 // loop_footer_branch
    %16 = sbr.rel target = $region3
  $region8: #{autoformer_forward.24} parent=0 // loop_exit
    _

// kernel: autoformer_forward.27
$region0: #{autoformer_forward.27}
  #allocation0 [shape = 'u32[]', space=smem, size = 0x4, offset = 0x4, fixed_abs, tag = 'smem constant byte address 0x4 - core index']
  #allocation1 [shape = 'u32[72,128]{1,0:T(1,128)}', space=vmem, size = 0x9000, scoped, tag = 'internal scratch']
  %s0 = inlined_call_operand.vmem [shape: f32[16,16], index: 0, kind: input, shape index: {}]
  %s1 = inlined_call_operand.vmem [shape: f32[2,16,32], index: 1, kind: input, shape index: {}]
  %s2 = inlined_call_operand.vmem [shape: f32[32,64], index: 2, kind: input, shape index: {}]
  %s3 = inlined_call_operand.vmem [shape: f32[64,32], index: 3, kind: input, shape index: {}]
  %s4 = inlined_call_operand.vmem [shape: f32[2,16,32], index: 4, kind: output, shape index: {0}]
  %s5 = inlined_call_operand.hbm [shape: f32[2,16,32], index: 5, kind: output, shape index: {1}]
  %6 = xla_tuple %s4, %s5
  %s7 = sld [smem:[#allocation0]]
  $region57: #{autoformer_forward.27} parent=0
    _
  %s9 = ssub.s32 1, %s7
  %s10 = scalar_select 0, %s9, %s7
  $region1: #{autoformer_forward.27} parent=0
    #allocation2 [shape = 'u8[16384]{0}', space=vmem, size = 0x4000, scoped, tag = 'output window, operand 1']
    #allocation3 [shape = 's32[2]{0}', space=sflag, size = 0x8, scoped, tag = 'scoped memory for autoformer_forward.27']
    %11 = vsyncpa [#allocation3], 0
    %s12 = scalar_lea.sflag [#allocation3], 1
    %13 = vsyncpa %s12, 0
    loop: start=0, step=1, limit=4
    $region2: #{autoformer_forward.27} parent=1 // loop_pre_header
      _
    $region3: #{autoformer_forward.27} parent=1 // loop_header
      %s15 = sphi 0, %s19
      %p16 = scmp.ge.s32.totalorder %s15, 4
      %s23 = sphi 0, %s23
      %s25 = sphi 0, %s23
      %s26 = sphi 0, %s25
      %s40 = sphi 0, %s26
      %s46 = sphi 0, %s48
      %s49 = sphi 0, %s46
      %s50 = sphi 0, %s49
      %s66 = sphi 0, %s50
      %s70 = sphi 0, %s70
      %s72 = sphi 0, %s70
      %s73 = sphi 0, %s72
      %s87 = sphi 0, %s73
      %s91 = sphi 0, %s91
      %s93 = sphi 0, %s91
      %s94 = sphi 0, %s93
      %s108 = sphi 0, %s94
      %s114 = sphi 0, %s116
      %s117 = sphi 0, %s114
      %s118 = sphi 0, %s117
      %s134 = sphi 0, %s118
      %s140 = sphi 0, %s142
      %s143 = sphi 0, %s140
      %s144 = sphi 0, %s143
      %s160 = sphi 0, %s144
    $region4: #{autoformer_forward.27} parent=1 // loop_header_branch
      %18 = sbr.rel (%p16) target = $region8
    $region5: #{autoformer_forward.27} parent=1 // loop_body
      %s20 = ssub.s32 %s15, 1
      %s21 = ssub.s32 %s15, 2
      %s22 = sadd.s32 %s15, 1
      %s24 = sadd.s32 %s23, 1
      %p27 = scmp.eq.s32.totalorder %s15, 1
      %p28 = scmp.ne.s32.totalorder %s23, %s25
      %p29 = scmp.eq.s32.totalorder %s15, 0
      %p30 = por %p28, %p29
      %p31 = scmp.ne.s32.totalorder %s23, %s25
      %p32 = scmp.eq.s32.totalorder %s20, 1
      %p33 = por %p31, %p32
      %p34 = scmp.ne.s32.totalorder %s25, %s26
      %p35 = scmp.eq.s32.totalorder %s20, 0
      %p36 = por %p34, %p35
      %p37 = scmp.ne.s32.totalorder %s25, %s26
      %p38 = scmp.eq.s32.totalorder %s21, 1
      %p39 = por %p37, %p38
      %p41 = scmp.ne.s32.totalorder %s26, %s40
      %p42 = scmp.eq.s32.totalorder %s21, 0
      %p43 = por %p41, %p42
      %s44 = ssub.s32 %s15, %s22
      %p45 = scmp.eq.s32.totalorder %s44, 0
      %s47 = sadd.s32 %s46, 1
      %s48 = scalar_select %p45, %s46, %s47
      %p51 = pneg %p45
      %p52 = scmp.eq.s32.totalorder %s15, 1
      %p53 = por %p51, %p52
      %p54 = scmp.ne.s32.totalorder %s46, %s49
      %p55 = scmp.eq.s32.totalorder %s15, 0
      %p56 = por %p54, %p55
      %p57 = scmp.ne.s32.totalorder %s46, %s49
      %p58 = scmp.eq.s32.totalorder %s20, 1
      %p59 = por %p57, %p58
      %p60 = scmp.ne.s32.totalorder %s49, %s50
      %p61 = scmp.eq.s32.totalorder %s20, 0
      %p62 = por %p60, %p61
      %p63 = scmp.ne.s32.totalorder %s49, %s50
      %p64 = scmp.eq.s32.totalorder %s21, 1
      %p65 = por %p63, %p64
      %p67 = scmp.ne.s32.totalorder %s50, %s66
      %p68 = scmp.eq.s32.totalorder %s21, 0
      %p69 = por %p67, %p68
      %s71 = sadd.s32 %s70, 1
      %p74 = scmp.eq.s32.totalorder %s15, 1
      %p75 = scmp.ne.s32.totalorder %s70, %s72
      %p76 = scmp.eq.s32.totalorder %s15, 0
      %p77 = por %p75, %p76
      %p78 = scmp.ne.s32.totalorder %s70, %s72
      %p79 = scmp.eq.s32.totalorder %s20, 1
      %p80 = por %p78, %p79
      %p81 = scmp.ne.s32.totalorder %s72, %s73
      %p82 = scmp.eq.s32.totalorder %s20, 0
      %p83 = por %p81, %p82
      %p84 = scmp.ne.s32.totalorder %s72, %s73
      %p85 = scmp.eq.s32.totalorder %s21, 1
      %p86 = por %p84, %p85
      %p88 = scmp.ne.s32.totalorder %s73, %s87
      %p89 = scmp.eq.s32.totalorder %s21, 0
      %p90 = por %p88, %p89
      %s92 = sadd.s32 %s91, 1
      %p95 = scmp.eq.s32.totalorder %s15, 1
      %p96 = scmp.ne.s32.totalorder %s91, %s93
      %p97 = scmp.eq.s32.totalorder %s15, 0
      %p98 = por %p96, %p97
      %p99 = scmp.ne.s32.totalorder %s91, %s93
      %p100 = scmp.eq.s32.totalorder %s20, 1
      %p101 = por %p99, %p100
      %p102 = scmp.ne.s32.totalorder %s93, %s94
      %p103 = scmp.eq.s32.totalorder %s20, 0
      %p104 = por %p102, %p103
      %p105 = scmp.ne.s32.totalorder %s93, %s94
      %p106 = scmp.eq.s32.totalorder %s21, 1
      %p107 = por %p105, %p106
      %p109 = scmp.ne.s32.totalorder %s94, %s108
      %p110 = scmp.eq.s32.totalorder %s21, 0
      %p111 = por %p109, %p110
      %s112 = ssub.s32 %s15, %s22
      %p113 = scmp.eq.s32.totalorder %s112, 0
      %s115 = sadd.s32 %s114, 1
      %s116 = scalar_select %p113, %s114, %s115
      %p119 = pneg %p113
      %p120 = scmp.eq.s32.totalorder %s15, 1
      %p121 = por %p119, %p120
      %p122 = scmp.ne.s32.totalorder %s114, %s117
      %p123 = scmp.eq.s32.totalorder %s15, 0
      %p124 = por %p122, %p123
      %p125 = scmp.ne.s32.totalorder %s114, %s117
      %p126 = scmp.eq.s32.totalorder %s20, 1
      %p127 = por %p125, %p126
      %p128 = scmp.ne.s32.totalorder %s117, %s118
      %p129 = scmp.eq.s32.totalorder %s20, 0
      %p130 = por %p128, %p129
      %p131 = scmp.ne.s32.totalorder %s117, %s118
      %p132 = scmp.eq.s32.totalorder %s21, 1
      %p133 = por %p131, %p132
      %p135 = scmp.ne.s32.totalorder %s118, %s134
      %p136 = scmp.eq.s32.totalorder %s21, 0
      %p137 = por %p135, %p136
      %s138 = ssub.s32 %s15, %s22
      %p139 = scmp.eq.s32.totalorder %s138, 0
      %s141 = sadd.s32 %s140, 1
      %s142 = scalar_select %p139, %s140, %s141
      %p145 = pneg %p139
      %p146 = scmp.eq.s32.totalorder %s15, 1
      %p147 = por %p145, %p146
      %p148 = scmp.ne.s32.totalorder %s140, %s143
      %p149 = scmp.eq.s32.totalorder %s15, 0
      %p150 = por %p148, %p149
      %p151 = scmp.ne.s32.totalorder %s140, %s143
      %p152 = scmp.eq.s32.totalorder %s20, 1
      %p153 = por %p151, %p152
      %p154 = scmp.ne.s32.totalorder %s143, %s144
      %p155 = scmp.eq.s32.totalorder %s20, 0
      %p156 = por %p154, %p155
      %p157 = scmp.ne.s32.totalorder %s143, %s144
      %p158 = scmp.eq.s32.totalorder %s21, 1
      %p159 = por %p157, %p158
      %p161 = scmp.ne.s32.totalorder %s144, %s160
      %p162 = scmp.eq.s32.totalorder %s21, 0
      %p163 = por %p161, %p162
      %p164 = scmp.le.s32.totalorder 1, %s15
      %p165 = scmp.lt.s32.totalorder %s15, 3
      %p166 = pnand %p164, %p165
      %p167 = pneg %p166
      // Predicated region
      $region9: #{autoformer_forward.27} parent=5 // pred_check
        _
      $region10: #{autoformer_forward.27} parent=5 // pred_check_branch
        %169 = sbr.rel (%p166) target = $region12
      $region11: #{autoformer_forward.27} parent=5 // pred_region
        %s170 = ssub.s32 %s15, 1
        // Predicated region
        $region13: #{autoformer_forward.27} parent=11 // pred_check
          %p171 = pneg %p36
        $region14: #{autoformer_forward.27} parent=11 // pred_check_branch
          %173 = sbr.rel (%p171) target = $region16
        $region15: #{autoformer_forward.27} parent=11 // pred_region
          _
        $region16: #{autoformer_forward.27} parent=11 // pred_fallthru
          _
        // Predicated region
        $region17: #{autoformer_forward.27} parent=11 // pred_check
          %p174 = pneg %p83
        $region18: #{autoformer_forward.27} parent=11 // pred_check_branch
          %176 = sbr.rel (%p174) target = $region20
        $region19: #{autoformer_forward.27} parent=11 // pred_region
          _
        $region20: #{autoformer_forward.27} parent=11 // pred_fallthru
          _
        // Predicated region
        $region21: #{autoformer_forward.27} parent=11 // pred_check
          %p177 = pneg %p104
        $region22: #{autoformer_forward.27} parent=11 // pred_check_branch
          %179 = sbr.rel (%p177) target = $region24
        $region23: #{autoformer_forward.27} parent=11 // pred_region
          _
        $region24: #{autoformer_forward.27} parent=11 // pred_fallthru
          _
      $region12: #{autoformer_forward.27} parent=5 // pred_fallthru
        _
      %p180 = scmp.lt.s32.totalorder %s15, 2
      // Predicated region
      $region25: #{autoformer_forward.27} parent=5 // pred_check
        %p181 = pneg %p180
      $region26: #{autoformer_forward.27} parent=5 // pred_check_branch
        %183 = sbr.rel (%p181) target = $region28
      $region27: #{autoformer_forward.27} parent=5 // pred_region
        // Predicated region
        $region29: #{autoformer_forward.27} parent=27 // pred_check
          %p184 = pneg %p56
        $region30: #{autoformer_forward.27} parent=27 // pred_check_branch
          %186 = sbr.rel (%p184) target = $region32
        $region31: #{autoformer_forward.27} parent=27 // pred_region
          %p187 = scmp.lt.s32.totalorder %s15, 1
          %s188 = scalar_select %p187, %s15, 1
          %s189 = smul.addr %s188, 2
          %s190 = smul.addr %s189, 8
          %s191 = scalar_lea.vmem %s1, %s190
        $region32: #{autoformer_forward.27} parent=27 // pred_fallthru
          _
      $region28: #{autoformer_forward.27} parent=5 // pred_fallthru
        _
      %p192 = scmp.le.s32.totalorder 1, %s15
      %p193 = scmp.lt.s32.totalorder %s15, 3
      %p194 = pnand %p192, %p193
      %p195 = pneg %p194
      // Predicated region
      $region33: #{autoformer_forward.27} parent=5 // pred_check
        _
      $region34: #{autoformer_forward.27} parent=5 // pred_check_branch
        %197 = sbr.rel (%p194) target = $region36
      $region35: #{autoformer_forward.27} parent=5 // pred_region
        %s198 = ssub.s32 %s15, 1
        %p199 = pneg %p36
        %p200 = pneg %p33
        %p201 = scmp.lt.s32.totalorder %s20, 1
        %s202 = scalar_select %p201, %s20, 1
        %s203 = smul.addr %s202, 2
        %s204 = smul.addr %s203, 8
        %s205 = scalar_lea.vmem %s1, %s204
        %p206 = pneg %p62
        %p207 = pneg %p59
        %p208 = pneg %p83
        %p209 = pneg %p80
        %p210 = pneg %p104
        %p211 = pneg %p101
        %p212 = pneg %p130
        %p213 = pneg %p127
        %p214 = scmp.lt.s32.totalorder %s20, 1
        %s215 = scalar_select %p214, %s20, 1
        %s216 = smul.addr %s215, 2
        %s217 = smul.addr %s216, 8
        %s218 = scalar_lea.vmem %s4, %s217
        %p219 = pneg %p156
        %p220 = pneg %p153
        %s221 = sand.u32 %s143, 1
        %s222 = scalar_lea.sflag [#allocation3], %s221
        %s223 = sand.u32 %s143, 1
        %s224 = smul.addr %s223, 16
        %s225 = scalar_lea.vmem [#allocation2], %s224
        %p226 = scmp.lt.s32.totalorder %s20, 1
        %s227 = scalar_select %p226, %s20, 1
        %s228 = smul.addr %s227, 2
        %s229 = smul.addr %s228, 8
        %s230 = scalar_lea.vmem %s1, %s229
        %p231 = scmp.lt.s32.totalorder %s20, 1
        %s232 = scalar_select %p231, %s20, 1
        %s233 = smul.addr %s232, 2
        %s234 = smul.addr %s233, 8
        %s235 = scalar_lea.vmem %s4, %s234
        %v236 = vld [vmem:[%s230] sm:$0xff]
        %v237 = vld [vmem:[%s230 + $0x8] sm:$0xff]
        %v238 = vld [vmem:[%s2] sm:$0xff]
        %v239 = vld [vmem:[%s2 + $0x8] sm:$0xff]
        %v240 = vld [vmem:[%s2 + $0x10] sm:$0xff]
        %v241 = vld [vmem:[%s2 + $0x18] sm:$0xff]
        %vm242 = vcmask 261120
        %v244 = vsel %vm242, %v236, 0
        %v247 = vsel %vm242, %v237, 0
        %249 = vmatpush.msra.mxu0 0.0
        %250 = vmatpush.msra.mxu0 0.0
        %251 = vmatpush.msra.mxu0 0.0
        %252 = vmatpush.msra.mxu0 0.0
        %253 = vmatpush.msra.mxu0 0.0
        %254 = vmatpush.msra.mxu0 0.0
        %255 = vmatpush.msra.mxu0 0.0
        %256 = vmatpush.msra.mxu0 0.0
        %257 = vmatpush.msra.mxu0 0.0
        %258 = vmatpush.msra.mxu0 0.0
        %259 = vmatpush.msra.mxu0 0.0
        %260 = vmatpush.msra.mxu0 0.0
        %261 = vmatpush.msra.mxu0 %v241
        %262 = vmatpush.msra.mxu0 %v240
        %263 = vmatpush.msra.mxu0 %v239
        %264 = vmatpush.msra.mxu0 %v238
        %265 = vmatmul.f32.gmra.mxu0 %v244
        %v266 = vpop.f32.mrf.mxu0
        %v267 = vadd.f32 0.0, %v266
        %268 = vmatmul.f32.gmra.mxu0 %v247
        %v269 = vpop.f32.mrf.mxu0
        %v270 = vadd.f32 0.0, %v269
        %271 = vdwg.mxu0
        %v272 = vmax.f32 %v267, 0.0
        %v273 = vmax.f32 %v270, 0.0
        %v274 = vld [vmem:[%s3] sm:$0xff]
        %v275 = vld [vmem:[%s3 + $0x8] sm:$0xff]
        %v276 = vld [vmem:[%s3 + $0x10] sm:$0xff]
        %v277 = vld [vmem:[%s3 + $0x18] sm:$0xff]
        %v278 = vld [vmem:[%s3 + $0x20] sm:$0xff]
        %v279 = vld [vmem:[%s3 + $0x28] sm:$0xff]
        %v280 = vld [vmem:[%s3 + $0x30] sm:$0xff]
        %v281 = vld [vmem:[%s3 + $0x38] sm:$0xff]
        %vm282 = vcmask 523264
        %v284 = vsel %vm282, %v272, 0
        %v287 = vsel %vm282, %v273, 0
        %289 = vmatpush.msra.mxu0 0.0
        %290 = vmatpush.msra.mxu0 0.0
        %291 = vmatpush.msra.mxu0 0.0
        %292 = vmatpush.msra.mxu0 0.0
        %293 = vmatpush.msra.mxu0 0.0
        %294 = vmatpush.msra.mxu0 0.0
        %295 = vmatpush.msra.mxu0 0.0
        %296 = vmatpush.msra.mxu0 0.0
        %297 = vmatpush.msra.mxu0 %v281
        %298 = vmatpush.msra.mxu0 %v280
        %299 = vmatpush.msra.mxu0 %v279
        %300 = vmatpush.msra.mxu0 %v278
        %301 = vmatpush.msra.mxu0 %v277
        %302 = vmatpush.msra.mxu0 %v276
        %303 = vmatpush.msra.mxu0 %v275
        %304 = vmatpush.msra.mxu0 %v274
        %305 = vmatmul.f32.gmra.mxu0 %v284
        %v306 = vpop.f32.mrf.mxu0
        %v307 = vadd.f32 0.0, %v306
        %308 = vmatmul.f32.gmra.mxu0 %v287
        %v309 = vpop.f32.mrf.mxu0
        %v310 = vadd.f32 0.0, %v309
        %311 = vdwg.mxu0
        %v312 = vadd.f32 %v236, %v307
        %v313 = vadd.f32 %v237, %v310
        %v314 = vld [vmem:[%s0] sm:$0xff]
        %v315 = vld [vmem:[%s0 + $0x8] sm:$0xff]
        %vm316 = vcmask 130048
        %v318 = vsel %vm316, %v314, 0
        %v321 = vsel %vm316, %v315, 0
        %323 = vmatpush.msra.mxu0 0.0
        %324 = vmatpush.msra.mxu0 0.0
        %325 = vmatpush.msra.mxu0 0.0
        %326 = vmatpush.msra.mxu0 0.0
        %327 = vmatpush.msra.mxu0 0.0
        %328 = vmatpush.msra.mxu0 0.0
        %329 = vmatpush.msra.mxu0 0.0
        %330 = vmatpush.msra.mxu0 0.0
        %331 = vmatpush.msra.mxu0 0.0
        %332 = vmatpush.msra.mxu0 0.0
        %333 = vmatpush.msra.mxu0 0.0
        %334 = vmatpush.msra.mxu0 0.0
        %335 = vmatpush.msra.mxu0 0.0
        %336 = vmatpush.msra.mxu0 0.0
        %337 = vmatpush.msra.mxu0 %v313
        %338 = vmatpush.msra.mxu0 %v312
        %339 = vmatmul.f32.gmra.mxu0 %v318
        %v340 = vpop.f32.mrf.mxu0
        %v341 = vadd.f32 0.0, %v340
        %342 = vmatmul.f32.gmra.mxu0 %v321
        %v343 = vpop.f32.mrf.mxu0
        %v344 = vadd.f32 0.0, %v343
        %345 = vdwg.mxu0
        %346 = vst.msk [vmem:[%s225] sm:$0xff] %vm242, %v341
        %347 = vst.msk [vmem:[%s225 + $0x8] sm:$0xff] %vm242, %v344
        %v348 = vsub.f32 %v312, %v341
        %v349 = vsub.f32 %v313, %v344
        %350 = vst.msk [vmem:[%s235] sm:$0xff] %vm242, %v348
        %351 = vst.msk [vmem:[%s235 + $0x8] sm:$0xff] %vm242, %v349
        %p352 = scmp.lt.s32.totalorder %s20, 1
        %s353 = scalar_select %p352, %s20, 1
        %s354 = smul.addr %s353, 2
        %s355 = smul.addr %s354, 8
        %s356 = scalar_lea.vmem %s4, %s355
        %s357 = sand.u32 %s143, 1
        %s358 = scalar_lea.sflag [#allocation3], %s357
        %s359 = sand.u32 %s143, 1
        %s360 = smul.addr %s359, 16
        %s361 = scalar_lea.vmem [#allocation2], %s360
        // Predicated region
        $region37: #{autoformer_forward.27} parent=35 // pred_check
          %p362 = pneg %p127
        $region38: #{autoformer_forward.27} parent=35 // pred_check_branch
          %364 = sbr.rel (%p362) target = $region40
        $region39: #{autoformer_forward.27} parent=35 // pred_region
          _
        $region40: #{autoformer_forward.27} parent=35 // pred_fallthru
          _
        // Predicated region
        $region41: #{autoformer_forward.27} parent=35 // pred_check
          %p365 = pneg %p153
        $region42: #{autoformer_forward.27} parent=35 // pred_check_branch
          %367 = sbr.rel (%p365) target = $region44
        $region43: #{autoformer_forward.27} parent=35 // pred_region
          %369 = vsyncadd %s358, 0
          %s370 = smul.addr %s20, 2
          %s371 = smul.addr %s370, 8
          %s372 = scalar_lea.hbm %s5, %s371
          %s373 = sshll.u32 %s361, 4
          %s374 = int_to_ptr.vmem [resolvable:$true] %s373
          %s375 = sshll.u32 %s372, 4
          %s376 = int_to_ptr.hbm [resolvable:$true] %s375
          %381 = dma.vmem_to_hbm [thread:$0]  %s374, 256, %s376, %s358, 128, 128, 8
        $region44: #{autoformer_forward.27} parent=35 // pred_fallthru
          _
      $region36: #{autoformer_forward.27} parent=5 // pred_fallthru
        _
      %p382 = scmp.le.s32.totalorder 2, %s15
      // Predicated region
      $region45: #{autoformer_forward.27} parent=5 // pred_check
        %p383 = pneg %p382
      $region46: #{autoformer_forward.27} parent=5 // pred_check_branch
        %385 = sbr.rel (%p383) target = $region48
      $region47: #{autoformer_forward.27} parent=5 // pred_region
        %s386 = ssub.s32 %s15, 2
        // Predicated region
        $region49: #{autoformer_forward.27} parent=47 // pred_check
          %p387 = pneg %p133
        $region50: #{autoformer_forward.27} parent=47 // pred_check_branch
          %389 = sbr.rel (%p387) target = $region52
        $region51: #{autoformer_forward.27} parent=47 // pred_region
          %p390 = scmp.lt.s32.totalorder %s21, 1
          %s391 = scalar_select %p390, %s21, 1
          %s392 = smul.addr %s391, 2
          %s393 = smul.addr %s392, 8
          %s394 = scalar_lea.vmem %s4, %s393
        $region52: #{autoformer_forward.27} parent=47 // pred_fallthru
          _
        // Predicated region
        $region53: #{autoformer_forward.27} parent=47 // pred_check
          %p395 = pneg %p159
        $region54: #{autoformer_forward.27} parent=47 // pred_check_branch
          %397 = sbr.rel (%p395) target = $region56
        $region55: #{autoformer_forward.27} parent=47 // pred_region
          %s398 = sand.u32 %s144, 1
          %s399 = scalar_lea.sflag [#allocation3], %s398
          %s400 = sand.u32 %s144, 1
          %s401 = smul.addr %s400, 16
          %s402 = scalar_lea.vmem [#allocation2], %s401
          %404 = dma.done %s399, 256
        $region56: #{autoformer_forward.27} parent=47 // pred_fallthru
          _
      $region48: #{autoformer_forward.27} parent=5 // pred_fallthru
        _
    $region6: #{autoformer_forward.27} parent=1 // loop_footer
      %s19 = sadd.s32 1, %s15
    $region7: #{autoformer_forward.27} parent=1 // loop_footer_branch
      %14 = sbr.rel target = $region3
    $region8: #{autoformer_forward.27} parent=1 // loop_exit
      _
    %405 = vsyncpa [#allocation3], 1
    %s406 = scalar_lea.sflag [#allocation3], 1
    %407 = vsyncpa %s406, 1

// kernel: autoformer_forward.32
$region0: #{autoformer_forward.32}
  #allocation0 [shape = 'u32[]', space=smem, size = 0x4, offset = 0x4, fixed_abs, tag = 'smem constant byte address 0x4 - core index']
  #allocation1 [shape = 'u32[72,128]{1,0:T(1,128)}', space=vmem, size = 0x9000, scoped, tag = 'internal scratch']
  %s0 = inlined_call_operand.vmem [shape: f32[2,16,32], index: 0, kind: input, shape index: {}]
  %s1 = inlined_call_operand.vmem [shape: f32[1,32], index: 1, kind: input, shape index: {}]
  %s2 = inlined_call_operand.vmem [shape: f32[1,32], index: 2, kind: input, shape index: {}]
  %s3 = inlined_call_operand.vmem [shape: f32[2,16,32], index: 3, kind: output, shape index: {}]
  %s4 = sld [smem:[#allocation0]]
  $region45: #{autoformer_forward.32} parent=0
    _
  %s6 = ssub.s32 1, %s4
  %s7 = scalar_select 0, %s6, %s4
  loop: start=0, step=1, limit=4
  $region2: #{autoformer_forward.32} parent=0 // loop_pre_header
    _
  $region3: #{autoformer_forward.32} parent=0 // loop_header
    %s9 = sphi 0, %s13
    %p10 = scmp.ge.s32.totalorder %s9, 4
    %s19 = sphi 0, %s21
    %s22 = sphi 0, %s19
    %s23 = sphi 0, %s22
    %s39 = sphi 0, %s23
    %s43 = sphi 0, %s43
    %s45 = sphi 0, %s43
    %s46 = sphi 0, %s45
    %s60 = sphi 0, %s46
    %s64 = sphi 0, %s64
    %s66 = sphi 0, %s64
    %s67 = sphi 0, %s66
    %s81 = sphi 0, %s67
    %s87 = sphi 0, %s89
    %s90 = sphi 0, %s87
    %s91 = sphi 0, %s90
    %s107 = sphi 0, %s91
  $region4: #{autoformer_forward.32} parent=0 // loop_header_branch
    %12 = sbr.rel (%p10) target = $region8
  $region5: #{autoformer_forward.32} parent=0 // loop_body
    %s14 = ssub.s32 %s9, 1
    %s15 = ssub.s32 %s9, 2
    %s16 = sadd.s32 %s9, 1
    %s17 = ssub.s32 %s9, %s16
    %p18 = scmp.eq.s32.totalorder %s17, 0
    %s20 = sadd.s32 %s19, 1
    %s21 = scalar_select %p18, %s19, %s20
    %p24 = pneg %p18
    %p25 = scmp.eq.s32.totalorder %s9, 1
    %p26 = por %p24, %p25
    %p27 = scmp.ne.s32.totalorder %s19, %s22
    %p28 = scmp.eq.s32.totalorder %s9, 0
    %p29 = por %p27, %p28
    %p30 = scmp.ne.s32.totalorder %s19, %s22
    %p31 = scmp.eq.s32.totalorder %s14, 1
    %p32 = por %p30, %p31
    %p33 = scmp.ne.s32.totalorder %s22, %s23
    %p34 = scmp.eq.s32.totalorder %s14, 0
    %p35 = por %p33, %p34
    %p36 = scmp.ne.s32.totalorder %s22, %s23
    %p37 = scmp.eq.s32.totalorder %s15, 1
    %p38 = por %p36, %p37
    %p40 = scmp.ne.s32.totalorder %s23, %s39
    %p41 = scmp.eq.s32.totalorder %s15, 0
    %p42 = por %p40, %p41
    %s44 = sadd.s32 %s43, 1
    %p47 = scmp.eq.s32.totalorder %s9, 1
    %p48 = scmp.ne.s32.totalorder %s43, %s45
    %p49 = scmp.eq.s32.totalorder %s9, 0
    %p50 = por %p48, %p49
    %p51 = scmp.ne.s32.totalorder %s43, %s45
    %p52 = scmp.eq.s32.totalorder %s14, 1
    %p53 = por %p51, %p52
    %p54 = scmp.ne.s32.totalorder %s45, %s46
    %p55 = scmp.eq.s32.totalorder %s14, 0
    %p56 = por %p54, %p55
    %p57 = scmp.ne.s32.totalorder %s45, %s46
    %p58 = scmp.eq.s32.totalorder %s15, 1
    %p59 = por %p57, %p58
    %p61 = scmp.ne.s32.totalorder %s46, %s60
    %p62 = scmp.eq.s32.totalorder %s15, 0
    %p63 = por %p61, %p62
    %s65 = sadd.s32 %s64, 1
    %p68 = scmp.eq.s32.totalorder %s9, 1
    %p69 = scmp.ne.s32.totalorder %s64, %s66
    %p70 = scmp.eq.s32.totalorder %s9, 0
    %p71 = por %p69, %p70
    %p72 = scmp.ne.s32.totalorder %s64, %s66
    %p73 = scmp.eq.s32.totalorder %s14, 1
    %p74 = por %p72, %p73
    %p75 = scmp.ne.s32.totalorder %s66, %s67
    %p76 = scmp.eq.s32.totalorder %s14, 0
    %p77 = por %p75, %p76
    %p78 = scmp.ne.s32.totalorder %s66, %s67
    %p79 = scmp.eq.s32.totalorder %s15, 1
    %p80 = por %p78, %p79
    %p82 = scmp.ne.s32.totalorder %s67, %s81
    %p83 = scmp.eq.s32.totalorder %s15, 0
    %p84 = por %p82, %p83
    %s85 = ssub.s32 %s9, %s16
    %p86 = scmp.eq.s32.totalorder %s85, 0
    %s88 = sadd.s32 %s87, 1
    %s89 = scalar_select %p86, %s87, %s88
    %p92 = pneg %p86
    %p93 = scmp.eq.s32.totalorder %s9, 1
    %p94 = por %p92, %p93
    %p95 = scmp.ne.s32.totalorder %s87, %s90
    %p96 = scmp.eq.s32.totalorder %s9, 0
    %p97 = por %p95, %p96
    %p98 = scmp.ne.s32.totalorder %s87, %s90
    %p99 = scmp.eq.s32.totalorder %s14, 1
    %p100 = por %p98, %p99
    %p101 = scmp.ne.s32.totalorder %s90, %s91
    %p102 = scmp.eq.s32.totalorder %s14, 0
    %p103 = por %p101, %p102
    %p104 = scmp.ne.s32.totalorder %s90, %s91
    %p105 = scmp.eq.s32.totalorder %s15, 1
    %p106 = por %p104, %p105
    %p108 = scmp.ne.s32.totalorder %s91, %s107
    %p109 = scmp.eq.s32.totalorder %s15, 0
    %p110 = por %p108, %p109
    %p111 = scmp.le.s32.totalorder 1, %s9
    %p112 = scmp.lt.s32.totalorder %s9, 3
    %p113 = pnand %p111, %p112
    %p114 = pneg %p113
    // Predicated region
    $region9: #{autoformer_forward.32} parent=5 // pred_check
      _
    $region10: #{autoformer_forward.32} parent=5 // pred_check_branch
      %116 = sbr.rel (%p113) target = $region12
    $region11: #{autoformer_forward.32} parent=5 // pred_region
      %s117 = ssub.s32 %s9, 1
      // Predicated region
      $region13: #{autoformer_forward.32} parent=11 // pred_check
        %p118 = pneg %p56
      $region14: #{autoformer_forward.32} parent=11 // pred_check_branch
        %120 = sbr.rel (%p118) target = $region16
      $region15: #{autoformer_forward.32} parent=11 // pred_region
        _
      $region16: #{autoformer_forward.32} parent=11 // pred_fallthru
        _
      // Predicated region
      $region17: #{autoformer_forward.32} parent=11 // pred_check
        %p121 = pneg %p77
      $region18: #{autoformer_forward.32} parent=11 // pred_check_branch
        %123 = sbr.rel (%p121) target = $region20
      $region19: #{autoformer_forward.32} parent=11 // pred_region
        _
      $region20: #{autoformer_forward.32} parent=11 // pred_fallthru
        _
    $region12: #{autoformer_forward.32} parent=5 // pred_fallthru
      _
    %p124 = scmp.lt.s32.totalorder %s9, 2
    // Predicated region
    $region21: #{autoformer_forward.32} parent=5 // pred_check
      %p125 = pneg %p124
    $region22: #{autoformer_forward.32} parent=5 // pred_check_branch
      %127 = sbr.rel (%p125) target = $region24
    $region23: #{autoformer_forward.32} parent=5 // pred_region
      // Predicated region
      $region25: #{autoformer_forward.32} parent=23 // pred_check
        %p128 = pneg %p29
      $region26: #{autoformer_forward.32} parent=23 // pred_check_branch
        %130 = sbr.rel (%p128) target = $region28
      $region27: #{autoformer_forward.32} parent=23 // pred_region
        %p131 = scmp.lt.s32.totalorder %s9, 1
        %s132 = scalar_select %p131, %s9, 1
        %s133 = smul.addr %s132, 2
        %s134 = smul.addr %s133, 8
        %s135 = scalar_lea.vmem %s0, %s134
      $region28: #{autoformer_forward.32} parent=23 // pred_fallthru
        _
    $region24: #{autoformer_forward.32} parent=5 // pred_fallthru
      _
    %p136 = scmp.le.s32.totalorder 1, %s9
    %p137 = scmp.lt.s32.totalorder %s9, 3
    %p138 = pnand %p136, %p137
    %p139 = pneg %p138
    // Predicated region
    $region29: #{autoformer_forward.32} parent=5 // pred_check
      _
    $region30: #{autoformer_forward.32} parent=5 // pred_check_branch
      %141 = sbr.rel (%p138) target = $region32
    $region31: #{autoformer_forward.32} parent=5 // pred_region
      %s142 = ssub.s32 %s9, 1
      %p143 = scmp.lt.s32.totalorder %s14, 1
      %s144 = scalar_select %p143, %s14, 1
      %s145 = smul.addr %s144, 2
      %s146 = smul.addr %s145, 8
      %s147 = scalar_lea.vmem %s0, %s146
      %p148 = pneg %p35
      %p149 = pneg %p32
      %p150 = pneg %p56
      %p151 = pneg %p53
      %p152 = pneg %p77
      %p153 = pneg %p74
      %p154 = pneg %p103
      %p155 = pneg %p100
      %p156 = scmp.lt.s32.totalorder %s14, 1
      %s157 = scalar_select %p156, %s14, 1
      %s158 = smul.addr %s157, 2
      %s159 = smul.addr %s158, 8
      %s160 = scalar_lea.vmem %s3, %s159
      %p161 = scmp.lt.s32.totalorder %s14, 1
      %s162 = scalar_select %p161, %s14, 1
      %s163 = smul.addr %s162, 2
      %s164 = smul.addr %s163, 8
      %s165 = scalar_lea.vmem %s0, %s164
      %p166 = scmp.lt.s32.totalorder %s14, 1
      %s167 = scalar_select %p166, %s14, 1
      %s168 = smul.addr %s167, 2
      %s169 = smul.addr %s168, 8
      %s170 = scalar_lea.vmem %s3, %s169
      %v171 = vld [vmem:[%s165] sm:$0xff]
      %v172 = vld [vmem:[%s165 + $0x8] sm:$0xff]
      %v173 = vld [vmem:[%s1] sm:$0x1]
      %v174 = vld [vmem:[%s2] sm:$0x1]
      %vm175 = vcmask 261120
      %v176 = vsel %vm175, %v171, 0.0
      %177 = vadd.xlane.f32.xlu0 %v176
      %v178 = vpop.xlane.xlu0 %177
      %v179 = vsel %vm175, %v172, 0.0
      %180 = vadd.xlane.f32.xlu0 %v179
      %v181 = vpop.xlane.xlu0 %180
      %v182 = vrcp.pop 32.0
      %v183 = vmul.f32 32.0, %v182
      %v184 = vsub.f32 1.0, %v183
      %v185 = vmul.f32 %v182, %v184
      %v186 = vadd.f32 %v182, %v185
      %vm187 = vweird.f32 %v182
      %v188 = vsel %vm187, %v182, %v186
      %v189 = vmul.f32 %v178, %v188
      %v190 = vmul.f32 %v181, %v188
      %v191 = vsub.f32 %v171, %v189
      %v192 = vsub.f32 %v172, %v190
      %v193 = vmul.f32 %v191, %v191
      %v194 = vmul.f32 %v192, %v192
      %v195 = vsel %vm175, %v193, 0.0
      %196 = vadd.xlane.f32.xlu0 %v195
      %v197 = vpop.xlane.xlu0 %196
      %v198 = vsel %vm175, %v194, 0.0
      %199 = vadd.xlane.f32.xlu0 %v198
      %v200 = vpop.xlane.xlu0 %199
      %v201 = vmul.f32 %v197, %v188
      %v202 = vmul.f32 %v200, %v188
      %v203 = vadd.f32 %v201, 1e-05
      %v204 = vadd.f32 %v202, 1e-05
      %v205 = vrsqrt.pop %v203
      %v206 = vmul.f32 %v205, %v203
      %v207 = vmul.f32 %v206, %v205
      %v208 = vmul.f32 0.5, %v207
      %v209 = vsub.f32 1.5, %v208
      %v210 = vmul.f32 %v205, %v209
      %vm211 = vweird.f32 %v203
      %vm212 = vweird.f32 %v205
      %vm213 = vmor %vm211, %vm212
      %v214 = vsel %vm213, %v205, %v210
      %v215 = vrsqrt.pop %v204
      %v216 = vmul.f32 %v215, %v204
      %v217 = vmul.f32 %v216, %v215
      %v218 = vmul.f32 0.5, %v217
      %v219 = vsub.f32 1.5, %v218
      %v220 = vmul.f32 %v215, %v219
      %vm221 = vweird.f32 %v204
      %vm222 = vweird.f32 %v215
      %vm223 = vmor %vm221, %vm222
      %v224 = vsel %vm223, %v215, %v220
      %v225 = vmul.f32 %v191, %v214
      %v226 = vmul.f32 %v192, %v224
      %v228 = vperm.slane %v173, 0
      %v230 = vmul.f32 %v225, %v228
      %v231 = vmul.f32 %v226, %v228
      %v233 = vperm.slane %v174, 0
      %v235 = vadd.f32 %v230, %v233
      %v236 = vadd.f32 %v231, %v233
      %v237 = vsel %vm175, %v235, 0.0
      %v238 = vsel %vm175, %v236, 0.0
      %v239 = vadd.f32 %v237, %v238
      %v240 = vrot.slane %v239, 4
      %v241 = vadd.f32 %v239, %v240
      %v242 = vrot.slane %v241, 2
      %v243 = vadd.f32 %v241, %v242
      %v244 = vrot.slane %v243, 1
      %v245 = vadd.f32 %v243, %v244
      %v246 = vrcp.pop 16.0
      %v247 = vmul.f32 16.0, %v246
      %v248 = vsub.f32 1.0, %v247
      %v249 = vmul.f32 %v246, %v248
      %v250 = vadd.f32 %v246, %v249
      %vm251 = vweird.f32 %v246
      %v252 = vsel %vm251, %v246, %v250
      %v253 = vmul.f32 %v245, %v252
      %v254 = vsub.f32 %v235, %v253
      %v255 = vsub.f32 %v236, %v253
      %256 = vst.msk [vmem:[%s170] sm:$0xff] %vm175, %v254
      %257 = vst.msk [vmem:[%s170 + $0x8] sm:$0xff] %vm175, %v255
      %p258 = scmp.lt.s32.totalorder %s14, 1
      %s259 = scalar_select %p258, %s14, 1
      %s260 = smul.addr %s259, 2
      %s261 = smul.addr %s260, 8
      %s262 = scalar_lea.vmem %s3, %s261
      // Predicated region
      $region33: #{autoformer_forward.32} parent=31 // pred_check
        %p263 = pneg %p100
      $region34: #{autoformer_forward.32} parent=31 // pred_check_branch
        %265 = sbr.rel (%p263) target = $region36
      $region35: #{autoformer_forward.32} parent=31 // pred_region
        _
      $region36: #{autoformer_forward.32} parent=31 // pred_fallthru
        _
    $region32: #{autoformer_forward.32} parent=5 // pred_fallthru
      _
    %p266 = scmp.le.s32.totalorder 2, %s9
    // Predicated region
    $region37: #{autoformer_forward.32} parent=5 // pred_check
      %p267 = pneg %p266
    $region38: #{autoformer_forward.32} parent=5 // pred_check_branch
      %269 = sbr.rel (%p267) target = $region40
    $region39: #{autoformer_forward.32} parent=5 // pred_region
      %s270 = ssub.s32 %s9, 2
      // Predicated region
      $region41: #{autoformer_forward.32} parent=39 // pred_check
        %p271 = pneg %p106
      $region42: #{autoformer_forward.32} parent=39 // pred_check_branch
        %273 = sbr.rel (%p271) target = $region44
      $region43: #{autoformer_forward.32} parent=39 // pred_region
        %p274 = scmp.lt.s32.totalorder %s15, 1
        %s275 = scalar_select %p274, %s15, 1
        %s276 = smul.addr %s275, 2
        %s277 = smul.addr %s276, 8
        %s278 = scalar_lea.vmem %s3, %s277
      $region44: #{autoformer_forward.32} parent=39 // pred_fallthru
        _
    $region40: #{autoformer_forward.32} parent=5 // pred_fallthru
      _
  $region6: #{autoformer_forward.32} parent=0 // loop_footer
    %s13 = sadd.s32 1, %s9
  $region7: #{autoformer_forward.32} parent=0 // loop_footer_branch
    %8 = sbr.rel target = $region3
  $region8: #{autoformer_forward.32} parent=0 // loop_exit
    _

// kernel: autoformer_forward.37
$region0: #{autoformer_forward.37}
  #allocation0 [shape = 'u32[]', space=smem, size = 0x4, offset = 0x4, fixed_abs, tag = 'smem constant byte address 0x4 - core index']
  #allocation1 [shape = 'u32[72,128]{1,0:T(1,128)}', space=vmem, size = 0x9000, scoped, tag = 'internal scratch']
  %s0 = inlined_call_operand.vmem [shape: f32[2,16,32], index: 0, kind: input, shape index: {}]
  %s1 = inlined_call_operand.vmem [shape: f32[2,16,32], index: 1, kind: input, shape index: {}]
  %s2 = inlined_call_operand.vmem [shape: f32[32,32], index: 2, kind: input, shape index: {}]
  %s3 = inlined_call_operand.vmem [shape: f32[1,32], index: 3, kind: input, shape index: {}]
  %s4 = inlined_call_operand.vmem [shape: f32[32,32], index: 4, kind: input, shape index: {}]
  %s5 = inlined_call_operand.vmem [shape: f32[1,32], index: 5, kind: input, shape index: {}]
  %s6 = inlined_call_operand.vmem [shape: f32[32,32], index: 6, kind: input, shape index: {}]
  %s7 = inlined_call_operand.vmem [shape: f32[1,32], index: 7, kind: input, shape index: {}]
  %s8 = inlined_call_operand.vmem [shape: f32[16,16], index: 8, kind: input, shape index: {}]
  %s9 = inlined_call_operand.vmem [shape: f32[16,16], index: 9, kind: input, shape index: {}]
  %s10 = inlined_call_operand.vmem [shape: f32[2,16,1], index: 10, kind: output, shape index: {0}]
  %s11 = inlined_call_operand.vmem [shape: f32[2,16,32], index: 11, kind: output, shape index: {1}]
  %12 = xla_tuple %s10, %s11
  %s13 = sld [smem:[#allocation0]]
  $region81: #{autoformer_forward.37} parent=0
    _
  %s15 = ssub.s32 1, %s13
  %s16 = scalar_select 0, %s15, %s13
  loop: start=0, step=1, limit=4
  $region2: #{autoformer_forward.37} parent=0 // loop_pre_header
    _
  $region3: #{autoformer_forward.37} parent=0 // loop_header
    %s18 = sphi 0, %s22
    %p19 = scmp.ge.s32.totalorder %s18, 4
    %s28 = sphi 0, %s30
    %s31 = sphi 0, %s28
    %s32 = sphi 0, %s31
    %s48 = sphi 0, %s32
    %s54 = sphi 0, %s56
    %s57 = sphi 0, %s54
    %s58 = sphi 0, %s57
    %s74 = sphi 0, %s58
    %s78 = sphi 0, %s78
    %s80 = sphi 0, %s78
    %s81 = sphi 0, %s80
    %s95 = sphi 0, %s81
    %s99 = sphi 0, %s99
    %s101 = sphi 0, %s99
    %s102 = sphi 0, %s101
    %s116 = sphi 0, %s102
    %s120 = sphi 0, %s120
    %s122 = sphi 0, %s120
    %s123 = sphi 0, %s122
    %s137 = sphi 0, %s123
    %s141 = sphi 0, %s141
    %s143 = sphi 0, %s141
    %s144 = sphi 0, %s143
    %s158 = sphi 0, %s144
    %s162 = sphi 0, %s162
    %s164 = sphi 0, %s162
    %s165 = sphi 0, %s164
    %s179 = sphi 0, %s165
    %s183 = sphi 0, %s183
    %s185 = sphi 0, %s183
    %s186 = sphi 0, %s185
    %s200 = sphi 0, %s186
    %s204 = sphi 0, %s204
    %s206 = sphi 0, %s204
    %s207 = sphi 0, %s206
    %s221 = sphi 0, %s207
    %s225 = sphi 0, %s225
    %s227 = sphi 0, %s225
    %s228 = sphi 0, %s227
    %s242 = sphi 0, %s228
    %s248 = sphi 0, %s250
    %s251 = sphi 0, %s248
    %s252 = sphi 0, %s251
    %s268 = sphi 0, %s252
    %s274 = sphi 0, %s276
    %s277 = sphi 0, %s274
    %s278 = sphi 0, %s277
    %s294 = sphi 0, %s278
  $region4: #{autoformer_forward.37} parent=0 // loop_header_branch
    %21 = sbr.rel (%p19) target = $region8
  $region5: #{autoformer_forward.37} parent=0 // loop_body
    %s23 = ssub.s32 %s18, 1
    %s24 = ssub.s32 %s18, 2
    %s25 = sadd.s32 %s18, 1
    %s26 = ssub.s32 %s18, %s25
    %p27 = scmp.eq.s32.totalorder %s26, 0
    %s29 = sadd.s32 %s28, 1
    %s30 = scalar_select %p27, %s28, %s29
    %p33 = pneg %p27
    %p34 = scmp.eq.s32.totalorder %s18, 1
    %p35 = por %p33, %p34
    %p36 = scmp.ne.s32.totalorder %s28, %s31
    %p37 = scmp.eq.s32.totalorder %s18, 0
    %p38 = por %p36, %p37
    %p39 = scmp.ne.s32.totalorder %s28, %s31
    %p40 = scmp.eq.s32.totalorder %s23, 1
    %p41 = por %p39, %p40
    %p42 = scmp.ne.s32.totalorder %s31, %s32
    %p43 = scmp.eq.s32.totalorder %s23, 0
    %p44 = por %p42, %p43
    %p45 = scmp.ne.s32.totalorder %s31, %s32
    %p46 = scmp.eq.s32.totalorder %s24, 1
    %p47 = por %p45, %p46
    %p49 = scmp.ne.s32.totalorder %s32, %s48
    %p50 = scmp.eq.s32.totalorder %s24, 0
    %p51 = por %p49, %p50
    %s52 = ssub.s32 %s18, %s25
    %p53 = scmp.eq.s32.totalorder %s52, 0
    %s55 = sadd.s32 %s54, 1
    %s56 = scalar_select %p53, %s54, %s55
    %p59 = pneg %p53
    %p60 = scmp.eq.s32.totalorder %s18, 1
    %p61 = por %p59, %p60
    %p62 = scmp.ne.s32.totalorder %s54, %s57
    %p63 = scmp.eq.s32.totalorder %s18, 0
    %p64 = por %p62, %p63
    %p65 = scmp.ne.s32.totalorder %s54, %s57
    %p66 = scmp.eq.s32.totalorder %s23, 1
    %p67 = por %p65, %p66
    %p68 = scmp.ne.s32.totalorder %s57, %s58
    %p69 = scmp.eq.s32.totalorder %s23, 0
    %p70 = por %p68, %p69
    %p71 = scmp.ne.s32.totalorder %s57, %s58
    %p72 = scmp.eq.s32.totalorder %s24, 1
    %p73 = por %p71, %p72
    %p75 = scmp.ne.s32.totalorder %s58, %s74
    %p76 = scmp.eq.s32.totalorder %s24, 0
    %p77 = por %p75, %p76
    %s79 = sadd.s32 %s78, 1
    %p82 = scmp.eq.s32.totalorder %s18, 1
    %p83 = scmp.ne.s32.totalorder %s78, %s80
    %p84 = scmp.eq.s32.totalorder %s18, 0
    %p85 = por %p83, %p84
    %p86 = scmp.ne.s32.totalorder %s78, %s80
    %p87 = scmp.eq.s32.totalorder %s23, 1
    %p88 = por %p86, %p87
    %p89 = scmp.ne.s32.totalorder %s80, %s81
    %p90 = scmp.eq.s32.totalorder %s23, 0
    %p91 = por %p89, %p90
    %p92 = scmp.ne.s32.totalorder %s80, %s81
    %p93 = scmp.eq.s32.totalorder %s24, 1
    %p94 = por %p92, %p93
    %p96 = scmp.ne.s32.totalorder %s81, %s95
    %p97 = scmp.eq.s32.totalorder %s24, 0
    %p98 = por %p96, %p97
    %s100 = sadd.s32 %s99, 1
    %p103 = scmp.eq.s32.totalorder %s18, 1
    %p104 = scmp.ne.s32.totalorder %s99, %s101
    %p105 = scmp.eq.s32.totalorder %s18, 0
    %p106 = por %p104, %p105
    %p107 = scmp.ne.s32.totalorder %s99, %s101
    %p108 = scmp.eq.s32.totalorder %s23, 1
    %p109 = por %p107, %p108
    %p110 = scmp.ne.s32.totalorder %s101, %s102
    %p111 = scmp.eq.s32.totalorder %s23, 0
    %p112 = por %p110, %p111
    %p113 = scmp.ne.s32.totalorder %s101, %s102
    %p114 = scmp.eq.s32.totalorder %s24, 1
    %p115 = por %p113, %p114
    %p117 = scmp.ne.s32.totalorder %s102, %s116
    %p118 = scmp.eq.s32.totalorder %s24, 0
    %p119 = por %p117, %p118
    %s121 = sadd.s32 %s120, 1
    %p124 = scmp.eq.s32.totalorder %s18, 1
    %p125 = scmp.ne.s32.totalorder %s120, %s122
    %p126 = scmp.eq.s32.totalorder %s18, 0
    %p127 = por %p125, %p126
    %p128 = scmp.ne.s32.totalorder %s120, %s122
    %p129 = scmp.eq.s32.totalorder %s23, 1
    %p130 = por %p128, %p129
    %p131 = scmp.ne.s32.totalorder %s122, %s123
    %p132 = scmp.eq.s32.totalorder %s23, 0
    %p133 = por %p131, %p132
    %p134 = scmp.ne.s32.totalorder %s122, %s123
    %p135 = scmp.eq.s32.totalorder %s24, 1
    %p136 = por %p134, %p135
    %p138 = scmp.ne.s32.totalorder %s123, %s137
    %p139 = scmp.eq.s32.totalorder %s24, 0
    %p140 = por %p138, %p139
    %s142 = sadd.s32 %s141, 1
    %p145 = scmp.eq.s32.totalorder %s18, 1
    %p146 = scmp.ne.s32.totalorder %s141, %s143
    %p147 = scmp.eq.s32.totalorder %s18, 0
    %p148 = por %p146, %p147
    %p149 = scmp.ne.s32.totalorder %s141, %s143
    %p150 = scmp.eq.s32.totalorder %s23, 1
    %p151 = por %p149, %p150
    %p152 = scmp.ne.s32.totalorder %s143, %s144
    %p153 = scmp.eq.s32.totalorder %s23, 0
    %p154 = por %p152, %p153
    %p155 = scmp.ne.s32.totalorder %s143, %s144
    %p156 = scmp.eq.s32.totalorder %s24, 1
    %p157 = por %p155, %p156
    %p159 = scmp.ne.s32.totalorder %s144, %s158
    %p160 = scmp.eq.s32.totalorder %s24, 0
    %p161 = por %p159, %p160
    %s163 = sadd.s32 %s162, 1
    %p166 = scmp.eq.s32.totalorder %s18, 1
    %p167 = scmp.ne.s32.totalorder %s162, %s164
    %p168 = scmp.eq.s32.totalorder %s18, 0
    %p169 = por %p167, %p168
    %p170 = scmp.ne.s32.totalorder %s162, %s164
    %p171 = scmp.eq.s32.totalorder %s23, 1
    %p172 = por %p170, %p171
    %p173 = scmp.ne.s32.totalorder %s164, %s165
    %p174 = scmp.eq.s32.totalorder %s23, 0
    %p175 = por %p173, %p174
    %p176 = scmp.ne.s32.totalorder %s164, %s165
    %p177 = scmp.eq.s32.totalorder %s24, 1
    %p178 = por %p176, %p177
    %p180 = scmp.ne.s32.totalorder %s165, %s179
    %p181 = scmp.eq.s32.totalorder %s24, 0
    %p182 = por %p180, %p181
    %s184 = sadd.s32 %s183, 1
    %p187 = scmp.eq.s32.totalorder %s18, 1
    %p188 = scmp.ne.s32.totalorder %s183, %s185
    %p189 = scmp.eq.s32.totalorder %s18, 0
    %p190 = por %p188, %p189
    %p191 = scmp.ne.s32.totalorder %s183, %s185
    %p192 = scmp.eq.s32.totalorder %s23, 1
    %p193 = por %p191, %p192
    %p194 = scmp.ne.s32.totalorder %s185, %s186
    %p195 = scmp.eq.s32.totalorder %s23, 0
    %p196 = por %p194, %p195
    %p197 = scmp.ne.s32.totalorder %s185, %s186
    %p198 = scmp.eq.s32.totalorder %s24, 1
    %p199 = por %p197, %p198
    %p201 = scmp.ne.s32.totalorder %s186, %s200
    %p202 = scmp.eq.s32.totalorder %s24, 0
    %p203 = por %p201, %p202
    %s205 = sadd.s32 %s204, 1
    %p208 = scmp.eq.s32.totalorder %s18, 1
    %p209 = scmp.ne.s32.totalorder %s204, %s206
    %p210 = scmp.eq.s32.totalorder %s18, 0
    %p211 = por %p209, %p210
    %p212 = scmp.ne.s32.totalorder %s204, %s206
    %p213 = scmp.eq.s32.totalorder %s23, 1
    %p214 = por %p212, %p213
    %p215 = scmp.ne.s32.totalorder %s206, %s207
    %p216 = scmp.eq.s32.totalorder %s23, 0
    %p217 = por %p215, %p216
    %p218 = scmp.ne.s32.totalorder %s206, %s207
    %p219 = scmp.eq.s32.totalorder %s24, 1
    %p220 = por %p218, %p219
    %p222 = scmp.ne.s32.totalorder %s207, %s221
    %p223 = scmp.eq.s32.totalorder %s24, 0
    %p224 = por %p222, %p223
    %s226 = sadd.s32 %s225, 1
    %p229 = scmp.eq.s32.totalorder %s18, 1
    %p230 = scmp.ne.s32.totalorder %s225, %s227
    %p231 = scmp.eq.s32.totalorder %s18, 0
    %p232 = por %p230, %p231
    %p233 = scmp.ne.s32.totalorder %s225, %s227
    %p234 = scmp.eq.s32.totalorder %s23, 1
    %p235 = por %p233, %p234
    %p236 = scmp.ne.s32.totalorder %s227, %s228
    %p237 = scmp.eq.s32.totalorder %s23, 0
    %p238 = por %p236, %p237
    %p239 = scmp.ne.s32.totalorder %s227, %s228
    %p240 = scmp.eq.s32.totalorder %s24, 1
    %p241 = por %p239, %p240
    %p243 = scmp.ne.s32.totalorder %s228, %s242
    %p244 = scmp.eq.s32.totalorder %s24, 0
    %p245 = por %p243, %p244
    %s246 = ssub.s32 %s18, %s25
    %p247 = scmp.eq.s32.totalorder %s246, 0
    %s249 = sadd.s32 %s248, 1
    %s250 = scalar_select %p247, %s248, %s249
    %p253 = pneg %p247
    %p254 = scmp.eq.s32.totalorder %s18, 1
    %p255 = por %p253, %p254
    %p256 = scmp.ne.s32.totalorder %s248, %s251
    %p257 = scmp.eq.s32.totalorder %s18, 0
    %p258 = por %p256, %p257
    %p259 = scmp.ne.s32.totalorder %s248, %s251
    %p260 = scmp.eq.s32.totalorder %s23, 1
    %p261 = por %p259, %p260
    %p262 = scmp.ne.s32.totalorder %s251, %s252
    %p263 = scmp.eq.s32.totalorder %s23, 0
    %p264 = por %p262, %p263
    %p265 = scmp.ne.s32.totalorder %s251, %s252
    %p266 = scmp.eq.s32.totalorder %s24, 1
    %p267 = por %p265, %p266
    %p269 = scmp.ne.s32.totalorder %s252, %s268
    %p270 = scmp.eq.s32.totalorder %s24, 0
    %p271 = por %p269, %p270
    %s272 = ssub.s32 %s18, %s25
    %p273 = scmp.eq.s32.totalorder %s272, 0
    %s275 = sadd.s32 %s274, 1
    %s276 = scalar_select %p273, %s274, %s275
    %p279 = pneg %p273
    %p280 = scmp.eq.s32.totalorder %s18, 1
    %p281 = por %p279, %p280
    %p282 = scmp.ne.s32.totalorder %s274, %s277
    %p283 = scmp.eq.s32.totalorder %s18, 0
    %p284 = por %p282, %p283
    %p285 = scmp.ne.s32.totalorder %s274, %s277
    %p286 = scmp.eq.s32.totalorder %s23, 1
    %p287 = por %p285, %p286
    %p288 = scmp.ne.s32.totalorder %s277, %s278
    %p289 = scmp.eq.s32.totalorder %s23, 0
    %p290 = por %p288, %p289
    %p291 = scmp.ne.s32.totalorder %s277, %s278
    %p292 = scmp.eq.s32.totalorder %s24, 1
    %p293 = por %p291, %p292
    %p295 = scmp.ne.s32.totalorder %s278, %s294
    %p296 = scmp.eq.s32.totalorder %s24, 0
    %p297 = por %p295, %p296
    %p298 = scmp.le.s32.totalorder 1, %s18
    %p299 = scmp.lt.s32.totalorder %s18, 3
    %p300 = pnand %p298, %p299
    %p301 = pneg %p300
    // Predicated region
    $region9: #{autoformer_forward.37} parent=5 // pred_check
      _
    $region10: #{autoformer_forward.37} parent=5 // pred_check_branch
      %303 = sbr.rel (%p300) target = $region12
    $region11: #{autoformer_forward.37} parent=5 // pred_region
      %s304 = ssub.s32 %s18, 1
      // Predicated region
      $region13: #{autoformer_forward.37} parent=11 // pred_check
        %p305 = pneg %p91
      $region14: #{autoformer_forward.37} parent=11 // pred_check_branch
        %307 = sbr.rel (%p305) target = $region16
      $region15: #{autoformer_forward.37} parent=11 // pred_region
        _
      $region16: #{autoformer_forward.37} parent=11 // pred_fallthru
        _
      // Predicated region
      $region17: #{autoformer_forward.37} parent=11 // pred_check
        %p308 = pneg %p112
      $region18: #{autoformer_forward.37} parent=11 // pred_check_branch
        %310 = sbr.rel (%p308) target = $region20
      $region19: #{autoformer_forward.37} parent=11 // pred_region
        _
      $region20: #{autoformer_forward.37} parent=11 // pred_fallthru
        _
      // Predicated region
      $region21: #{autoformer_forward.37} parent=11 // pred_check
        %p311 = pneg %p133
      $region22: #{autoformer_forward.37} parent=11 // pred_check_branch
        %313 = sbr.rel (%p311) target = $region24
      $region23: #{autoformer_forward.37} parent=11 // pred_region
        _
      $region24: #{autoformer_forward.37} parent=11 // pred_fallthru
        _
      // Predicated region
      $region25: #{autoformer_forward.37} parent=11 // pred_check
        %p314 = pneg %p154
      $region26: #{autoformer_forward.37} parent=11 // pred_check_branch
        %316 = sbr.rel (%p314) target = $region28
      $region27: #{autoformer_forward.37} parent=11 // pred_region
        _
      $region28: #{autoformer_forward.37} parent=11 // pred_fallthru
        _
      // Predicated region
      $region29: #{autoformer_forward.37} parent=11 // pred_check
        %p317 = pneg %p175
      $region30: #{autoformer_forward.37} parent=11 // pred_check_branch
        %319 = sbr.rel (%p317) target = $region32
      $region31: #{autoformer_forward.37} parent=11 // pred_region
        _
      $region32: #{autoformer_forward.37} parent=11 // pred_fallthru
        _
      // Predicated region
      $region33: #{autoformer_forward.37} parent=11 // pred_check
        %p320 = pneg %p196
      $region34: #{autoformer_forward.37} parent=11 // pred_check_branch
        %322 = sbr.rel (%p320) target = $region36
      $region35: #{autoformer_forward.37} parent=11 // pred_region
        _
      $region36: #{autoformer_forward.37} parent=11 // pred_fallthru
        _
      // Predicated region
      $region37: #{autoformer_forward.37} parent=11 // pred_check
        %p323 = pneg %p217
      $region38: #{autoformer_forward.37} parent=11 // pred_check_branch
        %325 = sbr.rel (%p323) target = $region40
      $region39: #{autoformer_forward.37} parent=11 // pred_region
        _
      $region40: #{autoformer_forward.37} parent=11 // pred_fallthru
        _
      // Predicated region
      $region41: #{autoformer_forward.37} parent=11 // pred_check
        %p326 = pneg %p238
      $region42: #{autoformer_forward.37} parent=11 // pred_check_branch
        %328 = sbr.rel (%p326) target = $region44
      $region43: #{autoformer_forward.37} parent=11 // pred_region
        _
      $region44: #{autoformer_forward.37} parent=11 // pred_fallthru
        _
    $region12: #{autoformer_forward.37} parent=5 // pred_fallthru
      _
    %p329 = scmp.lt.s32.totalorder %s18, 2
    // Predicated region
    $region45: #{autoformer_forward.37} parent=5 // pred_check
      %p330 = pneg %p329
    $region46: #{autoformer_forward.37} parent=5 // pred_check_branch
      %332 = sbr.rel (%p330) target = $region48
    $region47: #{autoformer_forward.37} parent=5 // pred_region
      // Predicated region
      $region49: #{autoformer_forward.37} parent=47 // pred_check
        %p333 = pneg %p38
      $region50: #{autoformer_forward.37} parent=47 // pred_check_branch
        %335 = sbr.rel (%p333) target = $region52
      $region51: #{autoformer_forward.37} parent=47 // pred_region
        %p336 = scmp.lt.s32.totalorder %s18, 1
        %s337 = scalar_select %p336, %s18, 1
        %s338 = smul.addr %s337, 2
        %s339 = smul.addr %s338, 8
        %s340 = scalar_lea.vmem %s0, %s339
      $region52: #{autoformer_forward.37} parent=47 // pred_fallthru
        _
      // Predicated region
      $region53: #{autoformer_forward.37} parent=47 // pred_check
        %p341 = pneg %p64
      $region54: #{autoformer_forward.37} parent=47 // pred_check_branch
        %343 = sbr.rel (%p341) target = $region56
      $region55: #{autoformer_forward.37} parent=47 // pred_region
        %p344 = scmp.lt.s32.totalorder %s18, 1
        %s345 = scalar_select %p344, %s18, 1
        %s346 = smul.addr %s345, 2
        %s347 = smul.addr %s346, 8
        %s348 = scalar_lea.vmem %s1, %s347
      $region56: #{autoformer_forward.37} parent=47 // pred_fallthru
        _
    $region48: #{autoformer_forward.37} parent=5 // pred_fallthru
      _
    %p349 = scmp.le.s32.totalorder 1, %s18
    %p350 = scmp.lt.s32.totalorder %s18, 3
    %p351 = pnand %p349, %p350
    %p352 = pneg %p351
    // Predicated region
    $region57: #{autoformer_forward.37} parent=5 // pred_check
      _
    $region58: #{autoformer_forward.37} parent=5 // pred_check_branch
      %354 = sbr.rel (%p351) target = $region60
    $region59: #{autoformer_forward.37} parent=5 // pred_region
      %s355 = ssub.s32 %s18, 1
      %p356 = scmp.lt.s32.totalorder %s23, 1
      %s357 = scalar_select %p356, %s23, 1
      %s358 = smul.addr %s357, 2
      %s359 = smul.addr %s358, 8
      %s360 = scalar_lea.vmem %s0, %s359
      %p361 = pneg %p44
      %p362 = pneg %p41
      %p363 = scmp.lt.s32.totalorder %s23, 1
      %s364 = scalar_select %p363, %s23, 1
      %s365 = smul.addr %s364, 2
      %s366 = smul.addr %s365, 8
      %s367 = scalar_lea.vmem %s1, %s366
      %p368 = pneg %p70
      %p369 = pneg %p67
      %p370 = pneg %p91
      %p371 = pneg %p88
      %p372 = pneg %p112
      %p373 = pneg %p109
      %p374 = pneg %p133
      %p375 = pneg %p130
      %p376 = pneg %p154
      %p377 = pneg %p151
      %p378 = pneg %p175
      %p379 = pneg %p172
      %p380 = pneg %p196
      %p381 = pneg %p193
      %p382 = pneg %p217
      %p383 = pneg %p214
      %p384 = pneg %p238
      %p385 = pneg %p235
      %p386 = pneg %p264
      %p387 = pneg %p261
      %p388 = scmp.lt.s32.totalorder %s23, 1
      %s389 = scalar_select %p388, %s23, 1
      %s390 = smul.addr %s389, 2
      %s391 = smul.addr %s390, 8
      %s392 = scalar_lea.vmem %s10, %s391
      %p393 = pneg %p290
      %p394 = pneg %p287
      %p395 = scmp.lt.s32.totalorder %s23, 1
      %s396 = scalar_select %p395, %s23, 1
      %s397 = smul.addr %s396, 2
      %s398 = smul.addr %s397, 8
      %s399 = scalar_lea.vmem %s11, %s398
      %p400 = scmp.lt.s32.totalorder %s23, 1
      %s401 = scalar_select %p400, %s23, 1
      %s402 = smul.addr %s401, 2
      %s403 = smul.addr %s402, 8
      %s404 = scalar_lea.vmem %s0, %s403
      %p405 = scmp.lt.s32.totalorder %s23, 1
      %s406 = scalar_select %p405, %s23, 1
      %s407 = smul.addr %s406, 2
      %s408 = smul.addr %s407, 8
      %s409 = scalar_lea.vmem %s1, %s408
      %p410 = scmp.lt.s32.totalorder %s23, 1
      %s411 = scalar_select %p410, %s23, 1
      %s412 = smul.addr %s411, 2
      %s413 = smul.addr %s412, 8
      %s414 = scalar_lea.vmem %s10, %s413
      %p415 = scmp.lt.s32.totalorder %s23, 1
      %s416 = scalar_select %p415, %s23, 1
      %s417 = smul.addr %s416, 2
      %s418 = smul.addr %s417, 8
      %s419 = scalar_lea.vmem %s11, %s418
      %v420 = vld [vmem:[%s404] sm:$0xff]
      %v421 = vld [vmem:[%s404 + $0x8] sm:$0xff]
      %v422 = vld [vmem:[%s409] sm:$0xff]
      %v423 = vld [vmem:[%s409 + $0x8] sm:$0xff]
      %v424 = vld [vmem:[%s2] sm:$0xff]
      %v425 = vld [vmem:[%s2 + $0x8] sm:$0xff]
      %v426 = vld [vmem:[%s2 + $0x10] sm:$0xff]
      %v427 = vld [vmem:[%s2 + $0x18] sm:$0xff]
      %v428 = vld [vmem:[%s3] sm:$0x1]
      %v430 = vperm.slane %v428, 0
      %vm432 = vcmask 261120
      %v434 = vsel %vm432, %v420, 0
      %v437 = vsel %vm432, %v421, 0
      %439 = vmatpush.msra.mxu0 0.0
      %440 = vmatpush.msra.mxu0 0.0
      %441 = vmatpush.msra.mxu0 0.0
      %442 = vmatpush.msra.mxu0 0.0
      %443 = vmatpush.msra.mxu0 0.0
      %444 = vmatpush.msra.mxu0 0.0
      %445 = vmatpush.msra.mxu0 0.0
      %446 = vmatpush.msra.mxu0 0.0
      %447 = vmatpush.msra.mxu0 0.0
      %448 = vmatpush.msra.mxu0 0.0
      %449 = vmatpush.msra.mxu0 0.0
      %450 = vmatpush.msra.mxu0 0.0
      %451 = vmatpush.msra.mxu0 %v427
      %452 = vmatpush.msra.mxu0 %v426
      %453 = vmatpush.msra.mxu0 %v425
      %454 = vmatpush.msra.mxu0 %v424
      %455 = vmatmul.f32.gmra.mxu0 %v434
      %v456 = vpop.f32.mrf.mxu0
      %v457 = vadd.f32 %v430, %v456
      %458 = vmatmul.f32.gmra.mxu0 %v437
      %v459 = vpop.f32.mrf.mxu0
      %v460 = vadd.f32 %v430, %v459
      %461 = vdwg.mxu0
      %v462 = vld [vmem:[%s4] sm:$0xff]
      %v463 = vld [vmem:[%s4 + $0x8] sm:$0xff]
      %v464 = vld [vmem:[%s4 + $0x10] sm:$0xff]
      %v465 = vld [vmem:[%s4 + $0x18] sm:$0xff]
      %v466 = vld [vmem:[%s5] sm:$0x1]
      %v468 = vperm.slane %v466, 0
      %v471 = vsel %vm432, %v422, 0
      %v474 = vsel %vm432, %v423, 0
      %476 = vmatpush.msra.mxu0 0.0
      %477 = vmatpush.msra.mxu0 0.0
      %478 = vmatpush.msra.mxu0 0.0
      %479 = vmatpush.msra.mxu0 0.0
      %480 = vmatpush.msra.mxu0 0.0
      %481 = vmatpush.msra.mxu0 0.0
      %482 = vmatpush.msra.mxu0 0.0
      %483 = vmatpush.msra.mxu0 0.0
      %484 = vmatpush.msra.mxu0 0.0
      %485 = vmatpush.msra.mxu0 0.0
      %486 = vmatpush.msra.mxu0 0.0
      %487 = vmatpush.msra.mxu0 0.0
      %488 = vmatpush.msra.mxu0 %v465
      %489 = vmatpush.msra.mxu0 %v464
      %490 = vmatpush.msra.mxu0 %v463
      %491 = vmatpush.msra.mxu0 %v462
      %492 = vmatmul.f32.gmra.mxu0 %v471
      %v493 = vpop.f32.mrf.mxu0
      %v494 = vadd.f32 %v468, %v493
      %495 = vmatmul.f32.gmra.mxu0 %v474
      %v496 = vpop.f32.mrf.mxu0
      %v497 = vadd.f32 %v468, %v496
      %498 = vdwg.mxu0
      %v499 = vld [vmem:[%s6] sm:$0xff]
      %v500 = vld [vmem:[%s6 + $0x8] sm:$0xff]
      %v501 = vld [vmem:[%s6 + $0x10] sm:$0xff]
      %v502 = vld [vmem:[%s6 + $0x18] sm:$0xff]
      %v503 = vld [vmem:[%s7] sm:$0x1]
      %v505 = vperm.slane %v503, 0
      %507 = vmatpush.msra.mxu0 0.0
      %508 = vmatpush.msra.mxu0 0.0
      %509 = vmatpush.msra.mxu0 0.0
      %510 = vmatpush.msra.mxu0 0.0
      %511 = vmatpush.msra.mxu0 0.0
      %512 = vmatpush.msra.mxu0 0.0
      %513 = vmatpush.msra.mxu0 0.0
      %514 = vmatpush.msra.mxu0 0.0
      %515 = vmatpush.msra.mxu0 0.0
      %516 = vmatpush.msra.mxu0 0.0
      %517 = vmatpush.msra.mxu0 0.0
      %518 = vmatpush.msra.mxu0 0.0
      %519 = vmatpush.msra.mxu0 %v502
      %520 = vmatpush.msra.mxu0 %v501
      %521 = vmatpush.msra.mxu0 %v500
      %522 = vmatpush.msra.mxu0 %v499
      %523 = vmatmul.f32.gmra.mxu0 %v471
      %v524 = vpop.f32.mrf.mxu0
      %v525 = vadd.f32 %v505, %v524
      %526 = vmatmul.f32.gmra.mxu0 %v474
      %v527 = vpop.f32.mrf.mxu0
      %v528 = vadd.f32 %v505, %v527
      %529 = vdwg.mxu0
      %v530 = vld [vmem:[%s8] sm:$0xff]
      %v531 = vld [vmem:[%s8 + $0x8] sm:$0xff]
      %v532 = vld [vmem:[%s9] sm:$0xff]
      %v533 = vld [vmem:[%s9 + $0x8] sm:$0xff]
      %vm534 = vcmask 130048
      %v536 = vsel %vm534, %v530, 0
      %v539 = vsel %vm534, %v531, 0
      %541 = vmatpush.msra.mxu0 0.0
      %542 = vmatpush.msra.mxu0 0.0
      %543 = vmatpush.msra.mxu0 0.0
      %544 = vmatpush.msra.mxu0 0.0
      %545 = vmatpush.msra.mxu0 0.0
      %546 = vmatpush.msra.mxu0 0.0
      %547 = vmatpush.msra.mxu0 0.0
      %548 = vmatpush.msra.mxu0 0.0
      %549 = vmatpush.msra.mxu0 0.0
      %550 = vmatpush.msra.mxu0 0.0
      %551 = vmatpush.msra.mxu0 0.0
      %552 = vmatpush.msra.mxu0 0.0
      %553 = vmatpush.msra.mxu0 0.0
      %554 = vmatpush.msra.mxu0 0.0
      %555 = vmatpush.msra.mxu0 %v460
      %556 = vmatpush.msra.mxu0 %v457
      %557 = vmatmul.f32.gmra.mxu0 %v536
      %v558 = vpop.f32.mrf.mxu0
      %v559 = vadd.f32 0.0, %v558
      %560 = vmatmul.f32.gmra.mxu0 %v539
      %v561 = vpop.f32.mrf.mxu0
      %v562 = vadd.f32 0.0, %v561
      %563 = vdwg.mxu0
      %v565 = vsel %vm534, %v532, 0
      %v568 = vsel %vm534, %v533, 0
      %570 = vmatpush.msra.mxu0 0.0
      %571 = vmatpush.msra.mxu0 0.0
      %572 = vmatpush.msra.mxu0 0.0
      %573 = vmatpush.msra.mxu0 0.0
      %574 = vmatpush.msra.mxu0 0.0
      %575 = vmatpush.msra.mxu0 0.0
      %576 = vmatpush.msra.mxu0 0.0
      %577 = vmatpush.msra.mxu0 0.0
      %578 = vmatpush.msra.mxu0 0.0
      %579 = vmatpush.msra.mxu0 0.0
      %580 = vmatpush.msra.mxu0 0.0
      %581 = vmatpush.msra.mxu0 0.0
      %582 = vmatpush.msra.mxu0 0.0
      %583 = vmatpush.msra.mxu0 0.0
      %584 = vmatpush.msra.mxu0 %v460
      %585 = vmatpush.msra.mxu0 %v457
      %586 = vmatmul.f32.gmra.mxu0 %v565
      %v587 = vpop.f32.mrf.mxu0
      %v588 = vadd.f32 0.0, %v587
      %589 = vmatmul.f32.gmra.mxu0 %v568
      %v590 = vpop.f32.mrf.mxu0
      %v591 = vadd.f32 0.0, %v590
      %592 = vdwg.mxu0
      %593 = vmatpush.msra.mxu0 0.0
      %594 = vmatpush.msra.mxu0 0.0
      %595 = vmatpush.msra.mxu0 0.0
      %596 = vmatpush.msra.mxu0 0.0
      %597 = vmatpush.msra.mxu0 0.0
      %598 = vmatpush.msra.mxu0 0.0
      %599 = vmatpush.msra.mxu0 0.0
      %600 = vmatpush.msra.mxu0 0.0
      %601 = vmatpush.msra.mxu0 0.0
      %602 = vmatpush.msra.mxu0 0.0
      %603 = vmatpush.msra.mxu0 0.0
      %604 = vmatpush.msra.mxu0 0.0
      %605 = vmatpush.msra.mxu0 0.0
      %606 = vmatpush.msra.mxu0 0.0
      %607 = vmatpush.msra.mxu0 %v497
      %608 = vmatpush.msra.mxu0 %v494
      %609 = vmatmul.f32.gmra.mxu0 %v536
      %v610 = vpop.f32.mrf.mxu0
      %v611 = vadd.f32 0.0, %v610
      %612 = vmatmul.f32.gmra.mxu0 %v539
      %v613 = vpop.f32.mrf.mxu0
      %v614 = vadd.f32 0.0, %v613
      %615 = vdwg.mxu0
      %616 = vmatpush.msra.mxu0 0.0
      %617 = vmatpush.msra.mxu0 0.0
      %618 = vmatpush.msra.mxu0 0.0
      %619 = vmatpush.msra.mxu0 0.0
      %620 = vmatpush.msra.mxu0 0.0
      %621 = vmatpush.msra.mxu0 0.0
      %622 = vmatpush.msra.mxu0 0.0
      %623 = vmatpush.msra.mxu0 0.0
      %624 = vmatpush.msra.mxu0 0.0
      %625 = vmatpush.msra.mxu0 0.0
      %626 = vmatpush.msra.mxu0 0.0
      %627 = vmatpush.msra.mxu0 0.0
      %628 = vmatpush.msra.mxu0 0.0
      %629 = vmatpush.msra.mxu0 0.0
      %630 = vmatpush.msra.mxu0 %v497
      %631 = vmatpush.msra.mxu0 %v494
      %632 = vmatmul.f32.gmra.mxu0 %v565
      %v633 = vpop.f32.mrf.mxu0
      %v634 = vadd.f32 0.0, %v633
      %635 = vmatmul.f32.gmra.mxu0 %v568
      %v636 = vpop.f32.mrf.mxu0
      %v637 = vadd.f32 0.0, %v636
      %638 = vdwg.mxu0
      %v639 = vmul.f32 %v559, %v611
      %v640 = vmul.f32 %v562, %v614
      %v641 = vmul.f32 %v588, %v634
      %v642 = vmul.f32 %v591, %v637
      %v643 = vadd.f32 %v639, %v641
      %v644 = vadd.f32 %v640, %v642
      %v645 = vsel %vm432, %v643, 0.0
      %646 = vadd.xlane.f32.xlu0 %v645
      %v647 = vpop.xlane.xlu0 %646
      %v648 = vsel %vm432, %v644, 0.0
      %649 = vadd.xlane.f32.xlu0 %v648
      %v650 = vpop.xlane.xlu0 %649
      %v651 = vmul.f32 %v559, %v634
      %v652 = vmul.f32 %v562, %v637
      %v653 = vmul.f32 %v588, %v611
      %v654 = vmul.f32 %v591, %v614
      %v655 = vsub.f32 %v651, %v653
      %v656 = vsub.f32 %v652, %v654
      %v657 = vsel %vm432, %v655, 0.0
      %658 = vadd.xlane.f32.xlu0 %v657
      %v659 = vpop.xlane.xlu0 %658
      %v660 = vsel %vm432, %v656, 0.0
      %661 = vadd.xlane.f32.xlu0 %v660
      %v662 = vpop.xlane.xlu0 %661
      %663 = vmatpush.msra.mxu0 0.0
      %664 = vmatpush.msra.mxu0 0.0
      %665 = vmatpush.msra.mxu0 0.0
      %666 = vmatpush.msra.mxu0 0.0
      %667 = vmatpush.msra.mxu0 0.0
      %668 = vmatpush.msra.mxu0 0.0
      %669 = vmatpush.msra.mxu0 0.0
      %670 = vmatpush.msra.mxu0 0.0
      %671 = vmatpush.msra.mxu0 0.0
      %672 = vmatpush.msra.mxu0 0.0
      %673 = vmatpush.msra.mxu0 0.0
      %674 = vmatpush.msra.mxu0 0.0
      %675 = vmatpush.msra.mxu0 0.0
      %676 = vmatpush.msra.mxu0 0.0
      %677 = vmatpush.msra.mxu0 %v650
      %678 = vmatpush.msra.mxu0 %v647
      %679 = vmatmul.f32.gmra.mxu0 %v536
      %v680 = vpop.f32.mrf.mxu0
      %v681 = vadd.f32 0.0, %v680
      %682 = vmatmul.f32.gmra.mxu0 %v539
      %v683 = vpop.f32.mrf.mxu0
      %v684 = vadd.f32 0.0, %v683
      %685 = vdwg.mxu0
      %686 = vmatpush.msra.mxu0 0.0
      %687 = vmatpush.msra.mxu0 0.0
      %688 = vmatpush.msra.mxu0 0.0
      %689 = vmatpush.msra.mxu0 0.0
      %690 = vmatpush.msra.mxu0 0.0
      %691 = vmatpush.msra.mxu0 0.0
      %692 = vmatpush.msra.mxu0 0.0
      %693 = vmatpush.msra.mxu0 0.0
      %694 = vmatpush.msra.mxu0 0.0
      %695 = vmatpush.msra.mxu0 0.0
      %696 = vmatpush.msra.mxu0 0.0
      %697 = vmatpush.msra.mxu0 0.0
      %698 = vmatpush.msra.mxu0 0.0
      %699 = vmatpush.msra.mxu0 0.0
      %700 = vmatpush.msra.mxu0 %v662
      %701 = vmatpush.msra.mxu0 %v659
      %702 = vmatmul.f32.gmra.mxu0 %v565
      %v703 = vpop.f32.mrf.mxu0
      %v704 = vadd.f32 0.0, %v703
      %705 = vmatmul.f32.gmra.mxu0 %v568
      %v706 = vpop.f32.mrf.mxu0
      %v707 = vadd.f32 0.0, %v706
      %708 = vdwg.mxu0
      %v709 = vsub.f32 %v681, %v704
      %v710 = vsub.f32 %v684, %v707
      %v711 = vmul.f32 %v709, 0.001953125
      %v712 = vmul.f32 %v710, 0.001953125
      %vm713 = vcmask 7168
      %714 = vst.msk [vmem:[%s414] sm:$0xff] %vm713, %v711
      %715 = vst.msk [vmem:[%s414 + $0x8] sm:$0xff] %vm713, %v712
      %716 = vst.msk [vmem:[%s419] sm:$0xff] %vm432, %v525
      %717 = vst.msk [vmem:[%s419 + $0x8] sm:$0xff] %vm432, %v528
      %p718 = scmp.lt.s32.totalorder %s23, 1
      %s719 = scalar_select %p718, %s23, 1
      %s720 = smul.addr %s719, 2
      %s721 = smul.addr %s720, 8
      %s722 = scalar_lea.vmem %s10, %s721
      %p723 = scmp.lt.s32.totalorder %s23, 1
      %s724 = scalar_select %p723, %s23, 1
      %s725 = smul.addr %s724, 2
      %s726 = smul.addr %s725, 8
      %s727 = scalar_lea.vmem %s11, %s726
      // Predicated region
      $region61: #{autoformer_forward.37} parent=59 // pred_check
        %p728 = pneg %p261
      $region62: #{autoformer_forward.37} parent=59 // pred_check_branch
        %730 = sbr.rel (%p728) target = $region64
      $region63: #{autoformer_forward.37} parent=59 // pred_region
        _
      $region64: #{autoformer_forward.37} parent=59 // pred_fallthru
        _
      // Predicated region
      $region65: #{autoformer_forward.37} parent=59 // pred_check
        %p731 = pneg %p287
      $region66: #{autoformer_forward.37} parent=59 // pred_check_branch
        %733 = sbr.rel (%p731) target = $region68
      $region67: #{autoformer_forward.37} parent=59 // pred_region
        _
      $region68: #{autoformer_forward.37} parent=59 // pred_fallthru
        _
    $region60: #{autoformer_forward.37} parent=5 // pred_fallthru
      _
    %p734 = scmp.le.s32.totalorder 2, %s18
    // Predicated region
    $region69: #{autoformer_forward.37} parent=5 // pred_check
      %p735 = pneg %p734
    $region70: #{autoformer_forward.37} parent=5 // pred_check_branch
      %737 = sbr.rel (%p735) target = $region72
    $region71: #{autoformer_forward.37} parent=5 // pred_region
      %s738 = ssub.s32 %s18, 2
      // Predicated region
      $region73: #{autoformer_forward.37} parent=71 // pred_check
        %p739 = pneg %p267
      $region74: #{autoformer_forward.37} parent=71 // pred_check_branch
        %741 = sbr.rel (%p739) target = $region76
      $region75: #{autoformer_forward.37} parent=71 // pred_region
        %p742 = scmp.lt.s32.totalorder %s24, 1
        %s743 = scalar_select %p742, %s24, 1
        %s744 = smul.addr %s743, 2
        %s745 = smul.addr %s744, 8
        %s746 = scalar_lea.vmem %s10, %s745
      $region76: #{autoformer_forward.37} parent=71 // pred_fallthru
        _
      // Predicated region
      $region77: #{autoformer_forward.37} parent=71 // pred_check
        %p747 = pneg %p293
      $region78: #{autoformer_forward.37} parent=71 // pred_check_branch
        %749 = sbr.rel (%p747) target = $region80
      $region79: #{autoformer_forward.37} parent=71 // pred_region
        %p750 = scmp.lt.s32.totalorder %s24, 1
        %s751 = scalar_select %p750, %s24, 1
        %s752 = smul.addr %s751, 2
        %s753 = smul.addr %s752, 8
        %s754 = scalar_lea.vmem %s11, %s753
      $region80: #{autoformer_forward.37} parent=71 // pred_fallthru
        _
    $region72: #{autoformer_forward.37} parent=5 // pred_fallthru
      _
  $region6: #{autoformer_forward.37} parent=0 // loop_footer
    %s22 = sadd.s32 1, %s18
  $region7: #{autoformer_forward.37} parent=0 // loop_footer_branch
    %17 = sbr.rel target = $region3
  $region8: #{autoformer_forward.37} parent=0 // loop_exit
    _

// kernel: autoformer_forward.40
$region0: #{autoformer_forward.40}
  #allocation0 [shape = 'u32[]', space=smem, size = 0x4, offset = 0x4, fixed_abs, tag = 'smem constant byte address 0x4 - core index']
  #allocation1 [shape = 'u32[72,128]{1,0:T(1,128)}', space=vmem, size = 0x9000, scoped, tag = 'internal scratch']
  %s0 = inlined_call_operand.vmem [shape: f32[16,16], index: 0, kind: input, shape index: {}]
  %s1 = inlined_call_operand.vmem [shape: f32[2,16,32], index: 1, kind: input, shape index: {}]
  %s2 = inlined_call_operand.vmem [shape: f32[32,64], index: 2, kind: input, shape index: {}]
  %s3 = inlined_call_operand.vmem [shape: f32[64,32], index: 3, kind: input, shape index: {}]
  %s4 = inlined_call_operand.vmem [shape: f32[2,16,32], index: 4, kind: output, shape index: {0}]
  %s5 = inlined_call_operand.vmem [shape: f32[2,16,32], index: 5, kind: output, shape index: {1}]
  %6 = xla_tuple %s4, %s5
  %s7 = sld [smem:[#allocation0]]
  $region57: #{autoformer_forward.40} parent=0
    _
  %s9 = ssub.s32 1, %s7
  %s10 = scalar_select 0, %s9, %s7
  loop: start=0, step=1, limit=4
  $region2: #{autoformer_forward.40} parent=0 // loop_pre_header
    _
  $region3: #{autoformer_forward.40} parent=0 // loop_header
    %s12 = sphi 0, %s16
    %p13 = scmp.ge.s32.totalorder %s12, 4
    %s20 = sphi 0, %s20
    %s22 = sphi 0, %s20
    %s23 = sphi 0, %s22
    %s37 = sphi 0, %s23
    %s43 = sphi 0, %s45
    %s46 = sphi 0, %s43
    %s47 = sphi 0, %s46
    %s63 = sphi 0, %s47
    %s67 = sphi 0, %s67
    %s69 = sphi 0, %s67
    %s70 = sphi 0, %s69
    %s84 = sphi 0, %s70
    %s88 = sphi 0, %s88
    %s90 = sphi 0, %s88
    %s91 = sphi 0, %s90
    %s105 = sphi 0, %s91
    %s111 = sphi 0, %s113
    %s114 = sphi 0, %s111
    %s115 = sphi 0, %s114
    %s131 = sphi 0, %s115
    %s137 = sphi 0, %s139
    %s140 = sphi 0, %s137
    %s141 = sphi 0, %s140
    %s157 = sphi 0, %s141
  $region4: #{autoformer_forward.40} parent=0 // loop_header_branch
    %15 = sbr.rel (%p13) target = $region8
  $region5: #{autoformer_forward.40} parent=0 // loop_body
    %s17 = ssub.s32 %s12, 1
    %s18 = ssub.s32 %s12, 2
    %s19 = sadd.s32 %s12, 1
    %s21 = sadd.s32 %s20, 1
    %p24 = scmp.eq.s32.totalorder %s12, 1
    %p25 = scmp.ne.s32.totalorder %s20, %s22
    %p26 = scmp.eq.s32.totalorder %s12, 0
    %p27 = por %p25, %p26
    %p28 = scmp.ne.s32.totalorder %s20, %s22
    %p29 = scmp.eq.s32.totalorder %s17, 1
    %p30 = por %p28, %p29
    %p31 = scmp.ne.s32.totalorder %s22, %s23
    %p32 = scmp.eq.s32.totalorder %s17, 0
    %p33 = por %p31, %p32
    %p34 = scmp.ne.s32.totalorder %s22, %s23
    %p35 = scmp.eq.s32.totalorder %s18, 1
    %p36 = por %p34, %p35
    %p38 = scmp.ne.s32.totalorder %s23, %s37
    %p39 = scmp.eq.s32.totalorder %s18, 0
    %p40 = por %p38, %p39
    %s41 = ssub.s32 %s12, %s19
    %p42 = scmp.eq.s32.totalorder %s41, 0
    %s44 = sadd.s32 %s43, 1
    %s45 = scalar_select %p42, %s43, %s44
    %p48 = pneg %p42
    %p49 = scmp.eq.s32.totalorder %s12, 1
    %p50 = por %p48, %p49
    %p51 = scmp.ne.s32.totalorder %s43, %s46
    %p52 = scmp.eq.s32.totalorder %s12, 0
    %p53 = por %p51, %p52
    %p54 = scmp.ne.s32.totalorder %s43, %s46
    %p55 = scmp.eq.s32.totalorder %s17, 1
    %p56 = por %p54, %p55
    %p57 = scmp.ne.s32.totalorder %s46, %s47
    %p58 = scmp.eq.s32.totalorder %s17, 0
    %p59 = por %p57, %p58
    %p60 = scmp.ne.s32.totalorder %s46, %s47
    %p61 = scmp.eq.s32.totalorder %s18, 1
    %p62 = por %p60, %p61
    %p64 = scmp.ne.s32.totalorder %s47, %s63
    %p65 = scmp.eq.s32.totalorder %s18, 0
    %p66 = por %p64, %p65
    %s68 = sadd.s32 %s67, 1
    %p71 = scmp.eq.s32.totalorder %s12, 1
    %p72 = scmp.ne.s32.totalorder %s67, %s69
    %p73 = scmp.eq.s32.totalorder %s12, 0
    %p74 = por %p72, %p73
    %p75 = scmp.ne.s32.totalorder %s67, %s69
    %p76 = scmp.eq.s32.totalorder %s17, 1
    %p77 = por %p75, %p76
    %p78 = scmp.ne.s32.totalorder %s69, %s70
    %p79 = scmp.eq.s32.totalorder %s17, 0
    %p80 = por %p78, %p79
    %p81 = scmp.ne.s32.totalorder %s69, %s70
    %p82 = scmp.eq.s32.totalorder %s18, 1
    %p83 = por %p81, %p82
    %p85 = scmp.ne.s32.totalorder %s70, %s84
    %p86 = scmp.eq.s32.totalorder %s18, 0
    %p87 = por %p85, %p86
    %s89 = sadd.s32 %s88, 1
    %p92 = scmp.eq.s32.totalorder %s12, 1
    %p93 = scmp.ne.s32.totalorder %s88, %s90
    %p94 = scmp.eq.s32.totalorder %s12, 0
    %p95 = por %p93, %p94
    %p96 = scmp.ne.s32.totalorder %s88, %s90
    %p97 = scmp.eq.s32.totalorder %s17, 1
    %p98 = por %p96, %p97
    %p99 = scmp.ne.s32.totalorder %s90, %s91
    %p100 = scmp.eq.s32.totalorder %s17, 0
    %p101 = por %p99, %p100
    %p102 = scmp.ne.s32.totalorder %s90, %s91
    %p103 = scmp.eq.s32.totalorder %s18, 1
    %p104 = por %p102, %p103
    %p106 = scmp.ne.s32.totalorder %s91, %s105
    %p107 = scmp.eq.s32.totalorder %s18, 0
    %p108 = por %p106, %p107
    %s109 = ssub.s32 %s12, %s19
    %p110 = scmp.eq.s32.totalorder %s109, 0
    %s112 = sadd.s32 %s111, 1
    %s113 = scalar_select %p110, %s111, %s112
    %p116 = pneg %p110
    %p117 = scmp.eq.s32.totalorder %s12, 1
    %p118 = por %p116, %p117
    %p119 = scmp.ne.s32.totalorder %s111, %s114
    %p120 = scmp.eq.s32.totalorder %s12, 0
    %p121 = por %p119, %p120
    %p122 = scmp.ne.s32.totalorder %s111, %s114
    %p123 = scmp.eq.s32.totalorder %s17, 1
    %p124 = por %p122, %p123
    %p125 = scmp.ne.s32.totalorder %s114, %s115
    %p126 = scmp.eq.s32.totalorder %s17, 0
    %p127 = por %p125, %p126
    %p128 = scmp.ne.s32.totalorder %s114, %s115
    %p129 = scmp.eq.s32.totalorder %s18, 1
    %p130 = por %p128, %p129
    %p132 = scmp.ne.s32.totalorder %s115, %s131
    %p133 = scmp.eq.s32.totalorder %s18, 0
    %p134 = por %p132, %p133
    %s135 = ssub.s32 %s12, %s19
    %p136 = scmp.eq.s32.totalorder %s135, 0
    %s138 = sadd.s32 %s137, 1
    %s139 = scalar_select %p136, %s137, %s138
    %p142 = pneg %p136
    %p143 = scmp.eq.s32.totalorder %s12, 1
    %p144 = por %p142, %p143
    %p145 = scmp.ne.s32.totalorder %s137, %s140
    %p146 = scmp.eq.s32.totalorder %s12, 0
    %p147 = por %p145, %p146
    %p148 = scmp.ne.s32.totalorder %s137, %s140
    %p149 = scmp.eq.s32.totalorder %s17, 1
    %p150 = por %p148, %p149
    %p151 = scmp.ne.s32.totalorder %s140, %s141
    %p152 = scmp.eq.s32.totalorder %s17, 0
    %p153 = por %p151, %p152
    %p154 = scmp.ne.s32.totalorder %s140, %s141
    %p155 = scmp.eq.s32.totalorder %s18, 1
    %p156 = por %p154, %p155
    %p158 = scmp.ne.s32.totalorder %s141, %s157
    %p159 = scmp.eq.s32.totalorder %s18, 0
    %p160 = por %p158, %p159
    %p161 = scmp.le.s32.totalorder 1, %s12
    %p162 = scmp.lt.s32.totalorder %s12, 3
    %p163 = pnand %p161, %p162
    %p164 = pneg %p163
    // Predicated region
    $region9: #{autoformer_forward.40} parent=5 // pred_check
      _
    $region10: #{autoformer_forward.40} parent=5 // pred_check_branch
      %166 = sbr.rel (%p163) target = $region12
    $region11: #{autoformer_forward.40} parent=5 // pred_region
      %s167 = ssub.s32 %s12, 1
      // Predicated region
      $region13: #{autoformer_forward.40} parent=11 // pred_check
        %p168 = pneg %p33
      $region14: #{autoformer_forward.40} parent=11 // pred_check_branch
        %170 = sbr.rel (%p168) target = $region16
      $region15: #{autoformer_forward.40} parent=11 // pred_region
        _
      $region16: #{autoformer_forward.40} parent=11 // pred_fallthru
        _
      // Predicated region
      $region17: #{autoformer_forward.40} parent=11 // pred_check
        %p171 = pneg %p80
      $region18: #{autoformer_forward.40} parent=11 // pred_check_branch
        %173 = sbr.rel (%p171) target = $region20
      $region19: #{autoformer_forward.40} parent=11 // pred_region
        _
      $region20: #{autoformer_forward.40} parent=11 // pred_fallthru
        _
      // Predicated region
      $region21: #{autoformer_forward.40} parent=11 // pred_check
        %p174 = pneg %p101
      $region22: #{autoformer_forward.40} parent=11 // pred_check_branch
        %176 = sbr.rel (%p174) target = $region24
      $region23: #{autoformer_forward.40} parent=11 // pred_region
        _
      $region24: #{autoformer_forward.40} parent=11 // pred_fallthru
        _
    $region12: #{autoformer_forward.40} parent=5 // pred_fallthru
      _
    %p177 = scmp.lt.s32.totalorder %s12, 2
    // Predicated region
    $region25: #{autoformer_forward.40} parent=5 // pred_check
      %p178 = pneg %p177
    $region26: #{autoformer_forward.40} parent=5 // pred_check_branch
      %180 = sbr.rel (%p178) target = $region28
    $region27: #{autoformer_forward.40} parent=5 // pred_region
      // Predicated region
      $region29: #{autoformer_forward.40} parent=27 // pred_check
        %p181 = pneg %p53
      $region30: #{autoformer_forward.40} parent=27 // pred_check_branch
        %183 = sbr.rel (%p181) target = $region32
      $region31: #{autoformer_forward.40} parent=27 // pred_region
        %p184 = scmp.lt.s32.totalorder %s12, 1
        %s185 = scalar_select %p184, %s12, 1
        %s186 = smul.addr %s185, 2
        %s187 = smul.addr %s186, 8
        %s188 = scalar_lea.vmem %s1, %s187
      $region32: #{autoformer_forward.40} parent=27 // pred_fallthru
        _
    $region28: #{autoformer_forward.40} parent=5 // pred_fallthru
      _
    %p189 = scmp.le.s32.totalorder 1, %s12
    %p190 = scmp.lt.s32.totalorder %s12, 3
    %p191 = pnand %p189, %p190
    %p192 = pneg %p191
    // Predicated region
    $region33: #{autoformer_forward.40} parent=5 // pred_check
      _
    $region34: #{autoformer_forward.40} parent=5 // pred_check_branch
      %194 = sbr.rel (%p191) target = $region36
    $region35: #{autoformer_forward.40} parent=5 // pred_region
      %s195 = ssub.s32 %s12, 1
      %p196 = pneg %p33
      %p197 = pneg %p30
      %p198 = scmp.lt.s32.totalorder %s17, 1
      %s199 = scalar_select %p198, %s17, 1
      %s200 = smul.addr %s199, 2
      %s201 = smul.addr %s200, 8
      %s202 = scalar_lea.vmem %s1, %s201
      %p203 = pneg %p59
      %p204 = pneg %p56
      %p205 = pneg %p80
      %p206 = pneg %p77
      %p207 = pneg %p101
      %p208 = pneg %p98
      %p209 = pneg %p127
      %p210 = pneg %p124
      %p211 = scmp.lt.s32.totalorder %s17, 1
      %s212 = scalar_select %p211, %s17, 1
      %s213 = smul.addr %s212, 2
      %s214 = smul.addr %s213, 8
      %s215 = scalar_lea.vmem %s4, %s214
      %p216 = pneg %p153
      %p217 = pneg %p150
      %p218 = scmp.lt.s32.totalorder %s17, 1
      %s219 = scalar_select %p218, %s17, 1
      %s220 = smul.addr %s219, 2
      %s221 = smul.addr %s220, 8
      %s222 = scalar_lea.vmem %s5, %s221
      %p223 = scmp.lt.s32.totalorder %s17, 1
      %s224 = scalar_select %p223, %s17, 1
      %s225 = smul.addr %s224, 2
      %s226 = smul.addr %s225, 8
      %s227 = scalar_lea.vmem %s1, %s226
      %p228 = scmp.lt.s32.totalorder %s17, 1
      %s229 = scalar_select %p228, %s17, 1
      %s230 = smul.addr %s229, 2
      %s231 = smul.addr %s230, 8
      %s232 = scalar_lea.vmem %s4, %s231
      %p233 = scmp.lt.s32.totalorder %s17, 1
      %s234 = scalar_select %p233, %s17, 1
      %s235 = smul.addr %s234, 2
      %s236 = smul.addr %s235, 8
      %s237 = scalar_lea.vmem %s5, %s236
      %v238 = vld [vmem:[%s227] sm:$0xff]
      %v239 = vld [vmem:[%s227 + $0x8] sm:$0xff]
      %v240 = vld [vmem:[%s2] sm:$0xff]
      %v241 = vld [vmem:[%s2 + $0x8] sm:$0xff]
      %v242 = vld [vmem:[%s2 + $0x10] sm:$0xff]
      %v243 = vld [vmem:[%s2 + $0x18] sm:$0xff]
      %vm244 = vcmask 261120
      %v246 = vsel %vm244, %v238, 0
      %v249 = vsel %vm244, %v239, 0
      %251 = vmatpush.msra.mxu0 0.0
      %252 = vmatpush.msra.mxu0 0.0
      %253 = vmatpush.msra.mxu0 0.0
      %254 = vmatpush.msra.mxu0 0.0
      %255 = vmatpush.msra.mxu0 0.0
      %256 = vmatpush.msra.mxu0 0.0
      %257 = vmatpush.msra.mxu0 0.0
      %258 = vmatpush.msra.mxu0 0.0
      %259 = vmatpush.msra.mxu0 0.0
      %260 = vmatpush.msra.mxu0 0.0
      %261 = vmatpush.msra.mxu0 0.0
      %262 = vmatpush.msra.mxu0 0.0
      %263 = vmatpush.msra.mxu0 %v243
      %264 = vmatpush.msra.mxu0 %v242
      %265 = vmatpush.msra.mxu0 %v241
      %266 = vmatpush.msra.mxu0 %v240
      %267 = vmatmul.f32.gmra.mxu0 %v246
      %v268 = vpop.f32.mrf.mxu0
      %v269 = vadd.f32 0.0, %v268
      %270 = vmatmul.f32.gmra.mxu0 %v249
      %v271 = vpop.f32.mrf.mxu0
      %v272 = vadd.f32 0.0, %v271
      %273 = vdwg.mxu0
      %v274 = vmax.f32 %v269, 0.0
      %v275 = vmax.f32 %v272, 0.0
      %v276 = vld [vmem:[%s3] sm:$0xff]
      %v277 = vld [vmem:[%s3 + $0x8] sm:$0xff]
      %v278 = vld [vmem:[%s3 + $0x10] sm:$0xff]
      %v279 = vld [vmem:[%s3 + $0x18] sm:$0xff]
      %v280 = vld [vmem:[%s3 + $0x20] sm:$0xff]
      %v281 = vld [vmem:[%s3 + $0x28] sm:$0xff]
      %v282 = vld [vmem:[%s3 + $0x30] sm:$0xff]
      %v283 = vld [vmem:[%s3 + $0x38] sm:$0xff]
      %vm284 = vcmask 523264
      %v286 = vsel %vm284, %v274, 0
      %v289 = vsel %vm284, %v275, 0
      %291 = vmatpush.msra.mxu0 0.0
      %292 = vmatpush.msra.mxu0 0.0
      %293 = vmatpush.msra.mxu0 0.0
      %294 = vmatpush.msra.mxu0 0.0
      %295 = vmatpush.msra.mxu0 0.0
      %296 = vmatpush.msra.mxu0 0.0
      %297 = vmatpush.msra.mxu0 0.0
      %298 = vmatpush.msra.mxu0 0.0
      %299 = vmatpush.msra.mxu0 %v283
      %300 = vmatpush.msra.mxu0 %v282
      %301 = vmatpush.msra.mxu0 %v281
      %302 = vmatpush.msra.mxu0 %v280
      %303 = vmatpush.msra.mxu0 %v279
      %304 = vmatpush.msra.mxu0 %v278
      %305 = vmatpush.msra.mxu0 %v277
      %306 = vmatpush.msra.mxu0 %v276
      %307 = vmatmul.f32.gmra.mxu0 %v286
      %v308 = vpop.f32.mrf.mxu0
      %v309 = vadd.f32 0.0, %v308
      %310 = vmatmul.f32.gmra.mxu0 %v289
      %v311 = vpop.f32.mrf.mxu0
      %v312 = vadd.f32 0.0, %v311
      %313 = vdwg.mxu0
      %v314 = vadd.f32 %v238, %v309
      %v315 = vadd.f32 %v239, %v312
      %v316 = vld [vmem:[%s0] sm:$0xff]
      %v317 = vld [vmem:[%s0 + $0x8] sm:$0xff]
      %vm318 = vcmask 130048
      %v320 = vsel %vm318, %v316, 0
      %v323 = vsel %vm318, %v317, 0
      %325 = vmatpush.msra.mxu0 0.0
      %326 = vmatpush.msra.mxu0 0.0
      %327 = vmatpush.msra.mxu0 0.0
      %328 = vmatpush.msra.mxu0 0.0
      %329 = vmatpush.msra.mxu0 0.0
      %330 = vmatpush.msra.mxu0 0.0
      %331 = vmatpush.msra.mxu0 0.0
      %332 = vmatpush.msra.mxu0 0.0
      %333 = vmatpush.msra.mxu0 0.0
      %334 = vmatpush.msra.mxu0 0.0
      %335 = vmatpush.msra.mxu0 0.0
      %336 = vmatpush.msra.mxu0 0.0
      %337 = vmatpush.msra.mxu0 0.0
      %338 = vmatpush.msra.mxu0 0.0
      %339 = vmatpush.msra.mxu0 %v315
      %340 = vmatpush.msra.mxu0 %v314
      %341 = vmatmul.f32.gmra.mxu0 %v320
      %v342 = vpop.f32.mrf.mxu0
      %v343 = vadd.f32 0.0, %v342
      %344 = vmatmul.f32.gmra.mxu0 %v323
      %v345 = vpop.f32.mrf.mxu0
      %v346 = vadd.f32 0.0, %v345
      %347 = vdwg.mxu0
      %348 = vst.msk [vmem:[%s237] sm:$0xff] %vm244, %v343
      %349 = vst.msk [vmem:[%s237 + $0x8] sm:$0xff] %vm244, %v346
      %v350 = vsub.f32 %v314, %v343
      %v351 = vsub.f32 %v315, %v346
      %352 = vst.msk [vmem:[%s232] sm:$0xff] %vm244, %v350
      %353 = vst.msk [vmem:[%s232 + $0x8] sm:$0xff] %vm244, %v351
      %p354 = scmp.lt.s32.totalorder %s17, 1
      %s355 = scalar_select %p354, %s17, 1
      %s356 = smul.addr %s355, 2
      %s357 = smul.addr %s356, 8
      %s358 = scalar_lea.vmem %s4, %s357
      %p359 = scmp.lt.s32.totalorder %s17, 1
      %s360 = scalar_select %p359, %s17, 1
      %s361 = smul.addr %s360, 2
      %s362 = smul.addr %s361, 8
      %s363 = scalar_lea.vmem %s5, %s362
      // Predicated region
      $region37: #{autoformer_forward.40} parent=35 // pred_check
        %p364 = pneg %p124
      $region38: #{autoformer_forward.40} parent=35 // pred_check_branch
        %366 = sbr.rel (%p364) target = $region40
      $region39: #{autoformer_forward.40} parent=35 // pred_region
        _
      $region40: #{autoformer_forward.40} parent=35 // pred_fallthru
        _
      // Predicated region
      $region41: #{autoformer_forward.40} parent=35 // pred_check
        %p367 = pneg %p150
      $region42: #{autoformer_forward.40} parent=35 // pred_check_branch
        %369 = sbr.rel (%p367) target = $region44
      $region43: #{autoformer_forward.40} parent=35 // pred_region
        _
      $region44: #{autoformer_forward.40} parent=35 // pred_fallthru
        _
    $region36: #{autoformer_forward.40} parent=5 // pred_fallthru
      _
    %p370 = scmp.le.s32.totalorder 2, %s12
    // Predicated region
    $region45: #{autoformer_forward.40} parent=5 // pred_check
      %p371 = pneg %p370
    $region46: #{autoformer_forward.40} parent=5 // pred_check_branch
      %373 = sbr.rel (%p371) target = $region48
    $region47: #{autoformer_forward.40} parent=5 // pred_region
      %s374 = ssub.s32 %s12, 2
      // Predicated region
      $region49: #{autoformer_forward.40} parent=47 // pred_check
        %p375 = pneg %p130
      $region50: #{autoformer_forward.40} parent=47 // pred_check_branch
        %377 = sbr.rel (%p375) target = $region52
      $region51: #{autoformer_forward.40} parent=47 // pred_region
        %p378 = scmp.lt.s32.totalorder %s18, 1
        %s379 = scalar_select %p378, %s18, 1
        %s380 = smul.addr %s379, 2
        %s381 = smul.addr %s380, 8
        %s382 = scalar_lea.vmem %s4, %s381
      $region52: #{autoformer_forward.40} parent=47 // pred_fallthru
        _
      // Predicated region
      $region53: #{autoformer_forward.40} parent=47 // pred_check
        %p383 = pneg %p156
      $region54: #{autoformer_forward.40} parent=47 // pred_check_branch
        %385 = sbr.rel (%p383) target = $region56
      $region55: #{autoformer_forward.40} parent=47 // pred_region
        %p386 = scmp.lt.s32.totalorder %s18, 1
        %s387 = scalar_select %p386, %s18, 1
        %s388 = smul.addr %s387, 2
        %s389 = smul.addr %s388, 8
        %s390 = scalar_lea.vmem %s5, %s389
      $region56: #{autoformer_forward.40} parent=47 // pred_fallthru
        _
    $region48: #{autoformer_forward.40} parent=5 // pred_fallthru
      _
  $region6: #{autoformer_forward.40} parent=0 // loop_footer
    %s16 = sadd.s32 1, %s12
  $region7: #{autoformer_forward.40} parent=0 // loop_footer_branch
    %11 = sbr.rel target = $region3
  $region8: #{autoformer_forward.40} parent=0 // loop_exit
    _

// kernel: autoformer_forward.42
$region0: #{autoformer_forward.42}
  #allocation0 [shape = 'u32[]', space=smem, size = 0x4, offset = 0x4, fixed_abs, tag = 'smem constant byte address 0x4 - core index']
  #allocation1 [shape = 'u32[72,128]{1,0:T(1,128)}', space=vmem, size = 0x9000, scoped, tag = 'internal scratch']
  %s0 = inlined_call_operand.vmem [shape: f32[2,16,32], index: 0, kind: input, shape index: {}]
  %s1 = inlined_call_operand.vmem [shape: f32[1,32], index: 1, kind: input, shape index: {}]
  %s2 = inlined_call_operand.vmem [shape: f32[1,32], index: 2, kind: input, shape index: {}]
  %s3 = inlined_call_operand.vmem [shape: f32[32,4], index: 3, kind: input, shape index: {}]
  %s4 = inlined_call_operand.vmem [shape: f32[1,4], index: 4, kind: input, shape index: {}]
  %s5 = inlined_call_operand.vmem [shape: f32[2,16,4], index: 5, kind: output, shape index: {}]
  %s6 = sld [smem:[#allocation0]]
  $region53: #{autoformer_forward.42} parent=0
    _
  %s8 = ssub.s32 1, %s6
  %s9 = scalar_select 0, %s8, %s6
  loop: start=0, step=1, limit=4
  $region2: #{autoformer_forward.42} parent=0 // loop_pre_header
    _
  $region3: #{autoformer_forward.42} parent=0 // loop_header
    %s11 = sphi 0, %s15
    %p12 = scmp.ge.s32.totalorder %s11, 4
    %s21 = sphi 0, %s23
    %s24 = sphi 0, %s21
    %s25 = sphi 0, %s24
    %s41 = sphi 0, %s25
    %s45 = sphi 0, %s45
    %s47 = sphi 0, %s45
    %s48 = sphi 0, %s47
    %s62 = sphi 0, %s48
    %s66 = sphi 0, %s66
    %s68 = sphi 0, %s66
    %s69 = sphi 0, %s68
    %s83 = sphi 0, %s69
    %s87 = sphi 0, %s87
    %s89 = sphi 0, %s87
    %s90 = sphi 0, %s89
    %s104 = sphi 0, %s90
    %s108 = sphi 0, %s108
    %s110 = sphi 0, %s108
    %s111 = sphi 0, %s110
    %s125 = sphi 0, %s111
    %s131 = sphi 0, %s133
    %s134 = sphi 0, %s131
    %s135 = sphi 0, %s134
    %s151 = sphi 0, %s135
  $region4: #{autoformer_forward.42} parent=0 // loop_header_branch
    %14 = sbr.rel (%p12) target = $region8
  $region5: #{autoformer_forward.42} parent=0 // loop_body
    %s16 = ssub.s32 %s11, 1
    %s17 = ssub.s32 %s11, 2
    %s18 = sadd.s32 %s11, 1
    %s19 = ssub.s32 %s11, %s18
    %p20 = scmp.eq.s32.totalorder %s19, 0
    %s22 = sadd.s32 %s21, 1
    %s23 = scalar_select %p20, %s21, %s22
    %p26 = pneg %p20
    %p27 = scmp.eq.s32.totalorder %s11, 1
    %p28 = por %p26, %p27
    %p29 = scmp.ne.s32.totalorder %s21, %s24
    %p30 = scmp.eq.s32.totalorder %s11, 0
    %p31 = por %p29, %p30
    %p32 = scmp.ne.s32.totalorder %s21, %s24
    %p33 = scmp.eq.s32.totalorder %s16, 1
    %p34 = por %p32, %p33
    %p35 = scmp.ne.s32.totalorder %s24, %s25
    %p36 = scmp.eq.s32.totalorder %s16, 0
    %p37 = por %p35, %p36
    %p38 = scmp.ne.s32.totalorder %s24, %s25
    %p39 = scmp.eq.s32.totalorder %s17, 1
    %p40 = por %p38, %p39
    %p42 = scmp.ne.s32.totalorder %s25, %s41
    %p43 = scmp.eq.s32.totalorder %s17, 0
    %p44 = por %p42, %p43
    %s46 = sadd.s32 %s45, 1
    %p49 = scmp.eq.s32.totalorder %s11, 1
    %p50 = scmp.ne.s32.totalorder %s45, %s47
    %p51 = scmp.eq.s32.totalorder %s11, 0
    %p52 = por %p50, %p51
    %p53 = scmp.ne.s32.totalorder %s45, %s47
    %p54 = scmp.eq.s32.totalorder %s16, 1
    %p55 = por %p53, %p54
    %p56 = scmp.ne.s32.totalorder %s47, %s48
    %p57 = scmp.eq.s32.totalorder %s16, 0
    %p58 = por %p56, %p57
    %p59 = scmp.ne.s32.totalorder %s47, %s48
    %p60 = scmp.eq.s32.totalorder %s17, 1
    %p61 = por %p59, %p60
    %p63 = scmp.ne.s32.totalorder %s48, %s62
    %p64 = scmp.eq.s32.totalorder %s17, 0
    %p65 = por %p63, %p64
    %s67 = sadd.s32 %s66, 1
    %p70 = scmp.eq.s32.totalorder %s11, 1
    %p71 = scmp.ne.s32.totalorder %s66, %s68
    %p72 = scmp.eq.s32.totalorder %s11, 0
    %p73 = por %p71, %p72
    %p74 = scmp.ne.s32.totalorder %s66, %s68
    %p75 = scmp.eq.s32.totalorder %s16, 1
    %p76 = por %p74, %p75
    %p77 = scmp.ne.s32.totalorder %s68, %s69
    %p78 = scmp.eq.s32.totalorder %s16, 0
    %p79 = por %p77, %p78
    %p80 = scmp.ne.s32.totalorder %s68, %s69
    %p81 = scmp.eq.s32.totalorder %s17, 1
    %p82 = por %p80, %p81
    %p84 = scmp.ne.s32.totalorder %s69, %s83
    %p85 = scmp.eq.s32.totalorder %s17, 0
    %p86 = por %p84, %p85
    %s88 = sadd.s32 %s87, 1
    %p91 = scmp.eq.s32.totalorder %s11, 1
    %p92 = scmp.ne.s32.totalorder %s87, %s89
    %p93 = scmp.eq.s32.totalorder %s11, 0
    %p94 = por %p92, %p93
    %p95 = scmp.ne.s32.totalorder %s87, %s89
    %p96 = scmp.eq.s32.totalorder %s16, 1
    %p97 = por %p95, %p96
    %p98 = scmp.ne.s32.totalorder %s89, %s90
    %p99 = scmp.eq.s32.totalorder %s16, 0
    %p100 = por %p98, %p99
    %p101 = scmp.ne.s32.totalorder %s89, %s90
    %p102 = scmp.eq.s32.totalorder %s17, 1
    %p103 = por %p101, %p102
    %p105 = scmp.ne.s32.totalorder %s90, %s104
    %p106 = scmp.eq.s32.totalorder %s17, 0
    %p107 = por %p105, %p106
    %s109 = sadd.s32 %s108, 1
    %p112 = scmp.eq.s32.totalorder %s11, 1
    %p113 = scmp.ne.s32.totalorder %s108, %s110
    %p114 = scmp.eq.s32.totalorder %s11, 0
    %p115 = por %p113, %p114
    %p116 = scmp.ne.s32.totalorder %s108, %s110
    %p117 = scmp.eq.s32.totalorder %s16, 1
    %p118 = por %p116, %p117
    %p119 = scmp.ne.s32.totalorder %s110, %s111
    %p120 = scmp.eq.s32.totalorder %s16, 0
    %p121 = por %p119, %p120
    %p122 = scmp.ne.s32.totalorder %s110, %s111
    %p123 = scmp.eq.s32.totalorder %s17, 1
    %p124 = por %p122, %p123
    %p126 = scmp.ne.s32.totalorder %s111, %s125
    %p127 = scmp.eq.s32.totalorder %s17, 0
    %p128 = por %p126, %p127
    %s129 = ssub.s32 %s11, %s18
    %p130 = scmp.eq.s32.totalorder %s129, 0
    %s132 = sadd.s32 %s131, 1
    %s133 = scalar_select %p130, %s131, %s132
    %p136 = pneg %p130
    %p137 = scmp.eq.s32.totalorder %s11, 1
    %p138 = por %p136, %p137
    %p139 = scmp.ne.s32.totalorder %s131, %s134
    %p140 = scmp.eq.s32.totalorder %s11, 0
    %p141 = por %p139, %p140
    %p142 = scmp.ne.s32.totalorder %s131, %s134
    %p143 = scmp.eq.s32.totalorder %s16, 1
    %p144 = por %p142, %p143
    %p145 = scmp.ne.s32.totalorder %s134, %s135
    %p146 = scmp.eq.s32.totalorder %s16, 0
    %p147 = por %p145, %p146
    %p148 = scmp.ne.s32.totalorder %s134, %s135
    %p149 = scmp.eq.s32.totalorder %s17, 1
    %p150 = por %p148, %p149
    %p152 = scmp.ne.s32.totalorder %s135, %s151
    %p153 = scmp.eq.s32.totalorder %s17, 0
    %p154 = por %p152, %p153
    %p155 = scmp.le.s32.totalorder 1, %s11
    %p156 = scmp.lt.s32.totalorder %s11, 3
    %p157 = pnand %p155, %p156
    %p158 = pneg %p157
    // Predicated region
    $region9: #{autoformer_forward.42} parent=5 // pred_check
      _
    $region10: #{autoformer_forward.42} parent=5 // pred_check_branch
      %160 = sbr.rel (%p157) target = $region12
    $region11: #{autoformer_forward.42} parent=5 // pred_region
      %s161 = ssub.s32 %s11, 1
      // Predicated region
      $region13: #{autoformer_forward.42} parent=11 // pred_check
        %p162 = pneg %p58
      $region14: #{autoformer_forward.42} parent=11 // pred_check_branch
        %164 = sbr.rel (%p162) target = $region16
      $region15: #{autoformer_forward.42} parent=11 // pred_region
        _
      $region16: #{autoformer_forward.42} parent=11 // pred_fallthru
        _
      // Predicated region
      $region17: #{autoformer_forward.42} parent=11 // pred_check
        %p165 = pneg %p79
      $region18: #{autoformer_forward.42} parent=11 // pred_check_branch
        %167 = sbr.rel (%p165) target = $region20
      $region19: #{autoformer_forward.42} parent=11 // pred_region
        _
      $region20: #{autoformer_forward.42} parent=11 // pred_fallthru
        _
      // Predicated region
      $region21: #{autoformer_forward.42} parent=11 // pred_check
        %p168 = pneg %p100
      $region22: #{autoformer_forward.42} parent=11 // pred_check_branch
        %170 = sbr.rel (%p168) target = $region24
      $region23: #{autoformer_forward.42} parent=11 // pred_region
        _
      $region24: #{autoformer_forward.42} parent=11 // pred_fallthru
        _
      // Predicated region
      $region25: #{autoformer_forward.42} parent=11 // pred_check
        %p171 = pneg %p121
      $region26: #{autoformer_forward.42} parent=11 // pred_check_branch
        %173 = sbr.rel (%p171) target = $region28
      $region27: #{autoformer_forward.42} parent=11 // pred_region
        _
      $region28: #{autoformer_forward.42} parent=11 // pred_fallthru
        _
    $region12: #{autoformer_forward.42} parent=5 // pred_fallthru
      _
    %p174 = scmp.lt.s32.totalorder %s11, 2
    // Predicated region
    $region29: #{autoformer_forward.42} parent=5 // pred_check
      %p175 = pneg %p174
    $region30: #{autoformer_forward.42} parent=5 // pred_check_branch
      %177 = sbr.rel (%p175) target = $region32
    $region31: #{autoformer_forward.42} parent=5 // pred_region
      // Predicated region
      $region33: #{autoformer_forward.42} parent=31 // pred_check
        %p178 = pneg %p31
      $region34: #{autoformer_forward.42} parent=31 // pred_check_branch
        %180 = sbr.rel (%p178) target = $region36
      $region35: #{autoformer_forward.42} parent=31 // pred_region
        %p181 = scmp.lt.s32.totalorder %s11, 1
        %s182 = scalar_select %p181, %s11, 1
        %s183 = smul.addr %s182, 2
        %s184 = smul.addr %s183, 8
        %s185 = scalar_lea.vmem %s0, %s184
      $region36: #{autoformer_forward.42} parent=31 // pred_fallthru
        _
    $region32: #{autoformer_forward.42} parent=5 // pred_fallthru
      _
    %p186 = scmp.le.s32.totalorder 1, %s11
    %p187 = scmp.lt.s32.totalorder %s11, 3
    %p188 = pnand %p186, %p187
    %p189 = pneg %p188
    // Predicated region
    $region37: #{autoformer_forward.42} parent=5 // pred_check
      _
    $region38: #{autoformer_forward.42} parent=5 // pred_check_branch
      %191 = sbr.rel (%p188) target = $region40
    $region39: #{autoformer_forward.42} parent=5 // pred_region
      %s192 = ssub.s32 %s11, 1
      %p193 = scmp.lt.s32.totalorder %s16, 1
      %s194 = scalar_select %p193, %s16, 1
      %s195 = smul.addr %s194, 2
      %s196 = smul.addr %s195, 8
      %s197 = scalar_lea.vmem %s0, %s196
      %p198 = pneg %p37
      %p199 = pneg %p34
      %p200 = pneg %p58
      %p201 = pneg %p55
      %p202 = pneg %p79
      %p203 = pneg %p76
      %p204 = pneg %p100
      %p205 = pneg %p97
      %p206 = pneg %p121
      %p207 = pneg %p118
      %p208 = pneg %p147
      %p209 = pneg %p144
      %p210 = scmp.lt.s32.totalorder %s16, 1
      %s211 = scalar_select %p210, %s16, 1
      %s212 = smul.addr %s211, 2
      %s213 = smul.addr %s212, 8
      %s214 = scalar_lea.vmem %s5, %s213
      %p215 = scmp.lt.s32.totalorder %s16, 1
      %s216 = scalar_select %p215, %s16, 1
      %s217 = smul.addr %s216, 2
      %s218 = smul.addr %s217, 8
      %s219 = scalar_lea.vmem %s0, %s218
      %p220 = scmp.lt.s32.totalorder %s16, 1
      %s221 = scalar_select %p220, %s16, 1
      %s222 = smul.addr %s221, 2
      %s223 = smul.addr %s222, 8
      %s224 = scalar_lea.vmem %s5, %s223
      %v225 = vld [vmem:[%s219] sm:$0xff]
      %v226 = vld [vmem:[%s219 + $0x8] sm:$0xff]
      %v227 = vld [vmem:[%s1] sm:$0x1]
      %v228 = vld [vmem:[%s2] sm:$0x1]
      %vm229 = vcmask 261120
      %v230 = vsel %vm229, %v225, 0.0
      %231 = vadd.xlane.f32.xlu0 %v230
      %v232 = vpop.xlane.xlu0 %231
      %v233 = vsel %vm229, %v226, 0.0
      %234 = vadd.xlane.f32.xlu0 %v233
      %v235 = vpop.xlane.xlu0 %234
      %v236 = vrcp.pop 32.0
      %v237 = vmul.f32 32.0, %v236
      %v238 = vsub.f32 1.0, %v237
      %v239 = vmul.f32 %v236, %v238
      %v240 = vadd.f32 %v236, %v239
      %vm241 = vweird.f32 %v236
      %v242 = vsel %vm241, %v236, %v240
      %v243 = vmul.f32 %v232, %v242
      %v244 = vmul.f32 %v235, %v242
      %v245 = vsub.f32 %v225, %v243
      %v246 = vsub.f32 %v226, %v244
      %v247 = vmul.f32 %v245, %v245
      %v248 = vmul.f32 %v246, %v246
      %v249 = vsel %vm229, %v247, 0.0
      %250 = vadd.xlane.f32.xlu0 %v249
      %v251 = vpop.xlane.xlu0 %250
      %v252 = vsel %vm229, %v248, 0.0
      %253 = vadd.xlane.f32.xlu0 %v252
      %v254 = vpop.xlane.xlu0 %253
      %v255 = vmul.f32 %v251, %v242
      %v256 = vmul.f32 %v254, %v242
      %v257 = vadd.f32 %v255, 1e-05
      %v258 = vadd.f32 %v256, 1e-05
      %v259 = vrsqrt.pop %v257
      %v260 = vmul.f32 %v259, %v257
      %v261 = vmul.f32 %v260, %v259
      %v262 = vmul.f32 0.5, %v261
      %v263 = vsub.f32 1.5, %v262
      %v264 = vmul.f32 %v259, %v263
      %vm265 = vweird.f32 %v257
      %vm266 = vweird.f32 %v259
      %vm267 = vmor %vm265, %vm266
      %v268 = vsel %vm267, %v259, %v264
      %v269 = vrsqrt.pop %v258
      %v270 = vmul.f32 %v269, %v258
      %v271 = vmul.f32 %v270, %v269
      %v272 = vmul.f32 0.5, %v271
      %v273 = vsub.f32 1.5, %v272
      %v274 = vmul.f32 %v269, %v273
      %vm275 = vweird.f32 %v258
      %vm276 = vweird.f32 %v269
      %vm277 = vmor %vm275, %vm276
      %v278 = vsel %vm277, %v269, %v274
      %v279 = vmul.f32 %v245, %v268
      %v280 = vmul.f32 %v246, %v278
      %v282 = vperm.slane %v227, 0
      %v284 = vmul.f32 %v279, %v282
      %v285 = vmul.f32 %v280, %v282
      %v287 = vperm.slane %v228, 0
      %v289 = vadd.f32 %v284, %v287
      %v290 = vadd.f32 %v285, %v287
      %v291 = vsel %vm229, %v289, 0.0
      %v292 = vsel %vm229, %v290, 0.0
      %v293 = vadd.f32 %v291, %v292
      %v294 = vrot.slane %v293, 4
      %v295 = vadd.f32 %v293, %v294
      %v296 = vrot.slane %v295, 2
      %v297 = vadd.f32 %v295, %v296
      %v298 = vrot.slane %v297, 1
      %v299 = vadd.f32 %v297, %v298
      %v300 = vrcp.pop 16.0
      %v301 = vmul.f32 16.0, %v300
      %v302 = vsub.f32 1.0, %v301
      %v303 = vmul.f32 %v300, %v302
      %v304 = vadd.f32 %v300, %v303
      %vm305 = vweird.f32 %v300
      %v306 = vsel %vm305, %v300, %v304
      %v307 = vmul.f32 %v299, %v306
      %v308 = vsub.f32 %v289, %v307
      %v309 = vsub.f32 %v290, %v307
      %v310 = vld [vmem:[%s3] sm:$0xff]
      %v311 = vld [vmem:[%s3 + $0x8] sm:$0xff]
      %v312 = vld [vmem:[%s3 + $0x10] sm:$0xff]
      %v313 = vld [vmem:[%s3 + $0x18] sm:$0xff]
      %v314 = vld [vmem:[%s4] sm:$0x1]
      %v316 = vperm.slane %v314, 0
      %v319 = vsel %vm229, %v308, 0
      %v322 = vsel %vm229, %v309, 0
      %324 = vmatpush.msra.mxu0 0.0
      %325 = vmatpush.msra.mxu0 0.0
      %326 = vmatpush.msra.mxu0 0.0
      %327 = vmatpush.msra.mxu0 0.0
      %328 = vmatpush.msra.mxu0 0.0
      %329 = vmatpush.msra.mxu0 0.0
      %330 = vmatpush.msra.mxu0 0.0
      %331 = vmatpush.msra.mxu0 0.0
      %332 = vmatpush.msra.mxu0 0.0
      %333 = vmatpush.msra.mxu0 0.0
      %334 = vmatpush.msra.mxu0 0.0
      %335 = vmatpush.msra.mxu0 0.0
      %336 = vmatpush.msra.mxu0 %v313
      %337 = vmatpush.msra.mxu0 %v312
      %338 = vmatpush.msra.mxu0 %v311
      %339 = vmatpush.msra.mxu0 %v310
      %340 = vmatmul.f32.gmra.mxu0 %v319
      %v341 = vpop.f32.mrf.mxu0
      %v342 = vadd.f32 %v316, %v341
      %343 = vmatmul.f32.gmra.mxu0 %v322
      %v344 = vpop.f32.mrf.mxu0
      %v345 = vadd.f32 %v316, %v344
      %346 = vdwg.mxu0
      %vm347 = vcmask 31744
      %348 = vst.msk [vmem:[%s224] sm:$0xff] %vm347, %v342
      %349 = vst.msk [vmem:[%s224 + $0x8] sm:$0xff] %vm347, %v345
      %p350 = scmp.lt.s32.totalorder %s16, 1
      %s351 = scalar_select %p350, %s16, 1
      %s352 = smul.addr %s351, 2
      %s353 = smul.addr %s352, 8
      %s354 = scalar_lea.vmem %s5, %s353
      // Predicated region
      $region41: #{autoformer_forward.42} parent=39 // pred_check
        %p355 = pneg %p144
      $region42: #{autoformer_forward.42} parent=39 // pred_check_branch
        %357 = sbr.rel (%p355) target = $region44
      $region43: #{autoformer_forward.42} parent=39 // pred_region
        _
      $region44: #{autoformer_forward.42} parent=39 // pred_fallthru
        _
    $region40: #{autoformer_forward.42} parent=5 // pred_fallthru
      _
    %p358 = scmp.le.s32.totalorder 2, %s11
    // Predicated region
    $region45: #{autoformer_forward.42} parent=5 // pred_check
      %p359 = pneg %p358
    $region46: #{autoformer_forward.42} parent=5 // pred_check_branch
      %361 = sbr.rel (%p359) target = $region48
    $region47: #{autoformer_forward.42} parent=5 // pred_region
      %s362 = ssub.s32 %s11, 2
      // Predicated region
      $region49: #{autoformer_forward.42} parent=47 // pred_check
        %p363 = pneg %p150
      $region50: #{autoformer_forward.42} parent=47 // pred_check_branch
        %365 = sbr.rel (%p363) target = $region52
      $region51: #{autoformer_forward.42} parent=47 // pred_region
        %p366 = scmp.lt.s32.totalorder %s17, 1
        %s367 = scalar_select %p366, %s17, 1
        %s368 = smul.addr %s367, 2
        %s369 = smul.addr %s368, 8
        %s370 = scalar_lea.vmem %s5, %s369
      $region52: #{autoformer_forward.42} parent=47 // pred_fallthru
        _
    $region48: #{autoformer_forward.42} parent=5 // pred_fallthru
      _
  $region6: #{autoformer_forward.42} parent=0 // loop_footer
    %s15 = sadd.s32 1, %s11
  $region7: #{autoformer_forward.42} parent=0 // loop_footer_branch
    %10 = sbr.rel target = $region3
  $region8: #{autoformer_forward.42} parent=0 // loop_exit
    _

// kernel: autoformer_forward.41
$region0: #{autoformer_forward.41}
  #allocation0 [shape = 'u32[]', space=smem, size = 0x4, offset = 0x4, fixed_abs, tag = 'smem constant byte address 0x4 - core index']
  #allocation1 [shape = 'u32[72,128]{1,0:T(1,128)}', space=vmem, size = 0x9000, scoped, tag = 'internal scratch']
  %s0 = inlined_call_operand.vmem [shape: f32[2,16,32], index: 0, kind: input, shape index: {}]
  %s1 = inlined_call_operand.vmem [shape: f32[2,16,32], index: 1, kind: input, shape index: {}]
  %s2 = inlined_call_operand.vmem [shape: f32[2,16,32], index: 2, kind: input, shape index: {}]
  %s3 = inlined_call_operand.vmem [shape: f32[3,32,4], index: 3, kind: input, shape index: {}]
  %s4 = inlined_call_operand.vmem [shape: f32[16,16], index: 4, kind: input, shape index: {}]
  %s5 = inlined_call_operand.vmem [shape: f32[16,16], index: 5, kind: input, shape index: {}]
  %s6 = inlined_call_operand.vmem [shape: f32[2,16,4], index: 6, kind: output, shape index: {}]
  %s7 = sld [smem:[#allocation0]]
  $region57: #{autoformer_forward.41} parent=0
    _
  %s9 = ssub.s32 1, %s7
  %s10 = scalar_select 0, %s9, %s7
  loop: start=0, step=1, limit=4
  $region2: #{autoformer_forward.41} parent=0 // loop_pre_header
    _
  $region3: #{autoformer_forward.41} parent=0 // loop_header
    %s12 = sphi 0, %s16
    %p13 = scmp.ge.s32.totalorder %s12, 4
    %s22 = sphi 0, %s24
    %s25 = sphi 0, %s22
    %s26 = sphi 0, %s25
    %s42 = sphi 0, %s26
    %s48 = sphi 0, %s50
    %s51 = sphi 0, %s48
    %s52 = sphi 0, %s51
    %s68 = sphi 0, %s52
    %s74 = sphi 0, %s76
    %s77 = sphi 0, %s74
    %s78 = sphi 0, %s77
    %s94 = sphi 0, %s78
    %s98 = sphi 0, %s98
    %s100 = sphi 0, %s98
    %s101 = sphi 0, %s100
    %s115 = sphi 0, %s101
    %s119 = sphi 0, %s119
    %s121 = sphi 0, %s119
    %s122 = sphi 0, %s121
    %s136 = sphi 0, %s122
    %s140 = sphi 0, %s140
    %s142 = sphi 0, %s140
    %s143 = sphi 0, %s142
    %s157 = sphi 0, %s143
    %s163 = sphi 0, %s165
    %s166 = sphi 0, %s163
    %s167 = sphi 0, %s166
    %s183 = sphi 0, %s167
  $region4: #{autoformer_forward.41} parent=0 // loop_header_branch
    %15 = sbr.rel (%p13) target = $region8
  $region5: #{autoformer_forward.41} parent=0 // loop_body
    %s17 = ssub.s32 %s12, 1
    %s18 = ssub.s32 %s12, 2
    %s19 = sadd.s32 %s12, 1
    %s20 = ssub.s32 %s12, %s19
    %p21 = scmp.eq.s32.totalorder %s20, 0
    %s23 = sadd.s32 %s22, 1
    %s24 = scalar_select %p21, %s22, %s23
    %p27 = pneg %p21
    %p28 = scmp.eq.s32.totalorder %s12, 1
    %p29 = por %p27, %p28
    %p30 = scmp.ne.s32.totalorder %s22, %s25
    %p31 = scmp.eq.s32.totalorder %s12, 0
    %p32 = por %p30, %p31
    %p33 = scmp.ne.s32.totalorder %s22, %s25
    %p34 = scmp.eq.s32.totalorder %s17, 1
    %p35 = por %p33, %p34
    %p36 = scmp.ne.s32.totalorder %s25, %s26
    %p37 = scmp.eq.s32.totalorder %s17, 0
    %p38 = por %p36, %p37
    %p39 = scmp.ne.s32.totalorder %s25, %s26
    %p40 = scmp.eq.s32.totalorder %s18, 1
    %p41 = por %p39, %p40
    %p43 = scmp.ne.s32.totalorder %s26, %s42
    %p44 = scmp.eq.s32.totalorder %s18, 0
    %p45 = por %p43, %p44
    %s46 = ssub.s32 %s12, %s19
    %p47 = scmp.eq.s32.totalorder %s46, 0
    %s49 = sadd.s32 %s48, 1
    %s50 = scalar_select %p47, %s48, %s49
    %p53 = pneg %p47
    %p54 = scmp.eq.s32.totalorder %s12, 1
    %p55 = por %p53, %p54
    %p56 = scmp.ne.s32.totalorder %s48, %s51
    %p57 = scmp.eq.s32.totalorder %s12, 0
    %p58 = por %p56, %p57
    %p59 = scmp.ne.s32.totalorder %s48, %s51
    %p60 = scmp.eq.s32.totalorder %s17, 1
    %p61 = por %p59, %p60
    %p62 = scmp.ne.s32.totalorder %s51, %s52
    %p63 = scmp.eq.s32.totalorder %s17, 0
    %p64 = por %p62, %p63
    %p65 = scmp.ne.s32.totalorder %s51, %s52
    %p66 = scmp.eq.s32.totalorder %s18, 1
    %p67 = por %p65, %p66
    %p69 = scmp.ne.s32.totalorder %s52, %s68
    %p70 = scmp.eq.s32.totalorder %s18, 0
    %p71 = por %p69, %p70
    %s72 = ssub.s32 %s12, %s19
    %p73 = scmp.eq.s32.totalorder %s72, 0
    %s75 = sadd.s32 %s74, 1
    %s76 = scalar_select %p73, %s74, %s75
    %p79 = pneg %p73
    %p80 = scmp.eq.s32.totalorder %s12, 1
    %p81 = por %p79, %p80
    %p82 = scmp.ne.s32.totalorder %s74, %s77
    %p83 = scmp.eq.s32.totalorder %s12, 0
    %p84 = por %p82, %p83
    %p85 = scmp.ne.s32.totalorder %s74, %s77
    %p86 = scmp.eq.s32.totalorder %s17, 1
    %p87 = por %p85, %p86
    %p88 = scmp.ne.s32.totalorder %s77, %s78
    %p89 = scmp.eq.s32.totalorder %s17, 0
    %p90 = por %p88, %p89
    %p91 = scmp.ne.s32.totalorder %s77, %s78
    %p92 = scmp.eq.s32.totalorder %s18, 1
    %p93 = por %p91, %p92
    %p95 = scmp.ne.s32.totalorder %s78, %s94
    %p96 = scmp.eq.s32.totalorder %s18, 0
    %p97 = por %p95, %p96
    %s99 = sadd.s32 %s98, 1
    %p102 = scmp.eq.s32.totalorder %s12, 1
    %p103 = scmp.ne.s32.totalorder %s98, %s100
    %p104 = scmp.eq.s32.totalorder %s12, 0
    %p105 = por %p103, %p104
    %p106 = scmp.ne.s32.totalorder %s98, %s100
    %p107 = scmp.eq.s32.totalorder %s17, 1
    %p108 = por %p106, %p107
    %p109 = scmp.ne.s32.totalorder %s100, %s101
    %p110 = scmp.eq.s32.totalorder %s17, 0
    %p111 = por %p109, %p110
    %p112 = scmp.ne.s32.totalorder %s100, %s101
    %p113 = scmp.eq.s32.totalorder %s18, 1
    %p114 = por %p112, %p113
    %p116 = scmp.ne.s32.totalorder %s101, %s115
    %p117 = scmp.eq.s32.totalorder %s18, 0
    %p118 = por %p116, %p117
    %s120 = sadd.s32 %s119, 1
    %p123 = scmp.eq.s32.totalorder %s12, 1
    %p124 = scmp.ne.s32.totalorder %s119, %s121
    %p125 = scmp.eq.s32.totalorder %s12, 0
    %p126 = por %p124, %p125
    %p127 = scmp.ne.s32.totalorder %s119, %s121
    %p128 = scmp.eq.s32.totalorder %s17, 1
    %p129 = por %p127, %p128
    %p130 = scmp.ne.s32.totalorder %s121, %s122
    %p131 = scmp.eq.s32.totalorder %s17, 0
    %p132 = por %p130, %p131
    %p133 = scmp.ne.s32.totalorder %s121, %s122
    %p134 = scmp.eq.s32.totalorder %s18, 1
    %p135 = por %p133, %p134
    %p137 = scmp.ne.s32.totalorder %s122, %s136
    %p138 = scmp.eq.s32.totalorder %s18, 0
    %p139 = por %p137, %p138
    %s141 = sadd.s32 %s140, 1
    %p144 = scmp.eq.s32.totalorder %s12, 1
    %p145 = scmp.ne.s32.totalorder %s140, %s142
    %p146 = scmp.eq.s32.totalorder %s12, 0
    %p147 = por %p145, %p146
    %p148 = scmp.ne.s32.totalorder %s140, %s142
    %p149 = scmp.eq.s32.totalorder %s17, 1
    %p150 = por %p148, %p149
    %p151 = scmp.ne.s32.totalorder %s142, %s143
    %p152 = scmp.eq.s32.totalorder %s17, 0
    %p153 = por %p151, %p152
    %p154 = scmp.ne.s32.totalorder %s142, %s143
    %p155 = scmp.eq.s32.totalorder %s18, 1
    %p156 = por %p154, %p155
    %p158 = scmp.ne.s32.totalorder %s143, %s157
    %p159 = scmp.eq.s32.totalorder %s18, 0
    %p160 = por %p158, %p159
    %s161 = ssub.s32 %s12, %s19
    %p162 = scmp.eq.s32.totalorder %s161, 0
    %s164 = sadd.s32 %s163, 1
    %s165 = scalar_select %p162, %s163, %s164
    %p168 = pneg %p162
    %p169 = scmp.eq.s32.totalorder %s12, 1
    %p170 = por %p168, %p169
    %p171 = scmp.ne.s32.totalorder %s163, %s166
    %p172 = scmp.eq.s32.totalorder %s12, 0
    %p173 = por %p171, %p172
    %p174 = scmp.ne.s32.totalorder %s163, %s166
    %p175 = scmp.eq.s32.totalorder %s17, 1
    %p176 = por %p174, %p175
    %p177 = scmp.ne.s32.totalorder %s166, %s167
    %p178 = scmp.eq.s32.totalorder %s17, 0
    %p179 = por %p177, %p178
    %p180 = scmp.ne.s32.totalorder %s166, %s167
    %p181 = scmp.eq.s32.totalorder %s18, 1
    %p182 = por %p180, %p181
    %p184 = scmp.ne.s32.totalorder %s167, %s183
    %p185 = scmp.eq.s32.totalorder %s18, 0
    %p186 = por %p184, %p185
    %p187 = scmp.le.s32.totalorder 1, %s12
    %p188 = scmp.lt.s32.totalorder %s12, 3
    %p189 = pnand %p187, %p188
    %p190 = pneg %p189
    // Predicated region
    $region9: #{autoformer_forward.41} parent=5 // pred_check
      _
    $region10: #{autoformer_forward.41} parent=5 // pred_check_branch
      %192 = sbr.rel (%p189) target = $region12
    $region11: #{autoformer_forward.41} parent=5 // pred_region
      %s193 = ssub.s32 %s12, 1
      // Predicated region
      $region13: #{autoformer_forward.41} parent=11 // pred_check
        %p194 = pneg %p111
      $region14: #{autoformer_forward.41} parent=11 // pred_check_branch
        %196 = sbr.rel (%p194) target = $region16
      $region15: #{autoformer_forward.41} parent=11 // pred_region
        _
      $region16: #{autoformer_forward.41} parent=11 // pred_fallthru
        _
      // Predicated region
      $region17: #{autoformer_forward.41} parent=11 // pred_check
        %p197 = pneg %p132
      $region18: #{autoformer_forward.41} parent=11 // pred_check_branch
        %199 = sbr.rel (%p197) target = $region20
      $region19: #{autoformer_forward.41} parent=11 // pred_region
        _
      $region20: #{autoformer_forward.41} parent=11 // pred_fallthru
        _
      // Predicated region
      $region21: #{autoformer_forward.41} parent=11 // pred_check
        %p200 = pneg %p153
      $region22: #{autoformer_forward.41} parent=11 // pred_check_branch
        %202 = sbr.rel (%p200) target = $region24
      $region23: #{autoformer_forward.41} parent=11 // pred_region
        _
      $region24: #{autoformer_forward.41} parent=11 // pred_fallthru
        _
    $region12: #{autoformer_forward.41} parent=5 // pred_fallthru
      _
    %p203 = scmp.lt.s32.totalorder %s12, 2
    // Predicated region
    $region25: #{autoformer_forward.41} parent=5 // pred_check
      %p204 = pneg %p203
    $region26: #{autoformer_forward.41} parent=5 // pred_check_branch
      %206 = sbr.rel (%p204) target = $region28
    $region27: #{autoformer_forward.41} parent=5 // pred_region
      // Predicated region
      $region29: #{autoformer_forward.41} parent=27 // pred_check
        %p207 = pneg %p32
      $region30: #{autoformer_forward.41} parent=27 // pred_check_branch
        %209 = sbr.rel (%p207) target = $region32
      $region31: #{autoformer_forward.41} parent=27 // pred_region
        %p210 = scmp.lt.s32.totalorder %s12, 1
        %s211 = scalar_select %p210, %s12, 1
        %s212 = smul.addr %s211, 2
        %s213 = smul.addr %s212, 8
        %s214 = scalar_lea.vmem %s0, %s213
      $region32: #{autoformer_forward.41} parent=27 // pred_fallthru
        _
      // Predicated region
      $region33: #{autoformer_forward.41} parent=27 // pred_check
        %p215 = pneg %p58
      $region34: #{autoformer_forward.41} parent=27 // pred_check_branch
        %217 = sbr.rel (%p215) target = $region36
      $region35: #{autoformer_forward.41} parent=27 // pred_region
        %p218 = scmp.lt.s32.totalorder %s12, 1
        %s219 = scalar_select %p218, %s12, 1
        %s220 = smul.addr %s219, 2
        %s221 = smul.addr %s220, 8
        %s222 = scalar_lea.vmem %s1, %s221
      $region36: #{autoformer_forward.41} parent=27 // pred_fallthru
        _
      // Predicated region
      $region37: #{autoformer_forward.41} parent=27 // pred_check
        %p223 = pneg %p84
      $region38: #{autoformer_forward.41} parent=27 // pred_check_branch
        %225 = sbr.rel (%p223) target = $region40
      $region39: #{autoformer_forward.41} parent=27 // pred_region
        %p226 = scmp.lt.s32.totalorder %s12, 1
        %s227 = scalar_select %p226, %s12, 1
        %s228 = smul.addr %s227, 2
        %s229 = smul.addr %s228, 8
        %s230 = scalar_lea.vmem %s2, %s229
      $region40: #{autoformer_forward.41} parent=27 // pred_fallthru
        _
    $region28: #{autoformer_forward.41} parent=5 // pred_fallthru
      _
    %p231 = scmp.le.s32.totalorder 1, %s12
    %p232 = scmp.lt.s32.totalorder %s12, 3
    %p233 = pnand %p231, %p232
    %p234 = pneg %p233
    // Predicated region
    $region41: #{autoformer_forward.41} parent=5 // pred_check
      _
    $region42: #{autoformer_forward.41} parent=5 // pred_check_branch
      %236 = sbr.rel (%p233) target = $region44
    $region43: #{autoformer_forward.41} parent=5 // pred_region
      %s237 = ssub.s32 %s12, 1
      %p238 = scmp.lt.s32.totalorder %s17, 1
      %s239 = scalar_select %p238, %s17, 1
      %s240 = smul.addr %s239, 2
      %s241 = smul.addr %s240, 8
      %s242 = scalar_lea.vmem %s0, %s241
      %p243 = pneg %p38
      %p244 = pneg %p35
      %p245 = scmp.lt.s32.totalorder %s17, 1
      %s246 = scalar_select %p245, %s17, 1
      %s247 = smul.addr %s246, 2
      %s248 = smul.addr %s247, 8
      %s249 = scalar_lea.vmem %s1, %s248
      %p250 = pneg %p64
      %p251 = pneg %p61
      %p252 = scmp.lt.s32.totalorder %s17, 1
      %s253 = scalar_select %p252, %s17, 1
      %s254 = smul.addr %s253, 2
      %s255 = smul.addr %s254, 8
      %s256 = scalar_lea.vmem %s2, %s255
      %p257 = pneg %p90
      %p258 = pneg %p87
      %p259 = pneg %p111
      %p260 = pneg %p108
      %p261 = pneg %p132
      %p262 = pneg %p129
      %p263 = pneg %p153
      %p264 = pneg %p150
      %p265 = pneg %p179
      %p266 = pneg %p176
      %p267 = scmp.lt.s32.totalorder %s17, 1
      %s268 = scalar_select %p267, %s17, 1
      %s269 = smul.addr %s268, 2
      %s270 = smul.addr %s269, 8
      %s271 = scalar_lea.vmem %s6, %s270
      %p272 = scmp.lt.s32.totalorder %s17, 1
      %s273 = scalar_select %p272, %s17, 1
      %s274 = smul.addr %s273, 2
      %s275 = smul.addr %s274, 8
      %s276 = scalar_lea.vmem %s0, %s275
      %p277 = scmp.lt.s32.totalorder %s17, 1
      %s278 = scalar_select %p277, %s17, 1
      %s279 = smul.addr %s278, 2
      %s280 = smul.addr %s279, 8
      %s281 = scalar_lea.vmem %s1, %s280
      %p282 = scmp.lt.s32.totalorder %s17, 1
      %s283 = scalar_select %p282, %s17, 1
      %s284 = smul.addr %s283, 2
      %s285 = smul.addr %s284, 8
      %s286 = scalar_lea.vmem %s2, %s285
      %p287 = scmp.lt.s32.totalorder %s17, 1
      %s288 = scalar_select %p287, %s17, 1
      %s289 = smul.addr %s288, 2
      %s290 = smul.addr %s289, 8
      %s291 = scalar_lea.vmem %s6, %s290
      %v292 = vld [vmem:[%s276] sm:$0xff]
      %v293 = vld [vmem:[%s276 + $0x8] sm:$0xff]
      %v294 = vld [vmem:[%s281] sm:$0xff]
      %v295 = vld [vmem:[%s281 + $0x8] sm:$0xff]
      %v296 = vadd.f32 %v292, %v294
      %v297 = vadd.f32 %v293, %v295
      %v298 = vld [vmem:[%s286] sm:$0xff]
      %v299 = vld [vmem:[%s286 + $0x8] sm:$0xff]
      %v300 = vadd.f32 %v296, %v298
      %v301 = vadd.f32 %v297, %v299
      %v302 = vld [vmem:[%s4] sm:$0xff]
      %v303 = vld [vmem:[%s4 + $0x8] sm:$0xff]
      %v304 = vld [vmem:[%s5] sm:$0xff]
      %v305 = vld [vmem:[%s5 + $0x8] sm:$0xff]
      %v306 = vld [vmem:[%s3] sm:$0xff]
      %v307 = vld [vmem:[%s3 + $0x8] sm:$0xff]
      %v308 = vld [vmem:[%s3 + $0x10] sm:$0xff]
      %v309 = vld [vmem:[%s3 + $0x18] sm:$0xff]
      %vm310 = vcmask 261120
      %v312 = vsel %vm310, %v300, 0
      %v315 = vsel %vm310, %v301, 0
      %317 = vmatpush.msra.mxu0 0.0
      %318 = vmatpush.msra.mxu0 0.0
      %319 = vmatpush.msra.mxu0 0.0
      %320 = vmatpush.msra.mxu0 0.0
      %321 = vmatpush.msra.mxu0 0.0
      %322 = vmatpush.msra.mxu0 0.0
      %323 = vmatpush.msra.mxu0 0.0
      %324 = vmatpush.msra.mxu0 0.0
      %325 = vmatpush.msra.mxu0 0.0
      %326 = vmatpush.msra.mxu0 0.0
      %327 = vmatpush.msra.mxu0 0.0
      %328 = vmatpush.msra.mxu0 0.0
      %329 = vmatpush.msra.mxu0 %v309
      %330 = vmatpush.msra.mxu0 %v308
      %331 = vmatpush.msra.mxu0 %v307
      %332 = vmatpush.msra.mxu0 %v306
      %333 = vmatmul.f32.gmra.mxu0 %v312
      %v334 = vpop.f32.mrf.mxu0
      %v335 = vadd.f32 0.0, %v334
      %336 = vmatmul.f32.gmra.mxu0 %v315
      %v337 = vpop.f32.mrf.mxu0
      %v338 = vadd.f32 0.0, %v337
      %339 = vdwg.mxu0
      %s340 = scalar_lea.vmem %s3, 32
      %v341 = vld [vmem:[%s340] sm:$0xff]
      %v342 = vld [vmem:[%s340 + $0x8] sm:$0xff]
      %v343 = vld [vmem:[%s340 + $0x10] sm:$0xff]
      %v344 = vld [vmem:[%s340 + $0x18] sm:$0xff]
      %345 = vmatpush.msra.mxu0 0.0
      %346 = vmatpush.msra.mxu0 0.0
      %347 = vmatpush.msra.mxu0 0.0
      %348 = vmatpush.msra.mxu0 0.0
      %349 = vmatpush.msra.mxu0 0.0
      %350 = vmatpush.msra.mxu0 0.0
      %351 = vmatpush.msra.mxu0 0.0
      %352 = vmatpush.msra.mxu0 0.0
      %353 = vmatpush.msra.mxu0 0.0
      %354 = vmatpush.msra.mxu0 0.0
      %355 = vmatpush.msra.mxu0 0.0
      %356 = vmatpush.msra.mxu0 0.0
      %357 = vmatpush.msra.mxu0 %v344
      %358 = vmatpush.msra.mxu0 %v343
      %359 = vmatpush.msra.mxu0 %v342
      %360 = vmatpush.msra.mxu0 %v341
      %361 = vmatmul.f32.gmra.mxu0 %v312
      %v362 = vpop.f32.mrf.mxu0
      %v363 = vadd.f32 0.0, %v362
      %364 = vmatmul.f32.gmra.mxu0 %v315
      %v365 = vpop.f32.mrf.mxu0
      %v366 = vadd.f32 0.0, %v365
      %367 = vdwg.mxu0
      %s368 = scalar_lea.vmem %s3, 64
      %v369 = vld [vmem:[%s368] sm:$0xff]
      %v370 = vld [vmem:[%s368 + $0x8] sm:$0xff]
      %v371 = vld [vmem:[%s368 + $0x10] sm:$0xff]
      %v372 = vld [vmem:[%s368 + $0x18] sm:$0xff]
      %373 = vmatpush.msra.mxu0 0.0
      %374 = vmatpush.msra.mxu0 0.0
      %375 = vmatpush.msra.mxu0 0.0
      %376 = vmatpush.msra.mxu0 0.0
      %377 = vmatpush.msra.mxu0 0.0
      %378 = vmatpush.msra.mxu0 0.0
      %379 = vmatpush.msra.mxu0 0.0
      %380 = vmatpush.msra.mxu0 0.0
      %381 = vmatpush.msra.mxu0 0.0
      %382 = vmatpush.msra.mxu0 0.0
      %383 = vmatpush.msra.mxu0 0.0
      %384 = vmatpush.msra.mxu0 0.0
      %385 = vmatpush.msra.mxu0 %v372
      %386 = vmatpush.msra.mxu0 %v371
      %387 = vmatpush.msra.mxu0 %v370
      %388 = vmatpush.msra.mxu0 %v369
      %389 = vmatmul.f32.gmra.mxu0 %v312
      %v390 = vpop.f32.mrf.mxu0
      %v391 = vadd.f32 0.0, %v390
      %392 = vmatmul.f32.gmra.mxu0 %v315
      %v393 = vpop.f32.mrf.mxu0
      %v394 = vadd.f32 0.0, %v393
      %395 = vdwg.mxu0
      %vm396 = vcmask 130048
      %v398 = vsel %vm396, %v302, 0
      %v401 = vsel %vm396, %v303, 0
      %403 = vmatpush.msra.mxu0 0.0
      %404 = vmatpush.msra.mxu0 0.0
      %405 = vmatpush.msra.mxu0 0.0
      %406 = vmatpush.msra.mxu0 0.0
      %407 = vmatpush.msra.mxu0 0.0
      %408 = vmatpush.msra.mxu0 0.0
      %409 = vmatpush.msra.mxu0 0.0
      %410 = vmatpush.msra.mxu0 0.0
      %411 = vmatpush.msra.mxu0 0.0
      %412 = vmatpush.msra.mxu0 0.0
      %413 = vmatpush.msra.mxu0 0.0
      %414 = vmatpush.msra.mxu0 0.0
      %415 = vmatpush.msra.mxu0 0.0
      %416 = vmatpush.msra.mxu0 0.0
      %417 = vmatpush.msra.mxu0 %v338
      %418 = vmatpush.msra.mxu0 %v335
      %419 = vmatmul.f32.gmra.mxu0 %v398
      %v420 = vpop.f32.mrf.mxu0
      %v421 = vadd.f32 %v363, %v420
      %422 = vmatmul.f32.gmra.mxu0 %v401
      %v423 = vpop.f32.mrf.mxu0
      %v424 = vadd.f32 %v366, %v423
      %425 = vdwg.mxu0
      %v427 = vsel %vm396, %v304, 0
      %v430 = vsel %vm396, %v305, 0
      %432 = vmatpush.msra.mxu0 0.0
      %433 = vmatpush.msra.mxu0 0.0
      %434 = vmatpush.msra.mxu0 0.0
      %435 = vmatpush.msra.mxu0 0.0
      %436 = vmatpush.msra.mxu0 0.0
      %437 = vmatpush.msra.mxu0 0.0
      %438 = vmatpush.msra.mxu0 0.0
      %439 = vmatpush.msra.mxu0 0.0
      %440 = vmatpush.msra.mxu0 0.0
      %441 = vmatpush.msra.mxu0 0.0
      %442 = vmatpush.msra.mxu0 0.0
      %443 = vmatpush.msra.mxu0 0.0
      %444 = vmatpush.msra.mxu0 0.0
      %445 = vmatpush.msra.mxu0 0.0
      %446 = vmatpush.msra.mxu0 %v394
      %447 = vmatpush.msra.mxu0 %v391
      %448 = vmatmul.f32.gmra.mxu0 %v427
      %v449 = vpop.f32.mrf.mxu0
      %v450 = vadd.f32 0.0, %v449
      %451 = vmatmul.f32.gmra.mxu0 %v430
      %v452 = vpop.f32.mrf.mxu0
      %v453 = vadd.f32 0.0, %v452
      %454 = vdwg.mxu0
      %v455 = vadd.f32 %v421, %v450
      %v456 = vadd.f32 %v424, %v453
      %vm457 = vcmask 31744
      %458 = vst.msk [vmem:[%s291] sm:$0xff] %vm457, %v455
      %459 = vst.msk [vmem:[%s291 + $0x8] sm:$0xff] %vm457, %v456
      %p460 = scmp.lt.s32.totalorder %s17, 1
      %s461 = scalar_select %p460, %s17, 1
      %s462 = smul.addr %s461, 2
      %s463 = smul.addr %s462, 8
      %s464 = scalar_lea.vmem %s6, %s463
      // Predicated region
      $region45: #{autoformer_forward.41} parent=43 // pred_check
        %p465 = pneg %p176
      $region46: #{autoformer_forward.41} parent=43 // pred_check_branch
        %467 = sbr.rel (%p465) target = $region48
      $region47: #{autoformer_forward.41} parent=43 // pred_region
        _
      $region48: #{autoformer_forward.41} parent=43 // pred_fallthru
        _
    $region44: #{autoformer_forward.41} parent=5 // pred_fallthru
      _
    %p468 = scmp.le.s32.totalorder 2, %s12
    // Predicated region
    $region49: #{autoformer_forward.41} parent=5 // pred_check
      %p469 = pneg %p468
    $region50: #{autoformer_forward.41} parent=5 // pred_check_branch
      %471 = sbr.rel (%p469) target = $region52
    $region51: #{autoformer_forward.41} parent=5 // pred_region
      %s472 = ssub.s32 %s12, 2
      // Predicated region
      $region53: #{autoformer_forward.41} parent=51 // pred_check
        %p473 = pneg %p182
      $region54: #{autoformer_forward.41} parent=51 // pred_check_branch
        %475 = sbr.rel (%p473) target = $region56
      $region55: #{autoformer_forward.41} parent=51 // pred_region
        %p476 = scmp.lt.s32.totalorder %s18, 1
        %s477 = scalar_select %p476, %s18, 1
        %s478 = smul.addr %s477, 2
        %s479 = smul.addr %s478, 8
        %s480 = scalar_lea.vmem %s6, %s479
      $region56: #{autoformer_forward.41} parent=51 // pred_fallthru
        _
    $region52: #{autoformer_forward.41} parent=5 // pred_fallthru
      _
  $region6: #{autoformer_forward.41} parent=0 // loop_footer
    %s16 = sadd.s32 1, %s12
  $region7: #{autoformer_forward.41} parent=0 // loop_footer_branch
    %11 = sbr.rel target = $region3
  $region8: #{autoformer_forward.41} parent=0 // loop_exit
    _

// kernel: autoformer_forward.43
$region0: #{autoformer_forward.43}
  #allocation0 [shape = 'u32[]', space=smem, size = 0x4, offset = 0x4, fixed_abs, tag = 'smem constant byte address 0x4 - core index']
  #allocation1 [shape = 'u32[72,128]{1,0:T(1,128)}', space=vmem, size = 0x9000, scoped, tag = 'internal scratch']
  #allocation2 [shape = 'f32[1,1]{1,0:T(1,128)S(1)}', space=vmem, size = 0x200, scoped, tag = 'scoped memory for autoformer_forward.43']
  %s0 = inlined_call_operand.vmem [shape: f32[2,8,4], index: 0, kind: input, shape index: {}]
  %s1 = inlined_call_operand.vmem [shape: f32[2,8,4], index: 1, kind: input, shape index: {}]
  %s2 = inlined_call_operand.vmem [shape: f32[4,1], index: 2, kind: input, shape index: {}]
  %s3 = inlined_call_operand.<no memory space> [shape: f32[1,1], index: 3, kind: input, shape index: {}]
  %s4 = inlined_call_operand.vmem [shape: f32[2,8,1], index: 4, kind: output, shape index: {}]
  %s5 = sld [smem:[#allocation0]]
  $region49: #{autoformer_forward.43} parent=0
    _
  %s7 = ssub.s32 1, %s5
  %s8 = scalar_select 0, %s7, %s5
  %v9 = vstv %s3
  %10 = vst [vmem:[#allocation2] sm:$0x1] %v9
  loop: start=0, step=1, limit=4
  $region2: #{autoformer_forward.43} parent=0 // loop_pre_header
    _
  $region3: #{autoformer_forward.43} parent=0 // loop_header
    %s12 = sphi 0, %s16
    %p13 = scmp.ge.s32.totalorder %s12, 4
    %s22 = sphi 0, %s24
    %s25 = sphi 0, %s22
    %s26 = sphi 0, %s25
    %s42 = sphi 0, %s26
    %s48 = sphi 0, %s50
    %s51 = sphi 0, %s48
    %s52 = sphi 0, %s51
    %s68 = sphi 0, %s52
    %s72 = sphi 0, %s72
    %s74 = sphi 0, %s72
    %s75 = sphi 0, %s74
    %s89 = sphi 0, %s75
    %s93 = sphi 0, %s93
    %s95 = sphi 0, %s93
    %s96 = sphi 0, %s95
    %s110 = sphi 0, %s96
    %s116 = sphi 0, %s118
    %s119 = sphi 0, %s116
    %s120 = sphi 0, %s119
    %s136 = sphi 0, %s120
  $region4: #{autoformer_forward.43} parent=0 // loop_header_branch
    %15 = sbr.rel (%p13) target = $region8
  $region5: #{autoformer_forward.43} parent=0 // loop_body
    %s17 = ssub.s32 %s12, 1
    %s18 = ssub.s32 %s12, 2
    %s19 = sadd.s32 %s12, 1
    %s20 = ssub.s32 %s12, %s19
    %p21 = scmp.eq.s32.totalorder %s20, 0
    %s23 = sadd.s32 %s22, 1
    %s24 = scalar_select %p21, %s22, %s23
    %p27 = pneg %p21
    %p28 = scmp.eq.s32.totalorder %s12, 1
    %p29 = por %p27, %p28
    %p30 = scmp.ne.s32.totalorder %s22, %s25
    %p31 = scmp.eq.s32.totalorder %s12, 0
    %p32 = por %p30, %p31
    %p33 = scmp.ne.s32.totalorder %s22, %s25
    %p34 = scmp.eq.s32.totalorder %s17, 1
    %p35 = por %p33, %p34
    %p36 = scmp.ne.s32.totalorder %s25, %s26
    %p37 = scmp.eq.s32.totalorder %s17, 0
    %p38 = por %p36, %p37
    %p39 = scmp.ne.s32.totalorder %s25, %s26
    %p40 = scmp.eq.s32.totalorder %s18, 1
    %p41 = por %p39, %p40
    %p43 = scmp.ne.s32.totalorder %s26, %s42
    %p44 = scmp.eq.s32.totalorder %s18, 0
    %p45 = por %p43, %p44
    %s46 = ssub.s32 %s12, %s19
    %p47 = scmp.eq.s32.totalorder %s46, 0
    %s49 = sadd.s32 %s48, 1
    %s50 = scalar_select %p47, %s48, %s49
    %p53 = pneg %p47
    %p54 = scmp.eq.s32.totalorder %s12, 1
    %p55 = por %p53, %p54
    %p56 = scmp.ne.s32.totalorder %s48, %s51
    %p57 = scmp.eq.s32.totalorder %s12, 0
    %p58 = por %p56, %p57
    %p59 = scmp.ne.s32.totalorder %s48, %s51
    %p60 = scmp.eq.s32.totalorder %s17, 1
    %p61 = por %p59, %p60
    %p62 = scmp.ne.s32.totalorder %s51, %s52
    %p63 = scmp.eq.s32.totalorder %s17, 0
    %p64 = por %p62, %p63
    %p65 = scmp.ne.s32.totalorder %s51, %s52
    %p66 = scmp.eq.s32.totalorder %s18, 1
    %p67 = por %p65, %p66
    %p69 = scmp.ne.s32.totalorder %s52, %s68
    %p70 = scmp.eq.s32.totalorder %s18, 0
    %p71 = por %p69, %p70
    %s73 = sadd.s32 %s72, 1
    %p76 = scmp.eq.s32.totalorder %s12, 1
    %p77 = scmp.ne.s32.totalorder %s72, %s74
    %p78 = scmp.eq.s32.totalorder %s12, 0
    %p79 = por %p77, %p78
    %p80 = scmp.ne.s32.totalorder %s72, %s74
    %p81 = scmp.eq.s32.totalorder %s17, 1
    %p82 = por %p80, %p81
    %p83 = scmp.ne.s32.totalorder %s74, %s75
    %p84 = scmp.eq.s32.totalorder %s17, 0
    %p85 = por %p83, %p84
    %p86 = scmp.ne.s32.totalorder %s74, %s75
    %p87 = scmp.eq.s32.totalorder %s18, 1
    %p88 = por %p86, %p87
    %p90 = scmp.ne.s32.totalorder %s75, %s89
    %p91 = scmp.eq.s32.totalorder %s18, 0
    %p92 = por %p90, %p91
    %s94 = sadd.s32 %s93, 1
    %p97 = scmp.eq.s32.totalorder %s12, 1
    %p98 = scmp.ne.s32.totalorder %s93, %s95
    %p99 = scmp.eq.s32.totalorder %s12, 0
    %p100 = por %p98, %p99
    %p101 = scmp.ne.s32.totalorder %s93, %s95
    %p102 = scmp.eq.s32.totalorder %s17, 1
    %p103 = por %p101, %p102
    %p104 = scmp.ne.s32.totalorder %s95, %s96
    %p105 = scmp.eq.s32.totalorder %s17, 0
    %p106 = por %p104, %p105
    %p107 = scmp.ne.s32.totalorder %s95, %s96
    %p108 = scmp.eq.s32.totalorder %s18, 1
    %p109 = por %p107, %p108
    %p111 = scmp.ne.s32.totalorder %s96, %s110
    %p112 = scmp.eq.s32.totalorder %s18, 0
    %p113 = por %p111, %p112
    %s114 = ssub.s32 %s12, %s19
    %p115 = scmp.eq.s32.totalorder %s114, 0
    %s117 = sadd.s32 %s116, 1
    %s118 = scalar_select %p115, %s116, %s117
    %p121 = pneg %p115
    %p122 = scmp.eq.s32.totalorder %s12, 1
    %p123 = por %p121, %p122
    %p124 = scmp.ne.s32.totalorder %s116, %s119
    %p125 = scmp.eq.s32.totalorder %s12, 0
    %p126 = por %p124, %p125
    %p127 = scmp.ne.s32.totalorder %s116, %s119
    %p128 = scmp.eq.s32.totalorder %s17, 1
    %p129 = por %p127, %p128
    %p130 = scmp.ne.s32.totalorder %s119, %s120
    %p131 = scmp.eq.s32.totalorder %s17, 0
    %p132 = por %p130, %p131
    %p133 = scmp.ne.s32.totalorder %s119, %s120
    %p134 = scmp.eq.s32.totalorder %s18, 1
    %p135 = por %p133, %p134
    %p137 = scmp.ne.s32.totalorder %s120, %s136
    %p138 = scmp.eq.s32.totalorder %s18, 0
    %p139 = por %p137, %p138
    %p140 = scmp.le.s32.totalorder 1, %s12
    %p141 = scmp.lt.s32.totalorder %s12, 3
    %p142 = pnand %p140, %p141
    %p143 = pneg %p142
    // Predicated region
    $region9: #{autoformer_forward.43} parent=5 // pred_check
      _
    $region10: #{autoformer_forward.43} parent=5 // pred_check_branch
      %145 = sbr.rel (%p142) target = $region12
    $region11: #{autoformer_forward.43} parent=5 // pred_region
      %s146 = ssub.s32 %s12, 1
      // Predicated region
      $region13: #{autoformer_forward.43} parent=11 // pred_check
        %p147 = pneg %p85
      $region14: #{autoformer_forward.43} parent=11 // pred_check_branch
        %149 = sbr.rel (%p147) target = $region16
      $region15: #{autoformer_forward.43} parent=11 // pred_region
        _
      $region16: #{autoformer_forward.43} parent=11 // pred_fallthru
        _
      // Predicated region
      $region17: #{autoformer_forward.43} parent=11 // pred_check
        %p150 = pneg %p106
      $region18: #{autoformer_forward.43} parent=11 // pred_check_branch
        %152 = sbr.rel (%p150) target = $region20
      $region19: #{autoformer_forward.43} parent=11 // pred_region
        _
      $region20: #{autoformer_forward.43} parent=11 // pred_fallthru
        _
    $region12: #{autoformer_forward.43} parent=5 // pred_fallthru
      _
    %p153 = scmp.lt.s32.totalorder %s12, 2
    // Predicated region
    $region21: #{autoformer_forward.43} parent=5 // pred_check
      %p154 = pneg %p153
    $region22: #{autoformer_forward.43} parent=5 // pred_check_branch
      %156 = sbr.rel (%p154) target = $region24
    $region23: #{autoformer_forward.43} parent=5 // pred_region
      // Predicated region
      $region25: #{autoformer_forward.43} parent=23 // pred_check
        %p157 = pneg %p32
      $region26: #{autoformer_forward.43} parent=23 // pred_check_branch
        %159 = sbr.rel (%p157) target = $region28
      $region27: #{autoformer_forward.43} parent=23 // pred_region
        %p160 = scmp.lt.s32.totalorder %s12, 1
        %s161 = scalar_select %p160, %s12, 1
        %s162 = smul.addr %s161, 8
        %s163 = scalar_lea.vmem %s0, %s162
      $region28: #{autoformer_forward.43} parent=23 // pred_fallthru
        _
      // Predicated region
      $region29: #{autoformer_forward.43} parent=23 // pred_check
        %p164 = pneg %p58
      $region30: #{autoformer_forward.43} parent=23 // pred_check_branch
        %166 = sbr.rel (%p164) target = $region32
      $region31: #{autoformer_forward.43} parent=23 // pred_region
        %p167 = scmp.lt.s32.totalorder %s12, 1
        %s168 = scalar_select %p167, %s12, 1
        %s169 = smul.addr %s168, 8
        %s170 = scalar_lea.vmem %s1, %s169
      $region32: #{autoformer_forward.43} parent=23 // pred_fallthru
        _
    $region24: #{autoformer_forward.43} parent=5 // pred_fallthru
      _
    %p171 = scmp.le.s32.totalorder 1, %s12
    %p172 = scmp.lt.s32.totalorder %s12, 3
    %p173 = pnand %p171, %p172
    %p174 = pneg %p173
    // Predicated region
    $region33: #{autoformer_forward.43} parent=5 // pred_check
      _
    $region34: #{autoformer_forward.43} parent=5 // pred_check_branch
      %176 = sbr.rel (%p173) target = $region36
    $region35: #{autoformer_forward.43} parent=5 // pred_region
      %s177 = ssub.s32 %s12, 1
      %p178 = scmp.lt.s32.totalorder %s17, 1
      %s179 = scalar_select %p178, %s17, 1
      %s180 = smul.addr %s179, 8
      %s181 = scalar_lea.vmem %s0, %s180
      %p182 = pneg %p38
      %p183 = pneg %p35
      %p184 = scmp.lt.s32.totalorder %s17, 1
      %s185 = scalar_select %p184, %s17, 1
      %s186 = smul.addr %s185, 8
      %s187 = scalar_lea.vmem %s1, %s186
      %p188 = pneg %p64
      %p189 = pneg %p61
      %p190 = pneg %p85
      %p191 = pneg %p82
      %p192 = pneg %p106
      %p193 = pneg %p103
      %p194 = pneg %p132
      %p195 = pneg %p129
      %p196 = scmp.lt.s32.totalorder %s17, 1
      %s197 = scalar_select %p196, %s17, 1
      %s198 = smul.addr %s197, 8
      %s199 = scalar_lea.vmem %s4, %s198
      %p200 = scmp.lt.s32.totalorder %s17, 1
      %s201 = scalar_select %p200, %s17, 1
      %s202 = smul.addr %s201, 8
      %s203 = scalar_lea.vmem %s0, %s202
      %p204 = scmp.lt.s32.totalorder %s17, 1
      %s205 = scalar_select %p204, %s17, 1
      %s206 = smul.addr %s205, 8
      %s207 = scalar_lea.vmem %s1, %s206
      %p208 = scmp.lt.s32.totalorder %s17, 1
      %s209 = scalar_select %p208, %s17, 1
      %s210 = smul.addr %s209, 8
      %s211 = scalar_lea.vmem %s4, %s210
      %v212 = vld [vmem:[%s203] sm:$0xff]
      %v213 = vld [vmem:[%s207] sm:$0xff]
      %v214 = vadd.f32 %v212, %v213
      %v215 = vld [vmem:[%s2] sm:$0xf]
      %v216 = vld [vmem:[#allocation2] sm:$0x1]
      %v218 = vperm.slane %v216, 0
      %vm220 = vcmask 31744
      %v222 = vsel %vm220, %v214, 0
      %vm224 = vcmask 1043456
      %v226 = vsel %vm224, %v215, 0
      %228 = vmatpush.msra.mxu0 0.0
      %229 = vmatpush.msra.mxu0 0.0
      %230 = vmatpush.msra.mxu0 0.0
      %231 = vmatpush.msra.mxu0 0.0
      %232 = vmatpush.msra.mxu0 0.0
      %233 = vmatpush.msra.mxu0 0.0
      %234 = vmatpush.msra.mxu0 0.0
      %235 = vmatpush.msra.mxu0 0.0
      %236 = vmatpush.msra.mxu0 0.0
      %237 = vmatpush.msra.mxu0 0.0
      %238 = vmatpush.msra.mxu0 0.0
      %239 = vmatpush.msra.mxu0 0.0
      %240 = vmatpush.msra.mxu0 0.0
      %241 = vmatpush.msra.mxu0 0.0
      %242 = vmatpush.msra.mxu0 0.0
      %243 = vmatpush.msra.mxu0 %v226
      %244 = vmatmul.f32.gmra.mxu0 %v222
      %v245 = vpop.f32.mrf.mxu0
      %v246 = vadd.f32 %v218, %v245
      %247 = vdwg.mxu0
      %vm248 = vcmask 7168
      %249 = vst.msk [vmem:[%s211] sm:$0xff] %vm248, %v246
      %p250 = scmp.lt.s32.totalorder %s17, 1
      %s251 = scalar_select %p250, %s17, 1
      %s252 = smul.addr %s251, 8
      %s253 = scalar_lea.vmem %s4, %s252
      // Predicated region
      $region37: #{autoformer_forward.43} parent=35 // pred_check
        %p254 = pneg %p129
      $region38: #{autoformer_forward.43} parent=35 // pred_check_branch
        %256 = sbr.rel (%p254) target = $region40
      $region39: #{autoformer_forward.43} parent=35 // pred_region
        _
      $region40: #{autoformer_forward.43} parent=35 // pred_fallthru
        _
    $region36: #{autoformer_forward.43} parent=5 // pred_fallthru
      _
    %p257 = scmp.le.s32.totalorder 2, %s12
    // Predicated region
    $region41: #{autoformer_forward.43} parent=5 // pred_check
      %p258 = pneg %p257
    $region42: #{autoformer_forward.43} parent=5 // pred_check_branch
      %260 = sbr.rel (%p258) target = $region44
    $region43: #{autoformer_forward.43} parent=5 // pred_region
      %s261 = ssub.s32 %s12, 2
      // Predicated region
      $region45: #{autoformer_forward.43} parent=43 // pred_check
        %p262 = pneg %p135
      $region46: #{autoformer_forward.43} parent=43 // pred_check_branch
        %264 = sbr.rel (%p262) target = $region48
      $region47: #{autoformer_forward.43} parent=43 // pred_region
        %p265 = scmp.lt.s32.totalorder %s18, 1
        %s266 = scalar_select %p265, %s18, 1
        %s267 = smul.addr %s266, 8
        %s268 = scalar_lea.vmem %s4, %s267
      $region48: #{autoformer_forward.43} parent=43 // pred_fallthru
        _
    $region44: #{autoformer_forward.43} parent=5 // pred_fallthru
      _
  $region6: #{autoformer_forward.43} parent=0 // loop_footer
    %s16 = sadd.s32 1, %s12
  $region7: #{autoformer_forward.43} parent=0 // loop_footer_branch
    %11 = sbr.rel target = $region3
  $region8: #{autoformer_forward.43} parent=0 // loop_exit
    _

</llo_original>
